<compile_context>
chip_gen: v6e
topology: v6e:2x2x1
jax: 0.10.0
libtpu: 0.0.40
codegen_flags: <defaults>
</compile_context>

<pallas_src>
import functools
import math

import jax
import jax.numpy as jnp
from jax.experimental import pallas as pl
from jax.experimental.pallas import tpu as pltpu

EPS = 1e-5


# ------------------------------ Pallas kernel -------------------------------

def _inception_kernel(x_ref,
                      w1_ref, s1_ref, b1_ref,      # packed 1x1 (b2red|b3red|b1)
                      w2_ref, s2_ref, b2_ref,      # b2 3x3   (9*c2r, c2)
                      w3a_ref, s3a_ref, b3a_ref,   # b3 3x3 a (9*c3r, c3a)
                      w3b_ref, s3b_ref, b3b_ref,   # b3 3x3 b (9*c3a, c3b)
                      w4_ref, s4_ref, b4_ref,      # b4 1x1 (after maxpool)
                      o_ref, pad_ref,
                      *, B, H, W, P, cin, c1, c2r, c2, c3r, c3a, c3b, c4):
    HW = H * W
    f32 = jnp.float32
    bf16 = jnp.bfloat16
    CM = pad_ref.shape[1]

    # w-coordinate of every flattened row r = h*W + w; validity masks for the
    # dx = -1 / +1 taps (the h-boundary is handled by the scratch pad rows).
    wcol = jax.lax.broadcasted_iota(jnp.int32, (HW, 1), 0) % W
    m_left = wcol >= 1            # valid source when dx == -1
    m_right = wcol <= (W - 2)     # valid source when dx == +1

    def taps(nin, oob):
        """The 9 row-shifted (HW, nin) f32 views of the padded scratch."""
        out = []
        for i in range(3):
            for j in range(3):
                s = (i - 1) * W + (j - 1)
                t = pad_ref[P + s:P + s + HW, 0:nin]
                if j == 0:
                    t = jnp.where(m_left, t, oob)
                elif j == 2:
                    t = jnp.where(m_right, t, oob)
                out.append(t)
        return out

    def zero_pad_rows():
        # Only the padding rows are ever filled; the HW main rows are always
        # overwritten before being read.
        pad_ref[0:P, :] = jnp.zeros((P, CM), f32)
        pad_ref[P + HW:P + HW + P, :] = jnp.zeros((P, CM), f32)

    def conv3x3_bn_relu(act, w_r, s_r, b_r, nin):
        # One wide-K MXU matmul on an in-VMEM im2col slab (K = 9 * nin).
        pad_ref[P:P + HW, 0:nin] = act
        slab = jnp.concatenate(taps(nin, 0.0), axis=-1).astype(bf16)
        acc = jnp.dot(slab, w_r[...], preferred_element_type=f32)
        return jnp.maximum(acc * s_r[...] + b_r[...], 0.0)

    def maxpool3x3(act, nin):
        # -inf only in the pad rows (cols 0:nin) / masked lanes; runs last per
        # image so conv taps never observe the -inf fill.
        pad_ref[0:P, 0:nin] = jnp.full((P, nin), -jnp.inf, f32)
        pad_ref[P + HW:P + HW + P, 0:nin] = jnp.full((P, nin), -jnp.inf, f32)
        pad_ref[P:P + HW, 0:nin] = act
        ts = taps(nin, -jnp.inf)
        r = ts[0]
        for t in ts[1:]:
            r = jnp.maximum(r, t)
        return r

    # --- packed 1x1 (b2red | b3red | b1), batched over all B images ---------
    xf = x_ref[...].reshape(B * HW, cin)                       # (B*HW, Cin) f32
    yp_all = jnp.dot(xf.astype(bf16), w1_ref[...], preferred_element_type=f32)
    yp_all = jnp.maximum(yp_all * s1_ref[...] + b1_ref[...], 0.0)

    for b in range(B):
        zero_pad_rows()
        yp = yp_all[b * HW:(b + 1) * HW]
        y2r = yp[:, 0:c2r]
        y3r = yp[:, c2r:c2r + c3r]
        y1 = yp[:, c2r + c3r:c2r + c3r + c1]

        # --- b2 tail: 3x3 ----------------------------------------------------
        y2 = conv3x3_bn_relu(y2r, w2_ref, s2_ref, b2_ref, c2r)

        # --- b3 tail: 3x3 -> 3x3 (chained entirely in VMEM) ------------------
        y3 = conv3x3_bn_relu(y3r, w3a_ref, s3a_ref, b3a_ref, c3r)
        y3 = conv3x3_bn_relu(y3, w3b_ref, s3b_ref, b3b_ref, c3a)

        # --- b4: maxpool3x3 (pad=-inf) then 1x1 ------------------------------
        xpool = maxpool3x3(xf[b * HW:(b + 1) * HW], cin)
        y4 = jnp.dot(xpool.astype(bf16), w4_ref[...], preferred_element_type=f32)
        y4 = jnp.maximum(y4 * s4_ref[...] + b4_ref[...], 0.0)

        # --- channel concat -> one lane-dense (HW, Ctot) store ---------------
        o_ref[b] = jnp.concatenate([y1, y2, y3, y4], axis=-1).astype(o_ref.dtype)


# --------------------------- parameters / folding ---------------------------

def make_conv_bn(key, cin, cout, ksize):
    """Conv2d(cin,cout,k,pad=k//2,bias=True) + BatchNorm2d, eval-stats folded."""
    k = jax.random.split(key, 6)
    fan_in = cin * ksize * ksize
    w = jax.random.normal(k[0], (cout, cin, ksize, ksize),
                          jnp.float32) / math.sqrt(fan_in)
    b = 0.1 * jax.random.normal(k[1], (cout,), jnp.float32)
    gamma = 1.0 + 0.1 * jax.random.normal(k[2], (cout,), jnp.float32)
    beta = 0.1 * jax.random.normal(k[3], (cout,), jnp.float32)
    rmean = 0.1 * jax.random.normal(k[4], (cout,), jnp.float32)
    rvar = 1.0 + 0.1 * jnp.abs(jax.random.normal(k[5], (cout,), jnp.float32))
    scale = gamma / jnp.sqrt(rvar + EPS)
    bias = (b - rmean) * scale + beta
    if ksize == 1:
        w_kern = w.reshape(cout, cin).T.astype(jnp.bfloat16)        # (Cin, Cout)
    else:
        # (Cout,Cin,3,3) -> (3,3,Cin,Cout) -> (9*Cin, Cout);
        # slab column (i*3 + j)*Cin + c  <->  weight row (i*3 + j)*Cin + c.
        w_kern = jnp.transpose(w, (2, 3, 1, 0)).reshape(
            ksize * ksize * cin, cout).astype(jnp.bfloat16)
    return dict(w_kern=w_kern,
                scale=scale.reshape(1, cout).astype(jnp.float32),
                bias=bias.reshape(1, cout).astype(jnp.float32),
                w_ref=w, pad=ksize // 2)


def make_compact_inception(key, in_planes, n1x1, n3x3red, n3x3, n5x5red, n5x5,
                           pool_planes, flayer_cprate, cur_fconvid):
    c1 = int(n1x1 * (1 - flayer_cprate[cur_fconvid + 0]))
    c2r = int(n3x3red * (1 - flayer_cprate[cur_fconvid + 1]))
    c2 = int(n3x3 * (1 - flayer_cprate[cur_fconvid + 2]))
    c3r = int(n5x5red * (1 - flayer_cprate[cur_fconvid + 3]))
    c3a = int(n5x5 * (1 - flayer_cprate[cur_fconvid + 4]))
    c3b = int(n5x5 * (1 - flayer_cprate[cur_fconvid + 5]))
    c4 = int(pool_planes * (1 - flayer_cprate[cur_fconvid + 6]))
    keys = jax.random.split(key, 7)
    p_b1 = make_conv_bn(keys[0], in_planes, c1, 1)
    p_b2r = make_conv_bn(keys[1], in_planes, c2r, 1)
    p_b2 = make_conv_bn(keys[2], c2r, c2, 3)
    p_b3r = make_conv_bn(keys[3], in_planes, c3r, 1)
    p_b3a = make_conv_bn(keys[4], c3r, c3a, 3)
    p_b3b = make_conv_bn(keys[5], c3a, c3b, 3)
    p_b4 = make_conv_bn(keys[6], in_planes, c4, 1)
    # Pack the three parallel 1x1 convs that share input x along Cout.
    # Order (b2red | b3red | b1): the widest consumer (y2red) starts at lane 0.
    w1 = jnp.concatenate([p_b2r['w_kern'], p_b3r['w_kern'], p_b1['w_kern']], axis=1)
    s1 = jnp.concatenate([p_b2r['scale'], p_b3r['scale'], p_b1['scale']], axis=1)
    b1 = jnp.concatenate([p_b2r['bias'], p_b3r['bias'], p_b1['bias']], axis=1)
    return dict(
        dims=dict(cin=in_planes, c1=c1, c2r=c2r, c2=c2,
                  c3r=c3r, c3a=c3a, c3b=c3b, c4=c4),
        w1=w1, s1=s1, b1=b1,
        w2=p_b2['w_kern'], s2=p_b2['scale'], b2=p_b2['bias'],
        w3a=p_b3a['w_kern'], s3a=p_b3a['scale'], b3a=p_b3a['bias'],
        w3b=p_b3b['w_kern'], s3b=p_b3b['scale'], b3b=p_b3b['bias'],
        w4=p_b4['w_kern'], s4=p_b4['scale'], b4=p_b4['bias'],
        ref=dict(b1=p_b1, b2r=p_b2r, b2=p_b2, b3r=p_b3r,
                 b3a=p_b3a, b3b=p_b3b, b4=p_b4),
    )


# ------------------------------- forward pass --------------------------------

def _rep_spec(shape):
    zeros = (0,) * len(shape)
    return pl.BlockSpec(shape, lambda n, _z=zeros: _z)


def compact_inception_forward_nhwc(x_nhwc, params, imgs_per_step=1):
    """Inception block on (N, H, W, Cin) activations; returns (N, H, W, Ctot)."""
    N, H, W, cin = x_nhwc.shape
    d = params['dims']
    assert cin == d['cin']
    B = imgs_per_step
    assert N % B == 0 and W >= 2 and (H * W) % 8 == 0
    HW = H * W
    ctot = d['c1'] + d['c2'] + d['c3b'] + d['c4']
    # Padding rows so every (dy,dx) tap is an in-bounds row slice; multiple of 8.
    P = ((W + 1 + 7) // 8) * 8
    cmax = max(d['cin'], d['c2r'], d['c3r'], d['c3a'])

    x = x_nhwc.reshape(N, HW, cin)          # flattened spatial rows, C on lanes

    kern = functools.partial(_inception_kernel, B=B, H=H, W=W, P=P, **d)

    args = (x,
            params['w1'], params['s1'], params['b1'],
            params['w2'], params['s2'], params['b2'],
            params['w3a'], params['s3a'], params['b3a'],
            params['w3b'], params['s3b'], params['b3b'],
            params['w4'], params['s4'], params['b4'])

    in_specs = [pl.BlockSpec((B, HW, cin), lambda n: (n, 0, 0))]
    in_specs += [_rep_spec(a.shape) for a in args[1:]]

    out = pl.pallas_call(
        kern,
        out_shape=jax.ShapeDtypeStruct((N, HW, ctot), jnp.float32),
        grid=(N // B,),
        in_specs=in_specs,
        out_specs=pl.BlockSpec((B, HW, ctot), lambda n: (n, 0, 0)),
        scratch_shapes=[pltpu.VMEM((HW + 2 * P, cmax), jnp.float32)],
        compiler_params=pltpu.CompilerParams(
            dimension_semantics=("parallel",)),
    )(*args)
    return out.reshape(N, H, W, ctot)


def compact_inception_forward(x_nchw, params, imgs_per_step=1):
    """NCHW interface for parity with the PyTorch module.

    When chaining inception blocks, keep activations NHWC and call
    compact_inception_forward_nhwc directly; transpose only at the model
    boundary.
    """
    x_nhwc = jnp.transpose(x_nchw, (0, 2, 3, 1))
    y = compact_inception_forward_nhwc(x_nhwc, params, imgs_per_step)
    return jnp.transpose(y, (0, 3, 1, 2))


# ------------------------------ f32 reference --------------------------------

def _ref_cbr(x, p):
    y = jax.lax.conv_general_dilated(
        x, p['w_ref'], (1, 1), [(p['pad'], p['pad'])] * 2,
        dimension_numbers=('NCHW', 'OIHW', 'NCHW'),
        precision=jax.lax.Precision.HIGHEST)
    sc = p['scale'].reshape(1, -1, 1, 1)
    bi = p['bias'].reshape(1, -1, 1, 1)
    return jnp.maximum(y * sc + bi, 0.0)


def reference_forward(x_nchw, params):
    r = params['ref']
    y1 = _ref_cbr(x_nchw, r['b1'])
    y2 = _ref_cbr(_ref_cbr(x_nchw, r['b2r']), r['b2'])
    y3 = _ref_cbr(_ref_cbr(_ref_cbr(x_nchw, r['b3r']), r['b3a']), r['b3b'])
    xp = jax.lax.reduce_window(x_nchw, -jnp.inf, jax.lax.max,
                               (1, 1, 3, 3), (1, 1, 1, 1),
                               [(0, 0), (0, 0), (1, 1), (1, 1)])
    y4 = _ref_cbr(xp, r['b4'])
    return jnp.concatenate([y1, y2, y3, y4], axis=1)


if __name__ == "__main__":
    key = jax.random.PRNGKey(0)
    kparams, kx = jax.random.split(key)

    # Small but representative config: the "a3" inception with 50% pruning.
    N, in_planes, H, W = 2, 16, 16, 16
    flayer_cprate = [0.5] * 7
    params = make_compact_inception(kparams, in_planes,
                                    64, 96, 128, 16, 32, 32,
                                    flayer_cprate, 0)

    x = jax.random.normal(kx, (N, in_planes, H, W), jnp.float32)   # NCHW

    # imgs_per_step=1 keeps >= 2 grid steps (both v7x TensorCores busy);
    # raise it for large batches to amortize per-step overhead.
    fwd = jax.jit(lambda inp: compact_inception_forward(inp, params,
                                                        imgs_per_step=1))
    out = jax.block_until_ready(fwd(x))

    d = params['dims']
    ctot = d['c1'] + d['c2'] + d['c3b'] + d['c4']
    assert out.shape == (N, ctot, H, W), out.shape
    assert bool(jnp.all(jnp.isfinite(out)))

    # Parity vs an f32 XLA reference (kernel matmul operands are bf16).
    ref = reference_forward(x, params)
    err = float(jnp.max(jnp.abs(out - ref)))
    assert err < 0.15, f"max abs err vs f32 reference: {err}"

    print("KERNEL_OK")
</pallas_src>

<mosaic_0001>
module attributes {stable_mosaic.version = 11 : i64} {
  func.func @_inception_kernel(%arg0: i32, %arg1: memref<1x256x16xf32, #tpu.memory_space<vmem>>, %arg2: memref<16x88xbf16, #tpu.memory_space<vmem>>, %arg3: memref<1x88xf32, #tpu.memory_space<vmem>>, %arg4: memref<1x88xf32, #tpu.memory_space<vmem>>, %arg5: memref<432x64xbf16, #tpu.memory_space<vmem>>, %arg6: memref<1x64xf32, #tpu.memory_space<vmem>>, %arg7: memref<1x64xf32, #tpu.memory_space<vmem>>, %arg8: memref<72x16xbf16, #tpu.memory_space<vmem>>, %arg9: memref<1x16xf32, #tpu.memory_space<vmem>>, %arg10: memref<1x16xf32, #tpu.memory_space<vmem>>, %arg11: memref<144x16xbf16, #tpu.memory_space<vmem>>, %arg12: memref<1x16xf32, #tpu.memory_space<vmem>>, %arg13: memref<1x16xf32, #tpu.memory_space<vmem>>, %arg14: memref<16x16xbf16, #tpu.memory_space<vmem>>, %arg15: memref<1x16xf32, #tpu.memory_space<vmem>>, %arg16: memref<1x16xf32, #tpu.memory_space<vmem>>, %arg17: memref<1x256x128xf32, #tpu.memory_space<vmem>>, %arg18: memref<304x48xf32, #tpu.memory_space<vmem>>) attributes {dimension_semantics = [#tpu.dimension_semantics<parallel>], iteration_bounds = array<i64: 2>, scalar_prefetch = 0 : i64, scratch_operands = 1 : i64, tpu.core_type = #tpu.core_type<tc>, window_params = [{transform_indices = @transform_0, window_bounds = array<i64: 1, 256, 16>}, {pipeline_mode = #tpu.pipeline_mode<synchronous>, transform_indices = @transform_1, window_bounds = array<i64: 16, 88>}, {pipeline_mode = #tpu.pipeline_mode<synchronous>, transform_indices = @transform_2, window_bounds = array<i64: 1, 88>}, {pipeline_mode = #tpu.pipeline_mode<synchronous>, transform_indices = @transform_3, window_bounds = array<i64: 1, 88>}, {pipeline_mode = #tpu.pipeline_mode<synchronous>, transform_indices = @transform_4, window_bounds = array<i64: 432, 64>}, {pipeline_mode = #tpu.pipeline_mode<synchronous>, transform_indices = @transform_5, window_bounds = array<i64: 1, 64>}, {pipeline_mode = #tpu.pipeline_mode<synchronous>, transform_indices = @transform_6, window_bounds = array<i64: 1, 64>}, {pipeline_mode = #tpu.pipeline_mode<synchronous>, transform_indices = @transform_7, window_bounds = array<i64: 72, 16>}, {pipeline_mode = #tpu.pipeline_mode<synchronous>, transform_indices = @transform_8, window_bounds = array<i64: 1, 16>}, {pipeline_mode = #tpu.pipeline_mode<synchronous>, transform_indices = @transform_9, window_bounds = array<i64: 1, 16>}, {pipeline_mode = #tpu.pipeline_mode<synchronous>, transform_indices = @transform_10, window_bounds = array<i64: 144, 16>}, {pipeline_mode = #tpu.pipeline_mode<synchronous>, transform_indices = @transform_11, window_bounds = array<i64: 1, 16>}, {pipeline_mode = #tpu.pipeline_mode<synchronous>, transform_indices = @transform_12, window_bounds = array<i64: 1, 16>}, {pipeline_mode = #tpu.pipeline_mode<synchronous>, transform_indices = @transform_13, window_bounds = array<i64: 16, 16>}, {pipeline_mode = #tpu.pipeline_mode<synchronous>, transform_indices = @transform_14, window_bounds = array<i64: 1, 16>}, {pipeline_mode = #tpu.pipeline_mode<synchronous>, transform_indices = @transform_15, window_bounds = array<i64: 1, 16>}, {transform_indices = @transform_16, window_bounds = array<i64: 1, 256, 128>}]} {
    %0 = tpu.iota {dimensions = array<i32: 0>} : vector<256x1xi32>
    %c16_i32 = arith.constant 16 : i32
    %c0_i32 = arith.constant 0 : i32
    %1 = arith.cmpi eq, %c16_i32, %c0_i32 : i32
    %c1_i32 = arith.constant 1 : i32
    %2 = arith.select %1, %c1_i32, %c16_i32 : i32
    %3 = vector.broadcast %2 : i32 to vector<256x1xi32>
    %4 = arith.remsi %0, %3 : vector<256x1xi32>
    %c0_i32_0 = arith.constant 0 : i32
    %5 = vector.broadcast %c0_i32_0 : i32 to vector<256x1xi32>
    %6 = arith.cmpi ne, %4, %5 : vector<256x1xi32>
    %c0_i32_1 = arith.constant 0 : i32
    %7 = vector.broadcast %c0_i32_1 : i32 to vector<256x1xi32>
    %8 = arith.cmpi slt, %4, %7 : vector<256x1xi32>
    %c0_i32_2 = arith.constant 0 : i32
    %9 = arith.cmpi slt, %2, %c0_i32_2 : i32
    %10 = vector.broadcast %9 : i1 to vector<256x1xi1>
    %11 = vector.broadcast %10 : vector<256x1xi1> to vector<256x1xi1>
    %12 = arith.xori %8, %11 : vector<256x1xi1>
    %13 = arith.andi %12, %6 : vector<256x1xi1>
    %14 = vector.broadcast %2 : i32 to vector<256x1xi32>
    %15 = arith.addi %4, %14 : vector<256x1xi32>
    %16 = arith.select %13, %15, %4 : vector<256x1xi1>, vector<256x1xi32>
    %c1_i32_3 = arith.constant 1 : i32
    %17 = vector.broadcast %c1_i32_3 : i32 to vector<256x1xi32>
    %18 = arith.cmpi sge, %16, %17 : vector<256x1xi32>
    %c14_i32 = arith.constant 14 : i32
    %19 = vector.broadcast %c14_i32 : i32 to vector<256x1xi32>
    %20 = arith.cmpi sle, %16, %19 : vector<256x1xi32>
    %c0 = arith.constant 0 : index
    %c0_4 = arith.constant 0 : index
    %c0_5 = arith.constant 0 : index
    %21 = vector.load %arg1[%c0, %c0_4, %c0_5] : memref<1x256x16xf32, #tpu.memory_space<vmem>>, vector<1x256x16xf32>
    %22 = vector.shape_cast %21 : vector<1x256x16xf32> to vector<256x16xf32>
    %23 = arith.truncf %22 : vector<256x16xf32> to vector<256x16xbf16>
    %c0_6 = arith.constant 0 : index
    %c0_7 = arith.constant 0 : index
    %24 = vector.load %arg2[%c0_6, %c0_7] : memref<16x88xbf16, #tpu.memory_space<vmem>>, vector<16x88xbf16>
    %cst = arith.constant dense<0.000000e+00> : vector<256x88xf32>
    %25 = tpu.matmul %23, %24, %cst {dimension_numbers = #tpu.dot_dimension_numbers<[1], [0], [0], [1], [0, 0, 1, 1], [], []>} : vector<256x16xbf16>, vector<16x88xbf16>, vector<256x88xf32> -> vector<256x88xf32>
    %c0_8 = arith.constant 0 : index
    %c0_9 = arith.constant 0 : index
    %26 = vector.load %arg3[%c0_8, %c0_9] : memref<1x88xf32, #tpu.memory_space<vmem>>, vector<1x88xf32>
    %27 = vector.broadcast %26 : vector<1x88xf32> to vector<256x88xf32>
    %28 = arith.mulf %25, %27 : vector<256x88xf32>
    %c0_10 = arith.constant 0 : index
    %c0_11 = arith.constant 0 : index
    %29 = vector.load %arg4[%c0_10, %c0_11] : memref<1x88xf32, #tpu.memory_space<vmem>>, vector<1x88xf32>
    %30 = vector.broadcast %29 : vector<1x88xf32> to vector<256x88xf32>
    %31 = arith.addf %28, %30 : vector<256x88xf32>
    %cst_12 = arith.constant 0.000000e+00 : f32
    %32 = vector.broadcast %cst_12 : f32 to vector<256x88xf32>
    %33 = arith.maximumf %31, %32 : vector<256x88xf32>
    %cst_13 = arith.constant 0.000000e+00 : f32
    %34 = vector.broadcast %cst_13 : f32 to vector<24x48xf32>
    %c0_14 = arith.constant 0 : index
    %c0_15 = arith.constant 0 : index
    %35 = vector.load %arg18[%c0_14, %c0_15] : memref<304x48xf32, #tpu.memory_space<vmem>>, vector<24x48xf32>
    tpu.vector_store %arg18[%c0_14, %c0_15], %34 {strides = array<i32>} : memref<304x48xf32, #tpu.memory_space<vmem>>, vector<24x48xf32>,
    %cst_16 = arith.constant 0.000000e+00 : f32
    %36 = vector.broadcast %cst_16 : f32 to vector<24x48xf32>
    %c280 = arith.constant 280 : index
    %c0_17 = arith.constant 0 : index
    %37 = vector.load %arg18[%c280, %c0_17] : memref<304x48xf32, #tpu.memory_space<vmem>>, vector<24x48xf32>
    tpu.vector_store %arg18[%c280, %c0_17], %36 {strides = array<i32>} : memref<304x48xf32, #tpu.memory_space<vmem>>, vector<24x48xf32>,
    %38 = vector.extract_strided_slice %33 {offsets = [0, 0], sizes = [256, 48], strides = [1, 1]} : vector<256x88xf32> to vector<256x48xf32>
    %39 = vector.extract_strided_slice %33 {offsets = [0, 48], sizes = [256, 8], strides = [1, 1]} : vector<256x88xf32> to vector<256x8xf32>
    %40 = vector.extract_strided_slice %33 {offsets = [0, 56], sizes = [256, 32], strides = [1, 1]} : vector<256x88xf32> to vector<256x32xf32>
    %c24 = arith.constant 24 : index
    %c0_18 = arith.constant 0 : index
    %41 = vector.load %arg18[%c24, %c0_18] : memref<304x48xf32, #tpu.memory_space<vmem>>, vector<256x48xf32>
    tpu.vector_store %arg18[%c24, %c0_18], %38 {strides = array<i32>} : memref<304x48xf32, #tpu.memory_space<vmem>>, vector<256x48xf32>,
    %c7 = arith.constant 7 : index
    %c0_19 = arith.constant 0 : index
    %42 = vector.load %arg18[%c7, %c0_19] : memref<304x48xf32, #tpu.memory_space<vmem>>, vector<256x48xf32>
    %cst_20 = arith.constant 0.000000e+00 : f32
    %43 = vector.shape_cast %18 : vector<256x1xi1> to vector<256x1xi1>
    %44 = vector.broadcast %43 : vector<256x1xi1> to vector<256x48xi1>
    %45 = vector.broadcast %cst_20 : f32 to vector<256x48xf32>
    %46 = arith.select %44, %42, %45 : vector<256x48xi1>, vector<256x48xf32>
    %c8 = arith.constant 8 : index
    %c0_21 = arith.constant 0 : index
    %47 = vector.load %arg18[%c8, %c0_21] : memref<304x48xf32, #tpu.memory_space<vmem>>, vector<256x48xf32>
    %c9 = arith.constant 9 : index
    %c0_22 = arith.constant 0 : index
    %48 = vector.load %arg18[%c9, %c0_22] : memref<304x48xf32, #tpu.memory_space<vmem>>, vector<256x48xf32>
    %cst_23 = arith.constant 0.000000e+00 : f32
    %49 = vector.shape_cast %20 : vector<256x1xi1> to vector<256x1xi1>
    %50 = vector.broadcast %49 : vector<256x1xi1> to vector<256x48xi1>
    %51 = vector.broadcast %cst_23 : f32 to vector<256x48xf32>
    %52 = arith.select %50, %48, %51 : vector<256x48xi1>, vector<256x48xf32>
    %c23 = arith.constant 23 : index
    %c0_24 = arith.constant 0 : index
    %53 = vector.load %arg18[%c23, %c0_24] : memref<304x48xf32, #tpu.memory_space<vmem>>, vector<256x48xf32>
    %cst_25 = arith.constant 0.000000e+00 : f32
    %54 = vector.shape_cast %18 : vector<256x1xi1> to vector<256x1xi1>
    %55 = vector.broadcast %54 : vector<256x1xi1> to vector<256x48xi1>
    %56 = vector.broadcast %cst_25 : f32 to vector<256x48xf32>
    %57 = arith.select %55, %53, %56 : vector<256x48xi1>, vector<256x48xf32>
    %c24_26 = arith.constant 24 : index
    %c0_27 = arith.constant 0 : index
    %58 = vector.load %arg18[%c24_26, %c0_27] : memref<304x48xf32, #tpu.memory_space<vmem>>, vector<256x48xf32>
    %c25 = arith.constant 25 : index
    %c0_28 = arith.constant 0 : index
    %59 = vector.load %arg18[%c25, %c0_28] : memref<304x48xf32, #tpu.memory_space<vmem>>, vector<256x48xf32>
    %cst_29 = arith.constant 0.000000e+00 : f32
    %60 = vector.shape_cast %20 : vector<256x1xi1> to vector<256x1xi1>
    %61 = vector.broadcast %60 : vector<256x1xi1> to vector<256x48xi1>
    %62 = vector.broadcast %cst_29 : f32 to vector<256x48xf32>
    %63 = arith.select %61, %59, %62 : vector<256x48xi1>, vector<256x48xf32>
    %c39 = arith.constant 39 : index
    %c0_30 = arith.constant 0 : index
    %64 = vector.load %arg18[%c39, %c0_30] : memref<304x48xf32, #tpu.memory_space<vmem>>, vector<256x48xf32>
    %cst_31 = arith.constant 0.000000e+00 : f32
    %65 = vector.shape_cast %18 : vector<256x1xi1> to vector<256x1xi1>
    %66 = vector.broadcast %65 : vector<256x1xi1> to vector<256x48xi1>
    %67 = vector.broadcast %cst_31 : f32 to vector<256x48xf32>
    %68 = arith.select %66, %64, %67 : vector<256x48xi1>, vector<256x48xf32>
    %c40 = arith.constant 40 : index
    %c0_32 = arith.constant 0 : index
    %69 = vector.load %arg18[%c40, %c0_32] : memref<304x48xf32, #tpu.memory_space<vmem>>, vector<256x48xf32>
    %c41 = arith.constant 41 : index
    %c0_33 = arith.constant 0 : index
    %70 = vector.load %arg18[%c41, %c0_33] : memref<304x48xf32, #tpu.memory_space<vmem>>, vector<256x48xf32>
    %cst_34 = arith.constant 0.000000e+00 : f32
    %71 = vector.shape_cast %20 : vector<256x1xi1> to vector<256x1xi1>
    %72 = vector.broadcast %71 : vector<256x1xi1> to vector<256x48xi1>
    %73 = vector.broadcast %cst_34 : f32 to vector<256x48xf32>
    %74 = arith.select %72, %70, %73 : vector<256x48xi1>, vector<256x48xf32>
    %75 = tpu.concatenate %46, %47, %52, %57, %58, %63, %68, %69, %74 in 1 : vector<256x48xf32>, vector<256x48xf32>, vector<256x48xf32>, vector<256x48xf32>, vector<256x48xf32>, vector<256x48xf32>, vector<256x48xf32>, vector<256x48xf32>, vector<256x48xf32> -> vector<256x432xf32>
    %76 = arith.truncf %75 : vector<256x432xf32> to vector<256x432xbf16>
    %c0_35 = arith.constant 0 : index
    %c0_36 = arith.constant 0 : index
    %77 = vector.load %arg5[%c0_35, %c0_36] : memref<432x64xbf16, #tpu.memory_space<vmem>>, vector<432x64xbf16>
    %cst_37 = arith.constant dense<0.000000e+00> : vector<256x64xf32>
    %78 = tpu.matmul %76, %77, %cst_37 {dimension_numbers = #tpu.dot_dimension_numbers<[1], [0], [0], [1], [0, 0, 1, 1], [], []>} : vector<256x432xbf16>, vector<432x64xbf16>, vector<256x64xf32> -> vector<256x64xf32>
    %c0_38 = arith.constant 0 : index
    %c0_39 = arith.constant 0 : index
    %79 = vector.load %arg6[%c0_38, %c0_39] : memref<1x64xf32, #tpu.memory_space<vmem>>, vector<1x64xf32>
    %80 = vector.broadcast %79 : vector<1x64xf32> to vector<256x64xf32>
    %81 = arith.mulf %78, %80 : vector<256x64xf32>
    %c0_40 = arith.constant 0 : index
    %c0_41 = arith.constant 0 : index
    %82 = vector.load %arg7[%c0_40, %c0_41] : memref<1x64xf32, #tpu.memory_space<vmem>>, vector<1x64xf32>
    %83 = vector.broadcast %82 : vector<1x64xf32> to vector<256x64xf32>
    %84 = arith.addf %81, %83 : vector<256x64xf32>
    %cst_42 = arith.constant 0.000000e+00 : f32
    %85 = vector.broadcast %cst_42 : f32 to vector<256x64xf32>
    %86 = arith.maximumf %84, %85 : vector<256x64xf32>
    %c24_43 = arith.constant 24 : index
    %c0_44 = arith.constant 0 : index
    %87 = vector.load %arg18[%c24_43, %c0_44] : memref<304x48xf32, #tpu.memory_space<vmem>>, vector<256x8xf32>
    tpu.vector_store %arg18[%c24_43, %c0_44], %39 {strides = array<i32>} : memref<304x48xf32, #tpu.memory_space<vmem>>, vector<256x8xf32>,
    %c7_45 = arith.constant 7 : index
    %c0_46 = arith.constant 0 : index
    %88 = vector.load %arg18[%c7_45, %c0_46] : memref<304x48xf32, #tpu.memory_space<vmem>>, vector<256x8xf32>
    %cst_47 = arith.constant 0.000000e+00 : f32
    %89 = vector.shape_cast %18 : vector<256x1xi1> to vector<256x1xi1>
    %90 = vector.broadcast %89 : vector<256x1xi1> to vector<256x8xi1>
    %91 = vector.broadcast %cst_47 : f32 to vector<256x8xf32>
    %92 = arith.select %90, %88, %91 : vector<256x8xi1>, vector<256x8xf32>
    %c8_48 = arith.constant 8 : index
    %c0_49 = arith.constant 0 : index
    %93 = vector.load %arg18[%c8_48, %c0_49] : memref<304x48xf32, #tpu.memory_space<vmem>>, vector<256x8xf32>
    %c9_50 = arith.constant 9 : index
    %c0_51 = arith.constant 0 : index
    %94 = vector.load %arg18[%c9_50, %c0_51] : memref<304x48xf32, #tpu.memory_space<vmem>>, vector<256x8xf32>
    %cst_52 = arith.constant 0.000000e+00 : f32
    %95 = vector.shape_cast %20 : vector<256x1xi1> to vector<256x1xi1>
    %96 = vector.broadcast %95 : vector<256x1xi1> to vector<256x8xi1>
    %97 = vector.broadcast %cst_52 : f32 to vector<256x8xf32>
    %98 = arith.select %96, %94, %97 : vector<256x8xi1>, vector<256x8xf32>
    %c23_53 = arith.constant 23 : index
    %c0_54 = arith.constant 0 : index
    %99 = vector.load %arg18[%c23_53, %c0_54] : memref<304x48xf32, #tpu.memory_space<vmem>>, vector<256x8xf32>
    %cst_55 = arith.constant 0.000000e+00 : f32
    %100 = vector.shape_cast %18 : vector<256x1xi1> to vector<256x1xi1>
    %101 = vector.broadcast %100 : vector<256x1xi1> to vector<256x8xi1>
    %102 = vector.broadcast %cst_55 : f32 to vector<256x8xf32>
    %103 = arith.select %101, %99, %102 : vector<256x8xi1>, vector<256x8xf32>
    %c24_56 = arith.constant 24 : index
    %c0_57 = arith.constant 0 : index
    %104 = vector.load %arg18[%c24_56, %c0_57] : memref<304x48xf32, #tpu.memory_space<vmem>>, vector<256x8xf32>
    %c25_58 = arith.constant 25 : index
    %c0_59 = arith.constant 0 : index
    %105 = vector.load %arg18[%c25_58, %c0_59] : memref<304x48xf32, #tpu.memory_space<vmem>>, vector<256x8xf32>
    %cst_60 = arith.constant 0.000000e+00 : f32
    %106 = vector.shape_cast %20 : vector<256x1xi1> to vector<256x1xi1>
    %107 = vector.broadcast %106 : vector<256x1xi1> to vector<256x8xi1>
    %108 = vector.broadcast %cst_60 : f32 to vector<256x8xf32>
    %109 = arith.select %107, %105, %108 : vector<256x8xi1>, vector<256x8xf32>
    %c39_61 = arith.constant 39 : index
    %c0_62 = arith.constant 0 : index
    %110 = vector.load %arg18[%c39_61, %c0_62] : memref<304x48xf32, #tpu.memory_space<vmem>>, vector<256x8xf32>
    %cst_63 = arith.constant 0.000000e+00 : f32
    %111 = vector.shape_cast %18 : vector<256x1xi1> to vector<256x1xi1>
    %112 = vector.broadcast %111 : vector<256x1xi1> to vector<256x8xi1>
    %113 = vector.broadcast %cst_63 : f32 to vector<256x8xf32>
    %114 = arith.select %112, %110, %113 : vector<256x8xi1>, vector<256x8xf32>
    %c40_64 = arith.constant 40 : index
    %c0_65 = arith.constant 0 : index
    %115 = vector.load %arg18[%c40_64, %c0_65] : memref<304x48xf32, #tpu.memory_space<vmem>>, vector<256x8xf32>
    %c41_66 = arith.constant 41 : index
    %c0_67 = arith.constant 0 : index
    %116 = vector.load %arg18[%c41_66, %c0_67] : memref<304x48xf32, #tpu.memory_space<vmem>>, vector<256x8xf32>
    %cst_68 = arith.constant 0.000000e+00 : f32
    %117 = vector.shape_cast %20 : vector<256x1xi1> to vector<256x1xi1>
    %118 = vector.broadcast %117 : vector<256x1xi1> to vector<256x8xi1>
    %119 = vector.broadcast %cst_68 : f32 to vector<256x8xf32>
    %120 = arith.select %118, %116, %119 : vector<256x8xi1>, vector<256x8xf32>
    %121 = tpu.concatenate %92, %93, %98, %103, %104, %109, %114, %115, %120 in 1 : vector<256x8xf32>, vector<256x8xf32>, vector<256x8xf32>, vector<256x8xf32>, vector<256x8xf32>, vector<256x8xf32>, vector<256x8xf32>, vector<256x8xf32>, vector<256x8xf32> -> vector<256x72xf32>
    %122 = arith.truncf %121 : vector<256x72xf32> to vector<256x72xbf16>
    %c0_69 = arith.constant 0 : index
    %c0_70 = arith.constant 0 : index
    %123 = vector.load %arg8[%c0_69, %c0_70] : memref<72x16xbf16, #tpu.memory_space<vmem>>, vector<72x16xbf16>
    %cst_71 = arith.constant dense<0.000000e+00> : vector<256x16xf32>
    %124 = tpu.matmul %122, %123, %cst_71 {dimension_numbers = #tpu.dot_dimension_numbers<[1], [0], [0], [1], [0, 0, 1, 1], [], []>} : vector<256x72xbf16>, vector<72x16xbf16>, vector<256x16xf32> -> vector<256x16xf32>
    %c0_72 = arith.constant 0 : index
    %c0_73 = arith.constant 0 : index
    %125 = vector.load %arg9[%c0_72, %c0_73] : memref<1x16xf32, #tpu.memory_space<vmem>>, vector<1x16xf32>
    %126 = vector.broadcast %125 : vector<1x16xf32> to vector<256x16xf32>
    %127 = arith.mulf %124, %126 : vector<256x16xf32>
    %c0_74 = arith.constant 0 : index
    %c0_75 = arith.constant 0 : index
    %128 = vector.load %arg10[%c0_74, %c0_75] : memref<1x16xf32, #tpu.memory_space<vmem>>, vector<1x16xf32>
    %129 = vector.broadcast %128 : vector<1x16xf32> to vector<256x16xf32>
    %130 = arith.addf %127, %129 : vector<256x16xf32>
    %cst_76 = arith.constant 0.000000e+00 : f32
    %131 = vector.broadcast %cst_76 : f32 to vector<256x16xf32>
    %132 = arith.maximumf %130, %131 : vector<256x16xf32>
    %c24_77 = arith.constant 24 : index
    %c0_78 = arith.constant 0 : index
    %133 = vector.load %arg18[%c24_77, %c0_78] : memref<304x48xf32, #tpu.memory_space<vmem>>, vector<256x16xf32>
    tpu.vector_store %arg18[%c24_77, %c0_78], %132 {strides = array<i32>} : memref<304x48xf32, #tpu.memory_space<vmem>>, vector<256x16xf32>,
    %c7_79 = arith.constant 7 : index
    %c0_80 = arith.constant 0 : index
    %134 = vector.load %arg18[%c7_79, %c0_80] : memref<304x48xf32, #tpu.memory_space<vmem>>, vector<256x16xf32>
    %cst_81 = arith.constant 0.000000e+00 : f32
    %135 = vector.shape_cast %18 : vector<256x1xi1> to vector<256x1xi1>
    %136 = vector.broadcast %135 : vector<256x1xi1> to vector<256x16xi1>
    %137 = vector.broadcast %cst_81 : f32 to vector<256x16xf32>
    %138 = arith.select %136, %134, %137 : vector<256x16xi1>, vector<256x16xf32>
    %c8_82 = arith.constant 8 : index
    %c0_83 = arith.constant 0 : index
    %139 = vector.load %arg18[%c8_82, %c0_83] : memref<304x48xf32, #tpu.memory_space<vmem>>, vector<256x16xf32>
    %c9_84 = arith.constant 9 : index
    %c0_85 = arith.constant 0 : index
    %140 = vector.load %arg18[%c9_84, %c0_85] : memref<304x48xf32, #tpu.memory_space<vmem>>, vector<256x16xf32>
    %cst_86 = arith.constant 0.000000e+00 : f32
    %141 = vector.shape_cast %20 : vector<256x1xi1> to vector<256x1xi1>
    %142 = vector.broadcast %141 : vector<256x1xi1> to vector<256x16xi1>
    %143 = vector.broadcast %cst_86 : f32 to vector<256x16xf32>
    %144 = arith.select %142, %140, %143 : vector<256x16xi1>, vector<256x16xf32>
    %c23_87 = arith.constant 23 : index
    %c0_88 = arith.constant 0 : index
    %145 = vector.load %arg18[%c23_87, %c0_88] : memref<304x48xf32, #tpu.memory_space<vmem>>, vector<256x16xf32>
    %cst_89 = arith.constant 0.000000e+00 : f32
    %146 = vector.shape_cast %18 : vector<256x1xi1> to vector<256x1xi1>
    %147 = vector.broadcast %146 : vector<256x1xi1> to vector<256x16xi1>
    %148 = vector.broadcast %cst_89 : f32 to vector<256x16xf32>
    %149 = arith.select %147, %145, %148 : vector<256x16xi1>, vector<256x16xf32>
    %c24_90 = arith.constant 24 : index
    %c0_91 = arith.constant 0 : index
    %150 = vector.load %arg18[%c24_90, %c0_91] : memref<304x48xf32, #tpu.memory_space<vmem>>, vector<256x16xf32>
    %c25_92 = arith.constant 25 : index
    %c0_93 = arith.constant 0 : index
    %151 = vector.load %arg18[%c25_92, %c0_93] : memref<304x48xf32, #tpu.memory_space<vmem>>, vector<256x16xf32>
    %cst_94 = arith.constant 0.000000e+00 : f32
    %152 = vector.shape_cast %20 : vector<256x1xi1> to vector<256x1xi1>
    %153 = vector.broadcast %152 : vector<256x1xi1> to vector<256x16xi1>
    %154 = vector.broadcast %cst_94 : f32 to vector<256x16xf32>
    %155 = arith.select %153, %151, %154 : vector<256x16xi1>, vector<256x16xf32>
    %c39_95 = arith.constant 39 : index
    %c0_96 = arith.constant 0 : index
    %156 = vector.load %arg18[%c39_95, %c0_96] : memref<304x48xf32, #tpu.memory_space<vmem>>, vector<256x16xf32>
    %cst_97 = arith.constant 0.000000e+00 : f32
    %157 = vector.shape_cast %18 : vector<256x1xi1> to vector<256x1xi1>
    %158 = vector.broadcast %157 : vector<256x1xi1> to vector<256x16xi1>
    %159 = vector.broadcast %cst_97 : f32 to vector<256x16xf32>
    %160 = arith.select %158, %156, %159 : vector<256x16xi1>, vector<256x16xf32>
    %c40_98 = arith.constant 40 : index
    %c0_99 = arith.constant 0 : index
    %161 = vector.load %arg18[%c40_98, %c0_99] : memref<304x48xf32, #tpu.memory_space<vmem>>, vector<256x16xf32>
    %c41_100 = arith.constant 41 : index
    %c0_101 = arith.constant 0 : index
    %162 = vector.load %arg18[%c41_100, %c0_101] : memref<304x48xf32, #tpu.memory_space<vmem>>, vector<256x16xf32>
    %cst_102 = arith.constant 0.000000e+00 : f32
    %163 = vector.shape_cast %20 : vector<256x1xi1> to vector<256x1xi1>
    %164 = vector.broadcast %163 : vector<256x1xi1> to vector<256x16xi1>
    %165 = vector.broadcast %cst_102 : f32 to vector<256x16xf32>
    %166 = arith.select %164, %162, %165 : vector<256x16xi1>, vector<256x16xf32>
    %167 = tpu.concatenate %138, %139, %144, %149, %150, %155, %160, %161, %166 in 1 : vector<256x16xf32>, vector<256x16xf32>, vector<256x16xf32>, vector<256x16xf32>, vector<256x16xf32>, vector<256x16xf32>, vector<256x16xf32>, vector<256x16xf32>, vector<256x16xf32> -> vector<256x144xf32>
    %168 = arith.truncf %167 : vector<256x144xf32> to vector<256x144xbf16>
    %c0_103 = arith.constant 0 : index
    %c0_104 = arith.constant 0 : index
    %169 = vector.load %arg11[%c0_103, %c0_104] : memref<144x16xbf16, #tpu.memory_space<vmem>>, vector<144x16xbf16>
    %cst_105 = arith.constant dense<0.000000e+00> : vector<256x16xf32>
    %170 = tpu.matmul %168, %169, %cst_105 {dimension_numbers = #tpu.dot_dimension_numbers<[1], [0], [0], [1], [0, 0, 1, 1], [], []>} : vector<256x144xbf16>, vector<144x16xbf16>, vector<256x16xf32> -> vector<256x16xf32>
    %c0_106 = arith.constant 0 : index
    %c0_107 = arith.constant 0 : index
    %171 = vector.load %arg12[%c0_106, %c0_107] : memref<1x16xf32, #tpu.memory_space<vmem>>, vector<1x16xf32>
    %172 = vector.broadcast %171 : vector<1x16xf32> to vector<256x16xf32>
    %173 = arith.mulf %170, %172 : vector<256x16xf32>
    %c0_108 = arith.constant 0 : index
    %c0_109 = arith.constant 0 : index
    %174 = vector.load %arg13[%c0_108, %c0_109] : memref<1x16xf32, #tpu.memory_space<vmem>>, vector<1x16xf32>
    %175 = vector.broadcast %174 : vector<1x16xf32> to vector<256x16xf32>
    %176 = arith.addf %173, %175 : vector<256x16xf32>
    %cst_110 = arith.constant 0.000000e+00 : f32
    %177 = vector.broadcast %cst_110 : f32 to vector<256x16xf32>
    %178 = arith.maximumf %176, %177 : vector<256x16xf32>
    %cst_111 = arith.constant 0xFF800000 : f32
    %179 = vector.broadcast %cst_111 : f32 to vector<24x16xf32>
    %c0_112 = arith.constant 0 : index
    %c0_113 = arith.constant 0 : index
    %180 = vector.load %arg18[%c0_112, %c0_113] : memref<304x48xf32, #tpu.memory_space<vmem>>, vector<24x16xf32>
    tpu.vector_store %arg18[%c0_112, %c0_113], %179 {strides = array<i32>} : memref<304x48xf32, #tpu.memory_space<vmem>>, vector<24x16xf32>,
    %cst_114 = arith.constant 0xFF800000 : f32
    %181 = vector.broadcast %cst_114 : f32 to vector<24x16xf32>
    %c280_115 = arith.constant 280 : index
    %c0_116 = arith.constant 0 : index
    %182 = vector.load %arg18[%c280_115, %c0_116] : memref<304x48xf32, #tpu.memory_space<vmem>>, vector<24x16xf32>
    tpu.vector_store %arg18[%c280_115, %c0_116], %181 {strides = array<i32>} : memref<304x48xf32, #tpu.memory_space<vmem>>, vector<24x16xf32>,
    %c24_117 = arith.constant 24 : index
    %c0_118 = arith.constant 0 : index
    %183 = vector.load %arg18[%c24_117, %c0_118] : memref<304x48xf32, #tpu.memory_space<vmem>>, vector<256x16xf32>
    tpu.vector_store %arg18[%c24_117, %c0_118], %22 {strides = array<i32>} : memref<304x48xf32, #tpu.memory_space<vmem>>, vector<256x16xf32>,
    %c7_119 = arith.constant 7 : index
    %c0_120 = arith.constant 0 : index
    %184 = vector.load %arg18[%c7_119, %c0_120] : memref<304x48xf32, #tpu.memory_space<vmem>>, vector<256x16xf32>
    %cst_121 = arith.constant 0xFF800000 : f32
    %185 = vector.shape_cast %18 : vector<256x1xi1> to vector<256x1xi1>
    %186 = vector.broadcast %185 : vector<256x1xi1> to vector<256x16xi1>
    %187 = vector.broadcast %cst_121 : f32 to vector<256x16xf32>
    %188 = arith.select %186, %184, %187 : vector<256x16xi1>, vector<256x16xf32>
    %c8_122 = arith.constant 8 : index
    %c0_123 = arith.constant 0 : index
    %189 = vector.load %arg18[%c8_122, %c0_123] : memref<304x48xf32, #tpu.memory_space<vmem>>, vector<256x16xf32>
    %c9_124 = arith.constant 9 : index
    %c0_125 = arith.constant 0 : index
    %190 = vector.load %arg18[%c9_124, %c0_125] : memref<304x48xf32, #tpu.memory_space<vmem>>, vector<256x16xf32>
    %cst_126 = arith.constant 0xFF800000 : f32
    %191 = vector.shape_cast %20 : vector<256x1xi1> to vector<256x1xi1>
    %192 = vector.broadcast %191 : vector<256x1xi1> to vector<256x16xi1>
    %193 = vector.broadcast %cst_126 : f32 to vector<256x16xf32>
    %194 = arith.select %192, %190, %193 : vector<256x16xi1>, vector<256x16xf32>
    %c23_127 = arith.constant 23 : index
    %c0_128 = arith.constant 0 : index
    %195 = vector.load %arg18[%c23_127, %c0_128] : memref<304x48xf32, #tpu.memory_space<vmem>>, vector<256x16xf32>
    %cst_129 = arith.constant 0xFF800000 : f32
    %196 = vector.shape_cast %18 : vector<256x1xi1> to vector<256x1xi1>
    %197 = vector.broadcast %196 : vector<256x1xi1> to vector<256x16xi1>
    %198 = vector.broadcast %cst_129 : f32 to vector<256x16xf32>
    %199 = arith.select %197, %195, %198 : vector<256x16xi1>, vector<256x16xf32>
    %c24_130 = arith.constant 24 : index
    %c0_131 = arith.constant 0 : index
    %200 = vector.load %arg18[%c24_130, %c0_131] : memref<304x48xf32, #tpu.memory_space<vmem>>, vector<256x16xf32>
    %c25_132 = arith.constant 25 : index
    %c0_133 = arith.constant 0 : index
    %201 = vector.load %arg18[%c25_132, %c0_133] : memref<304x48xf32, #tpu.memory_space<vmem>>, vector<256x16xf32>
    %cst_134 = arith.constant 0xFF800000 : f32
    %202 = vector.shape_cast %20 : vector<256x1xi1> to vector<256x1xi1>
    %203 = vector.broadcast %202 : vector<256x1xi1> to vector<256x16xi1>
    %204 = vector.broadcast %cst_134 : f32 to vector<256x16xf32>
    %205 = arith.select %203, %201, %204 : vector<256x16xi1>, vector<256x16xf32>
    %c39_135 = arith.constant 39 : index
    %c0_136 = arith.constant 0 : index
    %206 = vector.load %arg18[%c39_135, %c0_136] : memref<304x48xf32, #tpu.memory_space<vmem>>, vector<256x16xf32>
    %cst_137 = arith.constant 0xFF800000 : f32
    %207 = vector.shape_cast %18 : vector<256x1xi1> to vector<256x1xi1>
    %208 = vector.broadcast %207 : vector<256x1xi1> to vector<256x16xi1>
    %209 = vector.broadcast %cst_137 : f32 to vector<256x16xf32>
    %210 = arith.select %208, %206, %209 : vector<256x16xi1>, vector<256x16xf32>
    %c40_138 = arith.constant 40 : index
    %c0_139 = arith.constant 0 : index
    %211 = vector.load %arg18[%c40_138, %c0_139] : memref<304x48xf32, #tpu.memory_space<vmem>>, vector<256x16xf32>
    %c41_140 = arith.constant 41 : index
    %c0_141 = arith.constant 0 : index
    %212 = vector.load %arg18[%c41_140, %c0_141] : memref<304x48xf32, #tpu.memory_space<vmem>>, vector<256x16xf32>
    %cst_142 = arith.constant 0xFF800000 : f32
    %213 = vector.shape_cast %20 : vector<256x1xi1> to vector<256x1xi1>
    %214 = vector.broadcast %213 : vector<256x1xi1> to vector<256x16xi1>
    %215 = vector.broadcast %cst_142 : f32 to vector<256x16xf32>
    %216 = arith.select %214, %212, %215 : vector<256x16xi1>, vector<256x16xf32>
    %217 = arith.maximumf %188, %189 : vector<256x16xf32>
    %218 = arith.maximumf %217, %194 : vector<256x16xf32>
    %219 = arith.maximumf %218, %199 : vector<256x16xf32>
    %220 = arith.maximumf %219, %200 : vector<256x16xf32>
    %221 = arith.maximumf %220, %205 : vector<256x16xf32>
    %222 = arith.maximumf %221, %210 : vector<256x16xf32>
    %223 = arith.maximumf %222, %211 : vector<256x16xf32>
    %224 = arith.maximumf %223, %216 : vector<256x16xf32>
    %225 = arith.truncf %224 : vector<256x16xf32> to vector<256x16xbf16>
    %c0_143 = arith.constant 0 : index
    %c0_144 = arith.constant 0 : index
    %226 = vector.load %arg14[%c0_143, %c0_144] : memref<16x16xbf16, #tpu.memory_space<vmem>>, vector<16x16xbf16>
    %cst_145 = arith.constant dense<0.000000e+00> : vector<256x16xf32>
    %227 = tpu.matmul %225, %226, %cst_145 {dimension_numbers = #tpu.dot_dimension_numbers<[1], [0], [0], [1], [0, 0, 1, 1], [], []>} : vector<256x16xbf16>, vector<16x16xbf16>, vector<256x16xf32> -> vector<256x16xf32>
    %c0_146 = arith.constant 0 : index
    %c0_147 = arith.constant 0 : index
    %228 = vector.load %arg15[%c0_146, %c0_147] : memref<1x16xf32, #tpu.memory_space<vmem>>, vector<1x16xf32>
    %229 = vector.broadcast %228 : vector<1x16xf32> to vector<256x16xf32>
    %230 = arith.mulf %227, %229 : vector<256x16xf32>
    %c0_148 = arith.constant 0 : index
    %c0_149 = arith.constant 0 : index
    %231 = vector.load %arg16[%c0_148, %c0_149] : memref<1x16xf32, #tpu.memory_space<vmem>>, vector<1x16xf32>
    %232 = vector.broadcast %231 : vector<1x16xf32> to vector<256x16xf32>
    %233 = arith.addf %230, %232 : vector<256x16xf32>
    %cst_150 = arith.constant 0.000000e+00 : f32
    %234 = vector.broadcast %cst_150 : f32 to vector<256x16xf32>
    %235 = arith.maximumf %233, %234 : vector<256x16xf32>
    %236 = tpu.concatenate %40, %86, %178, %235 in 1 : vector<256x32xf32>, vector<256x64xf32>, vector<256x16xf32>, vector<256x16xf32> -> vector<256x128xf32>
    %c0_151 = arith.constant 0 : index
    %c0_152 = arith.constant 0 : index
    %c0_153 = arith.constant 0 : index
    %237 = vector.load %arg17[%c0_151, %c0_152, %c0_153] : memref<1x256x128xf32, #tpu.memory_space<vmem>>, vector<1x256x128xf32>
    %238 = vector.shape_cast %237 : vector<1x256x128xf32> to vector<256x128xf32>
    %239 = vector.shape_cast %236 : vector<256x128xf32> to vector<1x256x128xf32>
    tpu.vector_store %arg17[%c0_151, %c0_152, %c0_153], %239 {strides = array<i32>} : memref<1x256x128xf32, #tpu.memory_space<vmem>>, vector<1x256x128xf32>,
    return
  }
  func.func @transform_0(%arg0: i32) -> (i32, i32, i32) {
    %c0_i32 = arith.constant 0 : i32
    %c0_i32_0 = arith.constant 0 : i32
    %c0_i32_1 = arith.constant 0 : i32
    return %arg0, %c0_i32, %c0_i32_0 : i32, i32, i32
  }
  func.func @transform_1(%arg0: i32) -> (i32, i32) {
    %c0_i32 = arith.constant 0 : i32
    %c0_i32_0 = arith.constant 0 : i32
    %c0_i32_1 = arith.constant 0 : i32
    return %c0_i32, %c0_i32_0 : i32, i32
  }
  func.func @transform_2(%arg0: i32) -> (i32, i32) {
    %c0_i32 = arith.constant 0 : i32
    %c0_i32_0 = arith.constant 0 : i32
    %c0_i32_1 = arith.constant 0 : i32
    return %c0_i32, %c0_i32_0 : i32, i32
  }
  func.func @transform_3(%arg0: i32) -> (i32, i32) {
    %c0_i32 = arith.constant 0 : i32
    %c0_i32_0 = arith.constant 0 : i32
    %c0_i32_1 = arith.constant 0 : i32
    return %c0_i32, %c0_i32_0 : i32, i32
  }
  func.func @transform_4(%arg0: i32) -> (i32, i32) {
    %c0_i32 = arith.constant 0 : i32
    %c0_i32_0 = arith.constant 0 : i32
    %c0_i32_1 = arith.constant 0 : i32
    return %c0_i32, %c0_i32_0 : i32, i32
  }
  func.func @transform_5(%arg0: i32) -> (i32, i32) {
    %c0_i32 = arith.constant 0 : i32
    %c0_i32_0 = arith.constant 0 : i32
    %c0_i32_1 = arith.constant 0 : i32
    return %c0_i32, %c0_i32_0 : i32, i32
  }
  func.func @transform_6(%arg0: i32) -> (i32, i32) {
    %c0_i32 = arith.constant 0 : i32
    %c0_i32_0 = arith.constant 0 : i32
    %c0_i32_1 = arith.constant 0 : i32
    return %c0_i32, %c0_i32_0 : i32, i32
  }
  func.func @transform_7(%arg0: i32) -> (i32, i32) {
    %c0_i32 = arith.constant 0 : i32
    %c0_i32_0 = arith.constant 0 : i32
    %c0_i32_1 = arith.constant 0 : i32
    return %c0_i32, %c0_i32_0 : i32, i32
  }
  func.func @transform_8(%arg0: i32) -> (i32, i32) {
    %c0_i32 = arith.constant 0 : i32
    %c0_i32_0 = arith.constant 0 : i32
    %c0_i32_1 = arith.constant 0 : i32
    return %c0_i32, %c0_i32_0 : i32, i32
  }
  func.func @transform_9(%arg0: i32) -> (i32, i32) {
    %c0_i32 = arith.constant 0 : i32
    %c0_i32_0 = arith.constant 0 : i32
    %c0_i32_1 = arith.constant 0 : i32
    return %c0_i32, %c0_i32_0 : i32, i32
  }
  func.func @transform_10(%arg0: i32) -> (i32, i32) {
    %c0_i32 = arith.constant 0 : i32
    %c0_i32_0 = arith.constant 0 : i32
    %c0_i32_1 = arith.constant 0 : i32
    return %c0_i32, %c0_i32_0 : i32, i32
  }
  func.func @transform_11(%arg0: i32) -> (i32, i32) {
    %c0_i32 = arith.constant 0 : i32
    %c0_i32_0 = arith.constant 0 : i32
    %c0_i32_1 = arith.constant 0 : i32
    return %c0_i32, %c0_i32_0 : i32, i32
  }
  func.func @transform_12(%arg0: i32) -> (i32, i32) {
    %c0_i32 = arith.constant 0 : i32
    %c0_i32_0 = arith.constant 0 : i32
    %c0_i32_1 = arith.constant 0 : i32
    return %c0_i32, %c0_i32_0 : i32, i32
  }
  func.func @transform_13(%arg0: i32) -> (i32, i32) {
    %c0_i32 = arith.constant 0 : i32
    %c0_i32_0 = arith.constant 0 : i32
    %c0_i32_1 = arith.constant 0 : i32
    return %c0_i32, %c0_i32_0 : i32, i32
  }
  func.func @transform_14(%arg0: i32) -> (i32, i32) {
    %c0_i32 = arith.constant 0 : i32
    %c0_i32_0 = arith.constant 0 : i32
    %c0_i32_1 = arith.constant 0 : i32
    return %c0_i32, %c0_i32_0 : i32, i32
  }
  func.func @transform_15(%arg0: i32) -> (i32, i32) {
    %c0_i32 = arith.constant 0 : i32
    %c0_i32_0 = arith.constant 0 : i32
    %c0_i32_1 = arith.constant 0 : i32
    return %c0_i32, %c0_i32_0 : i32, i32
  }
  func.func @transform_16(%arg0: i32) -> (i32, i32, i32) {
    %c0_i32 = arith.constant 0 : i32
    %c0_i32_0 = arith.constant 0 : i32
    %c0_i32_1 = arith.constant 0 : i32
    return %arg0, %c0_i32, %c0_i32_0 : i32, i32, i32
  }
}

</mosaic_0001>

<llo_original>
// kernel: _lambda_.1
$region0: #{_lambda_.1}
  #allocation0 [shape = 'u32[]', space=smem, size = 0x4, offset = 0x4, fixed_abs, tag = 'smem constant byte address 0x4 - core index']
  #allocation1 [shape = 'u32[144,128]{1,0:T(1,128)}', space=vmem, size = 0x12000, scoped, tag = 'internal scratch']
  #allocation2 [shape = 'f32[304,48]{1,0:T(8,128)}', space=vmem, size = 0x26000, scoped, tag = 'scratch operand']
  %s0 = inlined_call_operand.vmem [shape: f32[2,256,16], index: 0, kind: input, shape index: {}]
  %s1 = inlined_call_operand.vmem [shape: bf16[16,88], index: 1, kind: input, shape index: {}]
  %s2 = inlined_call_operand.vmem [shape: f32[1,88], index: 2, kind: input, shape index: {}]
  %s3 = inlined_call_operand.vmem [shape: f32[1,88], index: 3, kind: input, shape index: {}]
  %s4 = inlined_call_operand.vmem [shape: bf16[432,64], index: 4, kind: input, shape index: {}]
  %s5 = inlined_call_operand.vmem [shape: f32[1,64], index: 5, kind: input, shape index: {}]
  %s6 = inlined_call_operand.vmem [shape: f32[1,64], index: 6, kind: input, shape index: {}]
  %s7 = inlined_call_operand.vmem [shape: bf16[72,16], index: 7, kind: input, shape index: {}]
  %s8 = inlined_call_operand.vmem [shape: f32[1,16], index: 8, kind: input, shape index: {}]
  %s9 = inlined_call_operand.vmem [shape: f32[1,16], index: 9, kind: input, shape index: {}]
  %s10 = inlined_call_operand.vmem [shape: bf16[144,16], index: 10, kind: input, shape index: {}]
  %s11 = inlined_call_operand.vmem [shape: f32[1,16], index: 11, kind: input, shape index: {}]
  %s12 = inlined_call_operand.vmem [shape: f32[1,16], index: 12, kind: input, shape index: {}]
  %s13 = inlined_call_operand.vmem [shape: bf16[16,16], index: 13, kind: input, shape index: {}]
  %s14 = inlined_call_operand.vmem [shape: f32[1,16], index: 14, kind: input, shape index: {}]
  %s15 = inlined_call_operand.vmem [shape: f32[1,16], index: 15, kind: input, shape index: {}]
  %s16 = inlined_call_operand.hbm [shape: f32[2,256,128], index: 16, kind: output, shape index: {}]
  %s17 = sld [smem:[#allocation0]]
  $region97: #{_lambda_.1} parent=0
    _
  %s19 = ssub.s32 1, %s17
  %s20 = scalar_select 0, %s19, %s17
  $region1: #{_lambda_.1} parent=0
    #allocation3 [shape = 'u8[262144]{0}', space=vmem, size = 0x40000, scoped, tag = 'output window, operand 0']
    #allocation4 [shape = 's32[2]{0}', space=sflag, size = 0x8, scoped, tag = 'scoped memory for _lambda_.1']
    %21 = vsyncpa [#allocation4], 0
    %s22 = scalar_lea.sflag [#allocation4], 1
    %23 = vsyncpa %s22, 0
    loop: start=0, step=1, limit=4
    $region2: #{_lambda_.1} parent=1 // loop_pre_header
      _
    $region3: #{_lambda_.1} parent=1 // loop_header
      %s25 = sphi 0, %s29
      %p26 = scmp.ge.s32.totalorder %s25, 4
      %s35 = sphi 0, %s37
      %s38 = sphi 0, %s35
      %s39 = sphi 0, %s38
      %s55 = sphi 0, %s39
      %s59 = sphi 0, %s59
      %s61 = sphi 0, %s59
      %s62 = sphi 0, %s61
      %s76 = sphi 0, %s62
      %s80 = sphi 0, %s80
      %s82 = sphi 0, %s80
      %s83 = sphi 0, %s82
      %s97 = sphi 0, %s83
      %s101 = sphi 0, %s101
      %s103 = sphi 0, %s101
      %s104 = sphi 0, %s103
      %s118 = sphi 0, %s104
      %s122 = sphi 0, %s122
      %s124 = sphi 0, %s122
      %s125 = sphi 0, %s124
      %s139 = sphi 0, %s125
      %s143 = sphi 0, %s143
      %s145 = sphi 0, %s143
      %s146 = sphi 0, %s145
      %s160 = sphi 0, %s146
      %s164 = sphi 0, %s164
      %s166 = sphi 0, %s164
      %s167 = sphi 0, %s166
      %s181 = sphi 0, %s167
      %s185 = sphi 0, %s185
      %s187 = sphi 0, %s185
      %s188 = sphi 0, %s187
      %s202 = sphi 0, %s188
      %s206 = sphi 0, %s206
      %s208 = sphi 0, %s206
      %s209 = sphi 0, %s208
      %s223 = sphi 0, %s209
      %s227 = sphi 0, %s227
      %s229 = sphi 0, %s227
      %s230 = sphi 0, %s229
      %s244 = sphi 0, %s230
      %s248 = sphi 0, %s248
      %s250 = sphi 0, %s248
      %s251 = sphi 0, %s250
      %s265 = sphi 0, %s251
      %s269 = sphi 0, %s269
      %s271 = sphi 0, %s269
      %s272 = sphi 0, %s271
      %s286 = sphi 0, %s272
      %s290 = sphi 0, %s290
      %s292 = sphi 0, %s290
      %s293 = sphi 0, %s292
      %s307 = sphi 0, %s293
      %s311 = sphi 0, %s311
      %s313 = sphi 0, %s311
      %s314 = sphi 0, %s313
      %s328 = sphi 0, %s314
      %s332 = sphi 0, %s332
      %s334 = sphi 0, %s332
      %s335 = sphi 0, %s334
      %s349 = sphi 0, %s335
      %s353 = sphi 0, %s353
      %s355 = sphi 0, %s353
      %s356 = sphi 0, %s355
      %s370 = sphi 0, %s356
      %s376 = sphi 0, %s378
      %s379 = sphi 0, %s376
      %s380 = sphi 0, %s379
      %s396 = sphi 0, %s380
    $region4: #{_lambda_.1} parent=1 // loop_header_branch
      %28 = sbr.rel (%p26) target = $region8
    $region5: #{_lambda_.1} parent=1 // loop_body
      %s30 = ssub.s32 %s25, 1
      %s31 = ssub.s32 %s25, 2
      %s32 = sadd.s32 %s25, 1
      %s33 = ssub.s32 %s25, %s32
      %p34 = scmp.eq.s32.totalorder %s33, 0
      %s36 = sadd.s32 %s35, 1
      %s37 = scalar_select %p34, %s35, %s36
      %p40 = pneg %p34
      %p41 = scmp.eq.s32.totalorder %s25, 1
      %p42 = por %p40, %p41
      %p43 = scmp.ne.s32.totalorder %s35, %s38
      %p44 = scmp.eq.s32.totalorder %s25, 0
      %p45 = por %p43, %p44
      %p46 = scmp.ne.s32.totalorder %s35, %s38
      %p47 = scmp.eq.s32.totalorder %s30, 1
      %p48 = por %p46, %p47
      %p49 = scmp.ne.s32.totalorder %s38, %s39
      %p50 = scmp.eq.s32.totalorder %s30, 0
      %p51 = por %p49, %p50
      %p52 = scmp.ne.s32.totalorder %s38, %s39
      %p53 = scmp.eq.s32.totalorder %s31, 1
      %p54 = por %p52, %p53
      %p56 = scmp.ne.s32.totalorder %s39, %s55
      %p57 = scmp.eq.s32.totalorder %s31, 0
      %p58 = por %p56, %p57
      %s60 = sadd.s32 %s59, 1
      %p63 = scmp.eq.s32.totalorder %s25, 1
      %p64 = scmp.ne.s32.totalorder %s59, %s61
      %p65 = scmp.eq.s32.totalorder %s25, 0
      %p66 = por %p64, %p65
      %p67 = scmp.ne.s32.totalorder %s59, %s61
      %p68 = scmp.eq.s32.totalorder %s30, 1
      %p69 = por %p67, %p68
      %p70 = scmp.ne.s32.totalorder %s61, %s62
      %p71 = scmp.eq.s32.totalorder %s30, 0
      %p72 = por %p70, %p71
      %p73 = scmp.ne.s32.totalorder %s61, %s62
      %p74 = scmp.eq.s32.totalorder %s31, 1
      %p75 = por %p73, %p74
      %p77 = scmp.ne.s32.totalorder %s62, %s76
      %p78 = scmp.eq.s32.totalorder %s31, 0
      %p79 = por %p77, %p78
      %s81 = sadd.s32 %s80, 1
      %p84 = scmp.eq.s32.totalorder %s25, 1
      %p85 = scmp.ne.s32.totalorder %s80, %s82
      %p86 = scmp.eq.s32.totalorder %s25, 0
      %p87 = por %p85, %p86
      %p88 = scmp.ne.s32.totalorder %s80, %s82
      %p89 = scmp.eq.s32.totalorder %s30, 1
      %p90 = por %p88, %p89
      %p91 = scmp.ne.s32.totalorder %s82, %s83
      %p92 = scmp.eq.s32.totalorder %s30, 0
      %p93 = por %p91, %p92
      %p94 = scmp.ne.s32.totalorder %s82, %s83
      %p95 = scmp.eq.s32.totalorder %s31, 1
      %p96 = por %p94, %p95
      %p98 = scmp.ne.s32.totalorder %s83, %s97
      %p99 = scmp.eq.s32.totalorder %s31, 0
      %p100 = por %p98, %p99
      %s102 = sadd.s32 %s101, 1
      %p105 = scmp.eq.s32.totalorder %s25, 1
      %p106 = scmp.ne.s32.totalorder %s101, %s103
      %p107 = scmp.eq.s32.totalorder %s25, 0
      %p108 = por %p106, %p107
      %p109 = scmp.ne.s32.totalorder %s101, %s103
      %p110 = scmp.eq.s32.totalorder %s30, 1
      %p111 = por %p109, %p110
      %p112 = scmp.ne.s32.totalorder %s103, %s104
      %p113 = scmp.eq.s32.totalorder %s30, 0
      %p114 = por %p112, %p113
      %p115 = scmp.ne.s32.totalorder %s103, %s104
      %p116 = scmp.eq.s32.totalorder %s31, 1
      %p117 = por %p115, %p116
      %p119 = scmp.ne.s32.totalorder %s104, %s118
      %p120 = scmp.eq.s32.totalorder %s31, 0
      %p121 = por %p119, %p120
      %s123 = sadd.s32 %s122, 1
      %p126 = scmp.eq.s32.totalorder %s25, 1
      %p127 = scmp.ne.s32.totalorder %s122, %s124
      %p128 = scmp.eq.s32.totalorder %s25, 0
      %p129 = por %p127, %p128
      %p130 = scmp.ne.s32.totalorder %s122, %s124
      %p131 = scmp.eq.s32.totalorder %s30, 1
      %p132 = por %p130, %p131
      %p133 = scmp.ne.s32.totalorder %s124, %s125
      %p134 = scmp.eq.s32.totalorder %s30, 0
      %p135 = por %p133, %p134
      %p136 = scmp.ne.s32.totalorder %s124, %s125
      %p137 = scmp.eq.s32.totalorder %s31, 1
      %p138 = por %p136, %p137
      %p140 = scmp.ne.s32.totalorder %s125, %s139
      %p141 = scmp.eq.s32.totalorder %s31, 0
      %p142 = por %p140, %p141
      %s144 = sadd.s32 %s143, 1
      %p147 = scmp.eq.s32.totalorder %s25, 1
      %p148 = scmp.ne.s32.totalorder %s143, %s145
      %p149 = scmp.eq.s32.totalorder %s25, 0
      %p150 = por %p148, %p149
      %p151 = scmp.ne.s32.totalorder %s143, %s145
      %p152 = scmp.eq.s32.totalorder %s30, 1
      %p153 = por %p151, %p152
      %p154 = scmp.ne.s32.totalorder %s145, %s146
      %p155 = scmp.eq.s32.totalorder %s30, 0
      %p156 = por %p154, %p155
      %p157 = scmp.ne.s32.totalorder %s145, %s146
      %p158 = scmp.eq.s32.totalorder %s31, 1
      %p159 = por %p157, %p158
      %p161 = scmp.ne.s32.totalorder %s146, %s160
      %p162 = scmp.eq.s32.totalorder %s31, 0
      %p163 = por %p161, %p162
      %s165 = sadd.s32 %s164, 1
      %p168 = scmp.eq.s32.totalorder %s25, 1
      %p169 = scmp.ne.s32.totalorder %s164, %s166
      %p170 = scmp.eq.s32.totalorder %s25, 0
      %p171 = por %p169, %p170
      %p172 = scmp.ne.s32.totalorder %s164, %s166
      %p173 = scmp.eq.s32.totalorder %s30, 1
      %p174 = por %p172, %p173
      %p175 = scmp.ne.s32.totalorder %s166, %s167
      %p176 = scmp.eq.s32.totalorder %s30, 0
      %p177 = por %p175, %p176
      %p178 = scmp.ne.s32.totalorder %s166, %s167
      %p179 = scmp.eq.s32.totalorder %s31, 1
      %p180 = por %p178, %p179
      %p182 = scmp.ne.s32.totalorder %s167, %s181
      %p183 = scmp.eq.s32.totalorder %s31, 0
      %p184 = por %p182, %p183
      %s186 = sadd.s32 %s185, 1
      %p189 = scmp.eq.s32.totalorder %s25, 1
      %p190 = scmp.ne.s32.totalorder %s185, %s187
      %p191 = scmp.eq.s32.totalorder %s25, 0
      %p192 = por %p190, %p191
      %p193 = scmp.ne.s32.totalorder %s185, %s187
      %p194 = scmp.eq.s32.totalorder %s30, 1
      %p195 = por %p193, %p194
      %p196 = scmp.ne.s32.totalorder %s187, %s188
      %p197 = scmp.eq.s32.totalorder %s30, 0
      %p198 = por %p196, %p197
      %p199 = scmp.ne.s32.totalorder %s187, %s188
      %p200 = scmp.eq.s32.totalorder %s31, 1
      %p201 = por %p199, %p200
      %p203 = scmp.ne.s32.totalorder %s188, %s202
      %p204 = scmp.eq.s32.totalorder %s31, 0
      %p205 = por %p203, %p204
      %s207 = sadd.s32 %s206, 1
      %p210 = scmp.eq.s32.totalorder %s25, 1
      %p211 = scmp.ne.s32.totalorder %s206, %s208
      %p212 = scmp.eq.s32.totalorder %s25, 0
      %p213 = por %p211, %p212
      %p214 = scmp.ne.s32.totalorder %s206, %s208
      %p215 = scmp.eq.s32.totalorder %s30, 1
      %p216 = por %p214, %p215
      %p217 = scmp.ne.s32.totalorder %s208, %s209
      %p218 = scmp.eq.s32.totalorder %s30, 0
      %p219 = por %p217, %p218
      %p220 = scmp.ne.s32.totalorder %s208, %s209
      %p221 = scmp.eq.s32.totalorder %s31, 1
      %p222 = por %p220, %p221
      %p224 = scmp.ne.s32.totalorder %s209, %s223
      %p225 = scmp.eq.s32.totalorder %s31, 0
      %p226 = por %p224, %p225
      %s228 = sadd.s32 %s227, 1
      %p231 = scmp.eq.s32.totalorder %s25, 1
      %p232 = scmp.ne.s32.totalorder %s227, %s229
      %p233 = scmp.eq.s32.totalorder %s25, 0
      %p234 = por %p232, %p233
      %p235 = scmp.ne.s32.totalorder %s227, %s229
      %p236 = scmp.eq.s32.totalorder %s30, 1
      %p237 = por %p235, %p236
      %p238 = scmp.ne.s32.totalorder %s229, %s230
      %p239 = scmp.eq.s32.totalorder %s30, 0
      %p240 = por %p238, %p239
      %p241 = scmp.ne.s32.totalorder %s229, %s230
      %p242 = scmp.eq.s32.totalorder %s31, 1
      %p243 = por %p241, %p242
      %p245 = scmp.ne.s32.totalorder %s230, %s244
      %p246 = scmp.eq.s32.totalorder %s31, 0
      %p247 = por %p245, %p246
      %s249 = sadd.s32 %s248, 1
      %p252 = scmp.eq.s32.totalorder %s25, 1
      %p253 = scmp.ne.s32.totalorder %s248, %s250
      %p254 = scmp.eq.s32.totalorder %s25, 0
      %p255 = por %p253, %p254
      %p256 = scmp.ne.s32.totalorder %s248, %s250
      %p257 = scmp.eq.s32.totalorder %s30, 1
      %p258 = por %p256, %p257
      %p259 = scmp.ne.s32.totalorder %s250, %s251
      %p260 = scmp.eq.s32.totalorder %s30, 0
      %p261 = por %p259, %p260
      %p262 = scmp.ne.s32.totalorder %s250, %s251
      %p263 = scmp.eq.s32.totalorder %s31, 1
      %p264 = por %p262, %p263
      %p266 = scmp.ne.s32.totalorder %s251, %s265
      %p267 = scmp.eq.s32.totalorder %s31, 0
      %p268 = por %p266, %p267
      %s270 = sadd.s32 %s269, 1
      %p273 = scmp.eq.s32.totalorder %s25, 1
      %p274 = scmp.ne.s32.totalorder %s269, %s271
      %p275 = scmp.eq.s32.totalorder %s25, 0
      %p276 = por %p274, %p275
      %p277 = scmp.ne.s32.totalorder %s269, %s271
      %p278 = scmp.eq.s32.totalorder %s30, 1
      %p279 = por %p277, %p278
      %p280 = scmp.ne.s32.totalorder %s271, %s272
      %p281 = scmp.eq.s32.totalorder %s30, 0
      %p282 = por %p280, %p281
      %p283 = scmp.ne.s32.totalorder %s271, %s272
      %p284 = scmp.eq.s32.totalorder %s31, 1
      %p285 = por %p283, %p284
      %p287 = scmp.ne.s32.totalorder %s272, %s286
      %p288 = scmp.eq.s32.totalorder %s31, 0
      %p289 = por %p287, %p288
      %s291 = sadd.s32 %s290, 1
      %p294 = scmp.eq.s32.totalorder %s25, 1
      %p295 = scmp.ne.s32.totalorder %s290, %s292
      %p296 = scmp.eq.s32.totalorder %s25, 0
      %p297 = por %p295, %p296
      %p298 = scmp.ne.s32.totalorder %s290, %s292
      %p299 = scmp.eq.s32.totalorder %s30, 1
      %p300 = por %p298, %p299
      %p301 = scmp.ne.s32.totalorder %s292, %s293
      %p302 = scmp.eq.s32.totalorder %s30, 0
      %p303 = por %p301, %p302
      %p304 = scmp.ne.s32.totalorder %s292, %s293
      %p305 = scmp.eq.s32.totalorder %s31, 1
      %p306 = por %p304, %p305
      %p308 = scmp.ne.s32.totalorder %s293, %s307
      %p309 = scmp.eq.s32.totalorder %s31, 0
      %p310 = por %p308, %p309
      %s312 = sadd.s32 %s311, 1
      %p315 = scmp.eq.s32.totalorder %s25, 1
      %p316 = scmp.ne.s32.totalorder %s311, %s313
      %p317 = scmp.eq.s32.totalorder %s25, 0
      %p318 = por %p316, %p317
      %p319 = scmp.ne.s32.totalorder %s311, %s313
      %p320 = scmp.eq.s32.totalorder %s30, 1
      %p321 = por %p319, %p320
      %p322 = scmp.ne.s32.totalorder %s313, %s314
      %p323 = scmp.eq.s32.totalorder %s30, 0
      %p324 = por %p322, %p323
      %p325 = scmp.ne.s32.totalorder %s313, %s314
      %p326 = scmp.eq.s32.totalorder %s31, 1
      %p327 = por %p325, %p326
      %p329 = scmp.ne.s32.totalorder %s314, %s328
      %p330 = scmp.eq.s32.totalorder %s31, 0
      %p331 = por %p329, %p330
      %s333 = sadd.s32 %s332, 1
      %p336 = scmp.eq.s32.totalorder %s25, 1
      %p337 = scmp.ne.s32.totalorder %s332, %s334
      %p338 = scmp.eq.s32.totalorder %s25, 0
      %p339 = por %p337, %p338
      %p340 = scmp.ne.s32.totalorder %s332, %s334
      %p341 = scmp.eq.s32.totalorder %s30, 1
      %p342 = por %p340, %p341
      %p343 = scmp.ne.s32.totalorder %s334, %s335
      %p344 = scmp.eq.s32.totalorder %s30, 0
      %p345 = por %p343, %p344
      %p346 = scmp.ne.s32.totalorder %s334, %s335
      %p347 = scmp.eq.s32.totalorder %s31, 1
      %p348 = por %p346, %p347
      %p350 = scmp.ne.s32.totalorder %s335, %s349
      %p351 = scmp.eq.s32.totalorder %s31, 0
      %p352 = por %p350, %p351
      %s354 = sadd.s32 %s353, 1
      %p357 = scmp.eq.s32.totalorder %s25, 1
      %p358 = scmp.ne.s32.totalorder %s353, %s355
      %p359 = scmp.eq.s32.totalorder %s25, 0
      %p360 = por %p358, %p359
      %p361 = scmp.ne.s32.totalorder %s353, %s355
      %p362 = scmp.eq.s32.totalorder %s30, 1
      %p363 = por %p361, %p362
      %p364 = scmp.ne.s32.totalorder %s355, %s356
      %p365 = scmp.eq.s32.totalorder %s30, 0
      %p366 = por %p364, %p365
      %p367 = scmp.ne.s32.totalorder %s355, %s356
      %p368 = scmp.eq.s32.totalorder %s31, 1
      %p369 = por %p367, %p368
      %p371 = scmp.ne.s32.totalorder %s356, %s370
      %p372 = scmp.eq.s32.totalorder %s31, 0
      %p373 = por %p371, %p372
      %s374 = ssub.s32 %s25, %s32
      %p375 = scmp.eq.s32.totalorder %s374, 0
      %s377 = sadd.s32 %s376, 1
      %s378 = scalar_select %p375, %s376, %s377
      %p381 = pneg %p375
      %p382 = scmp.eq.s32.totalorder %s25, 1
      %p383 = por %p381, %p382
      %p384 = scmp.ne.s32.totalorder %s376, %s379
      %p385 = scmp.eq.s32.totalorder %s25, 0
      %p386 = por %p384, %p385
      %p387 = scmp.ne.s32.totalorder %s376, %s379
      %p388 = scmp.eq.s32.totalorder %s30, 1
      %p389 = por %p387, %p388
      %p390 = scmp.ne.s32.totalorder %s379, %s380
      %p391 = scmp.eq.s32.totalorder %s30, 0
      %p392 = por %p390, %p391
      %p393 = scmp.ne.s32.totalorder %s379, %s380
      %p394 = scmp.eq.s32.totalorder %s31, 1
      %p395 = por %p393, %p394
      %p397 = scmp.ne.s32.totalorder %s380, %s396
      %p398 = scmp.eq.s32.totalorder %s31, 0
      %p399 = por %p397, %p398
      %p400 = scmp.le.s32.totalorder 1, %s25
      %p401 = scmp.lt.s32.totalorder %s25, 3
      %p402 = pnand %p400, %p401
      %p403 = pneg %p402
      // Predicated region
      $region9: #{_lambda_.1} parent=5 // pred_check
        _
      $region10: #{_lambda_.1} parent=5 // pred_check_branch
        %405 = sbr.rel (%p402) target = $region12
      $region11: #{_lambda_.1} parent=5 // pred_region
        %s406 = ssub.s32 %s25, 1
        // Predicated region
        $region13: #{_lambda_.1} parent=11 // pred_check
          %p407 = pneg %p72
        $region14: #{_lambda_.1} parent=11 // pred_check_branch
          %409 = sbr.rel (%p407) target = $region16
        $region15: #{_lambda_.1} parent=11 // pred_region
          _
        $region16: #{_lambda_.1} parent=11 // pred_fallthru
          _
        // Predicated region
        $region17: #{_lambda_.1} parent=11 // pred_check
          %p410 = pneg %p93
        $region18: #{_lambda_.1} parent=11 // pred_check_branch
          %412 = sbr.rel (%p410) target = $region20
        $region19: #{_lambda_.1} parent=11 // pred_region
          _
        $region20: #{_lambda_.1} parent=11 // pred_fallthru
          _
        // Predicated region
        $region21: #{_lambda_.1} parent=11 // pred_check
          %p413 = pneg %p114
        $region22: #{_lambda_.1} parent=11 // pred_check_branch
          %415 = sbr.rel (%p413) target = $region24
        $region23: #{_lambda_.1} parent=11 // pred_region
          _
        $region24: #{_lambda_.1} parent=11 // pred_fallthru
          _
        // Predicated region
        $region25: #{_lambda_.1} parent=11 // pred_check
          %p416 = pneg %p135
        $region26: #{_lambda_.1} parent=11 // pred_check_branch
          %418 = sbr.rel (%p416) target = $region28
        $region27: #{_lambda_.1} parent=11 // pred_region
          _
        $region28: #{_lambda_.1} parent=11 // pred_fallthru
          _
        // Predicated region
        $region29: #{_lambda_.1} parent=11 // pred_check
          %p419 = pneg %p156
        $region30: #{_lambda_.1} parent=11 // pred_check_branch
          %421 = sbr.rel (%p419) target = $region32
        $region31: #{_lambda_.1} parent=11 // pred_region
          _
        $region32: #{_lambda_.1} parent=11 // pred_fallthru
          _
        // Predicated region
        $region33: #{_lambda_.1} parent=11 // pred_check
          %p422 = pneg %p177
        $region34: #{_lambda_.1} parent=11 // pred_check_branch
          %424 = sbr.rel (%p422) target = $region36
        $region35: #{_lambda_.1} parent=11 // pred_region
          _
        $region36: #{_lambda_.1} parent=11 // pred_fallthru
          _
        // Predicated region
        $region37: #{_lambda_.1} parent=11 // pred_check
          %p425 = pneg %p198
        $region38: #{_lambda_.1} parent=11 // pred_check_branch
          %427 = sbr.rel (%p425) target = $region40
        $region39: #{_lambda_.1} parent=11 // pred_region
          _
        $region40: #{_lambda_.1} parent=11 // pred_fallthru
          _
        // Predicated region
        $region41: #{_lambda_.1} parent=11 // pred_check
          %p428 = pneg %p219
        $region42: #{_lambda_.1} parent=11 // pred_check_branch
          %430 = sbr.rel (%p428) target = $region44
        $region43: #{_lambda_.1} parent=11 // pred_region
          _
        $region44: #{_lambda_.1} parent=11 // pred_fallthru
          _
        // Predicated region
        $region45: #{_lambda_.1} parent=11 // pred_check
          %p431 = pneg %p240
        $region46: #{_lambda_.1} parent=11 // pred_check_branch
          %433 = sbr.rel (%p431) target = $region48
        $region47: #{_lambda_.1} parent=11 // pred_region
          _
        $region48: #{_lambda_.1} parent=11 // pred_fallthru
          _
        // Predicated region
        $region49: #{_lambda_.1} parent=11 // pred_check
          %p434 = pneg %p261
        $region50: #{_lambda_.1} parent=11 // pred_check_branch
          %436 = sbr.rel (%p434) target = $region52
        $region51: #{_lambda_.1} parent=11 // pred_region
          _
        $region52: #{_lambda_.1} parent=11 // pred_fallthru
          _
        // Predicated region
        $region53: #{_lambda_.1} parent=11 // pred_check
          %p437 = pneg %p282
        $region54: #{_lambda_.1} parent=11 // pred_check_branch
          %439 = sbr.rel (%p437) target = $region56
        $region55: #{_lambda_.1} parent=11 // pred_region
          _
        $region56: #{_lambda_.1} parent=11 // pred_fallthru
          _
        // Predicated region
        $region57: #{_lambda_.1} parent=11 // pred_check
          %p440 = pneg %p303
        $region58: #{_lambda_.1} parent=11 // pred_check_branch
          %442 = sbr.rel (%p440) target = $region60
        $region59: #{_lambda_.1} parent=11 // pred_region
          _
        $region60: #{_lambda_.1} parent=11 // pred_fallthru
          _
        // Predicated region
        $region61: #{_lambda_.1} parent=11 // pred_check
          %p443 = pneg %p324
        $region62: #{_lambda_.1} parent=11 // pred_check_branch
          %445 = sbr.rel (%p443) target = $region64
        $region63: #{_lambda_.1} parent=11 // pred_region
          _
        $region64: #{_lambda_.1} parent=11 // pred_fallthru
          _
        // Predicated region
        $region65: #{_lambda_.1} parent=11 // pred_check
          %p446 = pneg %p345
        $region66: #{_lambda_.1} parent=11 // pred_check_branch
          %448 = sbr.rel (%p446) target = $region68
        $region67: #{_lambda_.1} parent=11 // pred_region
          _
        $region68: #{_lambda_.1} parent=11 // pred_fallthru
          _
        // Predicated region
        $region69: #{_lambda_.1} parent=11 // pred_check
          %p449 = pneg %p366
        $region70: #{_lambda_.1} parent=11 // pred_check_branch
          %451 = sbr.rel (%p449) target = $region72
        $region71: #{_lambda_.1} parent=11 // pred_region
          _
        $region72: #{_lambda_.1} parent=11 // pred_fallthru
          _
      $region12: #{_lambda_.1} parent=5 // pred_fallthru
        _
      %p452 = scmp.lt.s32.totalorder %s25, 2
      // Predicated region
      $region73: #{_lambda_.1} parent=5 // pred_check
        %p453 = pneg %p452
      $region74: #{_lambda_.1} parent=5 // pred_check_branch
        %455 = sbr.rel (%p453) target = $region76
      $region75: #{_lambda_.1} parent=5 // pred_region
        // Predicated region
        $region77: #{_lambda_.1} parent=75 // pred_check
          %p456 = pneg %p45
        $region78: #{_lambda_.1} parent=75 // pred_check_branch
          %458 = sbr.rel (%p456) target = $region80
        $region79: #{_lambda_.1} parent=75 // pred_region
          %p459 = scmp.lt.s32.totalorder %s25, 1
          %s460 = scalar_select %p459, %s25, 1
          %s461 = smul.addr %s460, 32
          %s462 = smul.addr %s461, 8
          %s463 = scalar_lea.vmem %s0, %s462
        $region80: #{_lambda_.1} parent=75 // pred_fallthru
          _
      $region76: #{_lambda_.1} parent=5 // pred_fallthru
        _
      %p464 = scmp.le.s32.totalorder 1, %s25
      %p465 = scmp.lt.s32.totalorder %s25, 3
      %p466 = pnand %p464, %p465
      %p467 = pneg %p466
      // Predicated region
      $region81: #{_lambda_.1} parent=5 // pred_check
        _
      $region82: #{_lambda_.1} parent=5 // pred_check_branch
        %469 = sbr.rel (%p466) target = $region84
      $region83: #{_lambda_.1} parent=5 // pred_region
        %s470 = ssub.s32 %s25, 1
        %p471 = scmp.lt.s32.totalorder %s30, 1
        %s472 = scalar_select %p471, %s30, 1
        %s473 = smul.addr %s472, 32
        %s474 = smul.addr %s473, 8
        %s475 = scalar_lea.vmem %s0, %s474
        %p476 = pneg %p51
        %p477 = pneg %p48
        %p478 = pneg %p72
        %p479 = pneg %p69
        %p480 = pneg %p93
        %p481 = pneg %p90
        %p482 = pneg %p114
        %p483 = pneg %p111
        %p484 = pneg %p135
        %p485 = pneg %p132
        %p486 = pneg %p156
        %p487 = pneg %p153
        %p488 = pneg %p177
        %p489 = pneg %p174
        %p490 = pneg %p198
        %p491 = pneg %p195
        %p492 = pneg %p219
        %p493 = pneg %p216
        %p494 = pneg %p240
        %p495 = pneg %p237
        %p496 = pneg %p261
        %p497 = pneg %p258
        %p498 = pneg %p282
        %p499 = pneg %p279
        %p500 = pneg %p303
        %p501 = pneg %p300
        %p502 = pneg %p324
        %p503 = pneg %p321
        %p504 = pneg %p345
        %p505 = pneg %p342
        %p506 = pneg %p366
        %p507 = pneg %p363
        %p508 = pneg %p392
        %p509 = pneg %p389
        %s510 = sand.u32 %s379, 1
        %s511 = scalar_lea.sflag [#allocation4], %s510
        %s512 = sand.u32 %s379, 1
        %s513 = smul.addr %s512, 256
        %s514 = scalar_lea.vmem [#allocation3], %s513
        %p515 = scmp.lt.s32.totalorder %s30, 1
        %s516 = scalar_select %p515, %s30, 1
        %s517 = smul.addr %s516, 32
        %s518 = smul.addr %s517, 8
        %s519 = scalar_lea.vmem %s0, %s518
        %v521 = vlaneseq
        %v522 = vshrl.u32 %v521, 7
        %v523 = vadd.s32 %v522, 8
        %v524 = vadd.s32 %v522, 16
        %v525 = vadd.s32 %v522, 24
        %v526 = vadd.s32 %v522, 32
        %v527 = vadd.s32 %v522, 40
        %v528 = vadd.s32 %v522, 48
        %v529 = vadd.s32 %v522, 56
        %v530 = vadd.s32 %v522, 64
        %v531 = vadd.s32 %v522, 72
        %v532 = vadd.s32 %v522, 80
        %v533 = vadd.s32 %v522, 88
        %v534 = vadd.s32 %v522, 96
        %v535 = vadd.s32 %v522, 104
        %v536 = vadd.s32 %v522, 112
        %v537 = vadd.s32 %v522, 120
        %v538 = vadd.s32 %v522, 128
        %v539 = vadd.s32 %v522, 136
        %v540 = vadd.s32 %v522, 144
        %v541 = vadd.s32 %v522, 152
        %v542 = vadd.s32 %v522, 160
        %v543 = vadd.s32 %v522, 168
        %v544 = vadd.s32 %v522, 176
        %v545 = vadd.s32 %v522, 184
        %v546 = vadd.s32 %v522, 192
        %v547 = vadd.s32 %v522, 200
        %v548 = vadd.s32 %v522, 208
        %v549 = vadd.s32 %v522, 216
        %v550 = vadd.s32 %v522, 224
        %v551 = vadd.s32 %v522, 232
        %v552 = vadd.s32 %v522, 240
        %v553 = vadd.s32 %v522, 248
        %vm554 = vcmp.lt.s32.totalorder %v522, 0
        %v555 = vsub.s32 0, %v522
        %v556 = vsel %vm554, %v555, %v522
        %v557 = vshrl.u32 %v556, 4
        %v558 = vand.u32 %v556, 15
        %v559 = vsub.s32 0, %v558
        %v560 = vsel %vm554, %v559, %v558
        %vm561 = vcmp.lt.s32.totalorder %v523, 0
        %v562 = vsub.s32 0, %v523
        %v563 = vsel %vm561, %v562, %v523
        %v564 = vshrl.u32 %v563, 4
        %v565 = vand.u32 %v563, 15
        %v566 = vsub.s32 0, %v565
        %v567 = vsel %vm561, %v566, %v565
        %vm568 = vcmp.lt.s32.totalorder %v524, 0
        %v569 = vsub.s32 0, %v524
        %v570 = vsel %vm568, %v569, %v524
        %v571 = vshrl.u32 %v570, 4
        %v572 = vand.u32 %v570, 15
        %v573 = vsub.s32 0, %v572
        %v574 = vsel %vm568, %v573, %v572
        %vm575 = vcmp.lt.s32.totalorder %v525, 0
        %v576 = vsub.s32 0, %v525
        %v577 = vsel %vm575, %v576, %v525
        %v578 = vshrl.u32 %v577, 4
        %v579 = vand.u32 %v577, 15
        %v580 = vsub.s32 0, %v579
        %v581 = vsel %vm575, %v580, %v579
        %vm582 = vcmp.lt.s32.totalorder %v526, 0
        %v583 = vsub.s32 0, %v526
        %v584 = vsel %vm582, %v583, %v526
        %v585 = vshrl.u32 %v584, 4
        %v586 = vand.u32 %v584, 15
        %v587 = vsub.s32 0, %v586
        %v588 = vsel %vm582, %v587, %v586
        %vm589 = vcmp.lt.s32.totalorder %v527, 0
        %v590 = vsub.s32 0, %v527
        %v591 = vsel %vm589, %v590, %v527
        %v592 = vshrl.u32 %v591, 4
        %v593 = vand.u32 %v591, 15
        %v594 = vsub.s32 0, %v593
        %v595 = vsel %vm589, %v594, %v593
        %vm596 = vcmp.lt.s32.totalorder %v528, 0
        %v597 = vsub.s32 0, %v528
        %v598 = vsel %vm596, %v597, %v528
        %v599 = vshrl.u32 %v598, 4
        %v600 = vand.u32 %v598, 15
        %v601 = vsub.s32 0, %v600
        %v602 = vsel %vm596, %v601, %v600
        %vm603 = vcmp.lt.s32.totalorder %v529, 0
        %v604 = vsub.s32 0, %v529
        %v605 = vsel %vm603, %v604, %v529
        %v606 = vshrl.u32 %v605, 4
        %v607 = vand.u32 %v605, 15
        %v608 = vsub.s32 0, %v607
        %v609 = vsel %vm603, %v608, %v607
        %vm610 = vcmp.lt.s32.totalorder %v530, 0
        %v611 = vsub.s32 0, %v530
        %v612 = vsel %vm610, %v611, %v530
        %v613 = vshrl.u32 %v612, 4
        %v614 = vand.u32 %v612, 15
        %v615 = vsub.s32 0, %v614
        %v616 = vsel %vm610, %v615, %v614
        %vm617 = vcmp.lt.s32.totalorder %v531, 0
        %v618 = vsub.s32 0, %v531
        %v619 = vsel %vm617, %v618, %v531
        %v620 = vshrl.u32 %v619, 4
        %v621 = vand.u32 %v619, 15
        %v622 = vsub.s32 0, %v621
        %v623 = vsel %vm617, %v622, %v621
        %vm624 = vcmp.lt.s32.totalorder %v532, 0
        %v625 = vsub.s32 0, %v532
        %v626 = vsel %vm624, %v625, %v532
        %v627 = vshrl.u32 %v626, 4
        %v628 = vand.u32 %v626, 15
        %v629 = vsub.s32 0, %v628
        %v630 = vsel %vm624, %v629, %v628
        %vm631 = vcmp.lt.s32.totalorder %v533, 0
        %v632 = vsub.s32 0, %v533
        %v633 = vsel %vm631, %v632, %v533
        %v634 = vshrl.u32 %v633, 4
        %v635 = vand.u32 %v633, 15
        %v636 = vsub.s32 0, %v635
        %v637 = vsel %vm631, %v636, %v635
        %vm638 = vcmp.lt.s32.totalorder %v534, 0
        %v639 = vsub.s32 0, %v534
        %v640 = vsel %vm638, %v639, %v534
        %v641 = vshrl.u32 %v640, 4
        %v642 = vand.u32 %v640, 15
        %v643 = vsub.s32 0, %v642
        %v644 = vsel %vm638, %v643, %v642
        %vm645 = vcmp.lt.s32.totalorder %v535, 0
        %v646 = vsub.s32 0, %v535
        %v647 = vsel %vm645, %v646, %v535
        %v648 = vshrl.u32 %v647, 4
        %v649 = vand.u32 %v647, 15
        %v650 = vsub.s32 0, %v649
        %v651 = vsel %vm645, %v650, %v649
        %vm652 = vcmp.lt.s32.totalorder %v536, 0
        %v653 = vsub.s32 0, %v536
        %v654 = vsel %vm652, %v653, %v536
        %v655 = vshrl.u32 %v654, 4
        %v656 = vand.u32 %v654, 15
        %v657 = vsub.s32 0, %v656
        %v658 = vsel %vm652, %v657, %v656
        %vm659 = vcmp.lt.s32.totalorder %v537, 0
        %v660 = vsub.s32 0, %v537
        %v661 = vsel %vm659, %v660, %v537
        %v662 = vshrl.u32 %v661, 4
        %v663 = vand.u32 %v661, 15
        %v664 = vsub.s32 0, %v663
        %v665 = vsel %vm659, %v664, %v663
        %vm666 = vcmp.lt.s32.totalorder %v538, 0
        %v667 = vsub.s32 0, %v538
        %v668 = vsel %vm666, %v667, %v538
        %v669 = vshrl.u32 %v668, 4
        %v670 = vand.u32 %v668, 15
        %v671 = vsub.s32 0, %v670
        %v672 = vsel %vm666, %v671, %v670
        %vm673 = vcmp.lt.s32.totalorder %v539, 0
        %v674 = vsub.s32 0, %v539
        %v675 = vsel %vm673, %v674, %v539
        %v676 = vshrl.u32 %v675, 4
        %v677 = vand.u32 %v675, 15
        %v678 = vsub.s32 0, %v677
        %v679 = vsel %vm673, %v678, %v677
        %vm680 = vcmp.lt.s32.totalorder %v540, 0
        %v681 = vsub.s32 0, %v540
        %v682 = vsel %vm680, %v681, %v540
        %v683 = vshrl.u32 %v682, 4
        %v684 = vand.u32 %v682, 15
        %v685 = vsub.s32 0, %v684
        %v686 = vsel %vm680, %v685, %v684
        %vm687 = vcmp.lt.s32.totalorder %v541, 0
        %v688 = vsub.s32 0, %v541
        %v689 = vsel %vm687, %v688, %v541
        %v690 = vshrl.u32 %v689, 4
        %v691 = vand.u32 %v689, 15
        %v692 = vsub.s32 0, %v691
        %v693 = vsel %vm687, %v692, %v691
        %vm694 = vcmp.lt.s32.totalorder %v542, 0
        %v695 = vsub.s32 0, %v542
        %v696 = vsel %vm694, %v695, %v542
        %v697 = vshrl.u32 %v696, 4
        %v698 = vand.u32 %v696, 15
        %v699 = vsub.s32 0, %v698
        %v700 = vsel %vm694, %v699, %v698
        %vm701 = vcmp.lt.s32.totalorder %v543, 0
        %v702 = vsub.s32 0, %v543
        %v703 = vsel %vm701, %v702, %v543
        %v704 = vshrl.u32 %v703, 4
        %v705 = vand.u32 %v703, 15
        %v706 = vsub.s32 0, %v705
        %v707 = vsel %vm701, %v706, %v705
        %vm708 = vcmp.lt.s32.totalorder %v544, 0
        %v709 = vsub.s32 0, %v544
        %v710 = vsel %vm708, %v709, %v544
        %v711 = vshrl.u32 %v710, 4
        %v712 = vand.u32 %v710, 15
        %v713 = vsub.s32 0, %v712
        %v714 = vsel %vm708, %v713, %v712
        %vm715 = vcmp.lt.s32.totalorder %v545, 0
        %v716 = vsub.s32 0, %v545
        %v717 = vsel %vm715, %v716, %v545
        %v718 = vshrl.u32 %v717, 4
        %v719 = vand.u32 %v717, 15
        %v720 = vsub.s32 0, %v719
        %v721 = vsel %vm715, %v720, %v719
        %vm722 = vcmp.lt.s32.totalorder %v546, 0
        %v723 = vsub.s32 0, %v546
        %v724 = vsel %vm722, %v723, %v546
        %v725 = vshrl.u32 %v724, 4
        %v726 = vand.u32 %v724, 15
        %v727 = vsub.s32 0, %v726
        %v728 = vsel %vm722, %v727, %v726
        %vm729 = vcmp.lt.s32.totalorder %v547, 0
        %v730 = vsub.s32 0, %v547
        %v731 = vsel %vm729, %v730, %v547
        %v732 = vshrl.u32 %v731, 4
        %v733 = vand.u32 %v731, 15
        %v734 = vsub.s32 0, %v733
        %v735 = vsel %vm729, %v734, %v733
        %vm736 = vcmp.lt.s32.totalorder %v548, 0
        %v737 = vsub.s32 0, %v548
        %v738 = vsel %vm736, %v737, %v548
        %v739 = vshrl.u32 %v738, 4
        %v740 = vand.u32 %v738, 15
        %v741 = vsub.s32 0, %v740
        %v742 = vsel %vm736, %v741, %v740
        %vm743 = vcmp.lt.s32.totalorder %v549, 0
        %v744 = vsub.s32 0, %v549
        %v745 = vsel %vm743, %v744, %v549
        %v746 = vshrl.u32 %v745, 4
        %v747 = vand.u32 %v745, 15
        %v748 = vsub.s32 0, %v747
        %v749 = vsel %vm743, %v748, %v747
        %vm750 = vcmp.lt.s32.totalorder %v550, 0
        %v751 = vsub.s32 0, %v550
        %v752 = vsel %vm750, %v751, %v550
        %v753 = vshrl.u32 %v752, 4
        %v754 = vand.u32 %v752, 15
        %v755 = vsub.s32 0, %v754
        %v756 = vsel %vm750, %v755, %v754
        %vm757 = vcmp.lt.s32.totalorder %v551, 0
        %v758 = vsub.s32 0, %v551
        %v759 = vsel %vm757, %v758, %v551
        %v760 = vshrl.u32 %v759, 4
        %v761 = vand.u32 %v759, 15
        %v762 = vsub.s32 0, %v761
        %v763 = vsel %vm757, %v762, %v761
        %vm764 = vcmp.lt.s32.totalorder %v552, 0
        %v765 = vsub.s32 0, %v552
        %v766 = vsel %vm764, %v765, %v552
        %v767 = vshrl.u32 %v766, 4
        %v768 = vand.u32 %v766, 15
        %v769 = vsub.s32 0, %v768
        %v770 = vsel %vm764, %v769, %v768
        %vm771 = vcmp.lt.s32.totalorder %v553, 0
        %v772 = vsub.s32 0, %v553
        %v773 = vsel %vm771, %v772, %v553
        %v774 = vshrl.u32 %v773, 4
        %v775 = vand.u32 %v773, 15
        %v776 = vsub.s32 0, %v775
        %v777 = vsel %vm771, %v776, %v775
        %vm778 = vcmp.ne.s32.totalorder %v560, 0
        %vm779 = vcmp.ne.s32.totalorder %v567, 0
        %vm780 = vcmp.ne.s32.totalorder %v574, 0
        %vm781 = vcmp.ne.s32.totalorder %v581, 0
        %vm782 = vcmp.ne.s32.totalorder %v588, 0
        %vm783 = vcmp.ne.s32.totalorder %v595, 0
        %vm784 = vcmp.ne.s32.totalorder %v602, 0
        %vm785 = vcmp.ne.s32.totalorder %v609, 0
        %vm786 = vcmp.ne.s32.totalorder %v616, 0
        %vm787 = vcmp.ne.s32.totalorder %v623, 0
        %vm788 = vcmp.ne.s32.totalorder %v630, 0
        %vm789 = vcmp.ne.s32.totalorder %v637, 0
        %vm790 = vcmp.ne.s32.totalorder %v644, 0
        %vm791 = vcmp.ne.s32.totalorder %v651, 0
        %vm792 = vcmp.ne.s32.totalorder %v658, 0
        %vm793 = vcmp.ne.s32.totalorder %v665, 0
        %vm794 = vcmp.ne.s32.totalorder %v672, 0
        %vm795 = vcmp.ne.s32.totalorder %v679, 0
        %vm796 = vcmp.ne.s32.totalorder %v686, 0
        %vm797 = vcmp.ne.s32.totalorder %v693, 0
        %vm798 = vcmp.ne.s32.totalorder %v700, 0
        %vm799 = vcmp.ne.s32.totalorder %v707, 0
        %vm800 = vcmp.ne.s32.totalorder %v714, 0
        %vm801 = vcmp.ne.s32.totalorder %v721, 0
        %vm802 = vcmp.ne.s32.totalorder %v728, 0
        %vm803 = vcmp.ne.s32.totalorder %v735, 0
        %vm804 = vcmp.ne.s32.totalorder %v742, 0
        %vm805 = vcmp.ne.s32.totalorder %v749, 0
        %vm806 = vcmp.ne.s32.totalorder %v756, 0
        %vm807 = vcmp.ne.s32.totalorder %v763, 0
        %vm808 = vcmp.ne.s32.totalorder %v770, 0
        %vm809 = vcmp.ne.s32.totalorder %v777, 0
        %vm810 = vcmp.lt.s32.totalorder %v560, 0
        %vm811 = vcmp.lt.s32.totalorder %v567, 0
        %vm812 = vcmp.lt.s32.totalorder %v574, 0
        %vm813 = vcmp.lt.s32.totalorder %v581, 0
        %vm814 = vcmp.lt.s32.totalorder %v588, 0
        %vm815 = vcmp.lt.s32.totalorder %v595, 0
        %vm816 = vcmp.lt.s32.totalorder %v602, 0
        %vm817 = vcmp.lt.s32.totalorder %v609, 0
        %vm818 = vcmp.lt.s32.totalorder %v616, 0
        %vm819 = vcmp.lt.s32.totalorder %v623, 0
        %vm820 = vcmp.lt.s32.totalorder %v630, 0
        %vm821 = vcmp.lt.s32.totalorder %v637, 0
        %vm822 = vcmp.lt.s32.totalorder %v644, 0
        %vm823 = vcmp.lt.s32.totalorder %v651, 0
        %vm824 = vcmp.lt.s32.totalorder %v658, 0
        %vm825 = vcmp.lt.s32.totalorder %v665, 0
        %vm826 = vcmp.lt.s32.totalorder %v672, 0
        %vm827 = vcmp.lt.s32.totalorder %v679, 0
        %vm828 = vcmp.lt.s32.totalorder %v686, 0
        %vm829 = vcmp.lt.s32.totalorder %v693, 0
        %vm830 = vcmp.lt.s32.totalorder %v700, 0
        %vm831 = vcmp.lt.s32.totalorder %v707, 0
        %vm832 = vcmp.lt.s32.totalorder %v714, 0
        %vm833 = vcmp.lt.s32.totalorder %v721, 0
        %vm834 = vcmp.lt.s32.totalorder %v728, 0
        %vm835 = vcmp.lt.s32.totalorder %v735, 0
        %vm836 = vcmp.lt.s32.totalorder %v742, 0
        %vm837 = vcmp.lt.s32.totalorder %v749, 0
        %vm838 = vcmp.lt.s32.totalorder %v756, 0
        %vm839 = vcmp.lt.s32.totalorder %v763, 0
        %vm840 = vcmp.lt.s32.totalorder %v770, 0
        %vm841 = vcmp.lt.s32.totalorder %v777, 0
        %vm842 = vmand %vm810, %vm778
        %vm843 = vmand %vm811, %vm779
        %vm844 = vmand %vm812, %vm780
        %vm845 = vmand %vm813, %vm781
        %vm846 = vmand %vm814, %vm782
        %vm847 = vmand %vm815, %vm783
        %vm848 = vmand %vm816, %vm784
        %vm849 = vmand %vm817, %vm785
        %vm850 = vmand %vm818, %vm786
        %vm851 = vmand %vm819, %vm787
        %vm852 = vmand %vm820, %vm788
        %vm853 = vmand %vm821, %vm789
        %vm854 = vmand %vm822, %vm790
        %vm855 = vmand %vm823, %vm791
        %vm856 = vmand %vm824, %vm792
        %vm857 = vmand %vm825, %vm793
        %vm858 = vmand %vm826, %vm794
        %vm859 = vmand %vm827, %vm795
        %vm860 = vmand %vm828, %vm796
        %vm861 = vmand %vm829, %vm797
        %vm862 = vmand %vm830, %vm798
        %vm863 = vmand %vm831, %vm799
        %vm864 = vmand %vm832, %vm800
        %vm865 = vmand %vm833, %vm801
        %vm866 = vmand %vm834, %vm802
        %vm867 = vmand %vm835, %vm803
        %vm868 = vmand %vm836, %vm804
        %vm869 = vmand %vm837, %vm805
        %vm870 = vmand %vm838, %vm806
        %vm871 = vmand %vm839, %vm807
        %vm872 = vmand %vm840, %vm808
        %vm873 = vmand %vm841, %vm809
        %v874 = vadd.s32 %v560, 16
        %v875 = vadd.s32 %v567, 16
        %v876 = vadd.s32 %v574, 16
        %v877 = vadd.s32 %v581, 16
        %v878 = vadd.s32 %v588, 16
        %v879 = vadd.s32 %v595, 16
        %v880 = vadd.s32 %v602, 16
        %v881 = vadd.s32 %v609, 16
        %v882 = vadd.s32 %v616, 16
        %v883 = vadd.s32 %v623, 16
        %v884 = vadd.s32 %v630, 16
        %v885 = vadd.s32 %v637, 16
        %v886 = vadd.s32 %v644, 16
        %v887 = vadd.s32 %v651, 16
        %v888 = vadd.s32 %v658, 16
        %v889 = vadd.s32 %v665, 16
        %v890 = vadd.s32 %v672, 16
        %v891 = vadd.s32 %v679, 16
        %v892 = vadd.s32 %v686, 16
        %v893 = vadd.s32 %v693, 16
        %v894 = vadd.s32 %v700, 16
        %v895 = vadd.s32 %v707, 16
        %v896 = vadd.s32 %v714, 16
        %v897 = vadd.s32 %v721, 16
        %v898 = vadd.s32 %v728, 16
        %v899 = vadd.s32 %v735, 16
        %v900 = vadd.s32 %v742, 16
        %v901 = vadd.s32 %v749, 16
        %v902 = vadd.s32 %v756, 16
        %v903 = vadd.s32 %v763, 16
        %v904 = vadd.s32 %v770, 16
        %v905 = vadd.s32 %v777, 16
        %v906 = vsel %vm842, %v874, %v560
        %v907 = vsel %vm843, %v875, %v567
        %v908 = vsel %vm844, %v876, %v574
        %v909 = vsel %vm845, %v877, %v581
        %v910 = vsel %vm846, %v878, %v588
        %v911 = vsel %vm847, %v879, %v595
        %v912 = vsel %vm848, %v880, %v602
        %v913 = vsel %vm849, %v881, %v609
        %v914 = vsel %vm850, %v882, %v616
        %v915 = vsel %vm851, %v883, %v623
        %v916 = vsel %vm852, %v884, %v630
        %v917 = vsel %vm853, %v885, %v637
        %v918 = vsel %vm854, %v886, %v644
        %v919 = vsel %vm855, %v887, %v651
        %v920 = vsel %vm856, %v888, %v658
        %v921 = vsel %vm857, %v889, %v665
        %v922 = vsel %vm858, %v890, %v672
        %v923 = vsel %vm859, %v891, %v679
        %v924 = vsel %vm860, %v892, %v686
        %v925 = vsel %vm861, %v893, %v693
        %v926 = vsel %vm862, %v894, %v700
        %v927 = vsel %vm863, %v895, %v707
        %v928 = vsel %vm864, %v896, %v714
        %v929 = vsel %vm865, %v897, %v721
        %v930 = vsel %vm866, %v898, %v728
        %v931 = vsel %vm867, %v899, %v735
        %v932 = vsel %vm868, %v900, %v742
        %v933 = vsel %vm869, %v901, %v749
        %v934 = vsel %vm870, %v902, %v756
        %v935 = vsel %vm871, %v903, %v763
        %v936 = vsel %vm872, %v904, %v770
        %v937 = vsel %vm873, %v905, %v777
        %vm938 = vcmp.ge.s32.totalorder %v906, 1
        %vm939 = vcmp.ge.s32.totalorder %v907, 1
        %vm940 = vcmp.ge.s32.totalorder %v908, 1
        %vm941 = vcmp.ge.s32.totalorder %v909, 1
        %vm942 = vcmp.ge.s32.totalorder %v910, 1
        %vm943 = vcmp.ge.s32.totalorder %v911, 1
        %vm944 = vcmp.ge.s32.totalorder %v912, 1
        %vm945 = vcmp.ge.s32.totalorder %v913, 1
        %vm946 = vcmp.ge.s32.totalorder %v914, 1
        %vm947 = vcmp.ge.s32.totalorder %v915, 1
        %vm948 = vcmp.ge.s32.totalorder %v916, 1
        %vm949 = vcmp.ge.s32.totalorder %v917, 1
        %vm950 = vcmp.ge.s32.totalorder %v918, 1
        %vm951 = vcmp.ge.s32.totalorder %v919, 1
        %vm952 = vcmp.ge.s32.totalorder %v920, 1
        %vm953 = vcmp.ge.s32.totalorder %v921, 1
        %vm954 = vcmp.ge.s32.totalorder %v922, 1
        %vm955 = vcmp.ge.s32.totalorder %v923, 1
        %vm956 = vcmp.ge.s32.totalorder %v924, 1
        %vm957 = vcmp.ge.s32.totalorder %v925, 1
        %vm958 = vcmp.ge.s32.totalorder %v926, 1
        %vm959 = vcmp.ge.s32.totalorder %v927, 1
        %vm960 = vcmp.ge.s32.totalorder %v928, 1
        %vm961 = vcmp.ge.s32.totalorder %v929, 1
        %vm962 = vcmp.ge.s32.totalorder %v930, 1
        %vm963 = vcmp.ge.s32.totalorder %v931, 1
        %vm964 = vcmp.ge.s32.totalorder %v932, 1
        %vm965 = vcmp.ge.s32.totalorder %v933, 1
        %vm966 = vcmp.ge.s32.totalorder %v934, 1
        %vm967 = vcmp.ge.s32.totalorder %v935, 1
        %vm968 = vcmp.ge.s32.totalorder %v936, 1
        %vm969 = vcmp.ge.s32.totalorder %v937, 1
        %vm970 = vcmp.le.s32.totalorder %v906, 14
        %vm971 = vcmp.le.s32.totalorder %v907, 14
        %vm972 = vcmp.le.s32.totalorder %v908, 14
        %vm973 = vcmp.le.s32.totalorder %v909, 14
        %vm974 = vcmp.le.s32.totalorder %v910, 14
        %vm975 = vcmp.le.s32.totalorder %v911, 14
        %vm976 = vcmp.le.s32.totalorder %v912, 14
        %vm977 = vcmp.le.s32.totalorder %v913, 14
        %vm978 = vcmp.le.s32.totalorder %v914, 14
        %vm979 = vcmp.le.s32.totalorder %v915, 14
        %vm980 = vcmp.le.s32.totalorder %v916, 14
        %vm981 = vcmp.le.s32.totalorder %v917, 14
        %vm982 = vcmp.le.s32.totalorder %v918, 14
        %vm983 = vcmp.le.s32.totalorder %v919, 14
        %vm984 = vcmp.le.s32.totalorder %v920, 14
        %vm985 = vcmp.le.s32.totalorder %v921, 14
        %vm986 = vcmp.le.s32.totalorder %v922, 14
        %vm987 = vcmp.le.s32.totalorder %v923, 14
        %vm988 = vcmp.le.s32.totalorder %v924, 14
        %vm989 = vcmp.le.s32.totalorder %v925, 14
        %vm990 = vcmp.le.s32.totalorder %v926, 14
        %vm991 = vcmp.le.s32.totalorder %v927, 14
        %vm992 = vcmp.le.s32.totalorder %v928, 14
        %vm993 = vcmp.le.s32.totalorder %v929, 14
        %vm994 = vcmp.le.s32.totalorder %v930, 14
        %vm995 = vcmp.le.s32.totalorder %v931, 14
        %vm996 = vcmp.le.s32.totalorder %v932, 14
        %vm997 = vcmp.le.s32.totalorder %v933, 14
        %vm998 = vcmp.le.s32.totalorder %v934, 14
        %vm999 = vcmp.le.s32.totalorder %v935, 14
        %vm1000 = vcmp.le.s32.totalorder %v936, 14
        %vm1001 = vcmp.le.s32.totalorder %v937, 14
        %v1002 = vld [vmem:[%s519] sm:$0xff]
        %v1003 = vld [vmem:[%s519 + $0x8] sm:$0xff]
        %v1004 = vld [vmem:[%s519 + $0x10] sm:$0xff]
        %v1005 = vld [vmem:[%s519 + $0x18] sm:$0xff]
        %v1006 = vld [vmem:[%s519 + $0x20] sm:$0xff]
        %v1007 = vld [vmem:[%s519 + $0x28] sm:$0xff]
        %v1008 = vld [vmem:[%s519 + $0x30] sm:$0xff]
        %v1009 = vld [vmem:[%s519 + $0x38] sm:$0xff]
        %v1010 = vld [vmem:[%s519 + $0x40] sm:$0xff]
        %v1011 = vld [vmem:[%s519 + $0x48] sm:$0xff]
        %v1012 = vld [vmem:[%s519 + $0x50] sm:$0xff]
        %v1013 = vld [vmem:[%s519 + $0x58] sm:$0xff]
        %v1014 = vld [vmem:[%s519 + $0x60] sm:$0xff]
        %v1015 = vld [vmem:[%s519 + $0x68] sm:$0xff]
        %v1016 = vld [vmem:[%s519 + $0x70] sm:$0xff]
        %v1017 = vld [vmem:[%s519 + $0x78] sm:$0xff]
        %v1018 = vld [vmem:[%s519 + $0x80] sm:$0xff]
        %v1019 = vld [vmem:[%s519 + $0x88] sm:$0xff]
        %v1020 = vld [vmem:[%s519 + $0x90] sm:$0xff]
        %v1021 = vld [vmem:[%s519 + $0x98] sm:$0xff]
        %v1022 = vld [vmem:[%s519 + $0xa0] sm:$0xff]
        %v1023 = vld [vmem:[%s519 + $0xa8] sm:$0xff]
        %v1024 = vld [vmem:[%s519 + $0xb0] sm:$0xff]
        %v1025 = vld [vmem:[%s519 + $0xb8] sm:$0xff]
        %v1026 = vld [vmem:[%s519 + $0xc0] sm:$0xff]
        %v1027 = vld [vmem:[%s519 + $0xc8] sm:$0xff]
        %v1028 = vld [vmem:[%s519 + $0xd0] sm:$0xff]
        %v1029 = vld [vmem:[%s519 + $0xd8] sm:$0xff]
        %v1030 = vld [vmem:[%s519 + $0xe0] sm:$0xff]
        %v1031 = vld [vmem:[%s519 + $0xe8] sm:$0xff]
        %v1032 = vld [vmem:[%s519 + $0xf0] sm:$0xff]
        %v1033 = vld [vmem:[%s519 + $0xf8] sm:$0xff]
        %v1034 = vpack.c.bf16 %v1003, %v1002
        %v1035 = vpack.c.bf16 %v1005, %v1004
        %v1036 = vpack.c.bf16 %v1007, %v1006
        %v1037 = vpack.c.bf16 %v1009, %v1008
        %v1038 = vpack.c.bf16 %v1011, %v1010
        %v1039 = vpack.c.bf16 %v1013, %v1012
        %v1040 = vpack.c.bf16 %v1015, %v1014
        %v1041 = vpack.c.bf16 %v1017, %v1016
        %v1042 = vpack.c.bf16 %v1019, %v1018
        %v1043 = vpack.c.bf16 %v1021, %v1020
        %v1044 = vpack.c.bf16 %v1023, %v1022
        %v1045 = vpack.c.bf16 %v1025, %v1024
        %v1046 = vpack.c.bf16 %v1027, %v1026
        %v1047 = vpack.c.bf16 %v1029, %v1028
        %v1048 = vpack.c.bf16 %v1031, %v1030
        %v1049 = vpack.c.bf16 %v1033, %v1032
        %v1050 = vld [vmem:[%s1] sm:$0xf]
        %v1051 = vld [vmem:[%s1 + $0x4] sm:$0xf]
        %v1054 = vunpack.c.l.b16 %v1050
        %v1055 = vunpack.c.l.b16 %v1051
        %v1056 = vpack.c.b16 %v1055, %v1054
        %vm1058 = vcmask 130048
        %v1060 = vsel %vm1058, %v1034, 0
        %v1063 = vsel %vm1058, %v1035, 0
        %v1066 = vsel %vm1058, %v1036, 0
        %v1069 = vsel %vm1058, %v1037, 0
        %v1072 = vsel %vm1058, %v1038, 0
        %v1075 = vsel %vm1058, %v1039, 0
        %v1078 = vsel %vm1058, %v1040, 0
        %v1081 = vsel %vm1058, %v1041, 0
        %v1084 = vsel %vm1058, %v1042, 0
        %v1087 = vsel %vm1058, %v1043, 0
        %v1090 = vsel %vm1058, %v1044, 0
        %v1093 = vsel %vm1058, %v1045, 0
        %v1096 = vsel %vm1058, %v1046, 0
        %v1099 = vsel %vm1058, %v1047, 0
        %v1102 = vsel %vm1058, %v1048, 0
        %v1105 = vsel %vm1058, %v1049, 0
        %1107 = vmatprep.subr.bf16.mxu0 0
        %1108 = vmatpush1.bf16.msra.mxu0 0
        %1109 = vmatprep.subr.bf16.mxu0 0
        %1110 = vmatpush1.bf16.msra.mxu0 0
        %1111 = vmatprep.subr.bf16.mxu0 0
        %1112 = vmatpush1.bf16.msra.mxu0 0
        %1113 = vmatprep.subr.bf16.mxu0 0
        %1114 = vmatpush1.bf16.msra.mxu0 0
        %1115 = vmatprep.subr.bf16.mxu0 0
        %1116 = vmatpush1.bf16.msra.mxu0 0
        %1117 = vmatprep.subr.bf16.mxu0 0
        %1118 = vmatpush1.bf16.msra.mxu0 0
        %1119 = vmatprep.subr.bf16.mxu0 0
        %1120 = vmatpush1.bf16.msra.mxu0 0
        %1121 = vmatprep.subr.bf16.mxu0 0
        %1122 = vmatpush1.bf16.msra.mxu0 %v1056
        %1123 = vmatprep.subr.bf16.mxu0 0
        %1124 = vmatpush2.bf16.msra.mxu0 0
        %1125 = vmatprep.subr.bf16.mxu0 0
        %1126 = vmatpush2.bf16.msra.mxu0 0
        %1127 = vmatprep.subr.bf16.mxu0 0
        %1128 = vmatpush2.bf16.msra.mxu0 0
        %1129 = vmatprep.subr.bf16.mxu0 0
        %1130 = vmatpush2.bf16.msra.mxu0 0
        %1131 = vmatprep.subr.bf16.mxu0 0
        %1132 = vmatpush2.bf16.msra.mxu0 0
        %1133 = vmatprep.subr.bf16.mxu0 0
        %1134 = vmatpush2.bf16.msra.mxu0 0
        %1135 = vmatprep.subr.bf16.mxu0 0
        %1136 = vmatpush2.bf16.msra.mxu0 0
        %1137 = vmatprep.subr.bf16.mxu0 0
        %1138 = vmatpush2.bf16.msra.mxu0 0
        %1139 = vmatprep.mubr.bf16.mxu0 0
        %1140 = vmatmul.mubr.bf16.gmra.mxu0 %v1060
        %v1141 = vpop.f32.mrf.mxu0
        %v1142 = vadd.f32 0.0, %v1141
        %v1143 = vpop.f32.mrf.mxu0
        %v1144 = vpop.f32.mrf.mxu0
        %v1145 = vadd.f32 0.0, %v1144
        %v1146 = vpop.f32.mrf.mxu0
        %1147 = vmatprep.mubr.bf16.mxu0 0
        %1148 = vmatmul.mubr.bf16.gmra.mxu0 %v1063
        %v1149 = vpop.f32.mrf.mxu0
        %v1150 = vadd.f32 0.0, %v1149
        %v1151 = vpop.f32.mrf.mxu0
        %v1152 = vpop.f32.mrf.mxu0
        %v1153 = vadd.f32 0.0, %v1152
        %v1154 = vpop.f32.mrf.mxu0
        %1155 = vmatprep.mubr.bf16.mxu0 0
        %1156 = vmatmul.mubr.bf16.gmra.mxu0 %v1066
        %v1157 = vpop.f32.mrf.mxu0
        %v1158 = vadd.f32 0.0, %v1157
        %v1159 = vpop.f32.mrf.mxu0
        %v1160 = vpop.f32.mrf.mxu0
        %v1161 = vadd.f32 0.0, %v1160
        %v1162 = vpop.f32.mrf.mxu0
        %1163 = vmatprep.mubr.bf16.mxu0 0
        %1164 = vmatmul.mubr.bf16.gmra.mxu0 %v1069
        %v1165 = vpop.f32.mrf.mxu0
        %v1166 = vadd.f32 0.0, %v1165
        %v1167 = vpop.f32.mrf.mxu0
        %v1168 = vpop.f32.mrf.mxu0
        %v1169 = vadd.f32 0.0, %v1168
        %v1170 = vpop.f32.mrf.mxu0
        %1171 = vmatprep.mubr.bf16.mxu0 0
        %1172 = vmatmul.mubr.bf16.gmra.mxu0 %v1072
        %v1173 = vpop.f32.mrf.mxu0
        %v1174 = vadd.f32 0.0, %v1173
        %v1175 = vpop.f32.mrf.mxu0
        %v1176 = vpop.f32.mrf.mxu0
        %v1177 = vadd.f32 0.0, %v1176
        %v1178 = vpop.f32.mrf.mxu0
        %1179 = vmatprep.mubr.bf16.mxu0 0
        %1180 = vmatmul.mubr.bf16.gmra.mxu0 %v1075
        %v1181 = vpop.f32.mrf.mxu0
        %v1182 = vadd.f32 0.0, %v1181
        %v1183 = vpop.f32.mrf.mxu0
        %v1184 = vpop.f32.mrf.mxu0
        %v1185 = vadd.f32 0.0, %v1184
        %v1186 = vpop.f32.mrf.mxu0
        %1187 = vmatprep.mubr.bf16.mxu0 0
        %1188 = vmatmul.mubr.bf16.gmra.mxu0 %v1078
        %v1189 = vpop.f32.mrf.mxu0
        %v1190 = vadd.f32 0.0, %v1189
        %v1191 = vpop.f32.mrf.mxu0
        %v1192 = vpop.f32.mrf.mxu0
        %v1193 = vadd.f32 0.0, %v1192
        %v1194 = vpop.f32.mrf.mxu0
        %1195 = vmatprep.mubr.bf16.mxu0 0
        %1196 = vmatmul.mubr.bf16.gmra.mxu0 %v1081
        %v1197 = vpop.f32.mrf.mxu0
        %v1198 = vadd.f32 0.0, %v1197
        %v1199 = vpop.f32.mrf.mxu0
        %v1200 = vpop.f32.mrf.mxu0
        %v1201 = vadd.f32 0.0, %v1200
        %v1202 = vpop.f32.mrf.mxu0
        %1203 = vmatprep.mubr.bf16.mxu0 0
        %1204 = vmatmul.mubr.bf16.gmra.mxu0 %v1084
        %v1205 = vpop.f32.mrf.mxu0
        %v1206 = vadd.f32 0.0, %v1205
        %v1207 = vpop.f32.mrf.mxu0
        %v1208 = vpop.f32.mrf.mxu0
        %v1209 = vadd.f32 0.0, %v1208
        %v1210 = vpop.f32.mrf.mxu0
        %1211 = vmatprep.mubr.bf16.mxu0 0
        %1212 = vmatmul.mubr.bf16.gmra.mxu0 %v1087
        %v1213 = vpop.f32.mrf.mxu0
        %v1214 = vadd.f32 0.0, %v1213
        %v1215 = vpop.f32.mrf.mxu0
        %v1216 = vpop.f32.mrf.mxu0
        %v1217 = vadd.f32 0.0, %v1216
        %v1218 = vpop.f32.mrf.mxu0
        %1219 = vmatprep.mubr.bf16.mxu0 0
        %1220 = vmatmul.mubr.bf16.gmra.mxu0 %v1090
        %v1221 = vpop.f32.mrf.mxu0
        %v1222 = vadd.f32 0.0, %v1221
        %v1223 = vpop.f32.mrf.mxu0
        %v1224 = vpop.f32.mrf.mxu0
        %v1225 = vadd.f32 0.0, %v1224
        %v1226 = vpop.f32.mrf.mxu0
        %1227 = vmatprep.mubr.bf16.mxu0 0
        %1228 = vmatmul.mubr.bf16.gmra.mxu0 %v1093
        %v1229 = vpop.f32.mrf.mxu0
        %v1230 = vadd.f32 0.0, %v1229
        %v1231 = vpop.f32.mrf.mxu0
        %v1232 = vpop.f32.mrf.mxu0
        %v1233 = vadd.f32 0.0, %v1232
        %v1234 = vpop.f32.mrf.mxu0
        %1235 = vmatprep.mubr.bf16.mxu0 0
        %1236 = vmatmul.mubr.bf16.gmra.mxu0 %v1096
        %v1237 = vpop.f32.mrf.mxu0
        %v1238 = vadd.f32 0.0, %v1237
        %v1239 = vpop.f32.mrf.mxu0
        %v1240 = vpop.f32.mrf.mxu0
        %v1241 = vadd.f32 0.0, %v1240
        %v1242 = vpop.f32.mrf.mxu0
        %1243 = vmatprep.mubr.bf16.mxu0 0
        %1244 = vmatmul.mubr.bf16.gmra.mxu0 %v1099
        %v1245 = vpop.f32.mrf.mxu0
        %v1246 = vadd.f32 0.0, %v1245
        %v1247 = vpop.f32.mrf.mxu0
        %v1248 = vpop.f32.mrf.mxu0
        %v1249 = vadd.f32 0.0, %v1248
        %v1250 = vpop.f32.mrf.mxu0
        %1251 = vmatprep.mubr.bf16.mxu0 0
        %1252 = vmatmul.mubr.bf16.gmra.mxu0 %v1102
        %v1253 = vpop.f32.mrf.mxu0
        %v1254 = vadd.f32 0.0, %v1253
        %v1255 = vpop.f32.mrf.mxu0
        %v1256 = vpop.f32.mrf.mxu0
        %v1257 = vadd.f32 0.0, %v1256
        %v1258 = vpop.f32.mrf.mxu0
        %1259 = vmatprep.mubr.bf16.mxu0 0
        %1260 = vmatmul.mubr.bf16.gmra.mxu0 %v1105
        %v1261 = vpop.f32.mrf.mxu0
        %v1262 = vadd.f32 0.0, %v1261
        %v1263 = vpop.f32.mrf.mxu0
        %v1264 = vpop.f32.mrf.mxu0
        %v1265 = vadd.f32 0.0, %v1264
        %v1266 = vpop.f32.mrf.mxu0
        %1267 = vdwg.mxu0
        %v1268 = vld [vmem:[%s2] sm:$0x1]
        %v1270 = vlaneseq
        %v1271 = vshrl.u32 %v1270, 7
        %v1272 = vsub.s32 0, %v1271
        %v1273 = vrot.slane %v1268, %v1272
        %v1275 = vmul.f32 %v1142, %v1273
        %v1276 = vmul.f32 %v1145, %v1273
        %v1277 = vmul.f32 %v1150, %v1273
        %v1278 = vmul.f32 %v1153, %v1273
        %v1279 = vmul.f32 %v1158, %v1273
        %v1280 = vmul.f32 %v1161, %v1273
        %v1281 = vmul.f32 %v1166, %v1273
        %v1282 = vmul.f32 %v1169, %v1273
        %v1283 = vmul.f32 %v1174, %v1273
        %v1284 = vmul.f32 %v1177, %v1273
        %v1285 = vmul.f32 %v1182, %v1273
        %v1286 = vmul.f32 %v1185, %v1273
        %v1287 = vmul.f32 %v1190, %v1273
        %v1288 = vmul.f32 %v1193, %v1273
        %v1289 = vmul.f32 %v1198, %v1273
        %v1290 = vmul.f32 %v1201, %v1273
        %v1291 = vmul.f32 %v1206, %v1273
        %v1292 = vmul.f32 %v1209, %v1273
        %v1293 = vmul.f32 %v1214, %v1273
        %v1294 = vmul.f32 %v1217, %v1273
        %v1295 = vmul.f32 %v1222, %v1273
        %v1296 = vmul.f32 %v1225, %v1273
        %v1297 = vmul.f32 %v1230, %v1273
        %v1298 = vmul.f32 %v1233, %v1273
        %v1299 = vmul.f32 %v1238, %v1273
        %v1300 = vmul.f32 %v1241, %v1273
        %v1301 = vmul.f32 %v1246, %v1273
        %v1302 = vmul.f32 %v1249, %v1273
        %v1303 = vmul.f32 %v1254, %v1273
        %v1304 = vmul.f32 %v1257, %v1273
        %v1305 = vmul.f32 %v1262, %v1273
        %v1306 = vmul.f32 %v1265, %v1273
        %v1307 = vld [vmem:[%s3] sm:$0x1]
        %v1309 = vlaneseq
        %v1310 = vshrl.u32 %v1309, 7
        %v1311 = vsub.s32 0, %v1310
        %v1312 = vrot.slane %v1307, %v1311
        %v1314 = vadd.f32 %v1275, %v1312
        %v1315 = vadd.f32 %v1276, %v1312
        %v1316 = vadd.f32 %v1277, %v1312
        %v1317 = vadd.f32 %v1278, %v1312
        %v1318 = vadd.f32 %v1279, %v1312
        %v1319 = vadd.f32 %v1280, %v1312
        %v1320 = vadd.f32 %v1281, %v1312
        %v1321 = vadd.f32 %v1282, %v1312
        %v1322 = vadd.f32 %v1283, %v1312
        %v1323 = vadd.f32 %v1284, %v1312
        %v1324 = vadd.f32 %v1285, %v1312
        %v1325 = vadd.f32 %v1286, %v1312
        %v1326 = vadd.f32 %v1287, %v1312
        %v1327 = vadd.f32 %v1288, %v1312
        %v1328 = vadd.f32 %v1289, %v1312
        %v1329 = vadd.f32 %v1290, %v1312
        %v1330 = vadd.f32 %v1291, %v1312
        %v1331 = vadd.f32 %v1292, %v1312
        %v1332 = vadd.f32 %v1293, %v1312
        %v1333 = vadd.f32 %v1294, %v1312
        %v1334 = vadd.f32 %v1295, %v1312
        %v1335 = vadd.f32 %v1296, %v1312
        %v1336 = vadd.f32 %v1297, %v1312
        %v1337 = vadd.f32 %v1298, %v1312
        %v1338 = vadd.f32 %v1299, %v1312
        %v1339 = vadd.f32 %v1300, %v1312
        %v1340 = vadd.f32 %v1301, %v1312
        %v1341 = vadd.f32 %v1302, %v1312
        %v1342 = vadd.f32 %v1303, %v1312
        %v1343 = vadd.f32 %v1304, %v1312
        %v1344 = vadd.f32 %v1305, %v1312
        %v1345 = vadd.f32 %v1306, %v1312
        %v1346 = vmax.f32 %v1314, 0.0
        %v1347 = vmax.f32 %v1315, 0.0
        %v1348 = vmax.f32 %v1316, 0.0
        %v1349 = vmax.f32 %v1317, 0.0
        %v1350 = vmax.f32 %v1318, 0.0
        %v1351 = vmax.f32 %v1319, 0.0
        %v1352 = vmax.f32 %v1320, 0.0
        %v1353 = vmax.f32 %v1321, 0.0
        %v1354 = vmax.f32 %v1322, 0.0
        %v1355 = vmax.f32 %v1323, 0.0
        %v1356 = vmax.f32 %v1324, 0.0
        %v1357 = vmax.f32 %v1325, 0.0
        %v1358 = vmax.f32 %v1326, 0.0
        %v1359 = vmax.f32 %v1327, 0.0
        %v1360 = vmax.f32 %v1328, 0.0
        %v1361 = vmax.f32 %v1329, 0.0
        %v1362 = vmax.f32 %v1330, 0.0
        %v1363 = vmax.f32 %v1331, 0.0
        %v1364 = vmax.f32 %v1332, 0.0
        %v1365 = vmax.f32 %v1333, 0.0
        %v1366 = vmax.f32 %v1334, 0.0
        %v1367 = vmax.f32 %v1335, 0.0
        %v1368 = vmax.f32 %v1336, 0.0
        %v1369 = vmax.f32 %v1337, 0.0
        %v1370 = vmax.f32 %v1338, 0.0
        %v1371 = vmax.f32 %v1339, 0.0
        %v1372 = vmax.f32 %v1340, 0.0
        %v1373 = vmax.f32 %v1341, 0.0
        %v1374 = vmax.f32 %v1342, 0.0
        %v1375 = vmax.f32 %v1343, 0.0
        %v1376 = vmax.f32 %v1344, 0.0
        %v1377 = vmax.f32 %v1345, 0.0
        %vm1378 = vcmask 392192
        %1379 = vst.msk [vmem:[#allocation2] sm:$0xff] %vm1378, 0.0
        %1380 = vst.msk [vmem:[#allocation2 + $0x8] sm:$0xff] %vm1378, 0.0
        %1381 = vst.msk [vmem:[#allocation2 + $0x10] sm:$0xff] %vm1378, 0.0
        %1382 = vst.msk [vmem:[#allocation2 + $0x118] sm:$0xff] %vm1378, 0.0
        %1383 = vst.msk [vmem:[#allocation2 + $0x120] sm:$0xff] %vm1378, 0.0
        %1384 = vst.msk [vmem:[#allocation2 + $0x128] sm:$0xff] %vm1378, 0.0
        %1385 = vst.msk [vmem:[#allocation2 + $0x18] sm:$0xff] %vm1378, %v1346
        %1386 = vst.msk [vmem:[#allocation2 + $0x20] sm:$0xff] %vm1378, %v1347
        %1387 = vst.msk [vmem:[#allocation2 + $0x28] sm:$0xff] %vm1378, %v1348
        %1388 = vst.msk [vmem:[#allocation2 + $0x30] sm:$0xff] %vm1378, %v1349
        %1389 = vst.msk [vmem:[#allocation2 + $0x38] sm:$0xff] %vm1378, %v1350
        %1390 = vst.msk [vmem:[#allocation2 + $0x40] sm:$0xff] %vm1378, %v1351
        %1391 = vst.msk [vmem:[#allocation2 + $0x48] sm:$0xff] %vm1378, %v1352
        %1392 = vst.msk [vmem:[#allocation2 + $0x50] sm:$0xff] %vm1378, %v1353
        %1393 = vst.msk [vmem:[#allocation2 + $0x58] sm:$0xff] %vm1378, %v1354
        %1394 = vst.msk [vmem:[#allocation2 + $0x60] sm:$0xff] %vm1378, %v1355
        %1395 = vst.msk [vmem:[#allocation2 + $0x68] sm:$0xff] %vm1378, %v1356
        %1396 = vst.msk [vmem:[#allocation2 + $0x70] sm:$0xff] %vm1378, %v1357
        %1397 = vst.msk [vmem:[#allocation2 + $0x78] sm:$0xff] %vm1378, %v1358
        %1398 = vst.msk [vmem:[#allocation2 + $0x80] sm:$0xff] %vm1378, %v1359
        %1399 = vst.msk [vmem:[#allocation2 + $0x88] sm:$0xff] %vm1378, %v1360
        %1400 = vst.msk [vmem:[#allocation2 + $0x90] sm:$0xff] %vm1378, %v1361
        %1401 = vst.msk [vmem:[#allocation2 + $0x98] sm:$0xff] %vm1378, %v1362
        %1402 = vst.msk [vmem:[#allocation2 + $0xa0] sm:$0xff] %vm1378, %v1363
        %1403 = vst.msk [vmem:[#allocation2 + $0xa8] sm:$0xff] %vm1378, %v1364
        %1404 = vst.msk [vmem:[#allocation2 + $0xb0] sm:$0xff] %vm1378, %v1365
        %1405 = vst.msk [vmem:[#allocation2 + $0xb8] sm:$0xff] %vm1378, %v1366
        %1406 = vst.msk [vmem:[#allocation2 + $0xc0] sm:$0xff] %vm1378, %v1367
        %1407 = vst.msk [vmem:[#allocation2 + $0xc8] sm:$0xff] %vm1378, %v1368
        %1408 = vst.msk [vmem:[#allocation2 + $0xd0] sm:$0xff] %vm1378, %v1369
        %1409 = vst.msk [vmem:[#allocation2 + $0xd8] sm:$0xff] %vm1378, %v1370
        %1410 = vst.msk [vmem:[#allocation2 + $0xe0] sm:$0xff] %vm1378, %v1371
        %1411 = vst.msk [vmem:[#allocation2 + $0xe8] sm:$0xff] %vm1378, %v1372
        %1412 = vst.msk [vmem:[#allocation2 + $0xf0] sm:$0xff] %vm1378, %v1373
        %1413 = vst.msk [vmem:[#allocation2 + $0xf8] sm:$0xff] %vm1378, %v1374
        %1414 = vst.msk [vmem:[#allocation2 + $0x100] sm:$0xff] %vm1378, %v1375
        %1415 = vst.msk [vmem:[#allocation2 + $0x108] sm:$0xff] %vm1378, %v1376
        %1416 = vst.msk [vmem:[#allocation2 + $0x110] sm:$0xff] %vm1378, %v1377
        %v1417 = vld [vmem:[#allocation2 + $0x7] sm:$0xff]
        %v1418 = vld [vmem:[#allocation2 + $0xf] sm:$0xff]
        %v1419 = vld [vmem:[#allocation2 + $0x17] sm:$0xff]
        %v1420 = vld [vmem:[#allocation2 + $0x1f] sm:$0xff]
        %v1421 = vld [vmem:[#allocation2 + $0x27] sm:$0xff]
        %v1422 = vld [vmem:[#allocation2 + $0x2f] sm:$0xff]
        %v1423 = vld [vmem:[#allocation2 + $0x37] sm:$0xff]
        %v1424 = vld [vmem:[#allocation2 + $0x3f] sm:$0xff]
        %v1425 = vld [vmem:[#allocation2 + $0x47] sm:$0xff]
        %v1426 = vld [vmem:[#allocation2 + $0x4f] sm:$0xff]
        %v1427 = vld [vmem:[#allocation2 + $0x57] sm:$0xff]
        %v1428 = vld [vmem:[#allocation2 + $0x5f] sm:$0xff]
        %v1429 = vld [vmem:[#allocation2 + $0x67] sm:$0xff]
        %v1430 = vld [vmem:[#allocation2 + $0x6f] sm:$0xff]
        %v1431 = vld [vmem:[#allocation2 + $0x77] sm:$0xff]
        %v1432 = vld [vmem:[#allocation2 + $0x7f] sm:$0xff]
        %v1433 = vld [vmem:[#allocation2 + $0x87] sm:$0xff]
        %v1434 = vld [vmem:[#allocation2 + $0x8f] sm:$0xff]
        %v1435 = vld [vmem:[#allocation2 + $0x97] sm:$0xff]
        %v1436 = vld [vmem:[#allocation2 + $0x9f] sm:$0xff]
        %v1437 = vld [vmem:[#allocation2 + $0xa7] sm:$0xff]
        %v1438 = vld [vmem:[#allocation2 + $0xaf] sm:$0xff]
        %v1439 = vld [vmem:[#allocation2 + $0xb7] sm:$0xff]
        %v1440 = vld [vmem:[#allocation2 + $0xbf] sm:$0xff]
        %v1441 = vld [vmem:[#allocation2 + $0xc7] sm:$0xff]
        %v1442 = vld [vmem:[#allocation2 + $0xcf] sm:$0xff]
        %v1443 = vld [vmem:[#allocation2 + $0xd7] sm:$0xff]
        %v1444 = vld [vmem:[#allocation2 + $0xdf] sm:$0xff]
        %v1445 = vld [vmem:[#allocation2 + $0xe7] sm:$0xff]
        %v1446 = vld [vmem:[#allocation2 + $0xef] sm:$0xff]
        %v1447 = vld [vmem:[#allocation2 + $0xf7] sm:$0xff]
        %v1448 = vld [vmem:[#allocation2 + $0xff] sm:$0xff]
        %v1449 = vsel %vm938, 1, 0
        %v1450 = vsel %vm939, 1, 0
        %v1451 = vsel %vm940, 1, 0
        %v1452 = vsel %vm941, 1, 0
        %v1453 = vsel %vm942, 1, 0
        %v1454 = vsel %vm943, 1, 0
        %v1455 = vsel %vm944, 1, 0
        %v1456 = vsel %vm945, 1, 0
        %v1457 = vsel %vm946, 1, 0
        %v1458 = vsel %vm947, 1, 0
        %v1459 = vsel %vm948, 1, 0
        %v1460 = vsel %vm949, 1, 0
        %v1461 = vsel %vm950, 1, 0
        %v1462 = vsel %vm951, 1, 0
        %v1463 = vsel %vm952, 1, 0
        %v1464 = vsel %vm953, 1, 0
        %v1465 = vsel %vm954, 1, 0
        %v1466 = vsel %vm955, 1, 0
        %v1467 = vsel %vm956, 1, 0
        %v1468 = vsel %vm957, 1, 0
        %v1469 = vsel %vm958, 1, 0
        %v1470 = vsel %vm959, 1, 0
        %v1471 = vsel %vm960, 1, 0
        %v1472 = vsel %vm961, 1, 0
        %v1473 = vsel %vm962, 1, 0
        %v1474 = vsel %vm963, 1, 0
        %v1475 = vsel %vm964, 1, 0
        %v1476 = vsel %vm965, 1, 0
        %v1477 = vsel %vm966, 1, 0
        %v1478 = vsel %vm967, 1, 0
        %v1479 = vsel %vm968, 1, 0
        %v1480 = vsel %vm969, 1, 0
        %vm1481 = vcmp.eq.s32.totalorder %v1449, 1
        %vm1482 = vcmp.eq.s32.totalorder %v1450, 1
        %vm1483 = vcmp.eq.s32.totalorder %v1451, 1
        %vm1484 = vcmp.eq.s32.totalorder %v1452, 1
        %vm1485 = vcmp.eq.s32.totalorder %v1453, 1
        %vm1486 = vcmp.eq.s32.totalorder %v1454, 1
        %vm1487 = vcmp.eq.s32.totalorder %v1455, 1
        %vm1488 = vcmp.eq.s32.totalorder %v1456, 1
        %vm1489 = vcmp.eq.s32.totalorder %v1457, 1
        %vm1490 = vcmp.eq.s32.totalorder %v1458, 1
        %vm1491 = vcmp.eq.s32.totalorder %v1459, 1
        %vm1492 = vcmp.eq.s32.totalorder %v1460, 1
        %vm1493 = vcmp.eq.s32.totalorder %v1461, 1
        %vm1494 = vcmp.eq.s32.totalorder %v1462, 1
        %vm1495 = vcmp.eq.s32.totalorder %v1463, 1
        %vm1496 = vcmp.eq.s32.totalorder %v1464, 1
        %vm1497 = vcmp.eq.s32.totalorder %v1465, 1
        %vm1498 = vcmp.eq.s32.totalorder %v1466, 1
        %vm1499 = vcmp.eq.s32.totalorder %v1467, 1
        %vm1500 = vcmp.eq.s32.totalorder %v1468, 1
        %vm1501 = vcmp.eq.s32.totalorder %v1469, 1
        %vm1502 = vcmp.eq.s32.totalorder %v1470, 1
        %vm1503 = vcmp.eq.s32.totalorder %v1471, 1
        %vm1504 = vcmp.eq.s32.totalorder %v1472, 1
        %vm1505 = vcmp.eq.s32.totalorder %v1473, 1
        %vm1506 = vcmp.eq.s32.totalorder %v1474, 1
        %vm1507 = vcmp.eq.s32.totalorder %v1475, 1
        %vm1508 = vcmp.eq.s32.totalorder %v1476, 1
        %vm1509 = vcmp.eq.s32.totalorder %v1477, 1
        %vm1510 = vcmp.eq.s32.totalorder %v1478, 1
        %vm1511 = vcmp.eq.s32.totalorder %v1479, 1
        %vm1512 = vcmp.eq.s32.totalorder %v1480, 1
        %v1513 = vsel %vm1481, %v1417, 0.0
        %v1514 = vsel %vm1482, %v1418, 0.0
        %v1515 = vsel %vm1483, %v1419, 0.0
        %v1516 = vsel %vm1484, %v1420, 0.0
        %v1517 = vsel %vm1485, %v1421, 0.0
        %v1518 = vsel %vm1486, %v1422, 0.0
        %v1519 = vsel %vm1487, %v1423, 0.0
        %v1520 = vsel %vm1488, %v1424, 0.0
        %v1521 = vsel %vm1489, %v1425, 0.0
        %v1522 = vsel %vm1490, %v1426, 0.0
        %v1523 = vsel %vm1491, %v1427, 0.0
        %v1524 = vsel %vm1492, %v1428, 0.0
        %v1525 = vsel %vm1493, %v1429, 0.0
        %v1526 = vsel %vm1494, %v1430, 0.0
        %v1527 = vsel %vm1495, %v1431, 0.0
        %v1528 = vsel %vm1496, %v1432, 0.0
        %v1529 = vsel %vm1497, %v1433, 0.0
        %v1530 = vsel %vm1498, %v1434, 0.0
        %v1531 = vsel %vm1499, %v1435, 0.0
        %v1532 = vsel %vm1500, %v1436, 0.0
        %v1533 = vsel %vm1501, %v1437, 0.0
        %v1534 = vsel %vm1502, %v1438, 0.0
        %v1535 = vsel %vm1503, %v1439, 0.0
        %v1536 = vsel %vm1504, %v1440, 0.0
        %v1537 = vsel %vm1505, %v1441, 0.0
        %v1538 = vsel %vm1506, %v1442, 0.0
        %v1539 = vsel %vm1507, %v1443, 0.0
        %v1540 = vsel %vm1508, %v1444, 0.0
        %v1541 = vsel %vm1509, %v1445, 0.0
        %v1542 = vsel %vm1510, %v1446, 0.0
        %v1543 = vsel %vm1511, %v1447, 0.0
        %v1544 = vsel %vm1512, %v1448, 0.0
        %v1545 = vld [vmem:[#allocation2 + $0x8] sm:$0xff]
        %v1546 = vld [vmem:[#allocation2 + $0x10] sm:$0xff]
        %v1547 = vld [vmem:[#allocation2 + $0x18] sm:$0xff]
        %v1548 = vld [vmem:[#allocation2 + $0x20] sm:$0xff]
        %v1549 = vld [vmem:[#allocation2 + $0x28] sm:$0xff]
        %v1550 = vld [vmem:[#allocation2 + $0x30] sm:$0xff]
        %v1551 = vld [vmem:[#allocation2 + $0x38] sm:$0xff]
        %v1552 = vld [vmem:[#allocation2 + $0x40] sm:$0xff]
        %v1553 = vld [vmem:[#allocation2 + $0x48] sm:$0xff]
        %v1554 = vld [vmem:[#allocation2 + $0x50] sm:$0xff]
        %v1555 = vld [vmem:[#allocation2 + $0x58] sm:$0xff]
        %v1556 = vld [vmem:[#allocation2 + $0x60] sm:$0xff]
        %v1557 = vld [vmem:[#allocation2 + $0x68] sm:$0xff]
        %v1558 = vld [vmem:[#allocation2 + $0x70] sm:$0xff]
        %v1559 = vld [vmem:[#allocation2 + $0x78] sm:$0xff]
        %v1560 = vld [vmem:[#allocation2 + $0x80] sm:$0xff]
        %v1561 = vld [vmem:[#allocation2 + $0x88] sm:$0xff]
        %v1562 = vld [vmem:[#allocation2 + $0x90] sm:$0xff]
        %v1563 = vld [vmem:[#allocation2 + $0x98] sm:$0xff]
        %v1564 = vld [vmem:[#allocation2 + $0xa0] sm:$0xff]
        %v1565 = vld [vmem:[#allocation2 + $0xa8] sm:$0xff]
        %v1566 = vld [vmem:[#allocation2 + $0xb0] sm:$0xff]
        %v1567 = vld [vmem:[#allocation2 + $0xb8] sm:$0xff]
        %v1568 = vld [vmem:[#allocation2 + $0xc0] sm:$0xff]
        %v1569 = vld [vmem:[#allocation2 + $0xc8] sm:$0xff]
        %v1570 = vld [vmem:[#allocation2 + $0xd0] sm:$0xff]
        %v1571 = vld [vmem:[#allocation2 + $0xd8] sm:$0xff]
        %v1572 = vld [vmem:[#allocation2 + $0xe0] sm:$0xff]
        %v1573 = vld [vmem:[#allocation2 + $0xe8] sm:$0xff]
        %v1574 = vld [vmem:[#allocation2 + $0xf0] sm:$0xff]
        %v1575 = vld [vmem:[#allocation2 + $0xf8] sm:$0xff]
        %v1576 = vld [vmem:[#allocation2 + $0x100] sm:$0xff]
        %v1577 = vld [vmem:[#allocation2 + $0x9] sm:$0xff]
        %v1578 = vld [vmem:[#allocation2 + $0x11] sm:$0xff]
        %v1579 = vld [vmem:[#allocation2 + $0x19] sm:$0xff]
        %v1580 = vld [vmem:[#allocation2 + $0x21] sm:$0xff]
        %v1581 = vld [vmem:[#allocation2 + $0x29] sm:$0xff]
        %v1582 = vld [vmem:[#allocation2 + $0x31] sm:$0xff]
        %v1583 = vld [vmem:[#allocation2 + $0x39] sm:$0xff]
        %v1584 = vld [vmem:[#allocation2 + $0x41] sm:$0xff]
        %v1585 = vld [vmem:[#allocation2 + $0x49] sm:$0xff]
        %v1586 = vld [vmem:[#allocation2 + $0x51] sm:$0xff]
        %v1587 = vld [vmem:[#allocation2 + $0x59] sm:$0xff]
        %v1588 = vld [vmem:[#allocation2 + $0x61] sm:$0xff]
        %v1589 = vld [vmem:[#allocation2 + $0x69] sm:$0xff]
        %v1590 = vld [vmem:[#allocation2 + $0x71] sm:$0xff]
        %v1591 = vld [vmem:[#allocation2 + $0x79] sm:$0xff]
        %v1592 = vld [vmem:[#allocation2 + $0x81] sm:$0xff]
        %v1593 = vld [vmem:[#allocation2 + $0x89] sm:$0xff]
        %v1594 = vld [vmem:[#allocation2 + $0x91] sm:$0xff]
        %v1595 = vld [vmem:[#allocation2 + $0x99] sm:$0xff]
        %v1596 = vld [vmem:[#allocation2 + $0xa1] sm:$0xff]
        %v1597 = vld [vmem:[#allocation2 + $0xa9] sm:$0xff]
        %v1598 = vld [vmem:[#allocation2 + $0xb1] sm:$0xff]
        %v1599 = vld [vmem:[#allocation2 + $0xb9] sm:$0xff]
        %v1600 = vld [vmem:[#allocation2 + $0xc1] sm:$0xff]
        %v1601 = vld [vmem:[#allocation2 + $0xc9] sm:$0xff]
        %v1602 = vld [vmem:[#allocation2 + $0xd1] sm:$0xff]
        %v1603 = vld [vmem:[#allocation2 + $0xd9] sm:$0xff]
        %v1604 = vld [vmem:[#allocation2 + $0xe1] sm:$0xff]
        %v1605 = vld [vmem:[#allocation2 + $0xe9] sm:$0xff]
        %v1606 = vld [vmem:[#allocation2 + $0xf1] sm:$0xff]
        %v1607 = vld [vmem:[#allocation2 + $0xf9] sm:$0xff]
        %v1608 = vld [vmem:[#allocation2 + $0x101] sm:$0xff]
        %v1609 = vsel %vm970, 1, 0
        %v1610 = vsel %vm971, 1, 0
        %v1611 = vsel %vm972, 1, 0
        %v1612 = vsel %vm973, 1, 0
        %v1613 = vsel %vm974, 1, 0
        %v1614 = vsel %vm975, 1, 0
        %v1615 = vsel %vm976, 1, 0
        %v1616 = vsel %vm977, 1, 0
        %v1617 = vsel %vm978, 1, 0
        %v1618 = vsel %vm979, 1, 0
        %v1619 = vsel %vm980, 1, 0
        %v1620 = vsel %vm981, 1, 0
        %v1621 = vsel %vm982, 1, 0
        %v1622 = vsel %vm983, 1, 0
        %v1623 = vsel %vm984, 1, 0
        %v1624 = vsel %vm985, 1, 0
        %v1625 = vsel %vm986, 1, 0
        %v1626 = vsel %vm987, 1, 0
        %v1627 = vsel %vm988, 1, 0
        %v1628 = vsel %vm989, 1, 0
        %v1629 = vsel %vm990, 1, 0
        %v1630 = vsel %vm991, 1, 0
        %v1631 = vsel %vm992, 1, 0
        %v1632 = vsel %vm993, 1, 0
        %v1633 = vsel %vm994, 1, 0
        %v1634 = vsel %vm995, 1, 0
        %v1635 = vsel %vm996, 1, 0
        %v1636 = vsel %vm997, 1, 0
        %v1637 = vsel %vm998, 1, 0
        %v1638 = vsel %vm999, 1, 0
        %v1639 = vsel %vm1000, 1, 0
        %v1640 = vsel %vm1001, 1, 0
        %vm1641 = vcmp.eq.s32.totalorder %v1609, 1
        %vm1642 = vcmp.eq.s32.totalorder %v1610, 1
        %vm1643 = vcmp.eq.s32.totalorder %v1611, 1
        %vm1644 = vcmp.eq.s32.totalorder %v1612, 1
        %vm1645 = vcmp.eq.s32.totalorder %v1613, 1
        %vm1646 = vcmp.eq.s32.totalorder %v1614, 1
        %vm1647 = vcmp.eq.s32.totalorder %v1615, 1
        %vm1648 = vcmp.eq.s32.totalorder %v1616, 1
        %vm1649 = vcmp.eq.s32.totalorder %v1617, 1
        %vm1650 = vcmp.eq.s32.totalorder %v1618, 1
        %vm1651 = vcmp.eq.s32.totalorder %v1619, 1
        %vm1652 = vcmp.eq.s32.totalorder %v1620, 1
        %vm1653 = vcmp.eq.s32.totalorder %v1621, 1
        %vm1654 = vcmp.eq.s32.totalorder %v1622, 1
        %vm1655 = vcmp.eq.s32.totalorder %v1623, 1
        %vm1656 = vcmp.eq.s32.totalorder %v1624, 1
        %vm1657 = vcmp.eq.s32.totalorder %v1625, 1
        %vm1658 = vcmp.eq.s32.totalorder %v1626, 1
        %vm1659 = vcmp.eq.s32.totalorder %v1627, 1
        %vm1660 = vcmp.eq.s32.totalorder %v1628, 1
        %vm1661 = vcmp.eq.s32.totalorder %v1629, 1
        %vm1662 = vcmp.eq.s32.totalorder %v1630, 1
        %vm1663 = vcmp.eq.s32.totalorder %v1631, 1
        %vm1664 = vcmp.eq.s32.totalorder %v1632, 1
        %vm1665 = vcmp.eq.s32.totalorder %v1633, 1
        %vm1666 = vcmp.eq.s32.totalorder %v1634, 1
        %vm1667 = vcmp.eq.s32.totalorder %v1635, 1
        %vm1668 = vcmp.eq.s32.totalorder %v1636, 1
        %vm1669 = vcmp.eq.s32.totalorder %v1637, 1
        %vm1670 = vcmp.eq.s32.totalorder %v1638, 1
        %vm1671 = vcmp.eq.s32.totalorder %v1639, 1
        %vm1672 = vcmp.eq.s32.totalorder %v1640, 1
        %v1673 = vsel %vm1641, %v1577, 0.0
        %v1674 = vsel %vm1642, %v1578, 0.0
        %v1675 = vsel %vm1643, %v1579, 0.0
        %v1676 = vsel %vm1644, %v1580, 0.0
        %v1677 = vsel %vm1645, %v1581, 0.0
        %v1678 = vsel %vm1646, %v1582, 0.0
        %v1679 = vsel %vm1647, %v1583, 0.0
        %v1680 = vsel %vm1648, %v1584, 0.0
        %v1681 = vsel %vm1649, %v1585, 0.0
        %v1682 = vsel %vm1650, %v1586, 0.0
        %v1683 = vsel %vm1651, %v1587, 0.0
        %v1684 = vsel %vm1652, %v1588, 0.0
        %v1685 = vsel %vm1653, %v1589, 0.0
        %v1686 = vsel %vm1654, %v1590, 0.0
        %v1687 = vsel %vm1655, %v1591, 0.0
        %v1688 = vsel %vm1656, %v1592, 0.0
        %v1689 = vsel %vm1657, %v1593, 0.0
        %v1690 = vsel %vm1658, %v1594, 0.0
        %v1691 = vsel %vm1659, %v1595, 0.0
        %v1692 = vsel %vm1660, %v1596, 0.0
        %v1693 = vsel %vm1661, %v1597, 0.0
        %v1694 = vsel %vm1662, %v1598, 0.0
        %v1695 = vsel %vm1663, %v1599, 0.0
        %v1696 = vsel %vm1664, %v1600, 0.0
        %v1697 = vsel %vm1665, %v1601, 0.0
        %v1698 = vsel %vm1666, %v1602, 0.0
        %v1699 = vsel %vm1667, %v1603, 0.0
        %v1700 = vsel %vm1668, %v1604, 0.0
        %v1701 = vsel %vm1669, %v1605, 0.0
        %v1702 = vsel %vm1670, %v1606, 0.0
        %v1703 = vsel %vm1671, %v1607, 0.0
        %v1704 = vsel %vm1672, %v1608, 0.0
        %v1705 = vld [vmem:[#allocation2 + $0x107] sm:$0xff]
        %v1706 = vld [vmem:[#allocation2 + $0x10f] sm:$0xff]
        %v1707 = vsel %vm1481, %v1419, 0.0
        %v1708 = vsel %vm1482, %v1420, 0.0
        %v1709 = vsel %vm1483, %v1421, 0.0
        %v1710 = vsel %vm1484, %v1422, 0.0
        %v1711 = vsel %vm1485, %v1423, 0.0
        %v1712 = vsel %vm1486, %v1424, 0.0
        %v1713 = vsel %vm1487, %v1425, 0.0
        %v1714 = vsel %vm1488, %v1426, 0.0
        %v1715 = vsel %vm1489, %v1427, 0.0
        %v1716 = vsel %vm1490, %v1428, 0.0
        %v1717 = vsel %vm1491, %v1429, 0.0
        %v1718 = vsel %vm1492, %v1430, 0.0
        %v1719 = vsel %vm1493, %v1431, 0.0
        %v1720 = vsel %vm1494, %v1432, 0.0
        %v1721 = vsel %vm1495, %v1433, 0.0
        %v1722 = vsel %vm1496, %v1434, 0.0
        %v1723 = vsel %vm1497, %v1435, 0.0
        %v1724 = vsel %vm1498, %v1436, 0.0
        %v1725 = vsel %vm1499, %v1437, 0.0
        %v1726 = vsel %vm1500, %v1438, 0.0
        %v1727 = vsel %vm1501, %v1439, 0.0
        %v1728 = vsel %vm1502, %v1440, 0.0
        %v1729 = vsel %vm1503, %v1441, 0.0
        %v1730 = vsel %vm1504, %v1442, 0.0
        %v1731 = vsel %vm1505, %v1443, 0.0
        %v1732 = vsel %vm1506, %v1444, 0.0
        %v1733 = vsel %vm1507, %v1445, 0.0
        %v1734 = vsel %vm1508, %v1446, 0.0
        %v1735 = vsel %vm1509, %v1447, 0.0
        %v1736 = vsel %vm1510, %v1448, 0.0
        %v1737 = vsel %vm1511, %v1705, 0.0
        %v1738 = vsel %vm1512, %v1706, 0.0
        %v1739 = vld [vmem:[#allocation2 + $0x108] sm:$0xff]
        %v1740 = vld [vmem:[#allocation2 + $0x110] sm:$0xff]
        %v1741 = vld [vmem:[#allocation2 + $0x109] sm:$0xff]
        %v1742 = vld [vmem:[#allocation2 + $0x111] sm:$0xff]
        %v1743 = vsel %vm1641, %v1579, 0.0
        %v1744 = vsel %vm1642, %v1580, 0.0
        %v1745 = vsel %vm1643, %v1581, 0.0
        %v1746 = vsel %vm1644, %v1582, 0.0
        %v1747 = vsel %vm1645, %v1583, 0.0
        %v1748 = vsel %vm1646, %v1584, 0.0
        %v1749 = vsel %vm1647, %v1585, 0.0
        %v1750 = vsel %vm1648, %v1586, 0.0
        %v1751 = vsel %vm1649, %v1587, 0.0
        %v1752 = vsel %vm1650, %v1588, 0.0
        %v1753 = vsel %vm1651, %v1589, 0.0
        %v1754 = vsel %vm1652, %v1590, 0.0
        %v1755 = vsel %vm1653, %v1591, 0.0
        %v1756 = vsel %vm1654, %v1592, 0.0
        %v1757 = vsel %vm1655, %v1593, 0.0
        %v1758 = vsel %vm1656, %v1594, 0.0
        %v1759 = vsel %vm1657, %v1595, 0.0
        %v1760 = vsel %vm1658, %v1596, 0.0
        %v1761 = vsel %vm1659, %v1597, 0.0
        %v1762 = vsel %vm1660, %v1598, 0.0
        %v1763 = vsel %vm1661, %v1599, 0.0
        %v1764 = vsel %vm1662, %v1600, 0.0
        %v1765 = vsel %vm1663, %v1601, 0.0
        %v1766 = vsel %vm1664, %v1602, 0.0
        %v1767 = vsel %vm1665, %v1603, 0.0
        %v1768 = vsel %vm1666, %v1604, 0.0
        %v1769 = vsel %vm1667, %v1605, 0.0
        %v1770 = vsel %vm1668, %v1606, 0.0
        %v1771 = vsel %vm1669, %v1607, 0.0
        %v1772 = vsel %vm1670, %v1608, 0.0
        %v1773 = vsel %vm1671, %v1741, 0.0
        %v1774 = vsel %vm1672, %v1742, 0.0
        %v1775 = vld [vmem:[#allocation2 + $0x117] sm:$0xff]
        %v1776 = vld [vmem:[#allocation2 + $0x11f] sm:$0xff]
        %v1777 = vsel %vm1481, %v1421, 0.0
        %v1778 = vsel %vm1482, %v1422, 0.0
        %v1779 = vsel %vm1483, %v1423, 0.0
        %v1780 = vsel %vm1484, %v1424, 0.0
        %v1781 = vsel %vm1485, %v1425, 0.0
        %v1782 = vsel %vm1486, %v1426, 0.0
        %v1783 = vsel %vm1487, %v1427, 0.0
        %v1784 = vsel %vm1488, %v1428, 0.0
        %v1785 = vsel %vm1489, %v1429, 0.0
        %v1786 = vsel %vm1490, %v1430, 0.0
        %v1787 = vsel %vm1491, %v1431, 0.0
        %v1788 = vsel %vm1492, %v1432, 0.0
        %v1789 = vsel %vm1493, %v1433, 0.0
        %v1790 = vsel %vm1494, %v1434, 0.0
        %v1791 = vsel %vm1495, %v1435, 0.0
        %v1792 = vsel %vm1496, %v1436, 0.0
        %v1793 = vsel %vm1497, %v1437, 0.0
        %v1794 = vsel %vm1498, %v1438, 0.0
        %v1795 = vsel %vm1499, %v1439, 0.0
        %v1796 = vsel %vm1500, %v1440, 0.0
        %v1797 = vsel %vm1501, %v1441, 0.0
        %v1798 = vsel %vm1502, %v1442, 0.0
        %v1799 = vsel %vm1503, %v1443, 0.0
        %v1800 = vsel %vm1504, %v1444, 0.0
        %v1801 = vsel %vm1505, %v1445, 0.0
        %v1802 = vsel %vm1506, %v1446, 0.0
        %v1803 = vsel %vm1507, %v1447, 0.0
        %v1804 = vsel %vm1508, %v1448, 0.0
        %v1805 = vsel %vm1509, %v1705, 0.0
        %v1806 = vsel %vm1510, %v1706, 0.0
        %v1807 = vsel %vm1511, %v1775, 0.0
        %v1808 = vsel %vm1512, %v1776, 0.0
        %v1809 = vld [vmem:[#allocation2 + $0x118] sm:$0xff]
        %v1810 = vld [vmem:[#allocation2 + $0x120] sm:$0xff]
        %v1811 = vld [vmem:[#allocation2 + $0x119] sm:$0xff]
        %v1812 = vld [vmem:[#allocation2 + $0x121] sm:$0xff]
        %v1813 = vsel %vm1641, %v1581, 0.0
        %v1814 = vsel %vm1642, %v1582, 0.0
        %v1815 = vsel %vm1643, %v1583, 0.0
        %v1816 = vsel %vm1644, %v1584, 0.0
        %v1817 = vsel %vm1645, %v1585, 0.0
        %v1818 = vsel %vm1646, %v1586, 0.0
        %v1819 = vsel %vm1647, %v1587, 0.0
        %v1820 = vsel %vm1648, %v1588, 0.0
        %v1821 = vsel %vm1649, %v1589, 0.0
        %v1822 = vsel %vm1650, %v1590, 0.0
        %v1823 = vsel %vm1651, %v1591, 0.0
        %v1824 = vsel %vm1652, %v1592, 0.0
        %v1825 = vsel %vm1653, %v1593, 0.0
        %v1826 = vsel %vm1654, %v1594, 0.0
        %v1827 = vsel %vm1655, %v1595, 0.0
        %v1828 = vsel %vm1656, %v1596, 0.0
        %v1829 = vsel %vm1657, %v1597, 0.0
        %v1830 = vsel %vm1658, %v1598, 0.0
        %v1831 = vsel %vm1659, %v1599, 0.0
        %v1832 = vsel %vm1660, %v1600, 0.0
        %v1833 = vsel %vm1661, %v1601, 0.0
        %v1834 = vsel %vm1662, %v1602, 0.0
        %v1835 = vsel %vm1663, %v1603, 0.0
        %v1836 = vsel %vm1664, %v1604, 0.0
        %v1837 = vsel %vm1665, %v1605, 0.0
        %v1838 = vsel %vm1666, %v1606, 0.0
        %v1839 = vsel %vm1667, %v1607, 0.0
        %v1840 = vsel %vm1668, %v1608, 0.0
        %v1841 = vsel %vm1669, %v1741, 0.0
        %v1842 = vsel %vm1670, %v1742, 0.0
        %v1843 = vsel %vm1671, %v1811, 0.0
        %v1844 = vsel %vm1672, %v1812, 0.0
        %1877 = vrot.lane.b32.xlu0 %v1545, 48
        %v1878 = vpop.permute.xlu0 %1877
        %1879 = vrot.lane.b32.xlu0 %v1546, 48
        %v1880 = vpop.permute.xlu0 %1879
        %1881 = vrot.lane.b32.xlu0 %v1547, 48
        %v1882 = vpop.permute.xlu0 %1881
        %1883 = vrot.lane.b32.xlu0 %v1548, 48
        %v1884 = vpop.permute.xlu0 %1883
        %1885 = vrot.lane.b32.xlu0 %v1549, 48
        %v1886 = vpop.permute.xlu0 %1885
        %1887 = vrot.lane.b32.xlu0 %v1550, 48
        %v1888 = vpop.permute.xlu0 %1887
        %1889 = vrot.lane.b32.xlu0 %v1551, 48
        %v1890 = vpop.permute.xlu0 %1889
        %1891 = vrot.lane.b32.xlu0 %v1552, 48
        %v1892 = vpop.permute.xlu0 %1891
        %1893 = vrot.lane.b32.xlu0 %v1553, 48
        %v1894 = vpop.permute.xlu0 %1893
        %1895 = vrot.lane.b32.xlu0 %v1554, 48
        %v1896 = vpop.permute.xlu0 %1895
        %1897 = vrot.lane.b32.xlu0 %v1555, 48
        %v1898 = vpop.permute.xlu0 %1897
        %1899 = vrot.lane.b32.xlu0 %v1556, 48
        %v1900 = vpop.permute.xlu0 %1899
        %1901 = vrot.lane.b32.xlu0 %v1557, 48
        %v1902 = vpop.permute.xlu0 %1901
        %1903 = vrot.lane.b32.xlu0 %v1558, 48
        %v1904 = vpop.permute.xlu0 %1903
        %1905 = vrot.lane.b32.xlu0 %v1559, 48
        %v1906 = vpop.permute.xlu0 %1905
        %1907 = vrot.lane.b32.xlu0 %v1560, 48
        %v1908 = vpop.permute.xlu0 %1907
        %1909 = vrot.lane.b32.xlu0 %v1561, 48
        %v1910 = vpop.permute.xlu0 %1909
        %1911 = vrot.lane.b32.xlu0 %v1562, 48
        %v1912 = vpop.permute.xlu0 %1911
        %1913 = vrot.lane.b32.xlu0 %v1563, 48
        %v1914 = vpop.permute.xlu0 %1913
        %1915 = vrot.lane.b32.xlu0 %v1564, 48
        %v1916 = vpop.permute.xlu0 %1915
        %1917 = vrot.lane.b32.xlu0 %v1565, 48
        %v1918 = vpop.permute.xlu0 %1917
        %1919 = vrot.lane.b32.xlu0 %v1566, 48
        %v1920 = vpop.permute.xlu0 %1919
        %1921 = vrot.lane.b32.xlu0 %v1567, 48
        %v1922 = vpop.permute.xlu0 %1921
        %1923 = vrot.lane.b32.xlu0 %v1568, 48
        %v1924 = vpop.permute.xlu0 %1923
        %1925 = vrot.lane.b32.xlu0 %v1569, 48
        %v1926 = vpop.permute.xlu0 %1925
        %1927 = vrot.lane.b32.xlu0 %v1570, 48
        %v1928 = vpop.permute.xlu0 %1927
        %1929 = vrot.lane.b32.xlu0 %v1571, 48
        %v1930 = vpop.permute.xlu0 %1929
        %1931 = vrot.lane.b32.xlu0 %v1572, 48
        %v1932 = vpop.permute.xlu0 %1931
        %1933 = vrot.lane.b32.xlu0 %v1573, 48
        %v1934 = vpop.permute.xlu0 %1933
        %1935 = vrot.lane.b32.xlu0 %v1574, 48
        %v1936 = vpop.permute.xlu0 %1935
        %1937 = vrot.lane.b32.xlu0 %v1575, 48
        %v1938 = vpop.permute.xlu0 %1937
        %1939 = vrot.lane.b32.xlu0 %v1576, 48
        %v1940 = vpop.permute.xlu0 %1939
        %2005 = vrot.lane.b32.xlu0 %v1673, 96
        %v2006 = vpop.permute.xlu0 %2005
        %2007 = vrot.lane.b32.xlu0 %v1674, 96
        %v2008 = vpop.permute.xlu0 %2007
        %2009 = vrot.lane.b32.xlu0 %v1675, 96
        %v2010 = vpop.permute.xlu0 %2009
        %2011 = vrot.lane.b32.xlu0 %v1676, 96
        %v2012 = vpop.permute.xlu0 %2011
        %2013 = vrot.lane.b32.xlu0 %v1677, 96
        %v2014 = vpop.permute.xlu0 %2013
        %2015 = vrot.lane.b32.xlu0 %v1678, 96
        %v2016 = vpop.permute.xlu0 %2015
        %2017 = vrot.lane.b32.xlu0 %v1679, 96
        %v2018 = vpop.permute.xlu0 %2017
        %2019 = vrot.lane.b32.xlu0 %v1680, 96
        %v2020 = vpop.permute.xlu0 %2019
        %2021 = vrot.lane.b32.xlu0 %v1681, 96
        %v2022 = vpop.permute.xlu0 %2021
        %2023 = vrot.lane.b32.xlu0 %v1682, 96
        %v2024 = vpop.permute.xlu0 %2023
        %2025 = vrot.lane.b32.xlu0 %v1683, 96
        %v2026 = vpop.permute.xlu0 %2025
        %2027 = vrot.lane.b32.xlu0 %v1684, 96
        %v2028 = vpop.permute.xlu0 %2027
        %2029 = vrot.lane.b32.xlu0 %v1685, 96
        %v2030 = vpop.permute.xlu0 %2029
        %2031 = vrot.lane.b32.xlu0 %v1686, 96
        %v2032 = vpop.permute.xlu0 %2031
        %2033 = vrot.lane.b32.xlu0 %v1687, 96
        %v2034 = vpop.permute.xlu0 %2033
        %2035 = vrot.lane.b32.xlu0 %v1688, 96
        %v2036 = vpop.permute.xlu0 %2035
        %2037 = vrot.lane.b32.xlu0 %v1689, 96
        %v2038 = vpop.permute.xlu0 %2037
        %2039 = vrot.lane.b32.xlu0 %v1690, 96
        %v2040 = vpop.permute.xlu0 %2039
        %2041 = vrot.lane.b32.xlu0 %v1691, 96
        %v2042 = vpop.permute.xlu0 %2041
        %2043 = vrot.lane.b32.xlu0 %v1692, 96
        %v2044 = vpop.permute.xlu0 %2043
        %2045 = vrot.lane.b32.xlu0 %v1693, 96
        %v2046 = vpop.permute.xlu0 %2045
        %2047 = vrot.lane.b32.xlu0 %v1694, 96
        %v2048 = vpop.permute.xlu0 %2047
        %2049 = vrot.lane.b32.xlu0 %v1695, 96
        %v2050 = vpop.permute.xlu0 %2049
        %2051 = vrot.lane.b32.xlu0 %v1696, 96
        %v2052 = vpop.permute.xlu0 %2051
        %2053 = vrot.lane.b32.xlu0 %v1697, 96
        %v2054 = vpop.permute.xlu0 %2053
        %2055 = vrot.lane.b32.xlu0 %v1698, 96
        %v2056 = vpop.permute.xlu0 %2055
        %2057 = vrot.lane.b32.xlu0 %v1699, 96
        %v2058 = vpop.permute.xlu0 %2057
        %2059 = vrot.lane.b32.xlu0 %v1700, 96
        %v2060 = vpop.permute.xlu0 %2059
        %2061 = vrot.lane.b32.xlu0 %v1701, 96
        %v2062 = vpop.permute.xlu0 %2061
        %2063 = vrot.lane.b32.xlu0 %v1702, 96
        %v2064 = vpop.permute.xlu0 %2063
        %2065 = vrot.lane.b32.xlu0 %v1703, 96
        %v2066 = vpop.permute.xlu0 %2065
        %2067 = vrot.lane.b32.xlu0 %v1704, 96
        %v2068 = vpop.permute.xlu0 %2067
        %2133 = vrot.lane.b32.xlu0 %v1707, 16
        %v2134 = vpop.permute.xlu0 %2133
        %2135 = vrot.lane.b32.xlu0 %v1708, 16
        %v2136 = vpop.permute.xlu0 %2135
        %2137 = vrot.lane.b32.xlu0 %v1709, 16
        %v2138 = vpop.permute.xlu0 %2137
        %2139 = vrot.lane.b32.xlu0 %v1710, 16
        %v2140 = vpop.permute.xlu0 %2139
        %2141 = vrot.lane.b32.xlu0 %v1711, 16
        %v2142 = vpop.permute.xlu0 %2141
        %2143 = vrot.lane.b32.xlu0 %v1712, 16
        %v2144 = vpop.permute.xlu0 %2143
        %2145 = vrot.lane.b32.xlu0 %v1713, 16
        %v2146 = vpop.permute.xlu0 %2145
        %2147 = vrot.lane.b32.xlu0 %v1714, 16
        %v2148 = vpop.permute.xlu0 %2147
        %2149 = vrot.lane.b32.xlu0 %v1715, 16
        %v2150 = vpop.permute.xlu0 %2149
        %2151 = vrot.lane.b32.xlu0 %v1716, 16
        %v2152 = vpop.permute.xlu0 %2151
        %2153 = vrot.lane.b32.xlu0 %v1717, 16
        %v2154 = vpop.permute.xlu0 %2153
        %2155 = vrot.lane.b32.xlu0 %v1718, 16
        %v2156 = vpop.permute.xlu0 %2155
        %2157 = vrot.lane.b32.xlu0 %v1719, 16
        %v2158 = vpop.permute.xlu0 %2157
        %2159 = vrot.lane.b32.xlu0 %v1720, 16
        %v2160 = vpop.permute.xlu0 %2159
        %2161 = vrot.lane.b32.xlu0 %v1721, 16
        %v2162 = vpop.permute.xlu0 %2161
        %2163 = vrot.lane.b32.xlu0 %v1722, 16
        %v2164 = vpop.permute.xlu0 %2163
        %2165 = vrot.lane.b32.xlu0 %v1723, 16
        %v2166 = vpop.permute.xlu0 %2165
        %2167 = vrot.lane.b32.xlu0 %v1724, 16
        %v2168 = vpop.permute.xlu0 %2167
        %2169 = vrot.lane.b32.xlu0 %v1725, 16
        %v2170 = vpop.permute.xlu0 %2169
        %2171 = vrot.lane.b32.xlu0 %v1726, 16
        %v2172 = vpop.permute.xlu0 %2171
        %2173 = vrot.lane.b32.xlu0 %v1727, 16
        %v2174 = vpop.permute.xlu0 %2173
        %2175 = vrot.lane.b32.xlu0 %v1728, 16
        %v2176 = vpop.permute.xlu0 %2175
        %2177 = vrot.lane.b32.xlu0 %v1729, 16
        %v2178 = vpop.permute.xlu0 %2177
        %2179 = vrot.lane.b32.xlu0 %v1730, 16
        %v2180 = vpop.permute.xlu0 %2179
        %2181 = vrot.lane.b32.xlu0 %v1731, 16
        %v2182 = vpop.permute.xlu0 %2181
        %2183 = vrot.lane.b32.xlu0 %v1732, 16
        %v2184 = vpop.permute.xlu0 %2183
        %2185 = vrot.lane.b32.xlu0 %v1733, 16
        %v2186 = vpop.permute.xlu0 %2185
        %2187 = vrot.lane.b32.xlu0 %v1734, 16
        %v2188 = vpop.permute.xlu0 %2187
        %2189 = vrot.lane.b32.xlu0 %v1735, 16
        %v2190 = vpop.permute.xlu0 %2189
        %2191 = vrot.lane.b32.xlu0 %v1736, 16
        %v2192 = vpop.permute.xlu0 %2191
        %2193 = vrot.lane.b32.xlu0 %v1737, 16
        %v2194 = vpop.permute.xlu0 %2193
        %2195 = vrot.lane.b32.xlu0 %v1738, 16
        %v2196 = vpop.permute.xlu0 %2195
        %2231 = vrot.lane.b32.xlu0 %v1547, 64
        %v2232 = vpop.permute.xlu0 %2231
        %2233 = vrot.lane.b32.xlu0 %v1548, 64
        %v2234 = vpop.permute.xlu0 %2233
        %2235 = vrot.lane.b32.xlu0 %v1549, 64
        %v2236 = vpop.permute.xlu0 %2235
        %2237 = vrot.lane.b32.xlu0 %v1550, 64
        %v2238 = vpop.permute.xlu0 %2237
        %2239 = vrot.lane.b32.xlu0 %v1551, 64
        %v2240 = vpop.permute.xlu0 %2239
        %2241 = vrot.lane.b32.xlu0 %v1552, 64
        %v2242 = vpop.permute.xlu0 %2241
        %2243 = vrot.lane.b32.xlu0 %v1553, 64
        %v2244 = vpop.permute.xlu0 %2243
        %2245 = vrot.lane.b32.xlu0 %v1554, 64
        %v2246 = vpop.permute.xlu0 %2245
        %2247 = vrot.lane.b32.xlu0 %v1555, 64
        %v2248 = vpop.permute.xlu0 %2247
        %2249 = vrot.lane.b32.xlu0 %v1556, 64
        %v2250 = vpop.permute.xlu0 %2249
        %2251 = vrot.lane.b32.xlu0 %v1557, 64
        %v2252 = vpop.permute.xlu0 %2251
        %2253 = vrot.lane.b32.xlu0 %v1558, 64
        %v2254 = vpop.permute.xlu0 %2253
        %2255 = vrot.lane.b32.xlu0 %v1559, 64
        %v2256 = vpop.permute.xlu0 %2255
        %2257 = vrot.lane.b32.xlu0 %v1560, 64
        %v2258 = vpop.permute.xlu0 %2257
        %2259 = vrot.lane.b32.xlu0 %v1561, 64
        %v2260 = vpop.permute.xlu0 %2259
        %2261 = vrot.lane.b32.xlu0 %v1562, 64
        %v2262 = vpop.permute.xlu0 %2261
        %2263 = vrot.lane.b32.xlu0 %v1563, 64
        %v2264 = vpop.permute.xlu0 %2263
        %2265 = vrot.lane.b32.xlu0 %v1564, 64
        %v2266 = vpop.permute.xlu0 %2265
        %2267 = vrot.lane.b32.xlu0 %v1565, 64
        %v2268 = vpop.permute.xlu0 %2267
        %2269 = vrot.lane.b32.xlu0 %v1566, 64
        %v2270 = vpop.permute.xlu0 %2269
        %2271 = vrot.lane.b32.xlu0 %v1567, 64
        %v2272 = vpop.permute.xlu0 %2271
        %2273 = vrot.lane.b32.xlu0 %v1568, 64
        %v2274 = vpop.permute.xlu0 %2273
        %2275 = vrot.lane.b32.xlu0 %v1569, 64
        %v2276 = vpop.permute.xlu0 %2275
        %2277 = vrot.lane.b32.xlu0 %v1570, 64
        %v2278 = vpop.permute.xlu0 %2277
        %2279 = vrot.lane.b32.xlu0 %v1571, 64
        %v2280 = vpop.permute.xlu0 %2279
        %2281 = vrot.lane.b32.xlu0 %v1572, 64
        %v2282 = vpop.permute.xlu0 %2281
        %2283 = vrot.lane.b32.xlu0 %v1573, 64
        %v2284 = vpop.permute.xlu0 %2283
        %2285 = vrot.lane.b32.xlu0 %v1574, 64
        %v2286 = vpop.permute.xlu0 %2285
        %2287 = vrot.lane.b32.xlu0 %v1575, 64
        %v2288 = vpop.permute.xlu0 %2287
        %2289 = vrot.lane.b32.xlu0 %v1576, 64
        %v2290 = vpop.permute.xlu0 %2289
        %2291 = vrot.lane.b32.xlu0 %v1739, 64
        %v2292 = vpop.permute.xlu0 %2291
        %2293 = vrot.lane.b32.xlu0 %v1740, 64
        %v2294 = vpop.permute.xlu0 %2293
        %2359 = vrot.lane.b32.xlu0 %v1743, 112
        %v2360 = vpop.permute.xlu0 %2359
        %2361 = vrot.lane.b32.xlu0 %v1744, 112
        %v2362 = vpop.permute.xlu0 %2361
        %2363 = vrot.lane.b32.xlu0 %v1745, 112
        %v2364 = vpop.permute.xlu0 %2363
        %2365 = vrot.lane.b32.xlu0 %v1746, 112
        %v2366 = vpop.permute.xlu0 %2365
        %2367 = vrot.lane.b32.xlu0 %v1747, 112
        %v2368 = vpop.permute.xlu0 %2367
        %2369 = vrot.lane.b32.xlu0 %v1748, 112
        %v2370 = vpop.permute.xlu0 %2369
        %2371 = vrot.lane.b32.xlu0 %v1749, 112
        %v2372 = vpop.permute.xlu0 %2371
        %2373 = vrot.lane.b32.xlu0 %v1750, 112
        %v2374 = vpop.permute.xlu0 %2373
        %2375 = vrot.lane.b32.xlu0 %v1751, 112
        %v2376 = vpop.permute.xlu0 %2375
        %2377 = vrot.lane.b32.xlu0 %v1752, 112
        %v2378 = vpop.permute.xlu0 %2377
        %2379 = vrot.lane.b32.xlu0 %v1753, 112
        %v2380 = vpop.permute.xlu0 %2379
        %2381 = vrot.lane.b32.xlu0 %v1754, 112
        %v2382 = vpop.permute.xlu0 %2381
        %2383 = vrot.lane.b32.xlu0 %v1755, 112
        %v2384 = vpop.permute.xlu0 %2383
        %2385 = vrot.lane.b32.xlu0 %v1756, 112
        %v2386 = vpop.permute.xlu0 %2385
        %2387 = vrot.lane.b32.xlu0 %v1757, 112
        %v2388 = vpop.permute.xlu0 %2387
        %2389 = vrot.lane.b32.xlu0 %v1758, 112
        %v2390 = vpop.permute.xlu0 %2389
        %2391 = vrot.lane.b32.xlu0 %v1759, 112
        %v2392 = vpop.permute.xlu0 %2391
        %2393 = vrot.lane.b32.xlu0 %v1760, 112
        %v2394 = vpop.permute.xlu0 %2393
        %2395 = vrot.lane.b32.xlu0 %v1761, 112
        %v2396 = vpop.permute.xlu0 %2395
        %2397 = vrot.lane.b32.xlu0 %v1762, 112
        %v2398 = vpop.permute.xlu0 %2397
        %2399 = vrot.lane.b32.xlu0 %v1763, 112
        %v2400 = vpop.permute.xlu0 %2399
        %2401 = vrot.lane.b32.xlu0 %v1764, 112
        %v2402 = vpop.permute.xlu0 %2401
        %2403 = vrot.lane.b32.xlu0 %v1765, 112
        %v2404 = vpop.permute.xlu0 %2403
        %2405 = vrot.lane.b32.xlu0 %v1766, 112
        %v2406 = vpop.permute.xlu0 %2405
        %2407 = vrot.lane.b32.xlu0 %v1767, 112
        %v2408 = vpop.permute.xlu0 %2407
        %2409 = vrot.lane.b32.xlu0 %v1768, 112
        %v2410 = vpop.permute.xlu0 %2409
        %2411 = vrot.lane.b32.xlu0 %v1769, 112
        %v2412 = vpop.permute.xlu0 %2411
        %2413 = vrot.lane.b32.xlu0 %v1770, 112
        %v2414 = vpop.permute.xlu0 %2413
        %2415 = vrot.lane.b32.xlu0 %v1771, 112
        %v2416 = vpop.permute.xlu0 %2415
        %2417 = vrot.lane.b32.xlu0 %v1772, 112
        %v2418 = vpop.permute.xlu0 %2417
        %2419 = vrot.lane.b32.xlu0 %v1773, 112
        %v2420 = vpop.permute.xlu0 %2419
        %2421 = vrot.lane.b32.xlu0 %v1774, 112
        %v2422 = vpop.permute.xlu0 %2421
        %2487 = vrot.lane.b32.xlu0 %v1777, 32
        %v2488 = vpop.permute.xlu0 %2487
        %2489 = vrot.lane.b32.xlu0 %v1778, 32
        %v2490 = vpop.permute.xlu0 %2489
        %2491 = vrot.lane.b32.xlu0 %v1779, 32
        %v2492 = vpop.permute.xlu0 %2491
        %2493 = vrot.lane.b32.xlu0 %v1780, 32
        %v2494 = vpop.permute.xlu0 %2493
        %2495 = vrot.lane.b32.xlu0 %v1781, 32
        %v2496 = vpop.permute.xlu0 %2495
        %2497 = vrot.lane.b32.xlu0 %v1782, 32
        %v2498 = vpop.permute.xlu0 %2497
        %2499 = vrot.lane.b32.xlu0 %v1783, 32
        %v2500 = vpop.permute.xlu0 %2499
        %2501 = vrot.lane.b32.xlu0 %v1784, 32
        %v2502 = vpop.permute.xlu0 %2501
        %2503 = vrot.lane.b32.xlu0 %v1785, 32
        %v2504 = vpop.permute.xlu0 %2503
        %2505 = vrot.lane.b32.xlu0 %v1786, 32
        %v2506 = vpop.permute.xlu0 %2505
        %2507 = vrot.lane.b32.xlu0 %v1787, 32
        %v2508 = vpop.permute.xlu0 %2507
        %2509 = vrot.lane.b32.xlu0 %v1788, 32
        %v2510 = vpop.permute.xlu0 %2509
        %2511 = vrot.lane.b32.xlu0 %v1789, 32
        %v2512 = vpop.permute.xlu0 %2511
        %2513 = vrot.lane.b32.xlu0 %v1790, 32
        %v2514 = vpop.permute.xlu0 %2513
        %2515 = vrot.lane.b32.xlu0 %v1791, 32
        %v2516 = vpop.permute.xlu0 %2515
        %2517 = vrot.lane.b32.xlu0 %v1792, 32
        %v2518 = vpop.permute.xlu0 %2517
        %2519 = vrot.lane.b32.xlu0 %v1793, 32
        %v2520 = vpop.permute.xlu0 %2519
        %2521 = vrot.lane.b32.xlu0 %v1794, 32
        %v2522 = vpop.permute.xlu0 %2521
        %2523 = vrot.lane.b32.xlu0 %v1795, 32
        %v2524 = vpop.permute.xlu0 %2523
        %2525 = vrot.lane.b32.xlu0 %v1796, 32
        %v2526 = vpop.permute.xlu0 %2525
        %2527 = vrot.lane.b32.xlu0 %v1797, 32
        %v2528 = vpop.permute.xlu0 %2527
        %2529 = vrot.lane.b32.xlu0 %v1798, 32
        %v2530 = vpop.permute.xlu0 %2529
        %2531 = vrot.lane.b32.xlu0 %v1799, 32
        %v2532 = vpop.permute.xlu0 %2531
        %2533 = vrot.lane.b32.xlu0 %v1800, 32
        %v2534 = vpop.permute.xlu0 %2533
        %2535 = vrot.lane.b32.xlu0 %v1801, 32
        %v2536 = vpop.permute.xlu0 %2535
        %2537 = vrot.lane.b32.xlu0 %v1802, 32
        %v2538 = vpop.permute.xlu0 %2537
        %2539 = vrot.lane.b32.xlu0 %v1803, 32
        %v2540 = vpop.permute.xlu0 %2539
        %2541 = vrot.lane.b32.xlu0 %v1804, 32
        %v2542 = vpop.permute.xlu0 %2541
        %2543 = vrot.lane.b32.xlu0 %v1805, 32
        %v2544 = vpop.permute.xlu0 %2543
        %2545 = vrot.lane.b32.xlu0 %v1806, 32
        %v2546 = vpop.permute.xlu0 %2545
        %2547 = vrot.lane.b32.xlu0 %v1807, 32
        %v2548 = vpop.permute.xlu0 %2547
        %2549 = vrot.lane.b32.xlu0 %v1808, 32
        %v2550 = vpop.permute.xlu0 %2549
        %2585 = vrot.lane.b32.xlu0 %v1549, 80
        %v2586 = vpop.permute.xlu0 %2585
        %2587 = vrot.lane.b32.xlu0 %v1550, 80
        %v2588 = vpop.permute.xlu0 %2587
        %2589 = vrot.lane.b32.xlu0 %v1551, 80
        %v2590 = vpop.permute.xlu0 %2589
        %2591 = vrot.lane.b32.xlu0 %v1552, 80
        %v2592 = vpop.permute.xlu0 %2591
        %2593 = vrot.lane.b32.xlu0 %v1553, 80
        %v2594 = vpop.permute.xlu0 %2593
        %2595 = vrot.lane.b32.xlu0 %v1554, 80
        %v2596 = vpop.permute.xlu0 %2595
        %2597 = vrot.lane.b32.xlu0 %v1555, 80
        %v2598 = vpop.permute.xlu0 %2597
        %2599 = vrot.lane.b32.xlu0 %v1556, 80
        %v2600 = vpop.permute.xlu0 %2599
        %2601 = vrot.lane.b32.xlu0 %v1557, 80
        %v2602 = vpop.permute.xlu0 %2601
        %2603 = vrot.lane.b32.xlu0 %v1558, 80
        %v2604 = vpop.permute.xlu0 %2603
        %2605 = vrot.lane.b32.xlu0 %v1559, 80
        %v2606 = vpop.permute.xlu0 %2605
        %2607 = vrot.lane.b32.xlu0 %v1560, 80
        %v2608 = vpop.permute.xlu0 %2607
        %2609 = vrot.lane.b32.xlu0 %v1561, 80
        %v2610 = vpop.permute.xlu0 %2609
        %2611 = vrot.lane.b32.xlu0 %v1562, 80
        %v2612 = vpop.permute.xlu0 %2611
        %2613 = vrot.lane.b32.xlu0 %v1563, 80
        %v2614 = vpop.permute.xlu0 %2613
        %2615 = vrot.lane.b32.xlu0 %v1564, 80
        %v2616 = vpop.permute.xlu0 %2615
        %2617 = vrot.lane.b32.xlu0 %v1565, 80
        %v2618 = vpop.permute.xlu0 %2617
        %2619 = vrot.lane.b32.xlu0 %v1566, 80
        %v2620 = vpop.permute.xlu0 %2619
        %2621 = vrot.lane.b32.xlu0 %v1567, 80
        %v2622 = vpop.permute.xlu0 %2621
        %2623 = vrot.lane.b32.xlu0 %v1568, 80
        %v2624 = vpop.permute.xlu0 %2623
        %2625 = vrot.lane.b32.xlu0 %v1569, 80
        %v2626 = vpop.permute.xlu0 %2625
        %2627 = vrot.lane.b32.xlu0 %v1570, 80
        %v2628 = vpop.permute.xlu0 %2627
        %2629 = vrot.lane.b32.xlu0 %v1571, 80
        %v2630 = vpop.permute.xlu0 %2629
        %2631 = vrot.lane.b32.xlu0 %v1572, 80
        %v2632 = vpop.permute.xlu0 %2631
        %2633 = vrot.lane.b32.xlu0 %v1573, 80
        %v2634 = vpop.permute.xlu0 %2633
        %2635 = vrot.lane.b32.xlu0 %v1574, 80
        %v2636 = vpop.permute.xlu0 %2635
        %2637 = vrot.lane.b32.xlu0 %v1575, 80
        %v2638 = vpop.permute.xlu0 %2637
        %2639 = vrot.lane.b32.xlu0 %v1576, 80
        %v2640 = vpop.permute.xlu0 %2639
        %2641 = vrot.lane.b32.xlu0 %v1739, 80
        %v2642 = vpop.permute.xlu0 %2641
        %2643 = vrot.lane.b32.xlu0 %v1740, 80
        %v2644 = vpop.permute.xlu0 %2643
        %2645 = vrot.lane.b32.xlu0 %v1809, 80
        %v2646 = vpop.permute.xlu0 %2645
        %2647 = vrot.lane.b32.xlu0 %v1810, 80
        %v2648 = vpop.permute.xlu0 %2647
        %v2681 = vsel %vm1378, %v1513, %v1878
        %v2682 = vsel %vm1378, %v1514, %v1880
        %v2683 = vsel %vm1378, %v1515, %v1882
        %v2684 = vsel %vm1378, %v1516, %v1884
        %v2685 = vsel %vm1378, %v1517, %v1886
        %v2686 = vsel %vm1378, %v1518, %v1888
        %v2687 = vsel %vm1378, %v1519, %v1890
        %v2688 = vsel %vm1378, %v1520, %v1892
        %v2689 = vsel %vm1378, %v1521, %v1894
        %v2690 = vsel %vm1378, %v1522, %v1896
        %v2691 = vsel %vm1378, %v1523, %v1898
        %v2692 = vsel %vm1378, %v1524, %v1900
        %v2693 = vsel %vm1378, %v1525, %v1902
        %v2694 = vsel %vm1378, %v1526, %v1904
        %v2695 = vsel %vm1378, %v1527, %v1906
        %v2696 = vsel %vm1378, %v1528, %v1908
        %v2697 = vsel %vm1378, %v1529, %v1910
        %v2698 = vsel %vm1378, %v1530, %v1912
        %v2699 = vsel %vm1378, %v1531, %v1914
        %v2700 = vsel %vm1378, %v1532, %v1916
        %v2701 = vsel %vm1378, %v1533, %v1918
        %v2702 = vsel %vm1378, %v1534, %v1920
        %v2703 = vsel %vm1378, %v1535, %v1922
        %v2704 = vsel %vm1378, %v1536, %v1924
        %v2705 = vsel %vm1378, %v1537, %v1926
        %v2706 = vsel %vm1378, %v1538, %v1928
        %v2707 = vsel %vm1378, %v1539, %v1930
        %v2708 = vsel %vm1378, %v1540, %v1932
        %v2709 = vsel %vm1378, %v1541, %v1934
        %v2710 = vsel %vm1378, %v1542, %v1936
        %v2711 = vsel %vm1378, %v1543, %v1938
        %v2712 = vsel %vm1378, %v1544, %v1940
        %vm2713 = vcmask 785408
        %v2714 = vsel %vm2713, %v2681, %v2006
        %v2715 = vsel %vm2713, %v2682, %v2008
        %v2716 = vsel %vm2713, %v2683, %v2010
        %v2717 = vsel %vm2713, %v2684, %v2012
        %v2718 = vsel %vm2713, %v2685, %v2014
        %v2719 = vsel %vm2713, %v2686, %v2016
        %v2720 = vsel %vm2713, %v2687, %v2018
        %v2721 = vsel %vm2713, %v2688, %v2020
        %v2722 = vsel %vm2713, %v2689, %v2022
        %v2723 = vsel %vm2713, %v2690, %v2024
        %v2724 = vsel %vm2713, %v2691, %v2026
        %v2725 = vsel %vm2713, %v2692, %v2028
        %v2726 = vsel %vm2713, %v2693, %v2030
        %v2727 = vsel %vm2713, %v2694, %v2032
        %v2728 = vsel %vm2713, %v2695, %v2034
        %v2729 = vsel %vm2713, %v2696, %v2036
        %v2730 = vsel %vm2713, %v2697, %v2038
        %v2731 = vsel %vm2713, %v2698, %v2040
        %v2732 = vsel %vm2713, %v2699, %v2042
        %v2733 = vsel %vm2713, %v2700, %v2044
        %v2734 = vsel %vm2713, %v2701, %v2046
        %v2735 = vsel %vm2713, %v2702, %v2048
        %v2736 = vsel %vm2713, %v2703, %v2050
        %v2737 = vsel %vm2713, %v2704, %v2052
        %v2738 = vsel %vm2713, %v2705, %v2054
        %v2739 = vsel %vm2713, %v2706, %v2056
        %v2740 = vsel %vm2713, %v2707, %v2058
        %v2741 = vsel %vm2713, %v2708, %v2060
        %v2742 = vsel %vm2713, %v2709, %v2062
        %v2743 = vsel %vm2713, %v2710, %v2064
        %v2744 = vsel %vm2713, %v2711, %v2066
        %v2745 = vsel %vm2713, %v2712, %v2068
        %v2746 = vsel %vm1058, %v2006, %v2134
        %v2747 = vsel %vm1058, %v2008, %v2136
        %v2748 = vsel %vm1058, %v2010, %v2138
        %v2749 = vsel %vm1058, %v2012, %v2140
        %v2750 = vsel %vm1058, %v2014, %v2142
        %v2751 = vsel %vm1058, %v2016, %v2144
        %v2752 = vsel %vm1058, %v2018, %v2146
        %v2753 = vsel %vm1058, %v2020, %v2148
        %v2754 = vsel %vm1058, %v2022, %v2150
        %v2755 = vsel %vm1058, %v2024, %v2152
        %v2756 = vsel %vm1058, %v2026, %v2154
        %v2757 = vsel %vm1058, %v2028, %v2156
        %v2758 = vsel %vm1058, %v2030, %v2158
        %v2759 = vsel %vm1058, %v2032, %v2160
        %v2760 = vsel %vm1058, %v2034, %v2162
        %v2761 = vsel %vm1058, %v2036, %v2164
        %v2762 = vsel %vm1058, %v2038, %v2166
        %v2763 = vsel %vm1058, %v2040, %v2168
        %v2764 = vsel %vm1058, %v2042, %v2170
        %v2765 = vsel %vm1058, %v2044, %v2172
        %v2766 = vsel %vm1058, %v2046, %v2174
        %v2767 = vsel %vm1058, %v2048, %v2176
        %v2768 = vsel %vm1058, %v2050, %v2178
        %v2769 = vsel %vm1058, %v2052, %v2180
        %v2770 = vsel %vm1058, %v2054, %v2182
        %v2771 = vsel %vm1058, %v2056, %v2184
        %v2772 = vsel %vm1058, %v2058, %v2186
        %v2773 = vsel %vm1058, %v2060, %v2188
        %v2774 = vsel %vm1058, %v2062, %v2190
        %v2775 = vsel %vm1058, %v2064, %v2192
        %v2776 = vsel %vm1058, %v2066, %v2194
        %v2777 = vsel %vm1058, %v2068, %v2196
        %vm2778 = vcmask 523264
        %v2779 = vsel %vm2778, %v2746, %v2232
        %v2780 = vsel %vm2778, %v2747, %v2234
        %v2781 = vsel %vm2778, %v2748, %v2236
        %v2782 = vsel %vm2778, %v2749, %v2238
        %v2783 = vsel %vm2778, %v2750, %v2240
        %v2784 = vsel %vm2778, %v2751, %v2242
        %v2785 = vsel %vm2778, %v2752, %v2244
        %v2786 = vsel %vm2778, %v2753, %v2246
        %v2787 = vsel %vm2778, %v2754, %v2248
        %v2788 = vsel %vm2778, %v2755, %v2250
        %v2789 = vsel %vm2778, %v2756, %v2252
        %v2790 = vsel %vm2778, %v2757, %v2254
        %v2791 = vsel %vm2778, %v2758, %v2256
        %v2792 = vsel %vm2778, %v2759, %v2258
        %v2793 = vsel %vm2778, %v2760, %v2260
        %v2794 = vsel %vm2778, %v2761, %v2262
        %v2795 = vsel %vm2778, %v2762, %v2264
        %v2796 = vsel %vm2778, %v2763, %v2266
        %v2797 = vsel %vm2778, %v2764, %v2268
        %v2798 = vsel %vm2778, %v2765, %v2270
        %v2799 = vsel %vm2778, %v2766, %v2272
        %v2800 = vsel %vm2778, %v2767, %v2274
        %v2801 = vsel %vm2778, %v2768, %v2276
        %v2802 = vsel %vm2778, %v2769, %v2278
        %v2803 = vsel %vm2778, %v2770, %v2280
        %v2804 = vsel %vm2778, %v2771, %v2282
        %v2805 = vsel %vm2778, %v2772, %v2284
        %v2806 = vsel %vm2778, %v2773, %v2286
        %v2807 = vsel %vm2778, %v2774, %v2288
        %v2808 = vsel %vm2778, %v2775, %v2290
        %v2809 = vsel %vm2778, %v2776, %v2292
        %v2810 = vsel %vm2778, %v2777, %v2294
        %vm2811 = vcmask 916480
        %v2812 = vsel %vm2811, %v2779, %v2360
        %v2813 = vsel %vm2811, %v2780, %v2362
        %v2814 = vsel %vm2811, %v2781, %v2364
        %v2815 = vsel %vm2811, %v2782, %v2366
        %v2816 = vsel %vm2811, %v2783, %v2368
        %v2817 = vsel %vm2811, %v2784, %v2370
        %v2818 = vsel %vm2811, %v2785, %v2372
        %v2819 = vsel %vm2811, %v2786, %v2374
        %v2820 = vsel %vm2811, %v2787, %v2376
        %v2821 = vsel %vm2811, %v2788, %v2378
        %v2822 = vsel %vm2811, %v2789, %v2380
        %v2823 = vsel %vm2811, %v2790, %v2382
        %v2824 = vsel %vm2811, %v2791, %v2384
        %v2825 = vsel %vm2811, %v2792, %v2386
        %v2826 = vsel %vm2811, %v2793, %v2388
        %v2827 = vsel %vm2811, %v2794, %v2390
        %v2828 = vsel %vm2811, %v2795, %v2392
        %v2829 = vsel %vm2811, %v2796, %v2394
        %v2830 = vsel %vm2811, %v2797, %v2396
        %v2831 = vsel %vm2811, %v2798, %v2398
        %v2832 = vsel %vm2811, %v2799, %v2400
        %v2833 = vsel %vm2811, %v2800, %v2402
        %v2834 = vsel %vm2811, %v2801, %v2404
        %v2835 = vsel %vm2811, %v2802, %v2406
        %v2836 = vsel %vm2811, %v2803, %v2408
        %v2837 = vsel %vm2811, %v2804, %v2410
        %v2838 = vsel %vm2811, %v2805, %v2412
        %v2839 = vsel %vm2811, %v2806, %v2414
        %v2840 = vsel %vm2811, %v2807, %v2416
        %v2841 = vsel %vm2811, %v2808, %v2418
        %v2842 = vsel %vm2811, %v2809, %v2420
        %v2843 = vsel %vm2811, %v2810, %v2422
        %vm2844 = vcmask 261120
        %v2845 = vsel %vm2844, %v2360, %v2488
        %v2846 = vsel %vm2844, %v2362, %v2490
        %v2847 = vsel %vm2844, %v2364, %v2492
        %v2848 = vsel %vm2844, %v2366, %v2494
        %v2849 = vsel %vm2844, %v2368, %v2496
        %v2850 = vsel %vm2844, %v2370, %v2498
        %v2851 = vsel %vm2844, %v2372, %v2500
        %v2852 = vsel %vm2844, %v2374, %v2502
        %v2853 = vsel %vm2844, %v2376, %v2504
        %v2854 = vsel %vm2844, %v2378, %v2506
        %v2855 = vsel %vm2844, %v2380, %v2508
        %v2856 = vsel %vm2844, %v2382, %v2510
        %v2857 = vsel %vm2844, %v2384, %v2512
        %v2858 = vsel %vm2844, %v2386, %v2514
        %v2859 = vsel %vm2844, %v2388, %v2516
        %v2860 = vsel %vm2844, %v2390, %v2518
        %v2861 = vsel %vm2844, %v2392, %v2520
        %v2862 = vsel %vm2844, %v2394, %v2522
        %v2863 = vsel %vm2844, %v2396, %v2524
        %v2864 = vsel %vm2844, %v2398, %v2526
        %v2865 = vsel %vm2844, %v2400, %v2528
        %v2866 = vsel %vm2844, %v2402, %v2530
        %v2867 = vsel %vm2844, %v2404, %v2532
        %v2868 = vsel %vm2844, %v2406, %v2534
        %v2869 = vsel %vm2844, %v2408, %v2536
        %v2870 = vsel %vm2844, %v2410, %v2538
        %v2871 = vsel %vm2844, %v2412, %v2540
        %v2872 = vsel %vm2844, %v2414, %v2542
        %v2873 = vsel %vm2844, %v2416, %v2544
        %v2874 = vsel %vm2844, %v2418, %v2546
        %v2875 = vsel %vm2844, %v2420, %v2548
        %v2876 = vsel %vm2844, %v2422, %v2550
        %vm2877 = vcmask 654336
        %v2878 = vsel %vm2877, %v2845, %v2586
        %v2879 = vsel %vm2877, %v2846, %v2588
        %v2880 = vsel %vm2877, %v2847, %v2590
        %v2881 = vsel %vm2877, %v2848, %v2592
        %v2882 = vsel %vm2877, %v2849, %v2594
        %v2883 = vsel %vm2877, %v2850, %v2596
        %v2884 = vsel %vm2877, %v2851, %v2598
        %v2885 = vsel %vm2877, %v2852, %v2600
        %v2886 = vsel %vm2877, %v2853, %v2602
        %v2887 = vsel %vm2877, %v2854, %v2604
        %v2888 = vsel %vm2877, %v2855, %v2606
        %v2889 = vsel %vm2877, %v2856, %v2608
        %v2890 = vsel %vm2877, %v2857, %v2610
        %v2891 = vsel %vm2877, %v2858, %v2612
        %v2892 = vsel %vm2877, %v2859, %v2614
        %v2893 = vsel %vm2877, %v2860, %v2616
        %v2894 = vsel %vm2877, %v2861, %v2618
        %v2895 = vsel %vm2877, %v2862, %v2620
        %v2896 = vsel %vm2877, %v2863, %v2622
        %v2897 = vsel %vm2877, %v2864, %v2624
        %v2898 = vsel %vm2877, %v2865, %v2626
        %v2899 = vsel %vm2877, %v2866, %v2628
        %v2900 = vsel %vm2877, %v2867, %v2630
        %v2901 = vsel %vm2877, %v2868, %v2632
        %v2902 = vsel %vm2877, %v2869, %v2634
        %v2903 = vsel %vm2877, %v2870, %v2636
        %v2904 = vsel %vm2877, %v2871, %v2638
        %v2905 = vsel %vm2877, %v2872, %v2640
        %v2906 = vsel %vm2877, %v2873, %v2642
        %v2907 = vsel %vm2877, %v2874, %v2644
        %v2908 = vsel %vm2877, %v2875, %v2646
        %v2909 = vsel %vm2877, %v2876, %v2648
        %v2910 = vpack.c.bf16 %v2715, %v2714
        %v2911 = vpack.c.bf16 %v2813, %v2812
        %v2912 = vpack.c.bf16 %v2879, %v2878
        %v2913 = vpack.c.bf16 %v1814, %v1813
        %v2914 = vpack.c.bf16 %v2717, %v2716
        %v2915 = vpack.c.bf16 %v2815, %v2814
        %v2916 = vpack.c.bf16 %v2881, %v2880
        %v2917 = vpack.c.bf16 %v1816, %v1815
        %v2918 = vpack.c.bf16 %v2719, %v2718
        %v2919 = vpack.c.bf16 %v2817, %v2816
        %v2920 = vpack.c.bf16 %v2883, %v2882
        %v2921 = vpack.c.bf16 %v1818, %v1817
        %v2922 = vpack.c.bf16 %v2721, %v2720
        %v2923 = vpack.c.bf16 %v2819, %v2818
        %v2924 = vpack.c.bf16 %v2885, %v2884
        %v2925 = vpack.c.bf16 %v1820, %v1819
        %v2926 = vpack.c.bf16 %v2723, %v2722
        %v2927 = vpack.c.bf16 %v2821, %v2820
        %v2928 = vpack.c.bf16 %v2887, %v2886
        %v2929 = vpack.c.bf16 %v1822, %v1821
        %v2930 = vpack.c.bf16 %v2725, %v2724
        %v2931 = vpack.c.bf16 %v2823, %v2822
        %v2932 = vpack.c.bf16 %v2889, %v2888
        %v2933 = vpack.c.bf16 %v1824, %v1823
        %v2934 = vpack.c.bf16 %v2727, %v2726
        %v2935 = vpack.c.bf16 %v2825, %v2824
        %v2936 = vpack.c.bf16 %v2891, %v2890
        %v2937 = vpack.c.bf16 %v1826, %v1825
        %v2938 = vpack.c.bf16 %v2729, %v2728
        %v2939 = vpack.c.bf16 %v2827, %v2826
        %v2940 = vpack.c.bf16 %v2893, %v2892
        %v2941 = vpack.c.bf16 %v1828, %v1827
        %v2942 = vpack.c.bf16 %v2731, %v2730
        %v2943 = vpack.c.bf16 %v2829, %v2828
        %v2944 = vpack.c.bf16 %v2895, %v2894
        %v2945 = vpack.c.bf16 %v1830, %v1829
        %v2946 = vpack.c.bf16 %v2733, %v2732
        %v2947 = vpack.c.bf16 %v2831, %v2830
        %v2948 = vpack.c.bf16 %v2897, %v2896
        %v2949 = vpack.c.bf16 %v1832, %v1831
        %v2950 = vpack.c.bf16 %v2735, %v2734
        %v2951 = vpack.c.bf16 %v2833, %v2832
        %v2952 = vpack.c.bf16 %v2899, %v2898
        %v2953 = vpack.c.bf16 %v1834, %v1833
        %v2954 = vpack.c.bf16 %v2737, %v2736
        %v2955 = vpack.c.bf16 %v2835, %v2834
        %v2956 = vpack.c.bf16 %v2901, %v2900
        %v2957 = vpack.c.bf16 %v1836, %v1835
        %v2958 = vpack.c.bf16 %v2739, %v2738
        %v2959 = vpack.c.bf16 %v2837, %v2836
        %v2960 = vpack.c.bf16 %v2903, %v2902
        %v2961 = vpack.c.bf16 %v1838, %v1837
        %v2962 = vpack.c.bf16 %v2741, %v2740
        %v2963 = vpack.c.bf16 %v2839, %v2838
        %v2964 = vpack.c.bf16 %v2905, %v2904
        %v2965 = vpack.c.bf16 %v1840, %v1839
        %v2966 = vpack.c.bf16 %v2743, %v2742
        %v2967 = vpack.c.bf16 %v2841, %v2840
        %v2968 = vpack.c.bf16 %v2907, %v2906
        %v2969 = vpack.c.bf16 %v1842, %v1841
        %v2970 = vpack.c.bf16 %v2745, %v2744
        %v2971 = vpack.c.bf16 %v2843, %v2842
        %v2972 = vpack.c.bf16 %v2909, %v2908
        %v2973 = vpack.c.bf16 %v1844, %v1843
        %v2974 = vld [vmem:[%s4] sm:$0xf]
        %v2975 = vld [vmem:[%s4 + $0x4] sm:$0xf]
        %v2976 = vld [vmem:[%s4 + $0x8] sm:$0xf]
        %v2977 = vld [vmem:[%s4 + $0xc] sm:$0xf]
        %v2978 = vld [vmem:[%s4 + $0x10] sm:$0xf]
        %v2979 = vld [vmem:[%s4 + $0x14] sm:$0xf]
        %v2980 = vld [vmem:[%s4 + $0x18] sm:$0xf]
        %v2981 = vld [vmem:[%s4 + $0x1c] sm:$0xf]
        %v2982 = vld [vmem:[%s4 + $0x20] sm:$0xf]
        %v2983 = vld [vmem:[%s4 + $0x24] sm:$0xf]
        %v2984 = vld [vmem:[%s4 + $0x28] sm:$0xf]
        %v2985 = vld [vmem:[%s4 + $0x2c] sm:$0xf]
        %v2986 = vld [vmem:[%s4 + $0x30] sm:$0xf]
        %v2987 = vld [vmem:[%s4 + $0x34] sm:$0xf]
        %v2988 = vld [vmem:[%s4 + $0x38] sm:$0xf]
        %v2989 = vld [vmem:[%s4 + $0x3c] sm:$0xf]
        %v2990 = vld [vmem:[%s4 + $0x40] sm:$0xf]
        %v2991 = vld [vmem:[%s4 + $0x44] sm:$0xf]
        %v2992 = vld [vmem:[%s4 + $0x48] sm:$0xf]
        %v2993 = vld [vmem:[%s4 + $0x4c] sm:$0xf]
        %v2994 = vld [vmem:[%s4 + $0x50] sm:$0xf]
        %v2995 = vld [vmem:[%s4 + $0x54] sm:$0xf]
        %v2996 = vld [vmem:[%s4 + $0x58] sm:$0xf]
        %v2997 = vld [vmem:[%s4 + $0x5c] sm:$0xf]
        %v2998 = vld [vmem:[%s4 + $0x60] sm:$0xf]
        %v2999 = vld [vmem:[%s4 + $0x64] sm:$0xf]
        %v3000 = vld [vmem:[%s4 + $0x68] sm:$0xf]
        %v3001 = vld [vmem:[%s4 + $0x6c] sm:$0xf]
        %v3002 = vld [vmem:[%s4 + $0x70] sm:$0xf]
        %v3003 = vld [vmem:[%s4 + $0x74] sm:$0xf]
        %v3004 = vld [vmem:[%s4 + $0x78] sm:$0xf]
        %v3005 = vld [vmem:[%s4 + $0x7c] sm:$0xf]
        %v3006 = vld [vmem:[%s4 + $0x80] sm:$0xf]
        %v3007 = vld [vmem:[%s4 + $0x84] sm:$0xf]
        %v3008 = vld [vmem:[%s4 + $0x88] sm:$0xf]
        %v3009 = vld [vmem:[%s4 + $0x8c] sm:$0xf]
        %v3010 = vld [vmem:[%s4 + $0x90] sm:$0xf]
        %v3011 = vld [vmem:[%s4 + $0x94] sm:$0xf]
        %v3012 = vld [vmem:[%s4 + $0x98] sm:$0xf]
        %v3013 = vld [vmem:[%s4 + $0x9c] sm:$0xf]
        %v3014 = vld [vmem:[%s4 + $0xa0] sm:$0xf]
        %v3015 = vld [vmem:[%s4 + $0xa4] sm:$0xf]
        %v3016 = vld [vmem:[%s4 + $0xa8] sm:$0xf]
        %v3017 = vld [vmem:[%s4 + $0xac] sm:$0xf]
        %v3018 = vld [vmem:[%s4 + $0xb0] sm:$0xf]
        %v3019 = vld [vmem:[%s4 + $0xb4] sm:$0xf]
        %v3020 = vld [vmem:[%s4 + $0xb8] sm:$0xf]
        %v3021 = vld [vmem:[%s4 + $0xbc] sm:$0xf]
        %v3022 = vld [vmem:[%s4 + $0xc0] sm:$0xf]
        %v3023 = vld [vmem:[%s4 + $0xc4] sm:$0xf]
        %v3024 = vld [vmem:[%s4 + $0xc8] sm:$0xf]
        %v3025 = vld [vmem:[%s4 + $0xcc] sm:$0xf]
        %v3026 = vld [vmem:[%s4 + $0xd0] sm:$0xf]
        %v3027 = vld [vmem:[%s4 + $0xd4] sm:$0xf]
        %v3082 = vunpack.c.l.b16 %v2974
        %v3083 = vunpack.c.l.b16 %v2975
        %v3084 = vunpack.c.l.b16 %v2976
        %v3085 = vunpack.c.l.b16 %v2977
        %v3086 = vunpack.c.l.b16 %v2978
        %v3087 = vunpack.c.l.b16 %v2979
        %v3088 = vunpack.c.l.b16 %v2980
        %v3089 = vunpack.c.l.b16 %v2981
        %v3090 = vunpack.c.l.b16 %v2982
        %v3091 = vunpack.c.l.b16 %v2983
        %v3092 = vunpack.c.l.b16 %v2984
        %v3093 = vunpack.c.l.b16 %v2985
        %v3094 = vunpack.c.l.b16 %v2986
        %v3095 = vunpack.c.l.b16 %v2987
        %v3096 = vunpack.c.l.b16 %v2988
        %v3097 = vunpack.c.l.b16 %v2989
        %v3098 = vunpack.c.l.b16 %v2990
        %v3099 = vunpack.c.l.b16 %v2991
        %v3100 = vunpack.c.l.b16 %v2992
        %v3101 = vunpack.c.l.b16 %v2993
        %v3102 = vunpack.c.l.b16 %v2994
        %v3103 = vunpack.c.l.b16 %v2995
        %v3104 = vunpack.c.l.b16 %v2996
        %v3105 = vunpack.c.l.b16 %v2997
        %v3106 = vunpack.c.l.b16 %v2998
        %v3107 = vunpack.c.l.b16 %v2999
        %v3108 = vunpack.c.l.b16 %v3000
        %v3109 = vunpack.c.l.b16 %v3001
        %v3110 = vunpack.c.l.b16 %v3002
        %v3111 = vunpack.c.l.b16 %v3003
        %v3112 = vunpack.c.l.b16 %v3004
        %v3113 = vunpack.c.l.b16 %v3005
        %v3114 = vunpack.c.l.b16 %v3006
        %v3115 = vunpack.c.l.b16 %v3007
        %v3116 = vunpack.c.l.b16 %v3008
        %v3117 = vunpack.c.l.b16 %v3009
        %v3118 = vunpack.c.l.b16 %v3010
        %v3119 = vunpack.c.l.b16 %v3011
        %v3120 = vunpack.c.l.b16 %v3012
        %v3121 = vunpack.c.l.b16 %v3013
        %v3122 = vunpack.c.l.b16 %v3014
        %v3123 = vunpack.c.l.b16 %v3015
        %v3124 = vunpack.c.l.b16 %v3016
        %v3125 = vunpack.c.l.b16 %v3017
        %v3126 = vunpack.c.l.b16 %v3018
        %v3127 = vunpack.c.l.b16 %v3019
        %v3128 = vunpack.c.l.b16 %v3020
        %v3129 = vunpack.c.l.b16 %v3021
        %v3130 = vunpack.c.l.b16 %v3022
        %v3131 = vunpack.c.l.b16 %v3023
        %v3132 = vunpack.c.l.b16 %v3024
        %v3133 = vunpack.c.l.b16 %v3025
        %v3134 = vunpack.c.l.b16 %v3026
        %v3135 = vunpack.c.l.b16 %v3027
        %v3136 = vpack.c.b16 %v3083, %v3082
        %v3137 = vpack.c.b16 %v3085, %v3084
        %v3138 = vpack.c.b16 %v3087, %v3086
        %v3139 = vpack.c.b16 %v3089, %v3088
        %v3140 = vpack.c.b16 %v3091, %v3090
        %v3141 = vpack.c.b16 %v3093, %v3092
        %v3142 = vpack.c.b16 %v3095, %v3094
        %v3143 = vpack.c.b16 %v3097, %v3096
        %v3144 = vpack.c.b16 %v3099, %v3098
        %v3145 = vpack.c.b16 %v3101, %v3100
        %v3146 = vpack.c.b16 %v3103, %v3102
        %v3147 = vpack.c.b16 %v3105, %v3104
        %v3148 = vpack.c.b16 %v3107, %v3106
        %v3149 = vpack.c.b16 %v3109, %v3108
        %v3150 = vpack.c.b16 %v3111, %v3110
        %v3151 = vpack.c.b16 %v3113, %v3112
        %v3152 = vpack.c.b16 %v3115, %v3114
        %v3153 = vpack.c.b16 %v3117, %v3116
        %v3154 = vpack.c.b16 %v3119, %v3118
        %v3155 = vpack.c.b16 %v3121, %v3120
        %v3156 = vpack.c.b16 %v3123, %v3122
        %v3157 = vpack.c.b16 %v3125, %v3124
        %v3158 = vpack.c.b16 %v3127, %v3126
        %v3159 = vpack.c.b16 %v3129, %v3128
        %v3160 = vpack.c.b16 %v3131, %v3130
        %v3161 = vpack.c.b16 %v3133, %v3132
        %v3162 = vpack.c.b16 %v3135, %v3134
        %v3191 = vsel %vm1378, %v2913, 0
        %v3194 = vsel %vm1378, %v2917, 0
        %v3197 = vsel %vm1378, %v2921, 0
        %v3200 = vsel %vm1378, %v2925, 0
        %v3203 = vsel %vm1378, %v2929, 0
        %v3206 = vsel %vm1378, %v2933, 0
        %v3209 = vsel %vm1378, %v2937, 0
        %v3212 = vsel %vm1378, %v2941, 0
        %v3215 = vsel %vm1378, %v2945, 0
        %v3218 = vsel %vm1378, %v2949, 0
        %v3221 = vsel %vm1378, %v2953, 0
        %v3224 = vsel %vm1378, %v2957, 0
        %v3227 = vsel %vm1378, %v2961, 0
        %v3230 = vsel %vm1378, %v2965, 0
        %v3233 = vsel %vm1378, %v2969, 0
        %v3236 = vsel %vm1378, %v2973, 0
        %3238 = vmatprep.subr.bf16.mxu0 0
        %3239 = vmatpush1.bf16.msra.mxu0 %v3143
        %3240 = vmatprep.subr.bf16.mxu0 0
        %3241 = vmatpush1.bf16.msra.mxu0 %v3142
        %3242 = vmatprep.subr.bf16.mxu0 0
        %3243 = vmatpush1.bf16.msra.mxu0 %v3141
        %3244 = vmatprep.subr.bf16.mxu0 0
        %3245 = vmatpush1.bf16.msra.mxu0 %v3140
        %3246 = vmatprep.subr.bf16.mxu0 0
        %3247 = vmatpush1.bf16.msra.mxu0 %v3139
        %3248 = vmatprep.subr.bf16.mxu0 0
        %3249 = vmatpush1.bf16.msra.mxu0 %v3138
        %3250 = vmatprep.subr.bf16.mxu0 0
        %3251 = vmatpush1.bf16.msra.mxu0 %v3137
        %3252 = vmatprep.subr.bf16.mxu0 0
        %3253 = vmatpush1.bf16.msra.mxu0 %v3136
        %3254 = vmatprep.subr.bf16.mxu0 0
        %3255 = vmatpush2.bf16.msra.mxu0 %v3151
        %3256 = vmatprep.subr.bf16.mxu0 0
        %3257 = vmatpush2.bf16.msra.mxu0 %v3150
        %3258 = vmatprep.subr.bf16.mxu0 0
        %3259 = vmatpush2.bf16.msra.mxu0 %v3149
        %3260 = vmatprep.subr.bf16.mxu0 0
        %3261 = vmatpush2.bf16.msra.mxu0 %v3148
        %3262 = vmatprep.subr.bf16.mxu0 0
        %3263 = vmatpush2.bf16.msra.mxu0 %v3147
        %3264 = vmatprep.subr.bf16.mxu0 0
        %3265 = vmatpush2.bf16.msra.mxu0 %v3146
        %3266 = vmatprep.subr.bf16.mxu0 0
        %3267 = vmatpush2.bf16.msra.mxu0 %v3145
        %3268 = vmatprep.subr.bf16.mxu0 0
        %3269 = vmatpush2.bf16.msra.mxu0 %v3144
        %3270 = vmatprep.mubr.bf16.mxu0 %v2911
        %3271 = vmatmul.mubr.bf16.gmra.mxu0 %v2910
        %v3272 = vpop.f32.mrf.mxu0
        %v3273 = vadd.f32 0.0, %v3272
        %v3274 = vpop.f32.mrf.mxu0
        %v3275 = vpop.f32.mrf.mxu0
        %v3276 = vadd.f32 0.0, %v3275
        %v3277 = vpop.f32.mrf.mxu0
        %3278 = vmatprep.mubr.bf16.mxu0 %v2915
        %3279 = vmatmul.mubr.bf16.gmra.mxu0 %v2914
        %v3280 = vpop.f32.mrf.mxu0
        %v3281 = vadd.f32 0.0, %v3280
        %v3282 = vpop.f32.mrf.mxu0
        %v3283 = vpop.f32.mrf.mxu0
        %v3284 = vadd.f32 0.0, %v3283
        %v3285 = vpop.f32.mrf.mxu0
        %3286 = vmatprep.mubr.bf16.mxu0 %v2919
        %3287 = vmatmul.mubr.bf16.gmra.mxu0 %v2918
        %v3288 = vpop.f32.mrf.mxu0
        %v3289 = vadd.f32 0.0, %v3288
        %v3290 = vpop.f32.mrf.mxu0
        %v3291 = vpop.f32.mrf.mxu0
        %v3292 = vadd.f32 0.0, %v3291
        %v3293 = vpop.f32.mrf.mxu0
        %3294 = vmatprep.mubr.bf16.mxu0 %v2923
        %3295 = vmatmul.mubr.bf16.gmra.mxu0 %v2922
        %v3296 = vpop.f32.mrf.mxu0
        %v3297 = vadd.f32 0.0, %v3296
        %v3298 = vpop.f32.mrf.mxu0
        %v3299 = vpop.f32.mrf.mxu0
        %v3300 = vadd.f32 0.0, %v3299
        %v3301 = vpop.f32.mrf.mxu0
        %3302 = vmatprep.mubr.bf16.mxu0 %v2927
        %3303 = vmatmul.mubr.bf16.gmra.mxu0 %v2926
        %v3304 = vpop.f32.mrf.mxu0
        %v3305 = vadd.f32 0.0, %v3304
        %v3306 = vpop.f32.mrf.mxu0
        %v3307 = vpop.f32.mrf.mxu0
        %v3308 = vadd.f32 0.0, %v3307
        %v3309 = vpop.f32.mrf.mxu0
        %3310 = vmatprep.mubr.bf16.mxu0 %v2931
        %3311 = vmatmul.mubr.bf16.gmra.mxu0 %v2930
        %v3312 = vpop.f32.mrf.mxu0
        %v3313 = vadd.f32 0.0, %v3312
        %v3314 = vpop.f32.mrf.mxu0
        %v3315 = vpop.f32.mrf.mxu0
        %v3316 = vadd.f32 0.0, %v3315
        %v3317 = vpop.f32.mrf.mxu0
        %3318 = vmatprep.mubr.bf16.mxu0 %v2935
        %3319 = vmatmul.mubr.bf16.gmra.mxu0 %v2934
        %v3320 = vpop.f32.mrf.mxu0
        %v3321 = vadd.f32 0.0, %v3320
        %v3322 = vpop.f32.mrf.mxu0
        %v3323 = vpop.f32.mrf.mxu0
        %v3324 = vadd.f32 0.0, %v3323
        %v3325 = vpop.f32.mrf.mxu0
        %3326 = vmatprep.mubr.bf16.mxu0 %v2939
        %3327 = vmatmul.mubr.bf16.gmra.mxu0 %v2938
        %v3328 = vpop.f32.mrf.mxu0
        %v3329 = vadd.f32 0.0, %v3328
        %v3330 = vpop.f32.mrf.mxu0
        %v3331 = vpop.f32.mrf.mxu0
        %v3332 = vadd.f32 0.0, %v3331
        %v3333 = vpop.f32.mrf.mxu0
        %3334 = vmatprep.mubr.bf16.mxu0 %v2943
        %3335 = vmatmul.mubr.bf16.gmra.mxu0 %v2942
        %v3336 = vpop.f32.mrf.mxu0
        %v3337 = vadd.f32 0.0, %v3336
        %v3338 = vpop.f32.mrf.mxu0
        %v3339 = vpop.f32.mrf.mxu0
        %v3340 = vadd.f32 0.0, %v3339
        %v3341 = vpop.f32.mrf.mxu0
        %3342 = vmatprep.mubr.bf16.mxu0 %v2947
        %3343 = vmatmul.mubr.bf16.gmra.mxu0 %v2946
        %v3344 = vpop.f32.mrf.mxu0
        %v3345 = vadd.f32 0.0, %v3344
        %v3346 = vpop.f32.mrf.mxu0
        %v3347 = vpop.f32.mrf.mxu0
        %v3348 = vadd.f32 0.0, %v3347
        %v3349 = vpop.f32.mrf.mxu0
        %3350 = vmatprep.mubr.bf16.mxu0 %v2951
        %3351 = vmatmul.mubr.bf16.gmra.mxu0 %v2950
        %v3352 = vpop.f32.mrf.mxu0
        %v3353 = vadd.f32 0.0, %v3352
        %v3354 = vpop.f32.mrf.mxu0
        %v3355 = vpop.f32.mrf.mxu0
        %v3356 = vadd.f32 0.0, %v3355
        %v3357 = vpop.f32.mrf.mxu0
        %3358 = vmatprep.mubr.bf16.mxu0 %v2955
        %3359 = vmatmul.mubr.bf16.gmra.mxu0 %v2954
        %v3360 = vpop.f32.mrf.mxu0
        %v3361 = vadd.f32 0.0, %v3360
        %v3362 = vpop.f32.mrf.mxu0
        %v3363 = vpop.f32.mrf.mxu0
        %v3364 = vadd.f32 0.0, %v3363
        %v3365 = vpop.f32.mrf.mxu0
        %3366 = vmatprep.mubr.bf16.mxu0 %v2959
        %3367 = vmatmul.mubr.bf16.gmra.mxu0 %v2958
        %v3368 = vpop.f32.mrf.mxu0
        %v3369 = vadd.f32 0.0, %v3368
        %v3370 = vpop.f32.mrf.mxu0
        %v3371 = vpop.f32.mrf.mxu0
        %v3372 = vadd.f32 0.0, %v3371
        %v3373 = vpop.f32.mrf.mxu0
        %3374 = vmatprep.mubr.bf16.mxu0 %v2963
        %3375 = vmatmul.mubr.bf16.gmra.mxu0 %v2962
        %v3376 = vpop.f32.mrf.mxu0
        %v3377 = vadd.f32 0.0, %v3376
        %v3378 = vpop.f32.mrf.mxu0
        %v3379 = vpop.f32.mrf.mxu0
        %v3380 = vadd.f32 0.0, %v3379
        %v3381 = vpop.f32.mrf.mxu0
        %3382 = vmatprep.mubr.bf16.mxu0 %v2967
        %3383 = vmatmul.mubr.bf16.gmra.mxu0 %v2966
        %v3384 = vpop.f32.mrf.mxu0
        %v3385 = vadd.f32 0.0, %v3384
        %v3386 = vpop.f32.mrf.mxu0
        %v3387 = vpop.f32.mrf.mxu0
        %v3388 = vadd.f32 0.0, %v3387
        %v3389 = vpop.f32.mrf.mxu0
        %3390 = vmatprep.mubr.bf16.mxu0 %v2971
        %3391 = vmatmul.mubr.bf16.gmra.mxu0 %v2970
        %v3392 = vpop.f32.mrf.mxu0
        %v3393 = vadd.f32 0.0, %v3392
        %v3394 = vpop.f32.mrf.mxu0
        %v3395 = vpop.f32.mrf.mxu0
        %v3396 = vadd.f32 0.0, %v3395
        %v3397 = vpop.f32.mrf.mxu0
        %3398 = vdwg.mxu0
        %3399 = vmatprep.subr.bf16.mxu0 0
        %3400 = vmatpush1.bf16.msra.mxu0 %v3159
        %3401 = vmatprep.subr.bf16.mxu0 0
        %3402 = vmatpush1.bf16.msra.mxu0 %v3158
        %3403 = vmatprep.subr.bf16.mxu0 0
        %3404 = vmatpush1.bf16.msra.mxu0 %v3157
        %3405 = vmatprep.subr.bf16.mxu0 0
        %3406 = vmatpush1.bf16.msra.mxu0 %v3156
        %3407 = vmatprep.subr.bf16.mxu0 0
        %3408 = vmatpush1.bf16.msra.mxu0 %v3155
        %3409 = vmatprep.subr.bf16.mxu0 0
        %3410 = vmatpush1.bf16.msra.mxu0 %v3154
        %3411 = vmatprep.subr.bf16.mxu0 0
        %3412 = vmatpush1.bf16.msra.mxu0 %v3153
        %3413 = vmatprep.subr.bf16.mxu0 0
        %3414 = vmatpush1.bf16.msra.mxu0 %v3152
        %3415 = vmatprep.subr.bf16.mxu0 0
        %3416 = vmatpush2.bf16.msra.mxu0 0
        %3417 = vmatprep.subr.bf16.mxu0 0
        %3418 = vmatpush2.bf16.msra.mxu0 0
        %3419 = vmatprep.subr.bf16.mxu0 0
        %3420 = vmatpush2.bf16.msra.mxu0 0
        %3421 = vmatprep.subr.bf16.mxu0 0
        %3422 = vmatpush2.bf16.msra.mxu0 0
        %3423 = vmatprep.subr.bf16.mxu0 0
        %3424 = vmatpush2.bf16.msra.mxu0 0
        %3425 = vmatprep.subr.bf16.mxu0 0
        %3426 = vmatpush2.bf16.msra.mxu0 %v3162
        %3427 = vmatprep.subr.bf16.mxu0 0
        %3428 = vmatpush2.bf16.msra.mxu0 %v3161
        %3429 = vmatprep.subr.bf16.mxu0 0
        %3430 = vmatpush2.bf16.msra.mxu0 %v3160
        %3431 = vmatprep.mubr.bf16.mxu0 %v3191
        %3432 = vmatmul.mubr.bf16.gmra.mxu0 %v2912
        %v3433 = vpop.f32.mrf.mxu0
        %v3434 = vadd.f32 %v3273, %v3433
        %v3435 = vpop.f32.mrf.mxu0
        %v3436 = vpop.f32.mrf.mxu0
        %v3437 = vadd.f32 %v3276, %v3436
        %v3438 = vpop.f32.mrf.mxu0
        %3439 = vmatprep.mubr.bf16.mxu0 %v3194
        %3440 = vmatmul.mubr.bf16.gmra.mxu0 %v2916
        %v3441 = vpop.f32.mrf.mxu0
        %v3442 = vadd.f32 %v3281, %v3441
        %v3443 = vpop.f32.mrf.mxu0
        %v3444 = vpop.f32.mrf.mxu0
        %v3445 = vadd.f32 %v3284, %v3444
        %v3446 = vpop.f32.mrf.mxu0
        %3447 = vmatprep.mubr.bf16.mxu0 %v3197
        %3448 = vmatmul.mubr.bf16.gmra.mxu0 %v2920
        %v3449 = vpop.f32.mrf.mxu0
        %v3450 = vadd.f32 %v3289, %v3449
        %v3451 = vpop.f32.mrf.mxu0
        %v3452 = vpop.f32.mrf.mxu0
        %v3453 = vadd.f32 %v3292, %v3452
        %v3454 = vpop.f32.mrf.mxu0
        %3455 = vmatprep.mubr.bf16.mxu0 %v3200
        %3456 = vmatmul.mubr.bf16.gmra.mxu0 %v2924
        %v3457 = vpop.f32.mrf.mxu0
        %v3458 = vadd.f32 %v3297, %v3457
        %v3459 = vpop.f32.mrf.mxu0
        %v3460 = vpop.f32.mrf.mxu0
        %v3461 = vadd.f32 %v3300, %v3460
        %v3462 = vpop.f32.mrf.mxu0
        %3463 = vmatprep.mubr.bf16.mxu0 %v3203
        %3464 = vmatmul.mubr.bf16.gmra.mxu0 %v2928
        %v3465 = vpop.f32.mrf.mxu0
        %v3466 = vadd.f32 %v3305, %v3465
        %v3467 = vpop.f32.mrf.mxu0
        %v3468 = vpop.f32.mrf.mxu0
        %v3469 = vadd.f32 %v3308, %v3468
        %v3470 = vpop.f32.mrf.mxu0
        %3471 = vmatprep.mubr.bf16.mxu0 %v3206
        %3472 = vmatmul.mubr.bf16.gmra.mxu0 %v2932
        %v3473 = vpop.f32.mrf.mxu0
        %v3474 = vadd.f32 %v3313, %v3473
        %v3475 = vpop.f32.mrf.mxu0
        %v3476 = vpop.f32.mrf.mxu0
        %v3477 = vadd.f32 %v3316, %v3476
        %v3478 = vpop.f32.mrf.mxu0
        %3479 = vmatprep.mubr.bf16.mxu0 %v3209
        %3480 = vmatmul.mubr.bf16.gmra.mxu0 %v2936
        %v3481 = vpop.f32.mrf.mxu0
        %v3482 = vadd.f32 %v3321, %v3481
        %v3483 = vpop.f32.mrf.mxu0
        %v3484 = vpop.f32.mrf.mxu0
        %v3485 = vadd.f32 %v3324, %v3484
        %v3486 = vpop.f32.mrf.mxu0
        %3487 = vmatprep.mubr.bf16.mxu0 %v3212
        %3488 = vmatmul.mubr.bf16.gmra.mxu0 %v2940
        %v3489 = vpop.f32.mrf.mxu0
        %v3490 = vadd.f32 %v3329, %v3489
        %v3491 = vpop.f32.mrf.mxu0
        %v3492 = vpop.f32.mrf.mxu0
        %v3493 = vadd.f32 %v3332, %v3492
        %v3494 = vpop.f32.mrf.mxu0
        %3495 = vmatprep.mubr.bf16.mxu0 %v3215
        %3496 = vmatmul.mubr.bf16.gmra.mxu0 %v2944
        %v3497 = vpop.f32.mrf.mxu0
        %v3498 = vadd.f32 %v3337, %v3497
        %v3499 = vpop.f32.mrf.mxu0
        %v3500 = vpop.f32.mrf.mxu0
        %v3501 = vadd.f32 %v3340, %v3500
        %v3502 = vpop.f32.mrf.mxu0
        %3503 = vmatprep.mubr.bf16.mxu0 %v3218
        %3504 = vmatmul.mubr.bf16.gmra.mxu0 %v2948
        %v3505 = vpop.f32.mrf.mxu0
        %v3506 = vadd.f32 %v3345, %v3505
        %v3507 = vpop.f32.mrf.mxu0
        %v3508 = vpop.f32.mrf.mxu0
        %v3509 = vadd.f32 %v3348, %v3508
        %v3510 = vpop.f32.mrf.mxu0
        %3511 = vmatprep.mubr.bf16.mxu0 %v3221
        %3512 = vmatmul.mubr.bf16.gmra.mxu0 %v2952
        %v3513 = vpop.f32.mrf.mxu0
        %v3514 = vadd.f32 %v3353, %v3513
        %v3515 = vpop.f32.mrf.mxu0
        %v3516 = vpop.f32.mrf.mxu0
        %v3517 = vadd.f32 %v3356, %v3516
        %v3518 = vpop.f32.mrf.mxu0
        %3519 = vmatprep.mubr.bf16.mxu0 %v3224
        %3520 = vmatmul.mubr.bf16.gmra.mxu0 %v2956
        %v3521 = vpop.f32.mrf.mxu0
        %v3522 = vadd.f32 %v3361, %v3521
        %v3523 = vpop.f32.mrf.mxu0
        %v3524 = vpop.f32.mrf.mxu0
        %v3525 = vadd.f32 %v3364, %v3524
        %v3526 = vpop.f32.mrf.mxu0
        %3527 = vmatprep.mubr.bf16.mxu0 %v3227
        %3528 = vmatmul.mubr.bf16.gmra.mxu0 %v2960
        %v3529 = vpop.f32.mrf.mxu0
        %v3530 = vadd.f32 %v3369, %v3529
        %v3531 = vpop.f32.mrf.mxu0
        %v3532 = vpop.f32.mrf.mxu0
        %v3533 = vadd.f32 %v3372, %v3532
        %v3534 = vpop.f32.mrf.mxu0
        %3535 = vmatprep.mubr.bf16.mxu0 %v3230
        %3536 = vmatmul.mubr.bf16.gmra.mxu0 %v2964
        %v3537 = vpop.f32.mrf.mxu0
        %v3538 = vadd.f32 %v3377, %v3537
        %v3539 = vpop.f32.mrf.mxu0
        %v3540 = vpop.f32.mrf.mxu0
        %v3541 = vadd.f32 %v3380, %v3540
        %v3542 = vpop.f32.mrf.mxu0
        %3543 = vmatprep.mubr.bf16.mxu0 %v3233
        %3544 = vmatmul.mubr.bf16.gmra.mxu0 %v2968
        %v3545 = vpop.f32.mrf.mxu0
        %v3546 = vadd.f32 %v3385, %v3545
        %v3547 = vpop.f32.mrf.mxu0
        %v3548 = vpop.f32.mrf.mxu0
        %v3549 = vadd.f32 %v3388, %v3548
        %v3550 = vpop.f32.mrf.mxu0
        %3551 = vmatprep.mubr.bf16.mxu0 %v3236
        %3552 = vmatmul.mubr.bf16.gmra.mxu0 %v2972
        %v3553 = vpop.f32.mrf.mxu0
        %v3554 = vadd.f32 %v3393, %v3553
        %v3555 = vpop.f32.mrf.mxu0
        %v3556 = vpop.f32.mrf.mxu0
        %v3557 = vadd.f32 %v3396, %v3556
        %v3558 = vpop.f32.mrf.mxu0
        %3559 = vdwg.mxu0
        %v3560 = vld [vmem:[%s5] sm:$0x1]
        %v3562 = vlaneseq
        %v3563 = vshrl.u32 %v3562, 7
        %v3564 = vsub.s32 0, %v3563
        %v3565 = vrot.slane %v3560, %v3564
        %v3567 = vmul.f32 %v3434, %v3565
        %v3568 = vmul.f32 %v3437, %v3565
        %v3569 = vmul.f32 %v3442, %v3565
        %v3570 = vmul.f32 %v3445, %v3565
        %v3571 = vmul.f32 %v3450, %v3565
        %v3572 = vmul.f32 %v3453, %v3565
        %v3573 = vmul.f32 %v3458, %v3565
        %v3574 = vmul.f32 %v3461, %v3565
        %v3575 = vmul.f32 %v3466, %v3565
        %v3576 = vmul.f32 %v3469, %v3565
        %v3577 = vmul.f32 %v3474, %v3565
        %v3578 = vmul.f32 %v3477, %v3565
        %v3579 = vmul.f32 %v3482, %v3565
        %v3580 = vmul.f32 %v3485, %v3565
        %v3581 = vmul.f32 %v3490, %v3565
        %v3582 = vmul.f32 %v3493, %v3565
        %v3583 = vmul.f32 %v3498, %v3565
        %v3584 = vmul.f32 %v3501, %v3565
        %v3585 = vmul.f32 %v3506, %v3565
        %v3586 = vmul.f32 %v3509, %v3565
        %v3587 = vmul.f32 %v3514, %v3565
        %v3588 = vmul.f32 %v3517, %v3565
        %v3589 = vmul.f32 %v3522, %v3565
        %v3590 = vmul.f32 %v3525, %v3565
        %v3591 = vmul.f32 %v3530, %v3565
        %v3592 = vmul.f32 %v3533, %v3565
        %v3593 = vmul.f32 %v3538, %v3565
        %v3594 = vmul.f32 %v3541, %v3565
        %v3595 = vmul.f32 %v3546, %v3565
        %v3596 = vmul.f32 %v3549, %v3565
        %v3597 = vmul.f32 %v3554, %v3565
        %v3598 = vmul.f32 %v3557, %v3565
        %v3599 = vld [vmem:[%s6] sm:$0x1]
        %v3601 = vlaneseq
        %v3602 = vshrl.u32 %v3601, 7
        %v3603 = vsub.s32 0, %v3602
        %v3604 = vrot.slane %v3599, %v3603
        %v3606 = vadd.f32 %v3567, %v3604
        %v3607 = vadd.f32 %v3568, %v3604
        %v3608 = vadd.f32 %v3569, %v3604
        %v3609 = vadd.f32 %v3570, %v3604
        %v3610 = vadd.f32 %v3571, %v3604
        %v3611 = vadd.f32 %v3572, %v3604
        %v3612 = vadd.f32 %v3573, %v3604
        %v3613 = vadd.f32 %v3574, %v3604
        %v3614 = vadd.f32 %v3575, %v3604
        %v3615 = vadd.f32 %v3576, %v3604
        %v3616 = vadd.f32 %v3577, %v3604
        %v3617 = vadd.f32 %v3578, %v3604
        %v3618 = vadd.f32 %v3579, %v3604
        %v3619 = vadd.f32 %v3580, %v3604
        %v3620 = vadd.f32 %v3581, %v3604
        %v3621 = vadd.f32 %v3582, %v3604
        %v3622 = vadd.f32 %v3583, %v3604
        %v3623 = vadd.f32 %v3584, %v3604
        %v3624 = vadd.f32 %v3585, %v3604
        %v3625 = vadd.f32 %v3586, %v3604
        %v3626 = vadd.f32 %v3587, %v3604
        %v3627 = vadd.f32 %v3588, %v3604
        %v3628 = vadd.f32 %v3589, %v3604
        %v3629 = vadd.f32 %v3590, %v3604
        %v3630 = vadd.f32 %v3591, %v3604
        %v3631 = vadd.f32 %v3592, %v3604
        %v3632 = vadd.f32 %v3593, %v3604
        %v3633 = vadd.f32 %v3594, %v3604
        %v3634 = vadd.f32 %v3595, %v3604
        %v3635 = vadd.f32 %v3596, %v3604
        %v3636 = vadd.f32 %v3597, %v3604
        %v3637 = vadd.f32 %v3598, %v3604
        %v3638 = vmax.f32 %v3606, 0.0
        %v3639 = vmax.f32 %v3607, 0.0
        %v3640 = vmax.f32 %v3608, 0.0
        %v3641 = vmax.f32 %v3609, 0.0
        %v3642 = vmax.f32 %v3610, 0.0
        %v3643 = vmax.f32 %v3611, 0.0
        %v3644 = vmax.f32 %v3612, 0.0
        %v3645 = vmax.f32 %v3613, 0.0
        %v3646 = vmax.f32 %v3614, 0.0
        %v3647 = vmax.f32 %v3615, 0.0
        %v3648 = vmax.f32 %v3616, 0.0
        %v3649 = vmax.f32 %v3617, 0.0
        %v3650 = vmax.f32 %v3618, 0.0
        %v3651 = vmax.f32 %v3619, 0.0
        %v3652 = vmax.f32 %v3620, 0.0
        %v3653 = vmax.f32 %v3621, 0.0
        %v3654 = vmax.f32 %v3622, 0.0
        %v3655 = vmax.f32 %v3623, 0.0
        %v3656 = vmax.f32 %v3624, 0.0
        %v3657 = vmax.f32 %v3625, 0.0
        %v3658 = vmax.f32 %v3626, 0.0
        %v3659 = vmax.f32 %v3627, 0.0
        %v3660 = vmax.f32 %v3628, 0.0
        %v3661 = vmax.f32 %v3629, 0.0
        %v3662 = vmax.f32 %v3630, 0.0
        %v3663 = vmax.f32 %v3631, 0.0
        %v3664 = vmax.f32 %v3632, 0.0
        %v3665 = vmax.f32 %v3633, 0.0
        %v3666 = vmax.f32 %v3634, 0.0
        %v3667 = vmax.f32 %v3635, 0.0
        %v3668 = vmax.f32 %v3636, 0.0
        %v3669 = vmax.f32 %v3637, 0.0
        %3702 = vrot.lane.b32.xlu0 %v1346, 80
        %v3703 = vpop.permute.xlu0 %3702
        %3704 = vrot.lane.b32.xlu0 %v1347, 80
        %v3705 = vpop.permute.xlu0 %3704
        %3706 = vrot.lane.b32.xlu0 %v1348, 80
        %v3707 = vpop.permute.xlu0 %3706
        %3708 = vrot.lane.b32.xlu0 %v1349, 80
        %v3709 = vpop.permute.xlu0 %3708
        %3710 = vrot.lane.b32.xlu0 %v1350, 80
        %v3711 = vpop.permute.xlu0 %3710
        %3712 = vrot.lane.b32.xlu0 %v1351, 80
        %v3713 = vpop.permute.xlu0 %3712
        %3714 = vrot.lane.b32.xlu0 %v1352, 80
        %v3715 = vpop.permute.xlu0 %3714
        %3716 = vrot.lane.b32.xlu0 %v1353, 80
        %v3717 = vpop.permute.xlu0 %3716
        %3718 = vrot.lane.b32.xlu0 %v1354, 80
        %v3719 = vpop.permute.xlu0 %3718
        %3720 = vrot.lane.b32.xlu0 %v1355, 80
        %v3721 = vpop.permute.xlu0 %3720
        %3722 = vrot.lane.b32.xlu0 %v1356, 80
        %v3723 = vpop.permute.xlu0 %3722
        %3724 = vrot.lane.b32.xlu0 %v1357, 80
        %v3725 = vpop.permute.xlu0 %3724
        %3726 = vrot.lane.b32.xlu0 %v1358, 80
        %v3727 = vpop.permute.xlu0 %3726
        %3728 = vrot.lane.b32.xlu0 %v1359, 80
        %v3729 = vpop.permute.xlu0 %3728
        %3730 = vrot.lane.b32.xlu0 %v1360, 80
        %v3731 = vpop.permute.xlu0 %3730
        %3732 = vrot.lane.b32.xlu0 %v1361, 80
        %v3733 = vpop.permute.xlu0 %3732
        %3734 = vrot.lane.b32.xlu0 %v1362, 80
        %v3735 = vpop.permute.xlu0 %3734
        %3736 = vrot.lane.b32.xlu0 %v1363, 80
        %v3737 = vpop.permute.xlu0 %3736
        %3738 = vrot.lane.b32.xlu0 %v1364, 80
        %v3739 = vpop.permute.xlu0 %3738
        %3740 = vrot.lane.b32.xlu0 %v1365, 80
        %v3741 = vpop.permute.xlu0 %3740
        %3742 = vrot.lane.b32.xlu0 %v1366, 80
        %v3743 = vpop.permute.xlu0 %3742
        %3744 = vrot.lane.b32.xlu0 %v1367, 80
        %v3745 = vpop.permute.xlu0 %3744
        %3746 = vrot.lane.b32.xlu0 %v1368, 80
        %v3747 = vpop.permute.xlu0 %3746
        %3748 = vrot.lane.b32.xlu0 %v1369, 80
        %v3749 = vpop.permute.xlu0 %3748
        %3750 = vrot.lane.b32.xlu0 %v1370, 80
        %v3751 = vpop.permute.xlu0 %3750
        %3752 = vrot.lane.b32.xlu0 %v1371, 80
        %v3753 = vpop.permute.xlu0 %3752
        %3754 = vrot.lane.b32.xlu0 %v1372, 80
        %v3755 = vpop.permute.xlu0 %3754
        %3756 = vrot.lane.b32.xlu0 %v1373, 80
        %v3757 = vpop.permute.xlu0 %3756
        %3758 = vrot.lane.b32.xlu0 %v1374, 80
        %v3759 = vpop.permute.xlu0 %3758
        %3760 = vrot.lane.b32.xlu0 %v1375, 80
        %v3761 = vpop.permute.xlu0 %3760
        %3762 = vrot.lane.b32.xlu0 %v1376, 80
        %v3763 = vpop.permute.xlu0 %3762
        %3764 = vrot.lane.b32.xlu0 %v1377, 80
        %v3765 = vpop.permute.xlu0 %3764
        %vm3798 = vcmask 64512
        %3799 = vst.msk [vmem:[#allocation2 + $0x18] sm:$0xff] %vm3798, %v3703
        %3800 = vst.msk [vmem:[#allocation2 + $0x20] sm:$0xff] %vm3798, %v3705
        %3801 = vst.msk [vmem:[#allocation2 + $0x28] sm:$0xff] %vm3798, %v3707
        %3802 = vst.msk [vmem:[#allocation2 + $0x30] sm:$0xff] %vm3798, %v3709
        %3803 = vst.msk [vmem:[#allocation2 + $0x38] sm:$0xff] %vm3798, %v3711
        %3804 = vst.msk [vmem:[#allocation2 + $0x40] sm:$0xff] %vm3798, %v3713
        %3805 = vst.msk [vmem:[#allocation2 + $0x48] sm:$0xff] %vm3798, %v3715
        %3806 = vst.msk [vmem:[#allocation2 + $0x50] sm:$0xff] %vm3798, %v3717
        %3807 = vst.msk [vmem:[#allocation2 + $0x58] sm:$0xff] %vm3798, %v3719
        %3808 = vst.msk [vmem:[#allocation2 + $0x60] sm:$0xff] %vm3798, %v3721
        %3809 = vst.msk [vmem:[#allocation2 + $0x68] sm:$0xff] %vm3798, %v3723
        %3810 = vst.msk [vmem:[#allocation2 + $0x70] sm:$0xff] %vm3798, %v3725
        %3811 = vst.msk [vmem:[#allocation2 + $0x78] sm:$0xff] %vm3798, %v3727
        %3812 = vst.msk [vmem:[#allocation2 + $0x80] sm:$0xff] %vm3798, %v3729
        %3813 = vst.msk [vmem:[#allocation2 + $0x88] sm:$0xff] %vm3798, %v3731
        %3814 = vst.msk [vmem:[#allocation2 + $0x90] sm:$0xff] %vm3798, %v3733
        %3815 = vst.msk [vmem:[#allocation2 + $0x98] sm:$0xff] %vm3798, %v3735
        %3816 = vst.msk [vmem:[#allocation2 + $0xa0] sm:$0xff] %vm3798, %v3737
        %3817 = vst.msk [vmem:[#allocation2 + $0xa8] sm:$0xff] %vm3798, %v3739
        %3818 = vst.msk [vmem:[#allocation2 + $0xb0] sm:$0xff] %vm3798, %v3741
        %3819 = vst.msk [vmem:[#allocation2 + $0xb8] sm:$0xff] %vm3798, %v3743
        %3820 = vst.msk [vmem:[#allocation2 + $0xc0] sm:$0xff] %vm3798, %v3745
        %3821 = vst.msk [vmem:[#allocation2 + $0xc8] sm:$0xff] %vm3798, %v3747
        %3822 = vst.msk [vmem:[#allocation2 + $0xd0] sm:$0xff] %vm3798, %v3749
        %3823 = vst.msk [vmem:[#allocation2 + $0xd8] sm:$0xff] %vm3798, %v3751
        %3824 = vst.msk [vmem:[#allocation2 + $0xe0] sm:$0xff] %vm3798, %v3753
        %3825 = vst.msk [vmem:[#allocation2 + $0xe8] sm:$0xff] %vm3798, %v3755
        %3826 = vst.msk [vmem:[#allocation2 + $0xf0] sm:$0xff] %vm3798, %v3757
        %3827 = vst.msk [vmem:[#allocation2 + $0xf8] sm:$0xff] %vm3798, %v3759
        %3828 = vst.msk [vmem:[#allocation2 + $0x100] sm:$0xff] %vm3798, %v3761
        %3829 = vst.msk [vmem:[#allocation2 + $0x108] sm:$0xff] %vm3798, %v3763
        %3830 = vst.msk [vmem:[#allocation2 + $0x110] sm:$0xff] %vm3798, %v3765
        %v3831 = vld [vmem:[#allocation2 + $0x7] sm:$0xff]
        %v3832 = vld [vmem:[#allocation2 + $0xf] sm:$0xff]
        %v3833 = vld [vmem:[#allocation2 + $0x17] sm:$0xff]
        %v3834 = vld [vmem:[#allocation2 + $0x1f] sm:$0xff]
        %v3835 = vld [vmem:[#allocation2 + $0x27] sm:$0xff]
        %v3836 = vld [vmem:[#allocation2 + $0x2f] sm:$0xff]
        %v3837 = vld [vmem:[#allocation2 + $0x37] sm:$0xff]
        %v3838 = vld [vmem:[#allocation2 + $0x3f] sm:$0xff]
        %v3839 = vld [vmem:[#allocation2 + $0x47] sm:$0xff]
        %v3840 = vld [vmem:[#allocation2 + $0x4f] sm:$0xff]
        %v3841 = vld [vmem:[#allocation2 + $0x57] sm:$0xff]
        %v3842 = vld [vmem:[#allocation2 + $0x5f] sm:$0xff]
        %v3843 = vld [vmem:[#allocation2 + $0x67] sm:$0xff]
        %v3844 = vld [vmem:[#allocation2 + $0x6f] sm:$0xff]
        %v3845 = vld [vmem:[#allocation2 + $0x77] sm:$0xff]
        %v3846 = vld [vmem:[#allocation2 + $0x7f] sm:$0xff]
        %v3847 = vld [vmem:[#allocation2 + $0x87] sm:$0xff]
        %v3848 = vld [vmem:[#allocation2 + $0x8f] sm:$0xff]
        %v3849 = vld [vmem:[#allocation2 + $0x97] sm:$0xff]
        %v3850 = vld [vmem:[#allocation2 + $0x9f] sm:$0xff]
        %v3851 = vld [vmem:[#allocation2 + $0xa7] sm:$0xff]
        %v3852 = vld [vmem:[#allocation2 + $0xaf] sm:$0xff]
        %v3853 = vld [vmem:[#allocation2 + $0xb7] sm:$0xff]
        %v3854 = vld [vmem:[#allocation2 + $0xbf] sm:$0xff]
        %v3855 = vld [vmem:[#allocation2 + $0xc7] sm:$0xff]
        %v3856 = vld [vmem:[#allocation2 + $0xcf] sm:$0xff]
        %v3857 = vld [vmem:[#allocation2 + $0xd7] sm:$0xff]
        %v3858 = vld [vmem:[#allocation2 + $0xdf] sm:$0xff]
        %v3859 = vld [vmem:[#allocation2 + $0xe7] sm:$0xff]
        %v3860 = vld [vmem:[#allocation2 + $0xef] sm:$0xff]
        %v3861 = vld [vmem:[#allocation2 + $0xf7] sm:$0xff]
        %v3862 = vld [vmem:[#allocation2 + $0xff] sm:$0xff]
        %v3863 = vsel %vm1481, %v3831, 0.0
        %v3864 = vsel %vm1482, %v3832, 0.0
        %v3865 = vsel %vm1483, %v3833, 0.0
        %v3866 = vsel %vm1484, %v3834, 0.0
        %v3867 = vsel %vm1485, %v3835, 0.0
        %v3868 = vsel %vm1486, %v3836, 0.0
        %v3869 = vsel %vm1487, %v3837, 0.0
        %v3870 = vsel %vm1488, %v3838, 0.0
        %v3871 = vsel %vm1489, %v3839, 0.0
        %v3872 = vsel %vm1490, %v3840, 0.0
        %v3873 = vsel %vm1491, %v3841, 0.0
        %v3874 = vsel %vm1492, %v3842, 0.0
        %v3875 = vsel %vm1493, %v3843, 0.0
        %v3876 = vsel %vm1494, %v3844, 0.0
        %v3877 = vsel %vm1495, %v3845, 0.0
        %v3878 = vsel %vm1496, %v3846, 0.0
        %v3879 = vsel %vm1497, %v3847, 0.0
        %v3880 = vsel %vm1498, %v3848, 0.0
        %v3881 = vsel %vm1499, %v3849, 0.0
        %v3882 = vsel %vm1500, %v3850, 0.0
        %v3883 = vsel %vm1501, %v3851, 0.0
        %v3884 = vsel %vm1502, %v3852, 0.0
        %v3885 = vsel %vm1503, %v3853, 0.0
        %v3886 = vsel %vm1504, %v3854, 0.0
        %v3887 = vsel %vm1505, %v3855, 0.0
        %v3888 = vsel %vm1506, %v3856, 0.0
        %v3889 = vsel %vm1507, %v3857, 0.0
        %v3890 = vsel %vm1508, %v3858, 0.0
        %v3891 = vsel %vm1509, %v3859, 0.0
        %v3892 = vsel %vm1510, %v3860, 0.0
        %v3893 = vsel %vm1511, %v3861, 0.0
        %v3894 = vsel %vm1512, %v3862, 0.0
        %v3895 = vld [vmem:[#allocation2 + $0x8] sm:$0xff]
        %v3896 = vld [vmem:[#allocation2 + $0x10] sm:$0xff]
        %v3897 = vld [vmem:[#allocation2 + $0x18] sm:$0xff]
        %v3898 = vld [vmem:[#allocation2 + $0x20] sm:$0xff]
        %v3899 = vld [vmem:[#allocation2 + $0x28] sm:$0xff]
        %v3900 = vld [vmem:[#allocation2 + $0x30] sm:$0xff]
        %v3901 = vld [vmem:[#allocation2 + $0x38] sm:$0xff]
        %v3902 = vld [vmem:[#allocation2 + $0x40] sm:$0xff]
        %v3903 = vld [vmem:[#allocation2 + $0x48] sm:$0xff]
        %v3904 = vld [vmem:[#allocation2 + $0x50] sm:$0xff]
        %v3905 = vld [vmem:[#allocation2 + $0x58] sm:$0xff]
        %v3906 = vld [vmem:[#allocation2 + $0x60] sm:$0xff]
        %v3907 = vld [vmem:[#allocation2 + $0x68] sm:$0xff]
        %v3908 = vld [vmem:[#allocation2 + $0x70] sm:$0xff]
        %v3909 = vld [vmem:[#allocation2 + $0x78] sm:$0xff]
        %v3910 = vld [vmem:[#allocation2 + $0x80] sm:$0xff]
        %v3911 = vld [vmem:[#allocation2 + $0x88] sm:$0xff]
        %v3912 = vld [vmem:[#allocation2 + $0x90] sm:$0xff]
        %v3913 = vld [vmem:[#allocation2 + $0x98] sm:$0xff]
        %v3914 = vld [vmem:[#allocation2 + $0xa0] sm:$0xff]
        %v3915 = vld [vmem:[#allocation2 + $0xa8] sm:$0xff]
        %v3916 = vld [vmem:[#allocation2 + $0xb0] sm:$0xff]
        %v3917 = vld [vmem:[#allocation2 + $0xb8] sm:$0xff]
        %v3918 = vld [vmem:[#allocation2 + $0xc0] sm:$0xff]
        %v3919 = vld [vmem:[#allocation2 + $0xc8] sm:$0xff]
        %v3920 = vld [vmem:[#allocation2 + $0xd0] sm:$0xff]
        %v3921 = vld [vmem:[#allocation2 + $0xd8] sm:$0xff]
        %v3922 = vld [vmem:[#allocation2 + $0xe0] sm:$0xff]
        %v3923 = vld [vmem:[#allocation2 + $0xe8] sm:$0xff]
        %v3924 = vld [vmem:[#allocation2 + $0xf0] sm:$0xff]
        %v3925 = vld [vmem:[#allocation2 + $0xf8] sm:$0xff]
        %v3926 = vld [vmem:[#allocation2 + $0x100] sm:$0xff]
        %v3927 = vld [vmem:[#allocation2 + $0x9] sm:$0xff]
        %v3928 = vld [vmem:[#allocation2 + $0x11] sm:$0xff]
        %v3929 = vld [vmem:[#allocation2 + $0x19] sm:$0xff]
        %v3930 = vld [vmem:[#allocation2 + $0x21] sm:$0xff]
        %v3931 = vld [vmem:[#allocation2 + $0x29] sm:$0xff]
        %v3932 = vld [vmem:[#allocation2 + $0x31] sm:$0xff]
        %v3933 = vld [vmem:[#allocation2 + $0x39] sm:$0xff]
        %v3934 = vld [vmem:[#allocation2 + $0x41] sm:$0xff]
        %v3935 = vld [vmem:[#allocation2 + $0x49] sm:$0xff]
        %v3936 = vld [vmem:[#allocation2 + $0x51] sm:$0xff]
        %v3937 = vld [vmem:[#allocation2 + $0x59] sm:$0xff]
        %v3938 = vld [vmem:[#allocation2 + $0x61] sm:$0xff]
        %v3939 = vld [vmem:[#allocation2 + $0x69] sm:$0xff]
        %v3940 = vld [vmem:[#allocation2 + $0x71] sm:$0xff]
        %v3941 = vld [vmem:[#allocation2 + $0x79] sm:$0xff]
        %v3942 = vld [vmem:[#allocation2 + $0x81] sm:$0xff]
        %v3943 = vld [vmem:[#allocation2 + $0x89] sm:$0xff]
        %v3944 = vld [vmem:[#allocation2 + $0x91] sm:$0xff]
        %v3945 = vld [vmem:[#allocation2 + $0x99] sm:$0xff]
        %v3946 = vld [vmem:[#allocation2 + $0xa1] sm:$0xff]
        %v3947 = vld [vmem:[#allocation2 + $0xa9] sm:$0xff]
        %v3948 = vld [vmem:[#allocation2 + $0xb1] sm:$0xff]
        %v3949 = vld [vmem:[#allocation2 + $0xb9] sm:$0xff]
        %v3950 = vld [vmem:[#allocation2 + $0xc1] sm:$0xff]
        %v3951 = vld [vmem:[#allocation2 + $0xc9] sm:$0xff]
        %v3952 = vld [vmem:[#allocation2 + $0xd1] sm:$0xff]
        %v3953 = vld [vmem:[#allocation2 + $0xd9] sm:$0xff]
        %v3954 = vld [vmem:[#allocation2 + $0xe1] sm:$0xff]
        %v3955 = vld [vmem:[#allocation2 + $0xe9] sm:$0xff]
        %v3956 = vld [vmem:[#allocation2 + $0xf1] sm:$0xff]
        %v3957 = vld [vmem:[#allocation2 + $0xf9] sm:$0xff]
        %v3958 = vld [vmem:[#allocation2 + $0x101] sm:$0xff]
        %v3959 = vsel %vm1641, %v3927, 0.0
        %v3960 = vsel %vm1642, %v3928, 0.0
        %v3961 = vsel %vm1643, %v3929, 0.0
        %v3962 = vsel %vm1644, %v3930, 0.0
        %v3963 = vsel %vm1645, %v3931, 0.0
        %v3964 = vsel %vm1646, %v3932, 0.0
        %v3965 = vsel %vm1647, %v3933, 0.0
        %v3966 = vsel %vm1648, %v3934, 0.0
        %v3967 = vsel %vm1649, %v3935, 0.0
        %v3968 = vsel %vm1650, %v3936, 0.0
        %v3969 = vsel %vm1651, %v3937, 0.0
        %v3970 = vsel %vm1652, %v3938, 0.0
        %v3971 = vsel %vm1653, %v3939, 0.0
        %v3972 = vsel %vm1654, %v3940, 0.0
        %v3973 = vsel %vm1655, %v3941, 0.0
        %v3974 = vsel %vm1656, %v3942, 0.0
        %v3975 = vsel %vm1657, %v3943, 0.0
        %v3976 = vsel %vm1658, %v3944, 0.0
        %v3977 = vsel %vm1659, %v3945, 0.0
        %v3978 = vsel %vm1660, %v3946, 0.0
        %v3979 = vsel %vm1661, %v3947, 0.0
        %v3980 = vsel %vm1662, %v3948, 0.0
        %v3981 = vsel %vm1663, %v3949, 0.0
        %v3982 = vsel %vm1664, %v3950, 0.0
        %v3983 = vsel %vm1665, %v3951, 0.0
        %v3984 = vsel %vm1666, %v3952, 0.0
        %v3985 = vsel %vm1667, %v3953, 0.0
        %v3986 = vsel %vm1668, %v3954, 0.0
        %v3987 = vsel %vm1669, %v3955, 0.0
        %v3988 = vsel %vm1670, %v3956, 0.0
        %v3989 = vsel %vm1671, %v3957, 0.0
        %v3990 = vsel %vm1672, %v3958, 0.0
        %v3991 = vld [vmem:[#allocation2 + $0x107] sm:$0xff]
        %v3992 = vld [vmem:[#allocation2 + $0x10f] sm:$0xff]
        %v3993 = vsel %vm1481, %v3833, 0.0
        %v3994 = vsel %vm1482, %v3834, 0.0
        %v3995 = vsel %vm1483, %v3835, 0.0
        %v3996 = vsel %vm1484, %v3836, 0.0
        %v3997 = vsel %vm1485, %v3837, 0.0
        %v3998 = vsel %vm1486, %v3838, 0.0
        %v3999 = vsel %vm1487, %v3839, 0.0
        %v4000 = vsel %vm1488, %v3840, 0.0
        %v4001 = vsel %vm1489, %v3841, 0.0
        %v4002 = vsel %vm1490, %v3842, 0.0
        %v4003 = vsel %vm1491, %v3843, 0.0
        %v4004 = vsel %vm1492, %v3844, 0.0
        %v4005 = vsel %vm1493, %v3845, 0.0
        %v4006 = vsel %vm1494, %v3846, 0.0
        %v4007 = vsel %vm1495, %v3847, 0.0
        %v4008 = vsel %vm1496, %v3848, 0.0
        %v4009 = vsel %vm1497, %v3849, 0.0
        %v4010 = vsel %vm1498, %v3850, 0.0
        %v4011 = vsel %vm1499, %v3851, 0.0
        %v4012 = vsel %vm1500, %v3852, 0.0
        %v4013 = vsel %vm1501, %v3853, 0.0
        %v4014 = vsel %vm1502, %v3854, 0.0
        %v4015 = vsel %vm1503, %v3855, 0.0
        %v4016 = vsel %vm1504, %v3856, 0.0
        %v4017 = vsel %vm1505, %v3857, 0.0
        %v4018 = vsel %vm1506, %v3858, 0.0
        %v4019 = vsel %vm1507, %v3859, 0.0
        %v4020 = vsel %vm1508, %v3860, 0.0
        %v4021 = vsel %vm1509, %v3861, 0.0
        %v4022 = vsel %vm1510, %v3862, 0.0
        %v4023 = vsel %vm1511, %v3991, 0.0
        %v4024 = vsel %vm1512, %v3992, 0.0
        %v4025 = vld [vmem:[#allocation2 + $0x108] sm:$0xff]
        %v4026 = vld [vmem:[#allocation2 + $0x110] sm:$0xff]
        %v4027 = vld [vmem:[#allocation2 + $0x109] sm:$0xff]
        %v4028 = vld [vmem:[#allocation2 + $0x111] sm:$0xff]
        %v4029 = vsel %vm1641, %v3929, 0.0
        %v4030 = vsel %vm1642, %v3930, 0.0
        %v4031 = vsel %vm1643, %v3931, 0.0
        %v4032 = vsel %vm1644, %v3932, 0.0
        %v4033 = vsel %vm1645, %v3933, 0.0
        %v4034 = vsel %vm1646, %v3934, 0.0
        %v4035 = vsel %vm1647, %v3935, 0.0
        %v4036 = vsel %vm1648, %v3936, 0.0
        %v4037 = vsel %vm1649, %v3937, 0.0
        %v4038 = vsel %vm1650, %v3938, 0.0
        %v4039 = vsel %vm1651, %v3939, 0.0
        %v4040 = vsel %vm1652, %v3940, 0.0
        %v4041 = vsel %vm1653, %v3941, 0.0
        %v4042 = vsel %vm1654, %v3942, 0.0
        %v4043 = vsel %vm1655, %v3943, 0.0
        %v4044 = vsel %vm1656, %v3944, 0.0
        %v4045 = vsel %vm1657, %v3945, 0.0
        %v4046 = vsel %vm1658, %v3946, 0.0
        %v4047 = vsel %vm1659, %v3947, 0.0
        %v4048 = vsel %vm1660, %v3948, 0.0
        %v4049 = vsel %vm1661, %v3949, 0.0
        %v4050 = vsel %vm1662, %v3950, 0.0
        %v4051 = vsel %vm1663, %v3951, 0.0
        %v4052 = vsel %vm1664, %v3952, 0.0
        %v4053 = vsel %vm1665, %v3953, 0.0
        %v4054 = vsel %vm1666, %v3954, 0.0
        %v4055 = vsel %vm1667, %v3955, 0.0
        %v4056 = vsel %vm1668, %v3956, 0.0
        %v4057 = vsel %vm1669, %v3957, 0.0
        %v4058 = vsel %vm1670, %v3958, 0.0
        %v4059 = vsel %vm1671, %v4027, 0.0
        %v4060 = vsel %vm1672, %v4028, 0.0
        %v4061 = vld [vmem:[#allocation2 + $0x117] sm:$0xff]
        %v4062 = vld [vmem:[#allocation2 + $0x11f] sm:$0xff]
        %v4063 = vsel %vm1481, %v3835, 0.0
        %v4064 = vsel %vm1482, %v3836, 0.0
        %v4065 = vsel %vm1483, %v3837, 0.0
        %v4066 = vsel %vm1484, %v3838, 0.0
        %v4067 = vsel %vm1485, %v3839, 0.0
        %v4068 = vsel %vm1486, %v3840, 0.0
        %v4069 = vsel %vm1487, %v3841, 0.0
        %v4070 = vsel %vm1488, %v3842, 0.0
        %v4071 = vsel %vm1489, %v3843, 0.0
        %v4072 = vsel %vm1490, %v3844, 0.0
        %v4073 = vsel %vm1491, %v3845, 0.0
        %v4074 = vsel %vm1492, %v3846, 0.0
        %v4075 = vsel %vm1493, %v3847, 0.0
        %v4076 = vsel %vm1494, %v3848, 0.0
        %v4077 = vsel %vm1495, %v3849, 0.0
        %v4078 = vsel %vm1496, %v3850, 0.0
        %v4079 = vsel %vm1497, %v3851, 0.0
        %v4080 = vsel %vm1498, %v3852, 0.0
        %v4081 = vsel %vm1499, %v3853, 0.0
        %v4082 = vsel %vm1500, %v3854, 0.0
        %v4083 = vsel %vm1501, %v3855, 0.0
        %v4084 = vsel %vm1502, %v3856, 0.0
        %v4085 = vsel %vm1503, %v3857, 0.0
        %v4086 = vsel %vm1504, %v3858, 0.0
        %v4087 = vsel %vm1505, %v3859, 0.0
        %v4088 = vsel %vm1506, %v3860, 0.0
        %v4089 = vsel %vm1507, %v3861, 0.0
        %v4090 = vsel %vm1508, %v3862, 0.0
        %v4091 = vsel %vm1509, %v3991, 0.0
        %v4092 = vsel %vm1510, %v3992, 0.0
        %v4093 = vsel %vm1511, %v4061, 0.0
        %v4094 = vsel %vm1512, %v4062, 0.0
        %v4095 = vld [vmem:[#allocation2 + $0x118] sm:$0xff]
        %v4096 = vld [vmem:[#allocation2 + $0x120] sm:$0xff]
        %v4097 = vld [vmem:[#allocation2 + $0x119] sm:$0xff]
        %v4098 = vld [vmem:[#allocation2 + $0x121] sm:$0xff]
        %v4099 = vsel %vm1641, %v3931, 0.0
        %v4100 = vsel %vm1642, %v3932, 0.0
        %v4101 = vsel %vm1643, %v3933, 0.0
        %v4102 = vsel %vm1644, %v3934, 0.0
        %v4103 = vsel %vm1645, %v3935, 0.0
        %v4104 = vsel %vm1646, %v3936, 0.0
        %v4105 = vsel %vm1647, %v3937, 0.0
        %v4106 = vsel %vm1648, %v3938, 0.0
        %v4107 = vsel %vm1649, %v3939, 0.0
        %v4108 = vsel %vm1650, %v3940, 0.0
        %v4109 = vsel %vm1651, %v3941, 0.0
        %v4110 = vsel %vm1652, %v3942, 0.0
        %v4111 = vsel %vm1653, %v3943, 0.0
        %v4112 = vsel %vm1654, %v3944, 0.0
        %v4113 = vsel %vm1655, %v3945, 0.0
        %v4114 = vsel %vm1656, %v3946, 0.0
        %v4115 = vsel %vm1657, %v3947, 0.0
        %v4116 = vsel %vm1658, %v3948, 0.0
        %v4117 = vsel %vm1659, %v3949, 0.0
        %v4118 = vsel %vm1660, %v3950, 0.0
        %v4119 = vsel %vm1661, %v3951, 0.0
        %v4120 = vsel %vm1662, %v3952, 0.0
        %v4121 = vsel %vm1663, %v3953, 0.0
        %v4122 = vsel %vm1664, %v3954, 0.0
        %v4123 = vsel %vm1665, %v3955, 0.0
        %v4124 = vsel %vm1666, %v3956, 0.0
        %v4125 = vsel %vm1667, %v3957, 0.0
        %v4126 = vsel %vm1668, %v3958, 0.0
        %v4127 = vsel %vm1669, %v4027, 0.0
        %v4128 = vsel %vm1670, %v4028, 0.0
        %v4129 = vsel %vm1671, %v4097, 0.0
        %v4130 = vsel %vm1672, %v4098, 0.0
        %4163 = vrot.lane.b32.xlu0 %v3895, 8
        %v4164 = vpop.permute.xlu0 %4163
        %4165 = vrot.lane.b32.xlu0 %v3896, 8
        %v4166 = vpop.permute.xlu0 %4165
        %4167 = vrot.lane.b32.xlu0 %v3897, 8
        %v4168 = vpop.permute.xlu0 %4167
        %4169 = vrot.lane.b32.xlu0 %v3898, 8
        %v4170 = vpop.permute.xlu0 %4169
        %4171 = vrot.lane.b32.xlu0 %v3899, 8
        %v4172 = vpop.permute.xlu0 %4171
        %4173 = vrot.lane.b32.xlu0 %v3900, 8
        %v4174 = vpop.permute.xlu0 %4173
        %4175 = vrot.lane.b32.xlu0 %v3901, 8
        %v4176 = vpop.permute.xlu0 %4175
        %4177 = vrot.lane.b32.xlu0 %v3902, 8
        %v4178 = vpop.permute.xlu0 %4177
        %4179 = vrot.lane.b32.xlu0 %v3903, 8
        %v4180 = vpop.permute.xlu0 %4179
        %4181 = vrot.lane.b32.xlu0 %v3904, 8
        %v4182 = vpop.permute.xlu0 %4181
        %4183 = vrot.lane.b32.xlu0 %v3905, 8
        %v4184 = vpop.permute.xlu0 %4183
        %4185 = vrot.lane.b32.xlu0 %v3906, 8
        %v4186 = vpop.permute.xlu0 %4185
        %4187 = vrot.lane.b32.xlu0 %v3907, 8
        %v4188 = vpop.permute.xlu0 %4187
        %4189 = vrot.lane.b32.xlu0 %v3908, 8
        %v4190 = vpop.permute.xlu0 %4189
        %4191 = vrot.lane.b32.xlu0 %v3909, 8
        %v4192 = vpop.permute.xlu0 %4191
        %4193 = vrot.lane.b32.xlu0 %v3910, 8
        %v4194 = vpop.permute.xlu0 %4193
        %4195 = vrot.lane.b32.xlu0 %v3911, 8
        %v4196 = vpop.permute.xlu0 %4195
        %4197 = vrot.lane.b32.xlu0 %v3912, 8
        %v4198 = vpop.permute.xlu0 %4197
        %4199 = vrot.lane.b32.xlu0 %v3913, 8
        %v4200 = vpop.permute.xlu0 %4199
        %4201 = vrot.lane.b32.xlu0 %v3914, 8
        %v4202 = vpop.permute.xlu0 %4201
        %4203 = vrot.lane.b32.xlu0 %v3915, 8
        %v4204 = vpop.permute.xlu0 %4203
        %4205 = vrot.lane.b32.xlu0 %v3916, 8
        %v4206 = vpop.permute.xlu0 %4205
        %4207 = vrot.lane.b32.xlu0 %v3917, 8
        %v4208 = vpop.permute.xlu0 %4207
        %4209 = vrot.lane.b32.xlu0 %v3918, 8
        %v4210 = vpop.permute.xlu0 %4209
        %4211 = vrot.lane.b32.xlu0 %v3919, 8
        %v4212 = vpop.permute.xlu0 %4211
        %4213 = vrot.lane.b32.xlu0 %v3920, 8
        %v4214 = vpop.permute.xlu0 %4213
        %4215 = vrot.lane.b32.xlu0 %v3921, 8
        %v4216 = vpop.permute.xlu0 %4215
        %4217 = vrot.lane.b32.xlu0 %v3922, 8
        %v4218 = vpop.permute.xlu0 %4217
        %4219 = vrot.lane.b32.xlu0 %v3923, 8
        %v4220 = vpop.permute.xlu0 %4219
        %4221 = vrot.lane.b32.xlu0 %v3924, 8
        %v4222 = vpop.permute.xlu0 %4221
        %4223 = vrot.lane.b32.xlu0 %v3925, 8
        %v4224 = vpop.permute.xlu0 %4223
        %4225 = vrot.lane.b32.xlu0 %v3926, 8
        %v4226 = vpop.permute.xlu0 %4225
        %4291 = vrot.lane.b32.xlu0 %v3959, 16
        %v4292 = vpop.permute.xlu0 %4291
        %4293 = vrot.lane.b32.xlu0 %v3960, 16
        %v4294 = vpop.permute.xlu0 %4293
        %4295 = vrot.lane.b32.xlu0 %v3961, 16
        %v4296 = vpop.permute.xlu0 %4295
        %4297 = vrot.lane.b32.xlu0 %v3962, 16
        %v4298 = vpop.permute.xlu0 %4297
        %4299 = vrot.lane.b32.xlu0 %v3963, 16
        %v4300 = vpop.permute.xlu0 %4299
        %4301 = vrot.lane.b32.xlu0 %v3964, 16
        %v4302 = vpop.permute.xlu0 %4301
        %4303 = vrot.lane.b32.xlu0 %v3965, 16
        %v4304 = vpop.permute.xlu0 %4303
        %4305 = vrot.lane.b32.xlu0 %v3966, 16
        %v4306 = vpop.permute.xlu0 %4305
        %4307 = vrot.lane.b32.xlu0 %v3967, 16
        %v4308 = vpop.permute.xlu0 %4307
        %4309 = vrot.lane.b32.xlu0 %v3968, 16
        %v4310 = vpop.permute.xlu0 %4309
        %4311 = vrot.lane.b32.xlu0 %v3969, 16
        %v4312 = vpop.permute.xlu0 %4311
        %4313 = vrot.lane.b32.xlu0 %v3970, 16
        %v4314 = vpop.permute.xlu0 %4313
        %4315 = vrot.lane.b32.xlu0 %v3971, 16
        %v4316 = vpop.permute.xlu0 %4315
        %4317 = vrot.lane.b32.xlu0 %v3972, 16
        %v4318 = vpop.permute.xlu0 %4317
        %4319 = vrot.lane.b32.xlu0 %v3973, 16
        %v4320 = vpop.permute.xlu0 %4319
        %4321 = vrot.lane.b32.xlu0 %v3974, 16
        %v4322 = vpop.permute.xlu0 %4321
        %4323 = vrot.lane.b32.xlu0 %v3975, 16
        %v4324 = vpop.permute.xlu0 %4323
        %4325 = vrot.lane.b32.xlu0 %v3976, 16
        %v4326 = vpop.permute.xlu0 %4325
        %4327 = vrot.lane.b32.xlu0 %v3977, 16
        %v4328 = vpop.permute.xlu0 %4327
        %4329 = vrot.lane.b32.xlu0 %v3978, 16
        %v4330 = vpop.permute.xlu0 %4329
        %4331 = vrot.lane.b32.xlu0 %v3979, 16
        %v4332 = vpop.permute.xlu0 %4331
        %4333 = vrot.lane.b32.xlu0 %v3980, 16
        %v4334 = vpop.permute.xlu0 %4333
        %4335 = vrot.lane.b32.xlu0 %v3981, 16
        %v4336 = vpop.permute.xlu0 %4335
        %4337 = vrot.lane.b32.xlu0 %v3982, 16
        %v4338 = vpop.permute.xlu0 %4337
        %4339 = vrot.lane.b32.xlu0 %v3983, 16
        %v4340 = vpop.permute.xlu0 %4339
        %4341 = vrot.lane.b32.xlu0 %v3984, 16
        %v4342 = vpop.permute.xlu0 %4341
        %4343 = vrot.lane.b32.xlu0 %v3985, 16
        %v4344 = vpop.permute.xlu0 %4343
        %4345 = vrot.lane.b32.xlu0 %v3986, 16
        %v4346 = vpop.permute.xlu0 %4345
        %4347 = vrot.lane.b32.xlu0 %v3987, 16
        %v4348 = vpop.permute.xlu0 %4347
        %4349 = vrot.lane.b32.xlu0 %v3988, 16
        %v4350 = vpop.permute.xlu0 %4349
        %4351 = vrot.lane.b32.xlu0 %v3989, 16
        %v4352 = vpop.permute.xlu0 %4351
        %4353 = vrot.lane.b32.xlu0 %v3990, 16
        %v4354 = vpop.permute.xlu0 %4353
        %4419 = vrot.lane.b32.xlu0 %v3993, 24
        %v4420 = vpop.permute.xlu0 %4419
        %4421 = vrot.lane.b32.xlu0 %v3994, 24
        %v4422 = vpop.permute.xlu0 %4421
        %4423 = vrot.lane.b32.xlu0 %v3995, 24
        %v4424 = vpop.permute.xlu0 %4423
        %4425 = vrot.lane.b32.xlu0 %v3996, 24
        %v4426 = vpop.permute.xlu0 %4425
        %4427 = vrot.lane.b32.xlu0 %v3997, 24
        %v4428 = vpop.permute.xlu0 %4427
        %4429 = vrot.lane.b32.xlu0 %v3998, 24
        %v4430 = vpop.permute.xlu0 %4429
        %4431 = vrot.lane.b32.xlu0 %v3999, 24
        %v4432 = vpop.permute.xlu0 %4431
        %4433 = vrot.lane.b32.xlu0 %v4000, 24
        %v4434 = vpop.permute.xlu0 %4433
        %4435 = vrot.lane.b32.xlu0 %v4001, 24
        %v4436 = vpop.permute.xlu0 %4435
        %4437 = vrot.lane.b32.xlu0 %v4002, 24
        %v4438 = vpop.permute.xlu0 %4437
        %4439 = vrot.lane.b32.xlu0 %v4003, 24
        %v4440 = vpop.permute.xlu0 %4439
        %4441 = vrot.lane.b32.xlu0 %v4004, 24
        %v4442 = vpop.permute.xlu0 %4441
        %4443 = vrot.lane.b32.xlu0 %v4005, 24
        %v4444 = vpop.permute.xlu0 %4443
        %4445 = vrot.lane.b32.xlu0 %v4006, 24
        %v4446 = vpop.permute.xlu0 %4445
        %4447 = vrot.lane.b32.xlu0 %v4007, 24
        %v4448 = vpop.permute.xlu0 %4447
        %4449 = vrot.lane.b32.xlu0 %v4008, 24
        %v4450 = vpop.permute.xlu0 %4449
        %4451 = vrot.lane.b32.xlu0 %v4009, 24
        %v4452 = vpop.permute.xlu0 %4451
        %4453 = vrot.lane.b32.xlu0 %v4010, 24
        %v4454 = vpop.permute.xlu0 %4453
        %4455 = vrot.lane.b32.xlu0 %v4011, 24
        %v4456 = vpop.permute.xlu0 %4455
        %4457 = vrot.lane.b32.xlu0 %v4012, 24
        %v4458 = vpop.permute.xlu0 %4457
        %4459 = vrot.lane.b32.xlu0 %v4013, 24
        %v4460 = vpop.permute.xlu0 %4459
        %4461 = vrot.lane.b32.xlu0 %v4014, 24
        %v4462 = vpop.permute.xlu0 %4461
        %4463 = vrot.lane.b32.xlu0 %v4015, 24
        %v4464 = vpop.permute.xlu0 %4463
        %4465 = vrot.lane.b32.xlu0 %v4016, 24
        %v4466 = vpop.permute.xlu0 %4465
        %4467 = vrot.lane.b32.xlu0 %v4017, 24
        %v4468 = vpop.permute.xlu0 %4467
        %4469 = vrot.lane.b32.xlu0 %v4018, 24
        %v4470 = vpop.permute.xlu0 %4469
        %4471 = vrot.lane.b32.xlu0 %v4019, 24
        %v4472 = vpop.permute.xlu0 %4471
        %4473 = vrot.lane.b32.xlu0 %v4020, 24
        %v4474 = vpop.permute.xlu0 %4473
        %4475 = vrot.lane.b32.xlu0 %v4021, 24
        %v4476 = vpop.permute.xlu0 %4475
        %4477 = vrot.lane.b32.xlu0 %v4022, 24
        %v4478 = vpop.permute.xlu0 %4477
        %4479 = vrot.lane.b32.xlu0 %v4023, 24
        %v4480 = vpop.permute.xlu0 %4479
        %4481 = vrot.lane.b32.xlu0 %v4024, 24
        %v4482 = vpop.permute.xlu0 %4481
        %4517 = vrot.lane.b32.xlu0 %v3897, 32
        %v4518 = vpop.permute.xlu0 %4517
        %4519 = vrot.lane.b32.xlu0 %v3898, 32
        %v4520 = vpop.permute.xlu0 %4519
        %4521 = vrot.lane.b32.xlu0 %v3899, 32
        %v4522 = vpop.permute.xlu0 %4521
        %4523 = vrot.lane.b32.xlu0 %v3900, 32
        %v4524 = vpop.permute.xlu0 %4523
        %4525 = vrot.lane.b32.xlu0 %v3901, 32
        %v4526 = vpop.permute.xlu0 %4525
        %4527 = vrot.lane.b32.xlu0 %v3902, 32
        %v4528 = vpop.permute.xlu0 %4527
        %4529 = vrot.lane.b32.xlu0 %v3903, 32
        %v4530 = vpop.permute.xlu0 %4529
        %4531 = vrot.lane.b32.xlu0 %v3904, 32
        %v4532 = vpop.permute.xlu0 %4531
        %4533 = vrot.lane.b32.xlu0 %v3905, 32
        %v4534 = vpop.permute.xlu0 %4533
        %4535 = vrot.lane.b32.xlu0 %v3906, 32
        %v4536 = vpop.permute.xlu0 %4535
        %4537 = vrot.lane.b32.xlu0 %v3907, 32
        %v4538 = vpop.permute.xlu0 %4537
        %4539 = vrot.lane.b32.xlu0 %v3908, 32
        %v4540 = vpop.permute.xlu0 %4539
        %4541 = vrot.lane.b32.xlu0 %v3909, 32
        %v4542 = vpop.permute.xlu0 %4541
        %4543 = vrot.lane.b32.xlu0 %v3910, 32
        %v4544 = vpop.permute.xlu0 %4543
        %4545 = vrot.lane.b32.xlu0 %v3911, 32
        %v4546 = vpop.permute.xlu0 %4545
        %4547 = vrot.lane.b32.xlu0 %v3912, 32
        %v4548 = vpop.permute.xlu0 %4547
        %4549 = vrot.lane.b32.xlu0 %v3913, 32
        %v4550 = vpop.permute.xlu0 %4549
        %4551 = vrot.lane.b32.xlu0 %v3914, 32
        %v4552 = vpop.permute.xlu0 %4551
        %4553 = vrot.lane.b32.xlu0 %v3915, 32
        %v4554 = vpop.permute.xlu0 %4553
        %4555 = vrot.lane.b32.xlu0 %v3916, 32
        %v4556 = vpop.permute.xlu0 %4555
        %4557 = vrot.lane.b32.xlu0 %v3917, 32
        %v4558 = vpop.permute.xlu0 %4557
        %4559 = vrot.lane.b32.xlu0 %v3918, 32
        %v4560 = vpop.permute.xlu0 %4559
        %4561 = vrot.lane.b32.xlu0 %v3919, 32
        %v4562 = vpop.permute.xlu0 %4561
        %4563 = vrot.lane.b32.xlu0 %v3920, 32
        %v4564 = vpop.permute.xlu0 %4563
        %4565 = vrot.lane.b32.xlu0 %v3921, 32
        %v4566 = vpop.permute.xlu0 %4565
        %4567 = vrot.lane.b32.xlu0 %v3922, 32
        %v4568 = vpop.permute.xlu0 %4567
        %4569 = vrot.lane.b32.xlu0 %v3923, 32
        %v4570 = vpop.permute.xlu0 %4569
        %4571 = vrot.lane.b32.xlu0 %v3924, 32
        %v4572 = vpop.permute.xlu0 %4571
        %4573 = vrot.lane.b32.xlu0 %v3925, 32
        %v4574 = vpop.permute.xlu0 %4573
        %4575 = vrot.lane.b32.xlu0 %v3926, 32
        %v4576 = vpop.permute.xlu0 %4575
        %4577 = vrot.lane.b32.xlu0 %v4025, 32
        %v4578 = vpop.permute.xlu0 %4577
        %4579 = vrot.lane.b32.xlu0 %v4026, 32
        %v4580 = vpop.permute.xlu0 %4579
        %4645 = vrot.lane.b32.xlu0 %v4029, 40
        %v4646 = vpop.permute.xlu0 %4645
        %4647 = vrot.lane.b32.xlu0 %v4030, 40
        %v4648 = vpop.permute.xlu0 %4647
        %4649 = vrot.lane.b32.xlu0 %v4031, 40
        %v4650 = vpop.permute.xlu0 %4649
        %4651 = vrot.lane.b32.xlu0 %v4032, 40
        %v4652 = vpop.permute.xlu0 %4651
        %4653 = vrot.lane.b32.xlu0 %v4033, 40
        %v4654 = vpop.permute.xlu0 %4653
        %4655 = vrot.lane.b32.xlu0 %v4034, 40
        %v4656 = vpop.permute.xlu0 %4655
        %4657 = vrot.lane.b32.xlu0 %v4035, 40
        %v4658 = vpop.permute.xlu0 %4657
        %4659 = vrot.lane.b32.xlu0 %v4036, 40
        %v4660 = vpop.permute.xlu0 %4659
        %4661 = vrot.lane.b32.xlu0 %v4037, 40
        %v4662 = vpop.permute.xlu0 %4661
        %4663 = vrot.lane.b32.xlu0 %v4038, 40
        %v4664 = vpop.permute.xlu0 %4663
        %4665 = vrot.lane.b32.xlu0 %v4039, 40
        %v4666 = vpop.permute.xlu0 %4665
        %4667 = vrot.lane.b32.xlu0 %v4040, 40
        %v4668 = vpop.permute.xlu0 %4667
        %4669 = vrot.lane.b32.xlu0 %v4041, 40
        %v4670 = vpop.permute.xlu0 %4669
        %4671 = vrot.lane.b32.xlu0 %v4042, 40
        %v4672 = vpop.permute.xlu0 %4671
        %4673 = vrot.lane.b32.xlu0 %v4043, 40
        %v4674 = vpop.permute.xlu0 %4673
        %4675 = vrot.lane.b32.xlu0 %v4044, 40
        %v4676 = vpop.permute.xlu0 %4675
        %4677 = vrot.lane.b32.xlu0 %v4045, 40
        %v4678 = vpop.permute.xlu0 %4677
        %4679 = vrot.lane.b32.xlu0 %v4046, 40
        %v4680 = vpop.permute.xlu0 %4679
        %4681 = vrot.lane.b32.xlu0 %v4047, 40
        %v4682 = vpop.permute.xlu0 %4681
        %4683 = vrot.lane.b32.xlu0 %v4048, 40
        %v4684 = vpop.permute.xlu0 %4683
        %4685 = vrot.lane.b32.xlu0 %v4049, 40
        %v4686 = vpop.permute.xlu0 %4685
        %4687 = vrot.lane.b32.xlu0 %v4050, 40
        %v4688 = vpop.permute.xlu0 %4687
        %4689 = vrot.lane.b32.xlu0 %v4051, 40
        %v4690 = vpop.permute.xlu0 %4689
        %4691 = vrot.lane.b32.xlu0 %v4052, 40
        %v4692 = vpop.permute.xlu0 %4691
        %4693 = vrot.lane.b32.xlu0 %v4053, 40
        %v4694 = vpop.permute.xlu0 %4693
        %4695 = vrot.lane.b32.xlu0 %v4054, 40
        %v4696 = vpop.permute.xlu0 %4695
        %4697 = vrot.lane.b32.xlu0 %v4055, 40
        %v4698 = vpop.permute.xlu0 %4697
        %4699 = vrot.lane.b32.xlu0 %v4056, 40
        %v4700 = vpop.permute.xlu0 %4699
        %4701 = vrot.lane.b32.xlu0 %v4057, 40
        %v4702 = vpop.permute.xlu0 %4701
        %4703 = vrot.lane.b32.xlu0 %v4058, 40
        %v4704 = vpop.permute.xlu0 %4703
        %4705 = vrot.lane.b32.xlu0 %v4059, 40
        %v4706 = vpop.permute.xlu0 %4705
        %4707 = vrot.lane.b32.xlu0 %v4060, 40
        %v4708 = vpop.permute.xlu0 %4707
        %4773 = vrot.lane.b32.xlu0 %v4063, 48
        %v4774 = vpop.permute.xlu0 %4773
        %4775 = vrot.lane.b32.xlu0 %v4064, 48
        %v4776 = vpop.permute.xlu0 %4775
        %4777 = vrot.lane.b32.xlu0 %v4065, 48
        %v4778 = vpop.permute.xlu0 %4777
        %4779 = vrot.lane.b32.xlu0 %v4066, 48
        %v4780 = vpop.permute.xlu0 %4779
        %4781 = vrot.lane.b32.xlu0 %v4067, 48
        %v4782 = vpop.permute.xlu0 %4781
        %4783 = vrot.lane.b32.xlu0 %v4068, 48
        %v4784 = vpop.permute.xlu0 %4783
        %4785 = vrot.lane.b32.xlu0 %v4069, 48
        %v4786 = vpop.permute.xlu0 %4785
        %4787 = vrot.lane.b32.xlu0 %v4070, 48
        %v4788 = vpop.permute.xlu0 %4787
        %4789 = vrot.lane.b32.xlu0 %v4071, 48
        %v4790 = vpop.permute.xlu0 %4789
        %4791 = vrot.lane.b32.xlu0 %v4072, 48
        %v4792 = vpop.permute.xlu0 %4791
        %4793 = vrot.lane.b32.xlu0 %v4073, 48
        %v4794 = vpop.permute.xlu0 %4793
        %4795 = vrot.lane.b32.xlu0 %v4074, 48
        %v4796 = vpop.permute.xlu0 %4795
        %4797 = vrot.lane.b32.xlu0 %v4075, 48
        %v4798 = vpop.permute.xlu0 %4797
        %4799 = vrot.lane.b32.xlu0 %v4076, 48
        %v4800 = vpop.permute.xlu0 %4799
        %4801 = vrot.lane.b32.xlu0 %v4077, 48
        %v4802 = vpop.permute.xlu0 %4801
        %4803 = vrot.lane.b32.xlu0 %v4078, 48
        %v4804 = vpop.permute.xlu0 %4803
        %4805 = vrot.lane.b32.xlu0 %v4079, 48
        %v4806 = vpop.permute.xlu0 %4805
        %4807 = vrot.lane.b32.xlu0 %v4080, 48
        %v4808 = vpop.permute.xlu0 %4807
        %4809 = vrot.lane.b32.xlu0 %v4081, 48
        %v4810 = vpop.permute.xlu0 %4809
        %4811 = vrot.lane.b32.xlu0 %v4082, 48
        %v4812 = vpop.permute.xlu0 %4811
        %4813 = vrot.lane.b32.xlu0 %v4083, 48
        %v4814 = vpop.permute.xlu0 %4813
        %4815 = vrot.lane.b32.xlu0 %v4084, 48
        %v4816 = vpop.permute.xlu0 %4815
        %4817 = vrot.lane.b32.xlu0 %v4085, 48
        %v4818 = vpop.permute.xlu0 %4817
        %4819 = vrot.lane.b32.xlu0 %v4086, 48
        %v4820 = vpop.permute.xlu0 %4819
        %4821 = vrot.lane.b32.xlu0 %v4087, 48
        %v4822 = vpop.permute.xlu0 %4821
        %4823 = vrot.lane.b32.xlu0 %v4088, 48
        %v4824 = vpop.permute.xlu0 %4823
        %4825 = vrot.lane.b32.xlu0 %v4089, 48
        %v4826 = vpop.permute.xlu0 %4825
        %4827 = vrot.lane.b32.xlu0 %v4090, 48
        %v4828 = vpop.permute.xlu0 %4827
        %4829 = vrot.lane.b32.xlu0 %v4091, 48
        %v4830 = vpop.permute.xlu0 %4829
        %4831 = vrot.lane.b32.xlu0 %v4092, 48
        %v4832 = vpop.permute.xlu0 %4831
        %4833 = vrot.lane.b32.xlu0 %v4093, 48
        %v4834 = vpop.permute.xlu0 %4833
        %4835 = vrot.lane.b32.xlu0 %v4094, 48
        %v4836 = vpop.permute.xlu0 %4835
        %4871 = vrot.lane.b32.xlu0 %v3899, 56
        %v4872 = vpop.permute.xlu0 %4871
        %4873 = vrot.lane.b32.xlu0 %v3900, 56
        %v4874 = vpop.permute.xlu0 %4873
        %4875 = vrot.lane.b32.xlu0 %v3901, 56
        %v4876 = vpop.permute.xlu0 %4875
        %4877 = vrot.lane.b32.xlu0 %v3902, 56
        %v4878 = vpop.permute.xlu0 %4877
        %4879 = vrot.lane.b32.xlu0 %v3903, 56
        %v4880 = vpop.permute.xlu0 %4879
        %4881 = vrot.lane.b32.xlu0 %v3904, 56
        %v4882 = vpop.permute.xlu0 %4881
        %4883 = vrot.lane.b32.xlu0 %v3905, 56
        %v4884 = vpop.permute.xlu0 %4883
        %4885 = vrot.lane.b32.xlu0 %v3906, 56
        %v4886 = vpop.permute.xlu0 %4885
        %4887 = vrot.lane.b32.xlu0 %v3907, 56
        %v4888 = vpop.permute.xlu0 %4887
        %4889 = vrot.lane.b32.xlu0 %v3908, 56
        %v4890 = vpop.permute.xlu0 %4889
        %4891 = vrot.lane.b32.xlu0 %v3909, 56
        %v4892 = vpop.permute.xlu0 %4891
        %4893 = vrot.lane.b32.xlu0 %v3910, 56
        %v4894 = vpop.permute.xlu0 %4893
        %4895 = vrot.lane.b32.xlu0 %v3911, 56
        %v4896 = vpop.permute.xlu0 %4895
        %4897 = vrot.lane.b32.xlu0 %v3912, 56
        %v4898 = vpop.permute.xlu0 %4897
        %4899 = vrot.lane.b32.xlu0 %v3913, 56
        %v4900 = vpop.permute.xlu0 %4899
        %4901 = vrot.lane.b32.xlu0 %v3914, 56
        %v4902 = vpop.permute.xlu0 %4901
        %4903 = vrot.lane.b32.xlu0 %v3915, 56
        %v4904 = vpop.permute.xlu0 %4903
        %4905 = vrot.lane.b32.xlu0 %v3916, 56
        %v4906 = vpop.permute.xlu0 %4905
        %4907 = vrot.lane.b32.xlu0 %v3917, 56
        %v4908 = vpop.permute.xlu0 %4907
        %4909 = vrot.lane.b32.xlu0 %v3918, 56
        %v4910 = vpop.permute.xlu0 %4909
        %4911 = vrot.lane.b32.xlu0 %v3919, 56
        %v4912 = vpop.permute.xlu0 %4911
        %4913 = vrot.lane.b32.xlu0 %v3920, 56
        %v4914 = vpop.permute.xlu0 %4913
        %4915 = vrot.lane.b32.xlu0 %v3921, 56
        %v4916 = vpop.permute.xlu0 %4915
        %4917 = vrot.lane.b32.xlu0 %v3922, 56
        %v4918 = vpop.permute.xlu0 %4917
        %4919 = vrot.lane.b32.xlu0 %v3923, 56
        %v4920 = vpop.permute.xlu0 %4919
        %4921 = vrot.lane.b32.xlu0 %v3924, 56
        %v4922 = vpop.permute.xlu0 %4921
        %4923 = vrot.lane.b32.xlu0 %v3925, 56
        %v4924 = vpop.permute.xlu0 %4923
        %4925 = vrot.lane.b32.xlu0 %v3926, 56
        %v4926 = vpop.permute.xlu0 %4925
        %4927 = vrot.lane.b32.xlu0 %v4025, 56
        %v4928 = vpop.permute.xlu0 %4927
        %4929 = vrot.lane.b32.xlu0 %v4026, 56
        %v4930 = vpop.permute.xlu0 %4929
        %4931 = vrot.lane.b32.xlu0 %v4095, 56
        %v4932 = vpop.permute.xlu0 %4931
        %4933 = vrot.lane.b32.xlu0 %v4096, 56
        %v4934 = vpop.permute.xlu0 %4933
        %4999 = vrot.lane.b32.xlu0 %v4099, 64
        %v5000 = vpop.permute.xlu0 %4999
        %5001 = vrot.lane.b32.xlu0 %v4100, 64
        %v5002 = vpop.permute.xlu0 %5001
        %5003 = vrot.lane.b32.xlu0 %v4101, 64
        %v5004 = vpop.permute.xlu0 %5003
        %5005 = vrot.lane.b32.xlu0 %v4102, 64
        %v5006 = vpop.permute.xlu0 %5005
        %5007 = vrot.lane.b32.xlu0 %v4103, 64
        %v5008 = vpop.permute.xlu0 %5007
        %5009 = vrot.lane.b32.xlu0 %v4104, 64
        %v5010 = vpop.permute.xlu0 %5009
        %5011 = vrot.lane.b32.xlu0 %v4105, 64
        %v5012 = vpop.permute.xlu0 %5011
        %5013 = vrot.lane.b32.xlu0 %v4106, 64
        %v5014 = vpop.permute.xlu0 %5013
        %5015 = vrot.lane.b32.xlu0 %v4107, 64
        %v5016 = vpop.permute.xlu0 %5015
        %5017 = vrot.lane.b32.xlu0 %v4108, 64
        %v5018 = vpop.permute.xlu0 %5017
        %5019 = vrot.lane.b32.xlu0 %v4109, 64
        %v5020 = vpop.permute.xlu0 %5019
        %5021 = vrot.lane.b32.xlu0 %v4110, 64
        %v5022 = vpop.permute.xlu0 %5021
        %5023 = vrot.lane.b32.xlu0 %v4111, 64
        %v5024 = vpop.permute.xlu0 %5023
        %5025 = vrot.lane.b32.xlu0 %v4112, 64
        %v5026 = vpop.permute.xlu0 %5025
        %5027 = vrot.lane.b32.xlu0 %v4113, 64
        %v5028 = vpop.permute.xlu0 %5027
        %5029 = vrot.lane.b32.xlu0 %v4114, 64
        %v5030 = vpop.permute.xlu0 %5029
        %5031 = vrot.lane.b32.xlu0 %v4115, 64
        %v5032 = vpop.permute.xlu0 %5031
        %5033 = vrot.lane.b32.xlu0 %v4116, 64
        %v5034 = vpop.permute.xlu0 %5033
        %5035 = vrot.lane.b32.xlu0 %v4117, 64
        %v5036 = vpop.permute.xlu0 %5035
        %5037 = vrot.lane.b32.xlu0 %v4118, 64
        %v5038 = vpop.permute.xlu0 %5037
        %5039 = vrot.lane.b32.xlu0 %v4119, 64
        %v5040 = vpop.permute.xlu0 %5039
        %5041 = vrot.lane.b32.xlu0 %v4120, 64
        %v5042 = vpop.permute.xlu0 %5041
        %5043 = vrot.lane.b32.xlu0 %v4121, 64
        %v5044 = vpop.permute.xlu0 %5043
        %5045 = vrot.lane.b32.xlu0 %v4122, 64
        %v5046 = vpop.permute.xlu0 %5045
        %5047 = vrot.lane.b32.xlu0 %v4123, 64
        %v5048 = vpop.permute.xlu0 %5047
        %5049 = vrot.lane.b32.xlu0 %v4124, 64
        %v5050 = vpop.permute.xlu0 %5049
        %5051 = vrot.lane.b32.xlu0 %v4125, 64
        %v5052 = vpop.permute.xlu0 %5051
        %5053 = vrot.lane.b32.xlu0 %v4126, 64
        %v5054 = vpop.permute.xlu0 %5053
        %5055 = vrot.lane.b32.xlu0 %v4127, 64
        %v5056 = vpop.permute.xlu0 %5055
        %5057 = vrot.lane.b32.xlu0 %v4128, 64
        %v5058 = vpop.permute.xlu0 %5057
        %5059 = vrot.lane.b32.xlu0 %v4129, 64
        %v5060 = vpop.permute.xlu0 %5059
        %5061 = vrot.lane.b32.xlu0 %v4130, 64
        %v5062 = vpop.permute.xlu0 %5061
        %v5095 = vsel %vm3798, %v3863, %v4164
        %v5096 = vsel %vm3798, %v3864, %v4166
        %v5097 = vsel %vm3798, %v3865, %v4168
        %v5098 = vsel %vm3798, %v3866, %v4170
        %v5099 = vsel %vm3798, %v3867, %v4172
        %v5100 = vsel %vm3798, %v3868, %v4174
        %v5101 = vsel %vm3798, %v3869, %v4176
        %v5102 = vsel %vm3798, %v3870, %v4178
        %v5103 = vsel %vm3798, %v3871, %v4180
        %v5104 = vsel %vm3798, %v3872, %v4182
        %v5105 = vsel %vm3798, %v3873, %v4184
        %v5106 = vsel %vm3798, %v3874, %v4186
        %v5107 = vsel %vm3798, %v3875, %v4188
        %v5108 = vsel %vm3798, %v3876, %v4190
        %v5109 = vsel %vm3798, %v3877, %v4192
        %v5110 = vsel %vm3798, %v3878, %v4194
        %v5111 = vsel %vm3798, %v3879, %v4196
        %v5112 = vsel %vm3798, %v3880, %v4198
        %v5113 = vsel %vm3798, %v3881, %v4200
        %v5114 = vsel %vm3798, %v3882, %v4202
        %v5115 = vsel %vm3798, %v3883, %v4204
        %v5116 = vsel %vm3798, %v3884, %v4206
        %v5117 = vsel %vm3798, %v3885, %v4208
        %v5118 = vsel %vm3798, %v3886, %v4210
        %v5119 = vsel %vm3798, %v3887, %v4212
        %v5120 = vsel %vm3798, %v3888, %v4214
        %v5121 = vsel %vm3798, %v3889, %v4216
        %v5122 = vsel %vm3798, %v3890, %v4218
        %v5123 = vsel %vm3798, %v3891, %v4220
        %v5124 = vsel %vm3798, %v3892, %v4222
        %v5125 = vsel %vm3798, %v3893, %v4224
        %v5126 = vsel %vm3798, %v3894, %v4226
        %v5127 = vsel %vm1058, %v5095, %v4292
        %v5128 = vsel %vm1058, %v5096, %v4294
        %v5129 = vsel %vm1058, %v5097, %v4296
        %v5130 = vsel %vm1058, %v5098, %v4298
        %v5131 = vsel %vm1058, %v5099, %v4300
        %v5132 = vsel %vm1058, %v5100, %v4302
        %v5133 = vsel %vm1058, %v5101, %v4304
        %v5134 = vsel %vm1058, %v5102, %v4306
        %v5135 = vsel %vm1058, %v5103, %v4308
        %v5136 = vsel %vm1058, %v5104, %v4310
        %v5137 = vsel %vm1058, %v5105, %v4312
        %v5138 = vsel %vm1058, %v5106, %v4314
        %v5139 = vsel %vm1058, %v5107, %v4316
        %v5140 = vsel %vm1058, %v5108, %v4318
        %v5141 = vsel %vm1058, %v5109, %v4320
        %v5142 = vsel %vm1058, %v5110, %v4322
        %v5143 = vsel %vm1058, %v5111, %v4324
        %v5144 = vsel %vm1058, %v5112, %v4326
        %v5145 = vsel %vm1058, %v5113, %v4328
        %v5146 = vsel %vm1058, %v5114, %v4330
        %v5147 = vsel %vm1058, %v5115, %v4332
        %v5148 = vsel %vm1058, %v5116, %v4334
        %v5149 = vsel %vm1058, %v5117, %v4336
        %v5150 = vsel %vm1058, %v5118, %v4338
        %v5151 = vsel %vm1058, %v5119, %v4340
        %v5152 = vsel %vm1058, %v5120, %v4342
        %v5153 = vsel %vm1058, %v5121, %v4344
        %v5154 = vsel %vm1058, %v5122, %v4346
        %v5155 = vsel %vm1058, %v5123, %v4348
        %v5156 = vsel %vm1058, %v5124, %v4350
        %v5157 = vsel %vm1058, %v5125, %v4352
        %v5158 = vsel %vm1058, %v5126, %v4354
        %vm5159 = vcmask 195584
        %v5160 = vsel %vm5159, %v5127, %v4420
        %v5161 = vsel %vm5159, %v5128, %v4422
        %v5162 = vsel %vm5159, %v5129, %v4424
        %v5163 = vsel %vm5159, %v5130, %v4426
        %v5164 = vsel %vm5159, %v5131, %v4428
        %v5165 = vsel %vm5159, %v5132, %v4430
        %v5166 = vsel %vm5159, %v5133, %v4432
        %v5167 = vsel %vm5159, %v5134, %v4434
        %v5168 = vsel %vm5159, %v5135, %v4436
        %v5169 = vsel %vm5159, %v5136, %v4438
        %v5170 = vsel %vm5159, %v5137, %v4440
        %v5171 = vsel %vm5159, %v5138, %v4442
        %v5172 = vsel %vm5159, %v5139, %v4444
        %v5173 = vsel %vm5159, %v5140, %v4446
        %v5174 = vsel %vm5159, %v5141, %v4448
        %v5175 = vsel %vm5159, %v5142, %v4450
        %v5176 = vsel %vm5159, %v5143, %v4452
        %v5177 = vsel %vm5159, %v5144, %v4454
        %v5178 = vsel %vm5159, %v5145, %v4456
        %v5179 = vsel %vm5159, %v5146, %v4458
        %v5180 = vsel %vm5159, %v5147, %v4460
        %v5181 = vsel %vm5159, %v5148, %v4462
        %v5182 = vsel %vm5159, %v5149, %v4464
        %v5183 = vsel %vm5159, %v5150, %v4466
        %v5184 = vsel %vm5159, %v5151, %v4468
        %v5185 = vsel %vm5159, %v5152, %v4470
        %v5186 = vsel %vm5159, %v5153, %v4472
        %v5187 = vsel %vm5159, %v5154, %v4474
        %v5188 = vsel %vm5159, %v5155, %v4476
        %v5189 = vsel %vm5159, %v5156, %v4478
        %v5190 = vsel %vm5159, %v5157, %v4480
        %v5191 = vsel %vm5159, %v5158, %v4482
        %v5192 = vsel %vm2844, %v5160, %v4518
        %v5193 = vsel %vm2844, %v5161, %v4520
        %v5194 = vsel %vm2844, %v5162, %v4522
        %v5195 = vsel %vm2844, %v5163, %v4524
        %v5196 = vsel %vm2844, %v5164, %v4526
        %v5197 = vsel %vm2844, %v5165, %v4528
        %v5198 = vsel %vm2844, %v5166, %v4530
        %v5199 = vsel %vm2844, %v5167, %v4532
        %v5200 = vsel %vm2844, %v5168, %v4534
        %v5201 = vsel %vm2844, %v5169, %v4536
        %v5202 = vsel %vm2844, %v5170, %v4538
        %v5203 = vsel %vm2844, %v5171, %v4540
        %v5204 = vsel %vm2844, %v5172, %v4542
        %v5205 = vsel %vm2844, %v5173, %v4544
        %v5206 = vsel %vm2844, %v5174, %v4546
        %v5207 = vsel %vm2844, %v5175, %v4548
        %v5208 = vsel %vm2844, %v5176, %v4550
        %v5209 = vsel %vm2844, %v5177, %v4552
        %v5210 = vsel %vm2844, %v5178, %v4554
        %v5211 = vsel %vm2844, %v5179, %v4556
        %v5212 = vsel %vm2844, %v5180, %v4558
        %v5213 = vsel %vm2844, %v5181, %v4560
        %v5214 = vsel %vm2844, %v5182, %v4562
        %v5215 = vsel %vm2844, %v5183, %v4564
        %v5216 = vsel %vm2844, %v5184, %v4566
        %v5217 = vsel %vm2844, %v5185, %v4568
        %v5218 = vsel %vm2844, %v5186, %v4570
        %v5219 = vsel %vm2844, %v5187, %v4572
        %v5220 = vsel %vm2844, %v5188, %v4574
        %v5221 = vsel %vm2844, %v5189, %v4576
        %v5222 = vsel %vm2844, %v5190, %v4578
        %v5223 = vsel %vm2844, %v5191, %v4580
        %vm5224 = vcmask 326656
        %v5225 = vsel %vm5224, %v5192, %v4646
        %v5226 = vsel %vm5224, %v5193, %v4648
        %v5227 = vsel %vm5224, %v5194, %v4650
        %v5228 = vsel %vm5224, %v5195, %v4652
        %v5229 = vsel %vm5224, %v5196, %v4654
        %v5230 = vsel %vm5224, %v5197, %v4656
        %v5231 = vsel %vm5224, %v5198, %v4658
        %v5232 = vsel %vm5224, %v5199, %v4660
        %v5233 = vsel %vm5224, %v5200, %v4662
        %v5234 = vsel %vm5224, %v5201, %v4664
        %v5235 = vsel %vm5224, %v5202, %v4666
        %v5236 = vsel %vm5224, %v5203, %v4668
        %v5237 = vsel %vm5224, %v5204, %v4670
        %v5238 = vsel %vm5224, %v5205, %v4672
        %v5239 = vsel %vm5224, %v5206, %v4674
        %v5240 = vsel %vm5224, %v5207, %v4676
        %v5241 = vsel %vm5224, %v5208, %v4678
        %v5242 = vsel %vm5224, %v5209, %v4680
        %v5243 = vsel %vm5224, %v5210, %v4682
        %v5244 = vsel %vm5224, %v5211, %v4684
        %v5245 = vsel %vm5224, %v5212, %v4686
        %v5246 = vsel %vm5224, %v5213, %v4688
        %v5247 = vsel %vm5224, %v5214, %v4690
        %v5248 = vsel %vm5224, %v5215, %v4692
        %v5249 = vsel %vm5224, %v5216, %v4694
        %v5250 = vsel %vm5224, %v5217, %v4696
        %v5251 = vsel %vm5224, %v5218, %v4698
        %v5252 = vsel %vm5224, %v5219, %v4700
        %v5253 = vsel %vm5224, %v5220, %v4702
        %v5254 = vsel %vm5224, %v5221, %v4704
        %v5255 = vsel %vm5224, %v5222, %v4706
        %v5256 = vsel %vm5224, %v5223, %v4708
        %v5257 = vsel %vm1378, %v5225, %v4774
        %v5258 = vsel %vm1378, %v5226, %v4776
        %v5259 = vsel %vm1378, %v5227, %v4778
        %v5260 = vsel %vm1378, %v5228, %v4780
        %v5261 = vsel %vm1378, %v5229, %v4782
        %v5262 = vsel %vm1378, %v5230, %v4784
        %v5263 = vsel %vm1378, %v5231, %v4786
        %v5264 = vsel %vm1378, %v5232, %v4788
        %v5265 = vsel %vm1378, %v5233, %v4790
        %v5266 = vsel %vm1378, %v5234, %v4792
        %v5267 = vsel %vm1378, %v5235, %v4794
        %v5268 = vsel %vm1378, %v5236, %v4796
        %v5269 = vsel %vm1378, %v5237, %v4798
        %v5270 = vsel %vm1378, %v5238, %v4800
        %v5271 = vsel %vm1378, %v5239, %v4802
        %v5272 = vsel %vm1378, %v5240, %v4804
        %v5273 = vsel %vm1378, %v5241, %v4806
        %v5274 = vsel %vm1378, %v5242, %v4808
        %v5275 = vsel %vm1378, %v5243, %v4810
        %v5276 = vsel %vm1378, %v5244, %v4812
        %v5277 = vsel %vm1378, %v5245, %v4814
        %v5278 = vsel %vm1378, %v5246, %v4816
        %v5279 = vsel %vm1378, %v5247, %v4818
        %v5280 = vsel %vm1378, %v5248, %v4820
        %v5281 = vsel %vm1378, %v5249, %v4822
        %v5282 = vsel %vm1378, %v5250, %v4824
        %v5283 = vsel %vm1378, %v5251, %v4826
        %v5284 = vsel %vm1378, %v5252, %v4828
        %v5285 = vsel %vm1378, %v5253, %v4830
        %v5286 = vsel %vm1378, %v5254, %v4832
        %v5287 = vsel %vm1378, %v5255, %v4834
        %v5288 = vsel %vm1378, %v5256, %v4836
        %vm5289 = vcmask 457728
        %v5290 = vsel %vm5289, %v5257, %v4872
        %v5291 = vsel %vm5289, %v5258, %v4874
        %v5292 = vsel %vm5289, %v5259, %v4876
        %v5293 = vsel %vm5289, %v5260, %v4878
        %v5294 = vsel %vm5289, %v5261, %v4880
        %v5295 = vsel %vm5289, %v5262, %v4882
        %v5296 = vsel %vm5289, %v5263, %v4884
        %v5297 = vsel %vm5289, %v5264, %v4886
        %v5298 = vsel %vm5289, %v5265, %v4888
        %v5299 = vsel %vm5289, %v5266, %v4890
        %v5300 = vsel %vm5289, %v5267, %v4892
        %v5301 = vsel %vm5289, %v5268, %v4894
        %v5302 = vsel %vm5289, %v5269, %v4896
        %v5303 = vsel %vm5289, %v5270, %v4898
        %v5304 = vsel %vm5289, %v5271, %v4900
        %v5305 = vsel %vm5289, %v5272, %v4902
        %v5306 = vsel %vm5289, %v5273, %v4904
        %v5307 = vsel %vm5289, %v5274, %v4906
        %v5308 = vsel %vm5289, %v5275, %v4908
        %v5309 = vsel %vm5289, %v5276, %v4910
        %v5310 = vsel %vm5289, %v5277, %v4912
        %v5311 = vsel %vm5289, %v5278, %v4914
        %v5312 = vsel %vm5289, %v5279, %v4916
        %v5313 = vsel %vm5289, %v5280, %v4918
        %v5314 = vsel %vm5289, %v5281, %v4920
        %v5315 = vsel %vm5289, %v5282, %v4922
        %v5316 = vsel %vm5289, %v5283, %v4924
        %v5317 = vsel %vm5289, %v5284, %v4926
        %v5318 = vsel %vm5289, %v5285, %v4928
        %v5319 = vsel %vm5289, %v5286, %v4930
        %v5320 = vsel %vm5289, %v5287, %v4932
        %v5321 = vsel %vm5289, %v5288, %v4934
        %v5322 = vsel %vm2778, %v5290, %v5000
        %v5323 = vsel %vm2778, %v5291, %v5002
        %v5324 = vsel %vm2778, %v5292, %v5004
        %v5325 = vsel %vm2778, %v5293, %v5006
        %v5326 = vsel %vm2778, %v5294, %v5008
        %v5327 = vsel %vm2778, %v5295, %v5010
        %v5328 = vsel %vm2778, %v5296, %v5012
        %v5329 = vsel %vm2778, %v5297, %v5014
        %v5330 = vsel %vm2778, %v5298, %v5016
        %v5331 = vsel %vm2778, %v5299, %v5018
        %v5332 = vsel %vm2778, %v5300, %v5020
        %v5333 = vsel %vm2778, %v5301, %v5022
        %v5334 = vsel %vm2778, %v5302, %v5024
        %v5335 = vsel %vm2778, %v5303, %v5026
        %v5336 = vsel %vm2778, %v5304, %v5028
        %v5337 = vsel %vm2778, %v5305, %v5030
        %v5338 = vsel %vm2778, %v5306, %v5032
        %v5339 = vsel %vm2778, %v5307, %v5034
        %v5340 = vsel %vm2778, %v5308, %v5036
        %v5341 = vsel %vm2778, %v5309, %v5038
        %v5342 = vsel %vm2778, %v5310, %v5040
        %v5343 = vsel %vm2778, %v5311, %v5042
        %v5344 = vsel %vm2778, %v5312, %v5044
        %v5345 = vsel %vm2778, %v5313, %v5046
        %v5346 = vsel %vm2778, %v5314, %v5048
        %v5347 = vsel %vm2778, %v5315, %v5050
        %v5348 = vsel %vm2778, %v5316, %v5052
        %v5349 = vsel %vm2778, %v5317, %v5054
        %v5350 = vsel %vm2778, %v5318, %v5056
        %v5351 = vsel %vm2778, %v5319, %v5058
        %v5352 = vsel %vm2778, %v5320, %v5060
        %v5353 = vsel %vm2778, %v5321, %v5062
        %v5354 = vpack.c.bf16 %v5323, %v5322
        %v5355 = vpack.c.bf16 %v5325, %v5324
        %v5356 = vpack.c.bf16 %v5327, %v5326
        %v5357 = vpack.c.bf16 %v5329, %v5328
        %v5358 = vpack.c.bf16 %v5331, %v5330
        %v5359 = vpack.c.bf16 %v5333, %v5332
        %v5360 = vpack.c.bf16 %v5335, %v5334
        %v5361 = vpack.c.bf16 %v5337, %v5336
        %v5362 = vpack.c.bf16 %v5339, %v5338
        %v5363 = vpack.c.bf16 %v5341, %v5340
        %v5364 = vpack.c.bf16 %v5343, %v5342
        %v5365 = vpack.c.bf16 %v5345, %v5344
        %v5366 = vpack.c.bf16 %v5347, %v5346
        %v5367 = vpack.c.bf16 %v5349, %v5348
        %v5368 = vpack.c.bf16 %v5351, %v5350
        %v5369 = vpack.c.bf16 %v5353, %v5352
        %v5370 = vld [vmem:[%s7] sm:$0xf]
        %v5371 = vld [vmem:[%s7 + $0x4] sm:$0xf]
        %v5372 = vld [vmem:[%s7 + $0x8] sm:$0xf]
        %v5373 = vld [vmem:[%s7 + $0xc] sm:$0xf]
        %v5374 = vld [vmem:[%s7 + $0x10] sm:$0xf]
        %v5375 = vld [vmem:[%s7 + $0x14] sm:$0xf]
        %v5376 = vld [vmem:[%s7 + $0x18] sm:$0xf]
        %v5377 = vld [vmem:[%s7 + $0x1c] sm:$0xf]
        %v5378 = vld [vmem:[%s7 + $0x20] sm:$0xf]
        %v5388 = vunpack.c.l.b16 %v5370
        %v5389 = vunpack.c.l.b16 %v5371
        %v5390 = vunpack.c.l.b16 %v5372
        %v5391 = vunpack.c.l.b16 %v5373
        %v5392 = vunpack.c.l.b16 %v5374
        %v5393 = vunpack.c.l.b16 %v5375
        %v5394 = vunpack.c.l.b16 %v5376
        %v5395 = vunpack.c.l.b16 %v5377
        %v5396 = vunpack.c.l.b16 %v5378
        %v5397 = vpack.c.b16 %v5389, %v5388
        %v5398 = vpack.c.b16 %v5391, %v5390
        %v5399 = vpack.c.b16 %v5393, %v5392
        %v5400 = vpack.c.b16 %v5395, %v5394
        %v5401 = vpack.c.b16 %v5396, %v5396
        %vm5406 = vcmask 588800
        %v5408 = vsel %vm5406, %v5354, 0
        %v5411 = vsel %vm5406, %v5355, 0
        %v5414 = vsel %vm5406, %v5356, 0
        %v5417 = vsel %vm5406, %v5357, 0
        %v5420 = vsel %vm5406, %v5358, 0
        %v5423 = vsel %vm5406, %v5359, 0
        %v5426 = vsel %vm5406, %v5360, 0
        %v5429 = vsel %vm5406, %v5361, 0
        %v5432 = vsel %vm5406, %v5362, 0
        %v5435 = vsel %vm5406, %v5363, 0
        %v5438 = vsel %vm5406, %v5364, 0
        %v5441 = vsel %vm5406, %v5365, 0
        %v5444 = vsel %vm5406, %v5366, 0
        %v5447 = vsel %vm5406, %v5367, 0
        %v5450 = vsel %vm5406, %v5368, 0
        %v5453 = vsel %vm5406, %v5369, 0
        %vm5455 = vcmask 1043456
        %v5457 = vsel %vm5455, %v5401, 0
        %5459 = vmatprep.subr.bf16.mxu0 0
        %5460 = vmatpush1.bf16.msra.mxu0 0
        %5461 = vmatprep.subr.bf16.mxu0 0
        %5462 = vmatpush1.bf16.msra.mxu0 0
        %5463 = vmatprep.subr.bf16.mxu0 0
        %5464 = vmatpush1.bf16.msra.mxu0 0
        %5465 = vmatprep.subr.bf16.mxu0 0
        %5466 = vmatpush1.bf16.msra.mxu0 %v5457
        %5467 = vmatprep.subr.bf16.mxu0 0
        %5468 = vmatpush1.bf16.msra.mxu0 %v5400
        %5469 = vmatprep.subr.bf16.mxu0 0
        %5470 = vmatpush1.bf16.msra.mxu0 %v5399
        %5471 = vmatprep.subr.bf16.mxu0 0
        %5472 = vmatpush1.bf16.msra.mxu0 %v5398
        %5473 = vmatprep.subr.bf16.mxu0 0
        %5474 = vmatpush1.bf16.msra.mxu0 %v5397
        %5475 = vmatprep.subr.bf16.mxu0 0
        %5476 = vmatpush2.bf16.msra.mxu0 0
        %5477 = vmatprep.subr.bf16.mxu0 0
        %5478 = vmatpush2.bf16.msra.mxu0 0
        %5479 = vmatprep.subr.bf16.mxu0 0
        %5480 = vmatpush2.bf16.msra.mxu0 0
        %5481 = vmatprep.subr.bf16.mxu0 0
        %5482 = vmatpush2.bf16.msra.mxu0 0
        %5483 = vmatprep.subr.bf16.mxu0 0
        %5484 = vmatpush2.bf16.msra.mxu0 0
        %5485 = vmatprep.subr.bf16.mxu0 0
        %5486 = vmatpush2.bf16.msra.mxu0 0
        %5487 = vmatprep.subr.bf16.mxu0 0
        %5488 = vmatpush2.bf16.msra.mxu0 0
        %5489 = vmatprep.subr.bf16.mxu0 0
        %5490 = vmatpush2.bf16.msra.mxu0 0
        %5491 = vmatprep.mubr.bf16.mxu0 0
        %5492 = vmatmul.mubr.bf16.gmra.mxu0 %v5408
        %v5493 = vpop.f32.mrf.mxu0
        %v5494 = vadd.f32 0.0, %v5493
        %v5495 = vpop.f32.mrf.mxu0
        %v5496 = vpop.f32.mrf.mxu0
        %v5497 = vadd.f32 0.0, %v5496
        %v5498 = vpop.f32.mrf.mxu0
        %5499 = vmatprep.mubr.bf16.mxu0 0
        %5500 = vmatmul.mubr.bf16.gmra.mxu0 %v5411
        %v5501 = vpop.f32.mrf.mxu0
        %v5502 = vadd.f32 0.0, %v5501
        %v5503 = vpop.f32.mrf.mxu0
        %v5504 = vpop.f32.mrf.mxu0
        %v5505 = vadd.f32 0.0, %v5504
        %v5506 = vpop.f32.mrf.mxu0
        %5507 = vmatprep.mubr.bf16.mxu0 0
        %5508 = vmatmul.mubr.bf16.gmra.mxu0 %v5414
        %v5509 = vpop.f32.mrf.mxu0
        %v5510 = vadd.f32 0.0, %v5509
        %v5511 = vpop.f32.mrf.mxu0
        %v5512 = vpop.f32.mrf.mxu0
        %v5513 = vadd.f32 0.0, %v5512
        %v5514 = vpop.f32.mrf.mxu0
        %5515 = vmatprep.mubr.bf16.mxu0 0
        %5516 = vmatmul.mubr.bf16.gmra.mxu0 %v5417
        %v5517 = vpop.f32.mrf.mxu0
        %v5518 = vadd.f32 0.0, %v5517
        %v5519 = vpop.f32.mrf.mxu0
        %v5520 = vpop.f32.mrf.mxu0
        %v5521 = vadd.f32 0.0, %v5520
        %v5522 = vpop.f32.mrf.mxu0
        %5523 = vmatprep.mubr.bf16.mxu0 0
        %5524 = vmatmul.mubr.bf16.gmra.mxu0 %v5420
        %v5525 = vpop.f32.mrf.mxu0
        %v5526 = vadd.f32 0.0, %v5525
        %v5527 = vpop.f32.mrf.mxu0
        %v5528 = vpop.f32.mrf.mxu0
        %v5529 = vadd.f32 0.0, %v5528
        %v5530 = vpop.f32.mrf.mxu0
        %5531 = vmatprep.mubr.bf16.mxu0 0
        %5532 = vmatmul.mubr.bf16.gmra.mxu0 %v5423
        %v5533 = vpop.f32.mrf.mxu0
        %v5534 = vadd.f32 0.0, %v5533
        %v5535 = vpop.f32.mrf.mxu0
        %v5536 = vpop.f32.mrf.mxu0
        %v5537 = vadd.f32 0.0, %v5536
        %v5538 = vpop.f32.mrf.mxu0
        %5539 = vmatprep.mubr.bf16.mxu0 0
        %5540 = vmatmul.mubr.bf16.gmra.mxu0 %v5426
        %v5541 = vpop.f32.mrf.mxu0
        %v5542 = vadd.f32 0.0, %v5541
        %v5543 = vpop.f32.mrf.mxu0
        %v5544 = vpop.f32.mrf.mxu0
        %v5545 = vadd.f32 0.0, %v5544
        %v5546 = vpop.f32.mrf.mxu0
        %5547 = vmatprep.mubr.bf16.mxu0 0
        %5548 = vmatmul.mubr.bf16.gmra.mxu0 %v5429
        %v5549 = vpop.f32.mrf.mxu0
        %v5550 = vadd.f32 0.0, %v5549
        %v5551 = vpop.f32.mrf.mxu0
        %v5552 = vpop.f32.mrf.mxu0
        %v5553 = vadd.f32 0.0, %v5552
        %v5554 = vpop.f32.mrf.mxu0
        %5555 = vmatprep.mubr.bf16.mxu0 0
        %5556 = vmatmul.mubr.bf16.gmra.mxu0 %v5432
        %v5557 = vpop.f32.mrf.mxu0
        %v5558 = vadd.f32 0.0, %v5557
        %v5559 = vpop.f32.mrf.mxu0
        %v5560 = vpop.f32.mrf.mxu0
        %v5561 = vadd.f32 0.0, %v5560
        %v5562 = vpop.f32.mrf.mxu0
        %5563 = vmatprep.mubr.bf16.mxu0 0
        %5564 = vmatmul.mubr.bf16.gmra.mxu0 %v5435
        %v5565 = vpop.f32.mrf.mxu0
        %v5566 = vadd.f32 0.0, %v5565
        %v5567 = vpop.f32.mrf.mxu0
        %v5568 = vpop.f32.mrf.mxu0
        %v5569 = vadd.f32 0.0, %v5568
        %v5570 = vpop.f32.mrf.mxu0
        %5571 = vmatprep.mubr.bf16.mxu0 0
        %5572 = vmatmul.mubr.bf16.gmra.mxu0 %v5438
        %v5573 = vpop.f32.mrf.mxu0
        %v5574 = vadd.f32 0.0, %v5573
        %v5575 = vpop.f32.mrf.mxu0
        %v5576 = vpop.f32.mrf.mxu0
        %v5577 = vadd.f32 0.0, %v5576
        %v5578 = vpop.f32.mrf.mxu0
        %5579 = vmatprep.mubr.bf16.mxu0 0
        %5580 = vmatmul.mubr.bf16.gmra.mxu0 %v5441
        %v5581 = vpop.f32.mrf.mxu0
        %v5582 = vadd.f32 0.0, %v5581
        %v5583 = vpop.f32.mrf.mxu0
        %v5584 = vpop.f32.mrf.mxu0
        %v5585 = vadd.f32 0.0, %v5584
        %v5586 = vpop.f32.mrf.mxu0
        %5587 = vmatprep.mubr.bf16.mxu0 0
        %5588 = vmatmul.mubr.bf16.gmra.mxu0 %v5444
        %v5589 = vpop.f32.mrf.mxu0
        %v5590 = vadd.f32 0.0, %v5589
        %v5591 = vpop.f32.mrf.mxu0
        %v5592 = vpop.f32.mrf.mxu0
        %v5593 = vadd.f32 0.0, %v5592
        %v5594 = vpop.f32.mrf.mxu0
        %5595 = vmatprep.mubr.bf16.mxu0 0
        %5596 = vmatmul.mubr.bf16.gmra.mxu0 %v5447
        %v5597 = vpop.f32.mrf.mxu0
        %v5598 = vadd.f32 0.0, %v5597
        %v5599 = vpop.f32.mrf.mxu0
        %v5600 = vpop.f32.mrf.mxu0
        %v5601 = vadd.f32 0.0, %v5600
        %v5602 = vpop.f32.mrf.mxu0
        %5603 = vmatprep.mubr.bf16.mxu0 0
        %5604 = vmatmul.mubr.bf16.gmra.mxu0 %v5450
        %v5605 = vpop.f32.mrf.mxu0
        %v5606 = vadd.f32 0.0, %v5605
        %v5607 = vpop.f32.mrf.mxu0
        %v5608 = vpop.f32.mrf.mxu0
        %v5609 = vadd.f32 0.0, %v5608
        %v5610 = vpop.f32.mrf.mxu0
        %5611 = vmatprep.mubr.bf16.mxu0 0
        %5612 = vmatmul.mubr.bf16.gmra.mxu0 %v5453
        %v5613 = vpop.f32.mrf.mxu0
        %v5614 = vadd.f32 0.0, %v5613
        %v5615 = vpop.f32.mrf.mxu0
        %v5616 = vpop.f32.mrf.mxu0
        %v5617 = vadd.f32 0.0, %v5616
        %v5618 = vpop.f32.mrf.mxu0
        %5619 = vdwg.mxu0
        %v5620 = vld [vmem:[%s8] sm:$0x1]
        %v5622 = vlaneseq
        %v5623 = vshrl.u32 %v5622, 7
        %v5624 = vsub.s32 0, %v5623
        %v5625 = vrot.slane %v5620, %v5624
        %v5627 = vmul.f32 %v5494, %v5625
        %v5628 = vmul.f32 %v5497, %v5625
        %v5629 = vmul.f32 %v5502, %v5625
        %v5630 = vmul.f32 %v5505, %v5625
        %v5631 = vmul.f32 %v5510, %v5625
        %v5632 = vmul.f32 %v5513, %v5625
        %v5633 = vmul.f32 %v5518, %v5625
        %v5634 = vmul.f32 %v5521, %v5625
        %v5635 = vmul.f32 %v5526, %v5625
        %v5636 = vmul.f32 %v5529, %v5625
        %v5637 = vmul.f32 %v5534, %v5625
        %v5638 = vmul.f32 %v5537, %v5625
        %v5639 = vmul.f32 %v5542, %v5625
        %v5640 = vmul.f32 %v5545, %v5625
        %v5641 = vmul.f32 %v5550, %v5625
        %v5642 = vmul.f32 %v5553, %v5625
        %v5643 = vmul.f32 %v5558, %v5625
        %v5644 = vmul.f32 %v5561, %v5625
        %v5645 = vmul.f32 %v5566, %v5625
        %v5646 = vmul.f32 %v5569, %v5625
        %v5647 = vmul.f32 %v5574, %v5625
        %v5648 = vmul.f32 %v5577, %v5625
        %v5649 = vmul.f32 %v5582, %v5625
        %v5650 = vmul.f32 %v5585, %v5625
        %v5651 = vmul.f32 %v5590, %v5625
        %v5652 = vmul.f32 %v5593, %v5625
        %v5653 = vmul.f32 %v5598, %v5625
        %v5654 = vmul.f32 %v5601, %v5625
        %v5655 = vmul.f32 %v5606, %v5625
        %v5656 = vmul.f32 %v5609, %v5625
        %v5657 = vmul.f32 %v5614, %v5625
        %v5658 = vmul.f32 %v5617, %v5625
        %v5659 = vld [vmem:[%s9] sm:$0x1]
        %v5661 = vlaneseq
        %v5662 = vshrl.u32 %v5661, 7
        %v5663 = vsub.s32 0, %v5662
        %v5664 = vrot.slane %v5659, %v5663
        %v5666 = vadd.f32 %v5627, %v5664
        %v5667 = vadd.f32 %v5628, %v5664
        %v5668 = vadd.f32 %v5629, %v5664
        %v5669 = vadd.f32 %v5630, %v5664
        %v5670 = vadd.f32 %v5631, %v5664
        %v5671 = vadd.f32 %v5632, %v5664
        %v5672 = vadd.f32 %v5633, %v5664
        %v5673 = vadd.f32 %v5634, %v5664
        %v5674 = vadd.f32 %v5635, %v5664
        %v5675 = vadd.f32 %v5636, %v5664
        %v5676 = vadd.f32 %v5637, %v5664
        %v5677 = vadd.f32 %v5638, %v5664
        %v5678 = vadd.f32 %v5639, %v5664
        %v5679 = vadd.f32 %v5640, %v5664
        %v5680 = vadd.f32 %v5641, %v5664
        %v5681 = vadd.f32 %v5642, %v5664
        %v5682 = vadd.f32 %v5643, %v5664
        %v5683 = vadd.f32 %v5644, %v5664
        %v5684 = vadd.f32 %v5645, %v5664
        %v5685 = vadd.f32 %v5646, %v5664
        %v5686 = vadd.f32 %v5647, %v5664
        %v5687 = vadd.f32 %v5648, %v5664
        %v5688 = vadd.f32 %v5649, %v5664
        %v5689 = vadd.f32 %v5650, %v5664
        %v5690 = vadd.f32 %v5651, %v5664
        %v5691 = vadd.f32 %v5652, %v5664
        %v5692 = vadd.f32 %v5653, %v5664
        %v5693 = vadd.f32 %v5654, %v5664
        %v5694 = vadd.f32 %v5655, %v5664
        %v5695 = vadd.f32 %v5656, %v5664
        %v5696 = vadd.f32 %v5657, %v5664
        %v5697 = vadd.f32 %v5658, %v5664
        %v5698 = vmax.f32 %v5666, 0.0
        %v5699 = vmax.f32 %v5667, 0.0
        %v5700 = vmax.f32 %v5668, 0.0
        %v5701 = vmax.f32 %v5669, 0.0
        %v5702 = vmax.f32 %v5670, 0.0
        %v5703 = vmax.f32 %v5671, 0.0
        %v5704 = vmax.f32 %v5672, 0.0
        %v5705 = vmax.f32 %v5673, 0.0
        %v5706 = vmax.f32 %v5674, 0.0
        %v5707 = vmax.f32 %v5675, 0.0
        %v5708 = vmax.f32 %v5676, 0.0
        %v5709 = vmax.f32 %v5677, 0.0
        %v5710 = vmax.f32 %v5678, 0.0
        %v5711 = vmax.f32 %v5679, 0.0
        %v5712 = vmax.f32 %v5680, 0.0
        %v5713 = vmax.f32 %v5681, 0.0
        %v5714 = vmax.f32 %v5682, 0.0
        %v5715 = vmax.f32 %v5683, 0.0
        %v5716 = vmax.f32 %v5684, 0.0
        %v5717 = vmax.f32 %v5685, 0.0
        %v5718 = vmax.f32 %v5686, 0.0
        %v5719 = vmax.f32 %v5687, 0.0
        %v5720 = vmax.f32 %v5688, 0.0
        %v5721 = vmax.f32 %v5689, 0.0
        %v5722 = vmax.f32 %v5690, 0.0
        %v5723 = vmax.f32 %v5691, 0.0
        %v5724 = vmax.f32 %v5692, 0.0
        %v5725 = vmax.f32 %v5693, 0.0
        %v5726 = vmax.f32 %v5694, 0.0
        %v5727 = vmax.f32 %v5695, 0.0
        %v5728 = vmax.f32 %v5696, 0.0
        %v5729 = vmax.f32 %v5697, 0.0
        %5730 = vst.msk [vmem:[#allocation2 + $0x18] sm:$0xff] %vm1058, %v5698
        %5731 = vst.msk [vmem:[#allocation2 + $0x20] sm:$0xff] %vm1058, %v5699
        %5732 = vst.msk [vmem:[#allocation2 + $0x28] sm:$0xff] %vm1058, %v5700
        %5733 = vst.msk [vmem:[#allocation2 + $0x30] sm:$0xff] %vm1058, %v5701
        %5734 = vst.msk [vmem:[#allocation2 + $0x38] sm:$0xff] %vm1058, %v5702
        %5735 = vst.msk [vmem:[#allocation2 + $0x40] sm:$0xff] %vm1058, %v5703
        %5736 = vst.msk [vmem:[#allocation2 + $0x48] sm:$0xff] %vm1058, %v5704
        %5737 = vst.msk [vmem:[#allocation2 + $0x50] sm:$0xff] %vm1058, %v5705
        %5738 = vst.msk [vmem:[#allocation2 + $0x58] sm:$0xff] %vm1058, %v5706
        %5739 = vst.msk [vmem:[#allocation2 + $0x60] sm:$0xff] %vm1058, %v5707
        %5740 = vst.msk [vmem:[#allocation2 + $0x68] sm:$0xff] %vm1058, %v5708
        %5741 = vst.msk [vmem:[#allocation2 + $0x70] sm:$0xff] %vm1058, %v5709
        %5742 = vst.msk [vmem:[#allocation2 + $0x78] sm:$0xff] %vm1058, %v5710
        %5743 = vst.msk [vmem:[#allocation2 + $0x80] sm:$0xff] %vm1058, %v5711
        %5744 = vst.msk [vmem:[#allocation2 + $0x88] sm:$0xff] %vm1058, %v5712
        %5745 = vst.msk [vmem:[#allocation2 + $0x90] sm:$0xff] %vm1058, %v5713
        %5746 = vst.msk [vmem:[#allocation2 + $0x98] sm:$0xff] %vm1058, %v5714
        %5747 = vst.msk [vmem:[#allocation2 + $0xa0] sm:$0xff] %vm1058, %v5715
        %5748 = vst.msk [vmem:[#allocation2 + $0xa8] sm:$0xff] %vm1058, %v5716
        %5749 = vst.msk [vmem:[#allocation2 + $0xb0] sm:$0xff] %vm1058, %v5717
        %5750 = vst.msk [vmem:[#allocation2 + $0xb8] sm:$0xff] %vm1058, %v5718
        %5751 = vst.msk [vmem:[#allocation2 + $0xc0] sm:$0xff] %vm1058, %v5719
        %5752 = vst.msk [vmem:[#allocation2 + $0xc8] sm:$0xff] %vm1058, %v5720
        %5753 = vst.msk [vmem:[#allocation2 + $0xd0] sm:$0xff] %vm1058, %v5721
        %5754 = vst.msk [vmem:[#allocation2 + $0xd8] sm:$0xff] %vm1058, %v5722
        %5755 = vst.msk [vmem:[#allocation2 + $0xe0] sm:$0xff] %vm1058, %v5723
        %5756 = vst.msk [vmem:[#allocation2 + $0xe8] sm:$0xff] %vm1058, %v5724
        %5757 = vst.msk [vmem:[#allocation2 + $0xf0] sm:$0xff] %vm1058, %v5725
        %5758 = vst.msk [vmem:[#allocation2 + $0xf8] sm:$0xff] %vm1058, %v5726
        %5759 = vst.msk [vmem:[#allocation2 + $0x100] sm:$0xff] %vm1058, %v5727
        %5760 = vst.msk [vmem:[#allocation2 + $0x108] sm:$0xff] %vm1058, %v5728
        %5761 = vst.msk [vmem:[#allocation2 + $0x110] sm:$0xff] %vm1058, %v5729
        %v5762 = vld [vmem:[#allocation2 + $0x7] sm:$0xff]
        %v5763 = vld [vmem:[#allocation2 + $0xf] sm:$0xff]
        %v5764 = vld [vmem:[#allocation2 + $0x17] sm:$0xff]
        %v5765 = vld [vmem:[#allocation2 + $0x1f] sm:$0xff]
        %v5766 = vld [vmem:[#allocation2 + $0x27] sm:$0xff]
        %v5767 = vld [vmem:[#allocation2 + $0x2f] sm:$0xff]
        %v5768 = vld [vmem:[#allocation2 + $0x37] sm:$0xff]
        %v5769 = vld [vmem:[#allocation2 + $0x3f] sm:$0xff]
        %v5770 = vld [vmem:[#allocation2 + $0x47] sm:$0xff]
        %v5771 = vld [vmem:[#allocation2 + $0x4f] sm:$0xff]
        %v5772 = vld [vmem:[#allocation2 + $0x57] sm:$0xff]
        %v5773 = vld [vmem:[#allocation2 + $0x5f] sm:$0xff]
        %v5774 = vld [vmem:[#allocation2 + $0x67] sm:$0xff]
        %v5775 = vld [vmem:[#allocation2 + $0x6f] sm:$0xff]
        %v5776 = vld [vmem:[#allocation2 + $0x77] sm:$0xff]
        %v5777 = vld [vmem:[#allocation2 + $0x7f] sm:$0xff]
        %v5778 = vld [vmem:[#allocation2 + $0x87] sm:$0xff]
        %v5779 = vld [vmem:[#allocation2 + $0x8f] sm:$0xff]
        %v5780 = vld [vmem:[#allocation2 + $0x97] sm:$0xff]
        %v5781 = vld [vmem:[#allocation2 + $0x9f] sm:$0xff]
        %v5782 = vld [vmem:[#allocation2 + $0xa7] sm:$0xff]
        %v5783 = vld [vmem:[#allocation2 + $0xaf] sm:$0xff]
        %v5784 = vld [vmem:[#allocation2 + $0xb7] sm:$0xff]
        %v5785 = vld [vmem:[#allocation2 + $0xbf] sm:$0xff]
        %v5786 = vld [vmem:[#allocation2 + $0xc7] sm:$0xff]
        %v5787 = vld [vmem:[#allocation2 + $0xcf] sm:$0xff]
        %v5788 = vld [vmem:[#allocation2 + $0xd7] sm:$0xff]
        %v5789 = vld [vmem:[#allocation2 + $0xdf] sm:$0xff]
        %v5790 = vld [vmem:[#allocation2 + $0xe7] sm:$0xff]
        %v5791 = vld [vmem:[#allocation2 + $0xef] sm:$0xff]
        %v5792 = vld [vmem:[#allocation2 + $0xf7] sm:$0xff]
        %v5793 = vld [vmem:[#allocation2 + $0xff] sm:$0xff]
        %v5794 = vsel %vm1481, %v5762, 0.0
        %v5795 = vsel %vm1482, %v5763, 0.0
        %v5796 = vsel %vm1483, %v5764, 0.0
        %v5797 = vsel %vm1484, %v5765, 0.0
        %v5798 = vsel %vm1485, %v5766, 0.0
        %v5799 = vsel %vm1486, %v5767, 0.0
        %v5800 = vsel %vm1487, %v5768, 0.0
        %v5801 = vsel %vm1488, %v5769, 0.0
        %v5802 = vsel %vm1489, %v5770, 0.0
        %v5803 = vsel %vm1490, %v5771, 0.0
        %v5804 = vsel %vm1491, %v5772, 0.0
        %v5805 = vsel %vm1492, %v5773, 0.0
        %v5806 = vsel %vm1493, %v5774, 0.0
        %v5807 = vsel %vm1494, %v5775, 0.0
        %v5808 = vsel %vm1495, %v5776, 0.0
        %v5809 = vsel %vm1496, %v5777, 0.0
        %v5810 = vsel %vm1497, %v5778, 0.0
        %v5811 = vsel %vm1498, %v5779, 0.0
        %v5812 = vsel %vm1499, %v5780, 0.0
        %v5813 = vsel %vm1500, %v5781, 0.0
        %v5814 = vsel %vm1501, %v5782, 0.0
        %v5815 = vsel %vm1502, %v5783, 0.0
        %v5816 = vsel %vm1503, %v5784, 0.0
        %v5817 = vsel %vm1504, %v5785, 0.0
        %v5818 = vsel %vm1505, %v5786, 0.0
        %v5819 = vsel %vm1506, %v5787, 0.0
        %v5820 = vsel %vm1507, %v5788, 0.0
        %v5821 = vsel %vm1508, %v5789, 0.0
        %v5822 = vsel %vm1509, %v5790, 0.0
        %v5823 = vsel %vm1510, %v5791, 0.0
        %v5824 = vsel %vm1511, %v5792, 0.0
        %v5825 = vsel %vm1512, %v5793, 0.0
        %v5826 = vld [vmem:[#allocation2 + $0x8] sm:$0xff]
        %v5827 = vld [vmem:[#allocation2 + $0x10] sm:$0xff]
        %v5828 = vld [vmem:[#allocation2 + $0x18] sm:$0xff]
        %v5829 = vld [vmem:[#allocation2 + $0x20] sm:$0xff]
        %v5830 = vld [vmem:[#allocation2 + $0x28] sm:$0xff]
        %v5831 = vld [vmem:[#allocation2 + $0x30] sm:$0xff]
        %v5832 = vld [vmem:[#allocation2 + $0x38] sm:$0xff]
        %v5833 = vld [vmem:[#allocation2 + $0x40] sm:$0xff]
        %v5834 = vld [vmem:[#allocation2 + $0x48] sm:$0xff]
        %v5835 = vld [vmem:[#allocation2 + $0x50] sm:$0xff]
        %v5836 = vld [vmem:[#allocation2 + $0x58] sm:$0xff]
        %v5837 = vld [vmem:[#allocation2 + $0x60] sm:$0xff]
        %v5838 = vld [vmem:[#allocation2 + $0x68] sm:$0xff]
        %v5839 = vld [vmem:[#allocation2 + $0x70] sm:$0xff]
        %v5840 = vld [vmem:[#allocation2 + $0x78] sm:$0xff]
        %v5841 = vld [vmem:[#allocation2 + $0x80] sm:$0xff]
        %v5842 = vld [vmem:[#allocation2 + $0x88] sm:$0xff]
        %v5843 = vld [vmem:[#allocation2 + $0x90] sm:$0xff]
        %v5844 = vld [vmem:[#allocation2 + $0x98] sm:$0xff]
        %v5845 = vld [vmem:[#allocation2 + $0xa0] sm:$0xff]
        %v5846 = vld [vmem:[#allocation2 + $0xa8] sm:$0xff]
        %v5847 = vld [vmem:[#allocation2 + $0xb0] sm:$0xff]
        %v5848 = vld [vmem:[#allocation2 + $0xb8] sm:$0xff]
        %v5849 = vld [vmem:[#allocation2 + $0xc0] sm:$0xff]
        %v5850 = vld [vmem:[#allocation2 + $0xc8] sm:$0xff]
        %v5851 = vld [vmem:[#allocation2 + $0xd0] sm:$0xff]
        %v5852 = vld [vmem:[#allocation2 + $0xd8] sm:$0xff]
        %v5853 = vld [vmem:[#allocation2 + $0xe0] sm:$0xff]
        %v5854 = vld [vmem:[#allocation2 + $0xe8] sm:$0xff]
        %v5855 = vld [vmem:[#allocation2 + $0xf0] sm:$0xff]
        %v5856 = vld [vmem:[#allocation2 + $0xf8] sm:$0xff]
        %v5857 = vld [vmem:[#allocation2 + $0x100] sm:$0xff]
        %v5858 = vld [vmem:[#allocation2 + $0x9] sm:$0xff]
        %v5859 = vld [vmem:[#allocation2 + $0x11] sm:$0xff]
        %v5860 = vld [vmem:[#allocation2 + $0x19] sm:$0xff]
        %v5861 = vld [vmem:[#allocation2 + $0x21] sm:$0xff]
        %v5862 = vld [vmem:[#allocation2 + $0x29] sm:$0xff]
        %v5863 = vld [vmem:[#allocation2 + $0x31] sm:$0xff]
        %v5864 = vld [vmem:[#allocation2 + $0x39] sm:$0xff]
        %v5865 = vld [vmem:[#allocation2 + $0x41] sm:$0xff]
        %v5866 = vld [vmem:[#allocation2 + $0x49] sm:$0xff]
        %v5867 = vld [vmem:[#allocation2 + $0x51] sm:$0xff]
        %v5868 = vld [vmem:[#allocation2 + $0x59] sm:$0xff]
        %v5869 = vld [vmem:[#allocation2 + $0x61] sm:$0xff]
        %v5870 = vld [vmem:[#allocation2 + $0x69] sm:$0xff]
        %v5871 = vld [vmem:[#allocation2 + $0x71] sm:$0xff]
        %v5872 = vld [vmem:[#allocation2 + $0x79] sm:$0xff]
        %v5873 = vld [vmem:[#allocation2 + $0x81] sm:$0xff]
        %v5874 = vld [vmem:[#allocation2 + $0x89] sm:$0xff]
        %v5875 = vld [vmem:[#allocation2 + $0x91] sm:$0xff]
        %v5876 = vld [vmem:[#allocation2 + $0x99] sm:$0xff]
        %v5877 = vld [vmem:[#allocation2 + $0xa1] sm:$0xff]
        %v5878 = vld [vmem:[#allocation2 + $0xa9] sm:$0xff]
        %v5879 = vld [vmem:[#allocation2 + $0xb1] sm:$0xff]
        %v5880 = vld [vmem:[#allocation2 + $0xb9] sm:$0xff]
        %v5881 = vld [vmem:[#allocation2 + $0xc1] sm:$0xff]
        %v5882 = vld [vmem:[#allocation2 + $0xc9] sm:$0xff]
        %v5883 = vld [vmem:[#allocation2 + $0xd1] sm:$0xff]
        %v5884 = vld [vmem:[#allocation2 + $0xd9] sm:$0xff]
        %v5885 = vld [vmem:[#allocation2 + $0xe1] sm:$0xff]
        %v5886 = vld [vmem:[#allocation2 + $0xe9] sm:$0xff]
        %v5887 = vld [vmem:[#allocation2 + $0xf1] sm:$0xff]
        %v5888 = vld [vmem:[#allocation2 + $0xf9] sm:$0xff]
        %v5889 = vld [vmem:[#allocation2 + $0x101] sm:$0xff]
        %v5890 = vsel %vm1641, %v5858, 0.0
        %v5891 = vsel %vm1642, %v5859, 0.0
        %v5892 = vsel %vm1643, %v5860, 0.0
        %v5893 = vsel %vm1644, %v5861, 0.0
        %v5894 = vsel %vm1645, %v5862, 0.0
        %v5895 = vsel %vm1646, %v5863, 0.0
        %v5896 = vsel %vm1647, %v5864, 0.0
        %v5897 = vsel %vm1648, %v5865, 0.0
        %v5898 = vsel %vm1649, %v5866, 0.0
        %v5899 = vsel %vm1650, %v5867, 0.0
        %v5900 = vsel %vm1651, %v5868, 0.0
        %v5901 = vsel %vm1652, %v5869, 0.0
        %v5902 = vsel %vm1653, %v5870, 0.0
        %v5903 = vsel %vm1654, %v5871, 0.0
        %v5904 = vsel %vm1655, %v5872, 0.0
        %v5905 = vsel %vm1656, %v5873, 0.0
        %v5906 = vsel %vm1657, %v5874, 0.0
        %v5907 = vsel %vm1658, %v5875, 0.0
        %v5908 = vsel %vm1659, %v5876, 0.0
        %v5909 = vsel %vm1660, %v5877, 0.0
        %v5910 = vsel %vm1661, %v5878, 0.0
        %v5911 = vsel %vm1662, %v5879, 0.0
        %v5912 = vsel %vm1663, %v5880, 0.0
        %v5913 = vsel %vm1664, %v5881, 0.0
        %v5914 = vsel %vm1665, %v5882, 0.0
        %v5915 = vsel %vm1666, %v5883, 0.0
        %v5916 = vsel %vm1667, %v5884, 0.0
        %v5917 = vsel %vm1668, %v5885, 0.0
        %v5918 = vsel %vm1669, %v5886, 0.0
        %v5919 = vsel %vm1670, %v5887, 0.0
        %v5920 = vsel %vm1671, %v5888, 0.0
        %v5921 = vsel %vm1672, %v5889, 0.0
        %v5922 = vld [vmem:[#allocation2 + $0x107] sm:$0xff]
        %v5923 = vld [vmem:[#allocation2 + $0x10f] sm:$0xff]
        %v5924 = vsel %vm1481, %v5764, 0.0
        %v5925 = vsel %vm1482, %v5765, 0.0
        %v5926 = vsel %vm1483, %v5766, 0.0
        %v5927 = vsel %vm1484, %v5767, 0.0
        %v5928 = vsel %vm1485, %v5768, 0.0
        %v5929 = vsel %vm1486, %v5769, 0.0
        %v5930 = vsel %vm1487, %v5770, 0.0
        %v5931 = vsel %vm1488, %v5771, 0.0
        %v5932 = vsel %vm1489, %v5772, 0.0
        %v5933 = vsel %vm1490, %v5773, 0.0
        %v5934 = vsel %vm1491, %v5774, 0.0
        %v5935 = vsel %vm1492, %v5775, 0.0
        %v5936 = vsel %vm1493, %v5776, 0.0
        %v5937 = vsel %vm1494, %v5777, 0.0
        %v5938 = vsel %vm1495, %v5778, 0.0
        %v5939 = vsel %vm1496, %v5779, 0.0
        %v5940 = vsel %vm1497, %v5780, 0.0
        %v5941 = vsel %vm1498, %v5781, 0.0
        %v5942 = vsel %vm1499, %v5782, 0.0
        %v5943 = vsel %vm1500, %v5783, 0.0
        %v5944 = vsel %vm1501, %v5784, 0.0
        %v5945 = vsel %vm1502, %v5785, 0.0
        %v5946 = vsel %vm1503, %v5786, 0.0
        %v5947 = vsel %vm1504, %v5787, 0.0
        %v5948 = vsel %vm1505, %v5788, 0.0
        %v5949 = vsel %vm1506, %v5789, 0.0
        %v5950 = vsel %vm1507, %v5790, 0.0
        %v5951 = vsel %vm1508, %v5791, 0.0
        %v5952 = vsel %vm1509, %v5792, 0.0
        %v5953 = vsel %vm1510, %v5793, 0.0
        %v5954 = vsel %vm1511, %v5922, 0.0
        %v5955 = vsel %vm1512, %v5923, 0.0
        %v5956 = vld [vmem:[#allocation2 + $0x108] sm:$0xff]
        %v5957 = vld [vmem:[#allocation2 + $0x110] sm:$0xff]
        %v5958 = vld [vmem:[#allocation2 + $0x109] sm:$0xff]
        %v5959 = vld [vmem:[#allocation2 + $0x111] sm:$0xff]
        %v5960 = vsel %vm1641, %v5860, 0.0
        %v5961 = vsel %vm1642, %v5861, 0.0
        %v5962 = vsel %vm1643, %v5862, 0.0
        %v5963 = vsel %vm1644, %v5863, 0.0
        %v5964 = vsel %vm1645, %v5864, 0.0
        %v5965 = vsel %vm1646, %v5865, 0.0
        %v5966 = vsel %vm1647, %v5866, 0.0
        %v5967 = vsel %vm1648, %v5867, 0.0
        %v5968 = vsel %vm1649, %v5868, 0.0
        %v5969 = vsel %vm1650, %v5869, 0.0
        %v5970 = vsel %vm1651, %v5870, 0.0
        %v5971 = vsel %vm1652, %v5871, 0.0
        %v5972 = vsel %vm1653, %v5872, 0.0
        %v5973 = vsel %vm1654, %v5873, 0.0
        %v5974 = vsel %vm1655, %v5874, 0.0
        %v5975 = vsel %vm1656, %v5875, 0.0
        %v5976 = vsel %vm1657, %v5876, 0.0
        %v5977 = vsel %vm1658, %v5877, 0.0
        %v5978 = vsel %vm1659, %v5878, 0.0
        %v5979 = vsel %vm1660, %v5879, 0.0
        %v5980 = vsel %vm1661, %v5880, 0.0
        %v5981 = vsel %vm1662, %v5881, 0.0
        %v5982 = vsel %vm1663, %v5882, 0.0
        %v5983 = vsel %vm1664, %v5883, 0.0
        %v5984 = vsel %vm1665, %v5884, 0.0
        %v5985 = vsel %vm1666, %v5885, 0.0
        %v5986 = vsel %vm1667, %v5886, 0.0
        %v5987 = vsel %vm1668, %v5887, 0.0
        %v5988 = vsel %vm1669, %v5888, 0.0
        %v5989 = vsel %vm1670, %v5889, 0.0
        %v5990 = vsel %vm1671, %v5958, 0.0
        %v5991 = vsel %vm1672, %v5959, 0.0
        %v5992 = vld [vmem:[#allocation2 + $0x117] sm:$0xff]
        %v5993 = vld [vmem:[#allocation2 + $0x11f] sm:$0xff]
        %v5994 = vsel %vm1481, %v5766, 0.0
        %v5995 = vsel %vm1482, %v5767, 0.0
        %v5996 = vsel %vm1483, %v5768, 0.0
        %v5997 = vsel %vm1484, %v5769, 0.0
        %v5998 = vsel %vm1485, %v5770, 0.0
        %v5999 = vsel %vm1486, %v5771, 0.0
        %v6000 = vsel %vm1487, %v5772, 0.0
        %v6001 = vsel %vm1488, %v5773, 0.0
        %v6002 = vsel %vm1489, %v5774, 0.0
        %v6003 = vsel %vm1490, %v5775, 0.0
        %v6004 = vsel %vm1491, %v5776, 0.0
        %v6005 = vsel %vm1492, %v5777, 0.0
        %v6006 = vsel %vm1493, %v5778, 0.0
        %v6007 = vsel %vm1494, %v5779, 0.0
        %v6008 = vsel %vm1495, %v5780, 0.0
        %v6009 = vsel %vm1496, %v5781, 0.0
        %v6010 = vsel %vm1497, %v5782, 0.0
        %v6011 = vsel %vm1498, %v5783, 0.0
        %v6012 = vsel %vm1499, %v5784, 0.0
        %v6013 = vsel %vm1500, %v5785, 0.0
        %v6014 = vsel %vm1501, %v5786, 0.0
        %v6015 = vsel %vm1502, %v5787, 0.0
        %v6016 = vsel %vm1503, %v5788, 0.0
        %v6017 = vsel %vm1504, %v5789, 0.0
        %v6018 = vsel %vm1505, %v5790, 0.0
        %v6019 = vsel %vm1506, %v5791, 0.0
        %v6020 = vsel %vm1507, %v5792, 0.0
        %v6021 = vsel %vm1508, %v5793, 0.0
        %v6022 = vsel %vm1509, %v5922, 0.0
        %v6023 = vsel %vm1510, %v5923, 0.0
        %v6024 = vsel %vm1511, %v5992, 0.0
        %v6025 = vsel %vm1512, %v5993, 0.0
        %v6026 = vld [vmem:[#allocation2 + $0x118] sm:$0xff]
        %v6027 = vld [vmem:[#allocation2 + $0x120] sm:$0xff]
        %v6028 = vld [vmem:[#allocation2 + $0x119] sm:$0xff]
        %v6029 = vld [vmem:[#allocation2 + $0x121] sm:$0xff]
        %v6030 = vsel %vm1641, %v5862, 0.0
        %v6031 = vsel %vm1642, %v5863, 0.0
        %v6032 = vsel %vm1643, %v5864, 0.0
        %v6033 = vsel %vm1644, %v5865, 0.0
        %v6034 = vsel %vm1645, %v5866, 0.0
        %v6035 = vsel %vm1646, %v5867, 0.0
        %v6036 = vsel %vm1647, %v5868, 0.0
        %v6037 = vsel %vm1648, %v5869, 0.0
        %v6038 = vsel %vm1649, %v5870, 0.0
        %v6039 = vsel %vm1650, %v5871, 0.0
        %v6040 = vsel %vm1651, %v5872, 0.0
        %v6041 = vsel %vm1652, %v5873, 0.0
        %v6042 = vsel %vm1653, %v5874, 0.0
        %v6043 = vsel %vm1654, %v5875, 0.0
        %v6044 = vsel %vm1655, %v5876, 0.0
        %v6045 = vsel %vm1656, %v5877, 0.0
        %v6046 = vsel %vm1657, %v5878, 0.0
        %v6047 = vsel %vm1658, %v5879, 0.0
        %v6048 = vsel %vm1659, %v5880, 0.0
        %v6049 = vsel %vm1660, %v5881, 0.0
        %v6050 = vsel %vm1661, %v5882, 0.0
        %v6051 = vsel %vm1662, %v5883, 0.0
        %v6052 = vsel %vm1663, %v5884, 0.0
        %v6053 = vsel %vm1664, %v5885, 0.0
        %v6054 = vsel %vm1665, %v5886, 0.0
        %v6055 = vsel %vm1666, %v5887, 0.0
        %v6056 = vsel %vm1667, %v5888, 0.0
        %v6057 = vsel %vm1668, %v5889, 0.0
        %v6058 = vsel %vm1669, %v5958, 0.0
        %v6059 = vsel %vm1670, %v5959, 0.0
        %v6060 = vsel %vm1671, %v6028, 0.0
        %v6061 = vsel %vm1672, %v6029, 0.0
        %6094 = vrot.lane.b32.xlu0 %v5826, 16
        %v6095 = vpop.permute.xlu0 %6094
        %6096 = vrot.lane.b32.xlu0 %v5827, 16
        %v6097 = vpop.permute.xlu0 %6096
        %6098 = vrot.lane.b32.xlu0 %v5828, 16
        %v6099 = vpop.permute.xlu0 %6098
        %6100 = vrot.lane.b32.xlu0 %v5829, 16
        %v6101 = vpop.permute.xlu0 %6100
        %6102 = vrot.lane.b32.xlu0 %v5830, 16
        %v6103 = vpop.permute.xlu0 %6102
        %6104 = vrot.lane.b32.xlu0 %v5831, 16
        %v6105 = vpop.permute.xlu0 %6104
        %6106 = vrot.lane.b32.xlu0 %v5832, 16
        %v6107 = vpop.permute.xlu0 %6106
        %6108 = vrot.lane.b32.xlu0 %v5833, 16
        %v6109 = vpop.permute.xlu0 %6108
        %6110 = vrot.lane.b32.xlu0 %v5834, 16
        %v6111 = vpop.permute.xlu0 %6110
        %6112 = vrot.lane.b32.xlu0 %v5835, 16
        %v6113 = vpop.permute.xlu0 %6112
        %6114 = vrot.lane.b32.xlu0 %v5836, 16
        %v6115 = vpop.permute.xlu0 %6114
        %6116 = vrot.lane.b32.xlu0 %v5837, 16
        %v6117 = vpop.permute.xlu0 %6116
        %6118 = vrot.lane.b32.xlu0 %v5838, 16
        %v6119 = vpop.permute.xlu0 %6118
        %6120 = vrot.lane.b32.xlu0 %v5839, 16
        %v6121 = vpop.permute.xlu0 %6120
        %6122 = vrot.lane.b32.xlu0 %v5840, 16
        %v6123 = vpop.permute.xlu0 %6122
        %6124 = vrot.lane.b32.xlu0 %v5841, 16
        %v6125 = vpop.permute.xlu0 %6124
        %6126 = vrot.lane.b32.xlu0 %v5842, 16
        %v6127 = vpop.permute.xlu0 %6126
        %6128 = vrot.lane.b32.xlu0 %v5843, 16
        %v6129 = vpop.permute.xlu0 %6128
        %6130 = vrot.lane.b32.xlu0 %v5844, 16
        %v6131 = vpop.permute.xlu0 %6130
        %6132 = vrot.lane.b32.xlu0 %v5845, 16
        %v6133 = vpop.permute.xlu0 %6132
        %6134 = vrot.lane.b32.xlu0 %v5846, 16
        %v6135 = vpop.permute.xlu0 %6134
        %6136 = vrot.lane.b32.xlu0 %v5847, 16
        %v6137 = vpop.permute.xlu0 %6136
        %6138 = vrot.lane.b32.xlu0 %v5848, 16
        %v6139 = vpop.permute.xlu0 %6138
        %6140 = vrot.lane.b32.xlu0 %v5849, 16
        %v6141 = vpop.permute.xlu0 %6140
        %6142 = vrot.lane.b32.xlu0 %v5850, 16
        %v6143 = vpop.permute.xlu0 %6142
        %6144 = vrot.lane.b32.xlu0 %v5851, 16
        %v6145 = vpop.permute.xlu0 %6144
        %6146 = vrot.lane.b32.xlu0 %v5852, 16
        %v6147 = vpop.permute.xlu0 %6146
        %6148 = vrot.lane.b32.xlu0 %v5853, 16
        %v6149 = vpop.permute.xlu0 %6148
        %6150 = vrot.lane.b32.xlu0 %v5854, 16
        %v6151 = vpop.permute.xlu0 %6150
        %6152 = vrot.lane.b32.xlu0 %v5855, 16
        %v6153 = vpop.permute.xlu0 %6152
        %6154 = vrot.lane.b32.xlu0 %v5856, 16
        %v6155 = vpop.permute.xlu0 %6154
        %6156 = vrot.lane.b32.xlu0 %v5857, 16
        %v6157 = vpop.permute.xlu0 %6156
        %6222 = vrot.lane.b32.xlu0 %v5890, 32
        %v6223 = vpop.permute.xlu0 %6222
        %6224 = vrot.lane.b32.xlu0 %v5891, 32
        %v6225 = vpop.permute.xlu0 %6224
        %6226 = vrot.lane.b32.xlu0 %v5892, 32
        %v6227 = vpop.permute.xlu0 %6226
        %6228 = vrot.lane.b32.xlu0 %v5893, 32
        %v6229 = vpop.permute.xlu0 %6228
        %6230 = vrot.lane.b32.xlu0 %v5894, 32
        %v6231 = vpop.permute.xlu0 %6230
        %6232 = vrot.lane.b32.xlu0 %v5895, 32
        %v6233 = vpop.permute.xlu0 %6232
        %6234 = vrot.lane.b32.xlu0 %v5896, 32
        %v6235 = vpop.permute.xlu0 %6234
        %6236 = vrot.lane.b32.xlu0 %v5897, 32
        %v6237 = vpop.permute.xlu0 %6236
        %6238 = vrot.lane.b32.xlu0 %v5898, 32
        %v6239 = vpop.permute.xlu0 %6238
        %6240 = vrot.lane.b32.xlu0 %v5899, 32
        %v6241 = vpop.permute.xlu0 %6240
        %6242 = vrot.lane.b32.xlu0 %v5900, 32
        %v6243 = vpop.permute.xlu0 %6242
        %6244 = vrot.lane.b32.xlu0 %v5901, 32
        %v6245 = vpop.permute.xlu0 %6244
        %6246 = vrot.lane.b32.xlu0 %v5902, 32
        %v6247 = vpop.permute.xlu0 %6246
        %6248 = vrot.lane.b32.xlu0 %v5903, 32
        %v6249 = vpop.permute.xlu0 %6248
        %6250 = vrot.lane.b32.xlu0 %v5904, 32
        %v6251 = vpop.permute.xlu0 %6250
        %6252 = vrot.lane.b32.xlu0 %v5905, 32
        %v6253 = vpop.permute.xlu0 %6252
        %6254 = vrot.lane.b32.xlu0 %v5906, 32
        %v6255 = vpop.permute.xlu0 %6254
        %6256 = vrot.lane.b32.xlu0 %v5907, 32
        %v6257 = vpop.permute.xlu0 %6256
        %6258 = vrot.lane.b32.xlu0 %v5908, 32
        %v6259 = vpop.permute.xlu0 %6258
        %6260 = vrot.lane.b32.xlu0 %v5909, 32
        %v6261 = vpop.permute.xlu0 %6260
        %6262 = vrot.lane.b32.xlu0 %v5910, 32
        %v6263 = vpop.permute.xlu0 %6262
        %6264 = vrot.lane.b32.xlu0 %v5911, 32
        %v6265 = vpop.permute.xlu0 %6264
        %6266 = vrot.lane.b32.xlu0 %v5912, 32
        %v6267 = vpop.permute.xlu0 %6266
        %6268 = vrot.lane.b32.xlu0 %v5913, 32
        %v6269 = vpop.permute.xlu0 %6268
        %6270 = vrot.lane.b32.xlu0 %v5914, 32
        %v6271 = vpop.permute.xlu0 %6270
        %6272 = vrot.lane.b32.xlu0 %v5915, 32
        %v6273 = vpop.permute.xlu0 %6272
        %6274 = vrot.lane.b32.xlu0 %v5916, 32
        %v6275 = vpop.permute.xlu0 %6274
        %6276 = vrot.lane.b32.xlu0 %v5917, 32
        %v6277 = vpop.permute.xlu0 %6276
        %6278 = vrot.lane.b32.xlu0 %v5918, 32
        %v6279 = vpop.permute.xlu0 %6278
        %6280 = vrot.lane.b32.xlu0 %v5919, 32
        %v6281 = vpop.permute.xlu0 %6280
        %6282 = vrot.lane.b32.xlu0 %v5920, 32
        %v6283 = vpop.permute.xlu0 %6282
        %6284 = vrot.lane.b32.xlu0 %v5921, 32
        %v6285 = vpop.permute.xlu0 %6284
        %6350 = vrot.lane.b32.xlu0 %v5924, 48
        %v6351 = vpop.permute.xlu0 %6350
        %6352 = vrot.lane.b32.xlu0 %v5925, 48
        %v6353 = vpop.permute.xlu0 %6352
        %6354 = vrot.lane.b32.xlu0 %v5926, 48
        %v6355 = vpop.permute.xlu0 %6354
        %6356 = vrot.lane.b32.xlu0 %v5927, 48
        %v6357 = vpop.permute.xlu0 %6356
        %6358 = vrot.lane.b32.xlu0 %v5928, 48
        %v6359 = vpop.permute.xlu0 %6358
        %6360 = vrot.lane.b32.xlu0 %v5929, 48
        %v6361 = vpop.permute.xlu0 %6360
        %6362 = vrot.lane.b32.xlu0 %v5930, 48
        %v6363 = vpop.permute.xlu0 %6362
        %6364 = vrot.lane.b32.xlu0 %v5931, 48
        %v6365 = vpop.permute.xlu0 %6364
        %6366 = vrot.lane.b32.xlu0 %v5932, 48
        %v6367 = vpop.permute.xlu0 %6366
        %6368 = vrot.lane.b32.xlu0 %v5933, 48
        %v6369 = vpop.permute.xlu0 %6368
        %6370 = vrot.lane.b32.xlu0 %v5934, 48
        %v6371 = vpop.permute.xlu0 %6370
        %6372 = vrot.lane.b32.xlu0 %v5935, 48
        %v6373 = vpop.permute.xlu0 %6372
        %6374 = vrot.lane.b32.xlu0 %v5936, 48
        %v6375 = vpop.permute.xlu0 %6374
        %6376 = vrot.lane.b32.xlu0 %v5937, 48
        %v6377 = vpop.permute.xlu0 %6376
        %6378 = vrot.lane.b32.xlu0 %v5938, 48
        %v6379 = vpop.permute.xlu0 %6378
        %6380 = vrot.lane.b32.xlu0 %v5939, 48
        %v6381 = vpop.permute.xlu0 %6380
        %6382 = vrot.lane.b32.xlu0 %v5940, 48
        %v6383 = vpop.permute.xlu0 %6382
        %6384 = vrot.lane.b32.xlu0 %v5941, 48
        %v6385 = vpop.permute.xlu0 %6384
        %6386 = vrot.lane.b32.xlu0 %v5942, 48
        %v6387 = vpop.permute.xlu0 %6386
        %6388 = vrot.lane.b32.xlu0 %v5943, 48
        %v6389 = vpop.permute.xlu0 %6388
        %6390 = vrot.lane.b32.xlu0 %v5944, 48
        %v6391 = vpop.permute.xlu0 %6390
        %6392 = vrot.lane.b32.xlu0 %v5945, 48
        %v6393 = vpop.permute.xlu0 %6392
        %6394 = vrot.lane.b32.xlu0 %v5946, 48
        %v6395 = vpop.permute.xlu0 %6394
        %6396 = vrot.lane.b32.xlu0 %v5947, 48
        %v6397 = vpop.permute.xlu0 %6396
        %6398 = vrot.lane.b32.xlu0 %v5948, 48
        %v6399 = vpop.permute.xlu0 %6398
        %6400 = vrot.lane.b32.xlu0 %v5949, 48
        %v6401 = vpop.permute.xlu0 %6400
        %6402 = vrot.lane.b32.xlu0 %v5950, 48
        %v6403 = vpop.permute.xlu0 %6402
        %6404 = vrot.lane.b32.xlu0 %v5951, 48
        %v6405 = vpop.permute.xlu0 %6404
        %6406 = vrot.lane.b32.xlu0 %v5952, 48
        %v6407 = vpop.permute.xlu0 %6406
        %6408 = vrot.lane.b32.xlu0 %v5953, 48
        %v6409 = vpop.permute.xlu0 %6408
        %6410 = vrot.lane.b32.xlu0 %v5954, 48
        %v6411 = vpop.permute.xlu0 %6410
        %6412 = vrot.lane.b32.xlu0 %v5955, 48
        %v6413 = vpop.permute.xlu0 %6412
        %6448 = vrot.lane.b32.xlu0 %v5828, 64
        %v6449 = vpop.permute.xlu0 %6448
        %6450 = vrot.lane.b32.xlu0 %v5829, 64
        %v6451 = vpop.permute.xlu0 %6450
        %6452 = vrot.lane.b32.xlu0 %v5830, 64
        %v6453 = vpop.permute.xlu0 %6452
        %6454 = vrot.lane.b32.xlu0 %v5831, 64
        %v6455 = vpop.permute.xlu0 %6454
        %6456 = vrot.lane.b32.xlu0 %v5832, 64
        %v6457 = vpop.permute.xlu0 %6456
        %6458 = vrot.lane.b32.xlu0 %v5833, 64
        %v6459 = vpop.permute.xlu0 %6458
        %6460 = vrot.lane.b32.xlu0 %v5834, 64
        %v6461 = vpop.permute.xlu0 %6460
        %6462 = vrot.lane.b32.xlu0 %v5835, 64
        %v6463 = vpop.permute.xlu0 %6462
        %6464 = vrot.lane.b32.xlu0 %v5836, 64
        %v6465 = vpop.permute.xlu0 %6464
        %6466 = vrot.lane.b32.xlu0 %v5837, 64
        %v6467 = vpop.permute.xlu0 %6466
        %6468 = vrot.lane.b32.xlu0 %v5838, 64
        %v6469 = vpop.permute.xlu0 %6468
        %6470 = vrot.lane.b32.xlu0 %v5839, 64
        %v6471 = vpop.permute.xlu0 %6470
        %6472 = vrot.lane.b32.xlu0 %v5840, 64
        %v6473 = vpop.permute.xlu0 %6472
        %6474 = vrot.lane.b32.xlu0 %v5841, 64
        %v6475 = vpop.permute.xlu0 %6474
        %6476 = vrot.lane.b32.xlu0 %v5842, 64
        %v6477 = vpop.permute.xlu0 %6476
        %6478 = vrot.lane.b32.xlu0 %v5843, 64
        %v6479 = vpop.permute.xlu0 %6478
        %6480 = vrot.lane.b32.xlu0 %v5844, 64
        %v6481 = vpop.permute.xlu0 %6480
        %6482 = vrot.lane.b32.xlu0 %v5845, 64
        %v6483 = vpop.permute.xlu0 %6482
        %6484 = vrot.lane.b32.xlu0 %v5846, 64
        %v6485 = vpop.permute.xlu0 %6484
        %6486 = vrot.lane.b32.xlu0 %v5847, 64
        %v6487 = vpop.permute.xlu0 %6486
        %6488 = vrot.lane.b32.xlu0 %v5848, 64
        %v6489 = vpop.permute.xlu0 %6488
        %6490 = vrot.lane.b32.xlu0 %v5849, 64
        %v6491 = vpop.permute.xlu0 %6490
        %6492 = vrot.lane.b32.xlu0 %v5850, 64
        %v6493 = vpop.permute.xlu0 %6492
        %6494 = vrot.lane.b32.xlu0 %v5851, 64
        %v6495 = vpop.permute.xlu0 %6494
        %6496 = vrot.lane.b32.xlu0 %v5852, 64
        %v6497 = vpop.permute.xlu0 %6496
        %6498 = vrot.lane.b32.xlu0 %v5853, 64
        %v6499 = vpop.permute.xlu0 %6498
        %6500 = vrot.lane.b32.xlu0 %v5854, 64
        %v6501 = vpop.permute.xlu0 %6500
        %6502 = vrot.lane.b32.xlu0 %v5855, 64
        %v6503 = vpop.permute.xlu0 %6502
        %6504 = vrot.lane.b32.xlu0 %v5856, 64
        %v6505 = vpop.permute.xlu0 %6504
        %6506 = vrot.lane.b32.xlu0 %v5857, 64
        %v6507 = vpop.permute.xlu0 %6506
        %6508 = vrot.lane.b32.xlu0 %v5956, 64
        %v6509 = vpop.permute.xlu0 %6508
        %6510 = vrot.lane.b32.xlu0 %v5957, 64
        %v6511 = vpop.permute.xlu0 %6510
        %6576 = vrot.lane.b32.xlu0 %v5960, 80
        %v6577 = vpop.permute.xlu0 %6576
        %6578 = vrot.lane.b32.xlu0 %v5961, 80
        %v6579 = vpop.permute.xlu0 %6578
        %6580 = vrot.lane.b32.xlu0 %v5962, 80
        %v6581 = vpop.permute.xlu0 %6580
        %6582 = vrot.lane.b32.xlu0 %v5963, 80
        %v6583 = vpop.permute.xlu0 %6582
        %6584 = vrot.lane.b32.xlu0 %v5964, 80
        %v6585 = vpop.permute.xlu0 %6584
        %6586 = vrot.lane.b32.xlu0 %v5965, 80
        %v6587 = vpop.permute.xlu0 %6586
        %6588 = vrot.lane.b32.xlu0 %v5966, 80
        %v6589 = vpop.permute.xlu0 %6588
        %6590 = vrot.lane.b32.xlu0 %v5967, 80
        %v6591 = vpop.permute.xlu0 %6590
        %6592 = vrot.lane.b32.xlu0 %v5968, 80
        %v6593 = vpop.permute.xlu0 %6592
        %6594 = vrot.lane.b32.xlu0 %v5969, 80
        %v6595 = vpop.permute.xlu0 %6594
        %6596 = vrot.lane.b32.xlu0 %v5970, 80
        %v6597 = vpop.permute.xlu0 %6596
        %6598 = vrot.lane.b32.xlu0 %v5971, 80
        %v6599 = vpop.permute.xlu0 %6598
        %6600 = vrot.lane.b32.xlu0 %v5972, 80
        %v6601 = vpop.permute.xlu0 %6600
        %6602 = vrot.lane.b32.xlu0 %v5973, 80
        %v6603 = vpop.permute.xlu0 %6602
        %6604 = vrot.lane.b32.xlu0 %v5974, 80
        %v6605 = vpop.permute.xlu0 %6604
        %6606 = vrot.lane.b32.xlu0 %v5975, 80
        %v6607 = vpop.permute.xlu0 %6606
        %6608 = vrot.lane.b32.xlu0 %v5976, 80
        %v6609 = vpop.permute.xlu0 %6608
        %6610 = vrot.lane.b32.xlu0 %v5977, 80
        %v6611 = vpop.permute.xlu0 %6610
        %6612 = vrot.lane.b32.xlu0 %v5978, 80
        %v6613 = vpop.permute.xlu0 %6612
        %6614 = vrot.lane.b32.xlu0 %v5979, 80
        %v6615 = vpop.permute.xlu0 %6614
        %6616 = vrot.lane.b32.xlu0 %v5980, 80
        %v6617 = vpop.permute.xlu0 %6616
        %6618 = vrot.lane.b32.xlu0 %v5981, 80
        %v6619 = vpop.permute.xlu0 %6618
        %6620 = vrot.lane.b32.xlu0 %v5982, 80
        %v6621 = vpop.permute.xlu0 %6620
        %6622 = vrot.lane.b32.xlu0 %v5983, 80
        %v6623 = vpop.permute.xlu0 %6622
        %6624 = vrot.lane.b32.xlu0 %v5984, 80
        %v6625 = vpop.permute.xlu0 %6624
        %6626 = vrot.lane.b32.xlu0 %v5985, 80
        %v6627 = vpop.permute.xlu0 %6626
        %6628 = vrot.lane.b32.xlu0 %v5986, 80
        %v6629 = vpop.permute.xlu0 %6628
        %6630 = vrot.lane.b32.xlu0 %v5987, 80
        %v6631 = vpop.permute.xlu0 %6630
        %6632 = vrot.lane.b32.xlu0 %v5988, 80
        %v6633 = vpop.permute.xlu0 %6632
        %6634 = vrot.lane.b32.xlu0 %v5989, 80
        %v6635 = vpop.permute.xlu0 %6634
        %6636 = vrot.lane.b32.xlu0 %v5990, 80
        %v6637 = vpop.permute.xlu0 %6636
        %6638 = vrot.lane.b32.xlu0 %v5991, 80
        %v6639 = vpop.permute.xlu0 %6638
        %6704 = vrot.lane.b32.xlu0 %v5994, 96
        %v6705 = vpop.permute.xlu0 %6704
        %6706 = vrot.lane.b32.xlu0 %v5995, 96
        %v6707 = vpop.permute.xlu0 %6706
        %6708 = vrot.lane.b32.xlu0 %v5996, 96
        %v6709 = vpop.permute.xlu0 %6708
        %6710 = vrot.lane.b32.xlu0 %v5997, 96
        %v6711 = vpop.permute.xlu0 %6710
        %6712 = vrot.lane.b32.xlu0 %v5998, 96
        %v6713 = vpop.permute.xlu0 %6712
        %6714 = vrot.lane.b32.xlu0 %v5999, 96
        %v6715 = vpop.permute.xlu0 %6714
        %6716 = vrot.lane.b32.xlu0 %v6000, 96
        %v6717 = vpop.permute.xlu0 %6716
        %6718 = vrot.lane.b32.xlu0 %v6001, 96
        %v6719 = vpop.permute.xlu0 %6718
        %6720 = vrot.lane.b32.xlu0 %v6002, 96
        %v6721 = vpop.permute.xlu0 %6720
        %6722 = vrot.lane.b32.xlu0 %v6003, 96
        %v6723 = vpop.permute.xlu0 %6722
        %6724 = vrot.lane.b32.xlu0 %v6004, 96
        %v6725 = vpop.permute.xlu0 %6724
        %6726 = vrot.lane.b32.xlu0 %v6005, 96
        %v6727 = vpop.permute.xlu0 %6726
        %6728 = vrot.lane.b32.xlu0 %v6006, 96
        %v6729 = vpop.permute.xlu0 %6728
        %6730 = vrot.lane.b32.xlu0 %v6007, 96
        %v6731 = vpop.permute.xlu0 %6730
        %6732 = vrot.lane.b32.xlu0 %v6008, 96
        %v6733 = vpop.permute.xlu0 %6732
        %6734 = vrot.lane.b32.xlu0 %v6009, 96
        %v6735 = vpop.permute.xlu0 %6734
        %6736 = vrot.lane.b32.xlu0 %v6010, 96
        %v6737 = vpop.permute.xlu0 %6736
        %6738 = vrot.lane.b32.xlu0 %v6011, 96
        %v6739 = vpop.permute.xlu0 %6738
        %6740 = vrot.lane.b32.xlu0 %v6012, 96
        %v6741 = vpop.permute.xlu0 %6740
        %6742 = vrot.lane.b32.xlu0 %v6013, 96
        %v6743 = vpop.permute.xlu0 %6742
        %6744 = vrot.lane.b32.xlu0 %v6014, 96
        %v6745 = vpop.permute.xlu0 %6744
        %6746 = vrot.lane.b32.xlu0 %v6015, 96
        %v6747 = vpop.permute.xlu0 %6746
        %6748 = vrot.lane.b32.xlu0 %v6016, 96
        %v6749 = vpop.permute.xlu0 %6748
        %6750 = vrot.lane.b32.xlu0 %v6017, 96
        %v6751 = vpop.permute.xlu0 %6750
        %6752 = vrot.lane.b32.xlu0 %v6018, 96
        %v6753 = vpop.permute.xlu0 %6752
        %6754 = vrot.lane.b32.xlu0 %v6019, 96
        %v6755 = vpop.permute.xlu0 %6754
        %6756 = vrot.lane.b32.xlu0 %v6020, 96
        %v6757 = vpop.permute.xlu0 %6756
        %6758 = vrot.lane.b32.xlu0 %v6021, 96
        %v6759 = vpop.permute.xlu0 %6758
        %6760 = vrot.lane.b32.xlu0 %v6022, 96
        %v6761 = vpop.permute.xlu0 %6760
        %6762 = vrot.lane.b32.xlu0 %v6023, 96
        %v6763 = vpop.permute.xlu0 %6762
        %6764 = vrot.lane.b32.xlu0 %v6024, 96
        %v6765 = vpop.permute.xlu0 %6764
        %6766 = vrot.lane.b32.xlu0 %v6025, 96
        %v6767 = vpop.permute.xlu0 %6766
        %6802 = vrot.lane.b32.xlu0 %v5830, 112
        %v6803 = vpop.permute.xlu0 %6802
        %6804 = vrot.lane.b32.xlu0 %v5831, 112
        %v6805 = vpop.permute.xlu0 %6804
        %6806 = vrot.lane.b32.xlu0 %v5832, 112
        %v6807 = vpop.permute.xlu0 %6806
        %6808 = vrot.lane.b32.xlu0 %v5833, 112
        %v6809 = vpop.permute.xlu0 %6808
        %6810 = vrot.lane.b32.xlu0 %v5834, 112
        %v6811 = vpop.permute.xlu0 %6810
        %6812 = vrot.lane.b32.xlu0 %v5835, 112
        %v6813 = vpop.permute.xlu0 %6812
        %6814 = vrot.lane.b32.xlu0 %v5836, 112
        %v6815 = vpop.permute.xlu0 %6814
        %6816 = vrot.lane.b32.xlu0 %v5837, 112
        %v6817 = vpop.permute.xlu0 %6816
        %6818 = vrot.lane.b32.xlu0 %v5838, 112
        %v6819 = vpop.permute.xlu0 %6818
        %6820 = vrot.lane.b32.xlu0 %v5839, 112
        %v6821 = vpop.permute.xlu0 %6820
        %6822 = vrot.lane.b32.xlu0 %v5840, 112
        %v6823 = vpop.permute.xlu0 %6822
        %6824 = vrot.lane.b32.xlu0 %v5841, 112
        %v6825 = vpop.permute.xlu0 %6824
        %6826 = vrot.lane.b32.xlu0 %v5842, 112
        %v6827 = vpop.permute.xlu0 %6826
        %6828 = vrot.lane.b32.xlu0 %v5843, 112
        %v6829 = vpop.permute.xlu0 %6828
        %6830 = vrot.lane.b32.xlu0 %v5844, 112
        %v6831 = vpop.permute.xlu0 %6830
        %6832 = vrot.lane.b32.xlu0 %v5845, 112
        %v6833 = vpop.permute.xlu0 %6832
        %6834 = vrot.lane.b32.xlu0 %v5846, 112
        %v6835 = vpop.permute.xlu0 %6834
        %6836 = vrot.lane.b32.xlu0 %v5847, 112
        %v6837 = vpop.permute.xlu0 %6836
        %6838 = vrot.lane.b32.xlu0 %v5848, 112
        %v6839 = vpop.permute.xlu0 %6838
        %6840 = vrot.lane.b32.xlu0 %v5849, 112
        %v6841 = vpop.permute.xlu0 %6840
        %6842 = vrot.lane.b32.xlu0 %v5850, 112
        %v6843 = vpop.permute.xlu0 %6842
        %6844 = vrot.lane.b32.xlu0 %v5851, 112
        %v6845 = vpop.permute.xlu0 %6844
        %6846 = vrot.lane.b32.xlu0 %v5852, 112
        %v6847 = vpop.permute.xlu0 %6846
        %6848 = vrot.lane.b32.xlu0 %v5853, 112
        %v6849 = vpop.permute.xlu0 %6848
        %6850 = vrot.lane.b32.xlu0 %v5854, 112
        %v6851 = vpop.permute.xlu0 %6850
        %6852 = vrot.lane.b32.xlu0 %v5855, 112
        %v6853 = vpop.permute.xlu0 %6852
        %6854 = vrot.lane.b32.xlu0 %v5856, 112
        %v6855 = vpop.permute.xlu0 %6854
        %6856 = vrot.lane.b32.xlu0 %v5857, 112
        %v6857 = vpop.permute.xlu0 %6856
        %6858 = vrot.lane.b32.xlu0 %v5956, 112
        %v6859 = vpop.permute.xlu0 %6858
        %6860 = vrot.lane.b32.xlu0 %v5957, 112
        %v6861 = vpop.permute.xlu0 %6860
        %6862 = vrot.lane.b32.xlu0 %v6026, 112
        %v6863 = vpop.permute.xlu0 %6862
        %6864 = vrot.lane.b32.xlu0 %v6027, 112
        %v6865 = vpop.permute.xlu0 %6864
        %v6898 = vsel %vm1058, %v5794, %v6095
        %v6899 = vsel %vm1058, %v5795, %v6097
        %v6900 = vsel %vm1058, %v5796, %v6099
        %v6901 = vsel %vm1058, %v5797, %v6101
        %v6902 = vsel %vm1058, %v5798, %v6103
        %v6903 = vsel %vm1058, %v5799, %v6105
        %v6904 = vsel %vm1058, %v5800, %v6107
        %v6905 = vsel %vm1058, %v5801, %v6109
        %v6906 = vsel %vm1058, %v5802, %v6111
        %v6907 = vsel %vm1058, %v5803, %v6113
        %v6908 = vsel %vm1058, %v5804, %v6115
        %v6909 = vsel %vm1058, %v5805, %v6117
        %v6910 = vsel %vm1058, %v5806, %v6119
        %v6911 = vsel %vm1058, %v5807, %v6121
        %v6912 = vsel %vm1058, %v5808, %v6123
        %v6913 = vsel %vm1058, %v5809, %v6125
        %v6914 = vsel %vm1058, %v5810, %v6127
        %v6915 = vsel %vm1058, %v5811, %v6129
        %v6916 = vsel %vm1058, %v5812, %v6131
        %v6917 = vsel %vm1058, %v5813, %v6133
        %v6918 = vsel %vm1058, %v5814, %v6135
        %v6919 = vsel %vm1058, %v5815, %v6137
        %v6920 = vsel %vm1058, %v5816, %v6139
        %v6921 = vsel %vm1058, %v5817, %v6141
        %v6922 = vsel %vm1058, %v5818, %v6143
        %v6923 = vsel %vm1058, %v5819, %v6145
        %v6924 = vsel %vm1058, %v5820, %v6147
        %v6925 = vsel %vm1058, %v5821, %v6149
        %v6926 = vsel %vm1058, %v5822, %v6151
        %v6927 = vsel %vm1058, %v5823, %v6153
        %v6928 = vsel %vm1058, %v5824, %v6155
        %v6929 = vsel %vm1058, %v5825, %v6157
        %v6930 = vsel %vm2844, %v6898, %v6223
        %v6931 = vsel %vm2844, %v6899, %v6225
        %v6932 = vsel %vm2844, %v6900, %v6227
        %v6933 = vsel %vm2844, %v6901, %v6229
        %v6934 = vsel %vm2844, %v6902, %v6231
        %v6935 = vsel %vm2844, %v6903, %v6233
        %v6936 = vsel %vm2844, %v6904, %v6235
        %v6937 = vsel %vm2844, %v6905, %v6237
        %v6938 = vsel %vm2844, %v6906, %v6239
        %v6939 = vsel %vm2844, %v6907, %v6241
        %v6940 = vsel %vm2844, %v6908, %v6243
        %v6941 = vsel %vm2844, %v6909, %v6245
        %v6942 = vsel %vm2844, %v6910, %v6247
        %v6943 = vsel %vm2844, %v6911, %v6249
        %v6944 = vsel %vm2844, %v6912, %v6251
        %v6945 = vsel %vm2844, %v6913, %v6253
        %v6946 = vsel %vm2844, %v6914, %v6255
        %v6947 = vsel %vm2844, %v6915, %v6257
        %v6948 = vsel %vm2844, %v6916, %v6259
        %v6949 = vsel %vm2844, %v6917, %v6261
        %v6950 = vsel %vm2844, %v6918, %v6263
        %v6951 = vsel %vm2844, %v6919, %v6265
        %v6952 = vsel %vm2844, %v6920, %v6267
        %v6953 = vsel %vm2844, %v6921, %v6269
        %v6954 = vsel %vm2844, %v6922, %v6271
        %v6955 = vsel %vm2844, %v6923, %v6273
        %v6956 = vsel %vm2844, %v6924, %v6275
        %v6957 = vsel %vm2844, %v6925, %v6277
        %v6958 = vsel %vm2844, %v6926, %v6279
        %v6959 = vsel %vm2844, %v6927, %v6281
        %v6960 = vsel %vm2844, %v6928, %v6283
        %v6961 = vsel %vm2844, %v6929, %v6285
        %v6962 = vsel %vm1378, %v6930, %v6351
        %v6963 = vsel %vm1378, %v6931, %v6353
        %v6964 = vsel %vm1378, %v6932, %v6355
        %v6965 = vsel %vm1378, %v6933, %v6357
        %v6966 = vsel %vm1378, %v6934, %v6359
        %v6967 = vsel %vm1378, %v6935, %v6361
        %v6968 = vsel %vm1378, %v6936, %v6363
        %v6969 = vsel %vm1378, %v6937, %v6365
        %v6970 = vsel %vm1378, %v6938, %v6367
        %v6971 = vsel %vm1378, %v6939, %v6369
        %v6972 = vsel %vm1378, %v6940, %v6371
        %v6973 = vsel %vm1378, %v6941, %v6373
        %v6974 = vsel %vm1378, %v6942, %v6375
        %v6975 = vsel %vm1378, %v6943, %v6377
        %v6976 = vsel %vm1378, %v6944, %v6379
        %v6977 = vsel %vm1378, %v6945, %v6381
        %v6978 = vsel %vm1378, %v6946, %v6383
        %v6979 = vsel %vm1378, %v6947, %v6385
        %v6980 = vsel %vm1378, %v6948, %v6387
        %v6981 = vsel %vm1378, %v6949, %v6389
        %v6982 = vsel %vm1378, %v6950, %v6391
        %v6983 = vsel %vm1378, %v6951, %v6393
        %v6984 = vsel %vm1378, %v6952, %v6395
        %v6985 = vsel %vm1378, %v6953, %v6397
        %v6986 = vsel %vm1378, %v6954, %v6399
        %v6987 = vsel %vm1378, %v6955, %v6401
        %v6988 = vsel %vm1378, %v6956, %v6403
        %v6989 = vsel %vm1378, %v6957, %v6405
        %v6990 = vsel %vm1378, %v6958, %v6407
        %v6991 = vsel %vm1378, %v6959, %v6409
        %v6992 = vsel %vm1378, %v6960, %v6411
        %v6993 = vsel %vm1378, %v6961, %v6413
        %v6994 = vsel %vm2778, %v6962, %v6449
        %v6995 = vsel %vm2778, %v6963, %v6451
        %v6996 = vsel %vm2778, %v6964, %v6453
        %v6997 = vsel %vm2778, %v6965, %v6455
        %v6998 = vsel %vm2778, %v6966, %v6457
        %v6999 = vsel %vm2778, %v6967, %v6459
        %v7000 = vsel %vm2778, %v6968, %v6461
        %v7001 = vsel %vm2778, %v6969, %v6463
        %v7002 = vsel %vm2778, %v6970, %v6465
        %v7003 = vsel %vm2778, %v6971, %v6467
        %v7004 = vsel %vm2778, %v6972, %v6469
        %v7005 = vsel %vm2778, %v6973, %v6471
        %v7006 = vsel %vm2778, %v6974, %v6473
        %v7007 = vsel %vm2778, %v6975, %v6475
        %v7008 = vsel %vm2778, %v6976, %v6477
        %v7009 = vsel %vm2778, %v6977, %v6479
        %v7010 = vsel %vm2778, %v6978, %v6481
        %v7011 = vsel %vm2778, %v6979, %v6483
        %v7012 = vsel %vm2778, %v6980, %v6485
        %v7013 = vsel %vm2778, %v6981, %v6487
        %v7014 = vsel %vm2778, %v6982, %v6489
        %v7015 = vsel %vm2778, %v6983, %v6491
        %v7016 = vsel %vm2778, %v6984, %v6493
        %v7017 = vsel %vm2778, %v6985, %v6495
        %v7018 = vsel %vm2778, %v6986, %v6497
        %v7019 = vsel %vm2778, %v6987, %v6499
        %v7020 = vsel %vm2778, %v6988, %v6501
        %v7021 = vsel %vm2778, %v6989, %v6503
        %v7022 = vsel %vm2778, %v6990, %v6505
        %v7023 = vsel %vm2778, %v6991, %v6507
        %v7024 = vsel %vm2778, %v6992, %v6509
        %v7025 = vsel %vm2778, %v6993, %v6511
        %v7026 = vsel %vm2877, %v6994, %v6577
        %v7027 = vsel %vm2877, %v6995, %v6579
        %v7028 = vsel %vm2877, %v6996, %v6581
        %v7029 = vsel %vm2877, %v6997, %v6583
        %v7030 = vsel %vm2877, %v6998, %v6585
        %v7031 = vsel %vm2877, %v6999, %v6587
        %v7032 = vsel %vm2877, %v7000, %v6589
        %v7033 = vsel %vm2877, %v7001, %v6591
        %v7034 = vsel %vm2877, %v7002, %v6593
        %v7035 = vsel %vm2877, %v7003, %v6595
        %v7036 = vsel %vm2877, %v7004, %v6597
        %v7037 = vsel %vm2877, %v7005, %v6599
        %v7038 = vsel %vm2877, %v7006, %v6601
        %v7039 = vsel %vm2877, %v7007, %v6603
        %v7040 = vsel %vm2877, %v7008, %v6605
        %v7041 = vsel %vm2877, %v7009, %v6607
        %v7042 = vsel %vm2877, %v7010, %v6609
        %v7043 = vsel %vm2877, %v7011, %v6611
        %v7044 = vsel %vm2877, %v7012, %v6613
        %v7045 = vsel %vm2877, %v7013, %v6615
        %v7046 = vsel %vm2877, %v7014, %v6617
        %v7047 = vsel %vm2877, %v7015, %v6619
        %v7048 = vsel %vm2877, %v7016, %v6621
        %v7049 = vsel %vm2877, %v7017, %v6623
        %v7050 = vsel %vm2877, %v7018, %v6625
        %v7051 = vsel %vm2877, %v7019, %v6627
        %v7052 = vsel %vm2877, %v7020, %v6629
        %v7053 = vsel %vm2877, %v7021, %v6631
        %v7054 = vsel %vm2877, %v7022, %v6633
        %v7055 = vsel %vm2877, %v7023, %v6635
        %v7056 = vsel %vm2877, %v7024, %v6637
        %v7057 = vsel %vm2877, %v7025, %v6639
        %v7058 = vsel %vm2713, %v7026, %v6705
        %v7059 = vsel %vm2713, %v7027, %v6707
        %v7060 = vsel %vm2713, %v7028, %v6709
        %v7061 = vsel %vm2713, %v7029, %v6711
        %v7062 = vsel %vm2713, %v7030, %v6713
        %v7063 = vsel %vm2713, %v7031, %v6715
        %v7064 = vsel %vm2713, %v7032, %v6717
        %v7065 = vsel %vm2713, %v7033, %v6719
        %v7066 = vsel %vm2713, %v7034, %v6721
        %v7067 = vsel %vm2713, %v7035, %v6723
        %v7068 = vsel %vm2713, %v7036, %v6725
        %v7069 = vsel %vm2713, %v7037, %v6727
        %v7070 = vsel %vm2713, %v7038, %v6729
        %v7071 = vsel %vm2713, %v7039, %v6731
        %v7072 = vsel %vm2713, %v7040, %v6733
        %v7073 = vsel %vm2713, %v7041, %v6735
        %v7074 = vsel %vm2713, %v7042, %v6737
        %v7075 = vsel %vm2713, %v7043, %v6739
        %v7076 = vsel %vm2713, %v7044, %v6741
        %v7077 = vsel %vm2713, %v7045, %v6743
        %v7078 = vsel %vm2713, %v7046, %v6745
        %v7079 = vsel %vm2713, %v7047, %v6747
        %v7080 = vsel %vm2713, %v7048, %v6749
        %v7081 = vsel %vm2713, %v7049, %v6751
        %v7082 = vsel %vm2713, %v7050, %v6753
        %v7083 = vsel %vm2713, %v7051, %v6755
        %v7084 = vsel %vm2713, %v7052, %v6757
        %v7085 = vsel %vm2713, %v7053, %v6759
        %v7086 = vsel %vm2713, %v7054, %v6761
        %v7087 = vsel %vm2713, %v7055, %v6763
        %v7088 = vsel %vm2713, %v7056, %v6765
        %v7089 = vsel %vm2713, %v7057, %v6767
        %v7090 = vsel %vm2811, %v7058, %v6803
        %v7091 = vsel %vm2811, %v7059, %v6805
        %v7092 = vsel %vm2811, %v7060, %v6807
        %v7093 = vsel %vm2811, %v7061, %v6809
        %v7094 = vsel %vm2811, %v7062, %v6811
        %v7095 = vsel %vm2811, %v7063, %v6813
        %v7096 = vsel %vm2811, %v7064, %v6815
        %v7097 = vsel %vm2811, %v7065, %v6817
        %v7098 = vsel %vm2811, %v7066, %v6819
        %v7099 = vsel %vm2811, %v7067, %v6821
        %v7100 = vsel %vm2811, %v7068, %v6823
        %v7101 = vsel %vm2811, %v7069, %v6825
        %v7102 = vsel %vm2811, %v7070, %v6827
        %v7103 = vsel %vm2811, %v7071, %v6829
        %v7104 = vsel %vm2811, %v7072, %v6831
        %v7105 = vsel %vm2811, %v7073, %v6833
        %v7106 = vsel %vm2811, %v7074, %v6835
        %v7107 = vsel %vm2811, %v7075, %v6837
        %v7108 = vsel %vm2811, %v7076, %v6839
        %v7109 = vsel %vm2811, %v7077, %v6841
        %v7110 = vsel %vm2811, %v7078, %v6843
        %v7111 = vsel %vm2811, %v7079, %v6845
        %v7112 = vsel %vm2811, %v7080, %v6847
        %v7113 = vsel %vm2811, %v7081, %v6849
        %v7114 = vsel %vm2811, %v7082, %v6851
        %v7115 = vsel %vm2811, %v7083, %v6853
        %v7116 = vsel %vm2811, %v7084, %v6855
        %v7117 = vsel %vm2811, %v7085, %v6857
        %v7118 = vsel %vm2811, %v7086, %v6859
        %v7119 = vsel %vm2811, %v7087, %v6861
        %v7120 = vsel %vm2811, %v7088, %v6863
        %v7121 = vsel %vm2811, %v7089, %v6865
        %v7122 = vpack.c.bf16 %v7091, %v7090
        %v7123 = vpack.c.bf16 %v6031, %v6030
        %v7124 = vpack.c.bf16 %v7093, %v7092
        %v7125 = vpack.c.bf16 %v6033, %v6032
        %v7126 = vpack.c.bf16 %v7095, %v7094
        %v7127 = vpack.c.bf16 %v6035, %v6034
        %v7128 = vpack.c.bf16 %v7097, %v7096
        %v7129 = vpack.c.bf16 %v6037, %v6036
        %v7130 = vpack.c.bf16 %v7099, %v7098
        %v7131 = vpack.c.bf16 %v6039, %v6038
        %v7132 = vpack.c.bf16 %v7101, %v7100
        %v7133 = vpack.c.bf16 %v6041, %v6040
        %v7134 = vpack.c.bf16 %v7103, %v7102
        %v7135 = vpack.c.bf16 %v6043, %v6042
        %v7136 = vpack.c.bf16 %v7105, %v7104
        %v7137 = vpack.c.bf16 %v6045, %v6044
        %v7138 = vpack.c.bf16 %v7107, %v7106
        %v7139 = vpack.c.bf16 %v6047, %v6046
        %v7140 = vpack.c.bf16 %v7109, %v7108
        %v7141 = vpack.c.bf16 %v6049, %v6048
        %v7142 = vpack.c.bf16 %v7111, %v7110
        %v7143 = vpack.c.bf16 %v6051, %v6050
        %v7144 = vpack.c.bf16 %v7113, %v7112
        %v7145 = vpack.c.bf16 %v6053, %v6052
        %v7146 = vpack.c.bf16 %v7115, %v7114
        %v7147 = vpack.c.bf16 %v6055, %v6054
        %v7148 = vpack.c.bf16 %v7117, %v7116
        %v7149 = vpack.c.bf16 %v6057, %v6056
        %v7150 = vpack.c.bf16 %v7119, %v7118
        %v7151 = vpack.c.bf16 %v6059, %v6058
        %v7152 = vpack.c.bf16 %v7121, %v7120
        %v7153 = vpack.c.bf16 %v6061, %v6060
        %v7154 = vld [vmem:[%s10] sm:$0xf]
        %v7155 = vld [vmem:[%s10 + $0x4] sm:$0xf]
        %v7156 = vld [vmem:[%s10 + $0x8] sm:$0xf]
        %v7157 = vld [vmem:[%s10 + $0xc] sm:$0xf]
        %v7158 = vld [vmem:[%s10 + $0x10] sm:$0xf]
        %v7159 = vld [vmem:[%s10 + $0x14] sm:$0xf]
        %v7160 = vld [vmem:[%s10 + $0x18] sm:$0xf]
        %v7161 = vld [vmem:[%s10 + $0x1c] sm:$0xf]
        %v7162 = vld [vmem:[%s10 + $0x20] sm:$0xf]
        %v7163 = vld [vmem:[%s10 + $0x24] sm:$0xf]
        %v7164 = vld [vmem:[%s10 + $0x28] sm:$0xf]
        %v7165 = vld [vmem:[%s10 + $0x2c] sm:$0xf]
        %v7166 = vld [vmem:[%s10 + $0x30] sm:$0xf]
        %v7167 = vld [vmem:[%s10 + $0x34] sm:$0xf]
        %v7168 = vld [vmem:[%s10 + $0x38] sm:$0xf]
        %v7169 = vld [vmem:[%s10 + $0x3c] sm:$0xf]
        %v7170 = vld [vmem:[%s10 + $0x40] sm:$0xf]
        %v7171 = vld [vmem:[%s10 + $0x44] sm:$0xf]
        %v7190 = vunpack.c.l.b16 %v7154
        %v7191 = vunpack.c.l.b16 %v7155
        %v7192 = vunpack.c.l.b16 %v7156
        %v7193 = vunpack.c.l.b16 %v7157
        %v7194 = vunpack.c.l.b16 %v7158
        %v7195 = vunpack.c.l.b16 %v7159
        %v7196 = vunpack.c.l.b16 %v7160
        %v7197 = vunpack.c.l.b16 %v7161
        %v7198 = vunpack.c.l.b16 %v7162
        %v7199 = vunpack.c.l.b16 %v7163
        %v7200 = vunpack.c.l.b16 %v7164
        %v7201 = vunpack.c.l.b16 %v7165
        %v7202 = vunpack.c.l.b16 %v7166
        %v7203 = vunpack.c.l.b16 %v7167
        %v7204 = vunpack.c.l.b16 %v7168
        %v7205 = vunpack.c.l.b16 %v7169
        %v7206 = vunpack.c.l.b16 %v7170
        %v7207 = vunpack.c.l.b16 %v7171
        %v7208 = vpack.c.b16 %v7191, %v7190
        %v7209 = vpack.c.b16 %v7193, %v7192
        %v7210 = vpack.c.b16 %v7195, %v7194
        %v7211 = vpack.c.b16 %v7197, %v7196
        %v7212 = vpack.c.b16 %v7199, %v7198
        %v7213 = vpack.c.b16 %v7201, %v7200
        %v7214 = vpack.c.b16 %v7203, %v7202
        %v7215 = vpack.c.b16 %v7205, %v7204
        %v7216 = vpack.c.b16 %v7207, %v7206
        %v7227 = vsel %vm1058, %v7123, 0
        %v7230 = vsel %vm1058, %v7125, 0
        %v7233 = vsel %vm1058, %v7127, 0
        %v7236 = vsel %vm1058, %v7129, 0
        %v7239 = vsel %vm1058, %v7131, 0
        %v7242 = vsel %vm1058, %v7133, 0
        %v7245 = vsel %vm1058, %v7135, 0
        %v7248 = vsel %vm1058, %v7137, 0
        %v7251 = vsel %vm1058, %v7139, 0
        %v7254 = vsel %vm1058, %v7141, 0
        %v7257 = vsel %vm1058, %v7143, 0
        %v7260 = vsel %vm1058, %v7145, 0
        %v7263 = vsel %vm1058, %v7147, 0
        %v7266 = vsel %vm1058, %v7149, 0
        %v7269 = vsel %vm1058, %v7151, 0
        %v7272 = vsel %vm1058, %v7153, 0
        %7274 = vmatprep.subr.bf16.mxu0 0
        %7275 = vmatpush1.bf16.msra.mxu0 %v7215
        %7276 = vmatprep.subr.bf16.mxu0 0
        %7277 = vmatpush1.bf16.msra.mxu0 %v7214
        %7278 = vmatprep.subr.bf16.mxu0 0
        %7279 = vmatpush1.bf16.msra.mxu0 %v7213
        %7280 = vmatprep.subr.bf16.mxu0 0
        %7281 = vmatpush1.bf16.msra.mxu0 %v7212
        %7282 = vmatprep.subr.bf16.mxu0 0
        %7283 = vmatpush1.bf16.msra.mxu0 %v7211
        %7284 = vmatprep.subr.bf16.mxu0 0
        %7285 = vmatpush1.bf16.msra.mxu0 %v7210
        %7286 = vmatprep.subr.bf16.mxu0 0
        %7287 = vmatpush1.bf16.msra.mxu0 %v7209
        %7288 = vmatprep.subr.bf16.mxu0 0
        %7289 = vmatpush1.bf16.msra.mxu0 %v7208
        %7290 = vmatprep.subr.bf16.mxu0 0
        %7291 = vmatpush2.bf16.msra.mxu0 0
        %7292 = vmatprep.subr.bf16.mxu0 0
        %7293 = vmatpush2.bf16.msra.mxu0 0
        %7294 = vmatprep.subr.bf16.mxu0 0
        %7295 = vmatpush2.bf16.msra.mxu0 0
        %7296 = vmatprep.subr.bf16.mxu0 0
        %7297 = vmatpush2.bf16.msra.mxu0 0
        %7298 = vmatprep.subr.bf16.mxu0 0
        %7299 = vmatpush2.bf16.msra.mxu0 0
        %7300 = vmatprep.subr.bf16.mxu0 0
        %7301 = vmatpush2.bf16.msra.mxu0 0
        %7302 = vmatprep.subr.bf16.mxu0 0
        %7303 = vmatpush2.bf16.msra.mxu0 0
        %7304 = vmatprep.subr.bf16.mxu0 0
        %7305 = vmatpush2.bf16.msra.mxu0 %v7216
        %7306 = vmatprep.mubr.bf16.mxu0 %v7227
        %7307 = vmatmul.mubr.bf16.gmra.mxu0 %v7122
        %v7308 = vpop.f32.mrf.mxu0
        %v7309 = vadd.f32 0.0, %v7308
        %v7310 = vpop.f32.mrf.mxu0
        %v7311 = vpop.f32.mrf.mxu0
        %v7312 = vadd.f32 0.0, %v7311
        %v7313 = vpop.f32.mrf.mxu0
        %7314 = vmatprep.mubr.bf16.mxu0 %v7230
        %7315 = vmatmul.mubr.bf16.gmra.mxu0 %v7124
        %v7316 = vpop.f32.mrf.mxu0
        %v7317 = vadd.f32 0.0, %v7316
        %v7318 = vpop.f32.mrf.mxu0
        %v7319 = vpop.f32.mrf.mxu0
        %v7320 = vadd.f32 0.0, %v7319
        %v7321 = vpop.f32.mrf.mxu0
        %7322 = vmatprep.mubr.bf16.mxu0 %v7233
        %7323 = vmatmul.mubr.bf16.gmra.mxu0 %v7126
        %v7324 = vpop.f32.mrf.mxu0
        %v7325 = vadd.f32 0.0, %v7324
        %v7326 = vpop.f32.mrf.mxu0
        %v7327 = vpop.f32.mrf.mxu0
        %v7328 = vadd.f32 0.0, %v7327
        %v7329 = vpop.f32.mrf.mxu0
        %7330 = vmatprep.mubr.bf16.mxu0 %v7236
        %7331 = vmatmul.mubr.bf16.gmra.mxu0 %v7128
        %v7332 = vpop.f32.mrf.mxu0
        %v7333 = vadd.f32 0.0, %v7332
        %v7334 = vpop.f32.mrf.mxu0
        %v7335 = vpop.f32.mrf.mxu0
        %v7336 = vadd.f32 0.0, %v7335
        %v7337 = vpop.f32.mrf.mxu0
        %7338 = vmatprep.mubr.bf16.mxu0 %v7239
        %7339 = vmatmul.mubr.bf16.gmra.mxu0 %v7130
        %v7340 = vpop.f32.mrf.mxu0
        %v7341 = vadd.f32 0.0, %v7340
        %v7342 = vpop.f32.mrf.mxu0
        %v7343 = vpop.f32.mrf.mxu0
        %v7344 = vadd.f32 0.0, %v7343
        %v7345 = vpop.f32.mrf.mxu0
        %7346 = vmatprep.mubr.bf16.mxu0 %v7242
        %7347 = vmatmul.mubr.bf16.gmra.mxu0 %v7132
        %v7348 = vpop.f32.mrf.mxu0
        %v7349 = vadd.f32 0.0, %v7348
        %v7350 = vpop.f32.mrf.mxu0
        %v7351 = vpop.f32.mrf.mxu0
        %v7352 = vadd.f32 0.0, %v7351
        %v7353 = vpop.f32.mrf.mxu0
        %7354 = vmatprep.mubr.bf16.mxu0 %v7245
        %7355 = vmatmul.mubr.bf16.gmra.mxu0 %v7134
        %v7356 = vpop.f32.mrf.mxu0
        %v7357 = vadd.f32 0.0, %v7356
        %v7358 = vpop.f32.mrf.mxu0
        %v7359 = vpop.f32.mrf.mxu0
        %v7360 = vadd.f32 0.0, %v7359
        %v7361 = vpop.f32.mrf.mxu0
        %7362 = vmatprep.mubr.bf16.mxu0 %v7248
        %7363 = vmatmul.mubr.bf16.gmra.mxu0 %v7136
        %v7364 = vpop.f32.mrf.mxu0
        %v7365 = vadd.f32 0.0, %v7364
        %v7366 = vpop.f32.mrf.mxu0
        %v7367 = vpop.f32.mrf.mxu0
        %v7368 = vadd.f32 0.0, %v7367
        %v7369 = vpop.f32.mrf.mxu0
        %7370 = vmatprep.mubr.bf16.mxu0 %v7251
        %7371 = vmatmul.mubr.bf16.gmra.mxu0 %v7138
        %v7372 = vpop.f32.mrf.mxu0
        %v7373 = vadd.f32 0.0, %v7372
        %v7374 = vpop.f32.mrf.mxu0
        %v7375 = vpop.f32.mrf.mxu0
        %v7376 = vadd.f32 0.0, %v7375
        %v7377 = vpop.f32.mrf.mxu0
        %7378 = vmatprep.mubr.bf16.mxu0 %v7254
        %7379 = vmatmul.mubr.bf16.gmra.mxu0 %v7140
        %v7380 = vpop.f32.mrf.mxu0
        %v7381 = vadd.f32 0.0, %v7380
        %v7382 = vpop.f32.mrf.mxu0
        %v7383 = vpop.f32.mrf.mxu0
        %v7384 = vadd.f32 0.0, %v7383
        %v7385 = vpop.f32.mrf.mxu0
        %7386 = vmatprep.mubr.bf16.mxu0 %v7257
        %7387 = vmatmul.mubr.bf16.gmra.mxu0 %v7142
        %v7388 = vpop.f32.mrf.mxu0
        %v7389 = vadd.f32 0.0, %v7388
        %v7390 = vpop.f32.mrf.mxu0
        %v7391 = vpop.f32.mrf.mxu0
        %v7392 = vadd.f32 0.0, %v7391
        %v7393 = vpop.f32.mrf.mxu0
        %7394 = vmatprep.mubr.bf16.mxu0 %v7260
        %7395 = vmatmul.mubr.bf16.gmra.mxu0 %v7144
        %v7396 = vpop.f32.mrf.mxu0
        %v7397 = vadd.f32 0.0, %v7396
        %v7398 = vpop.f32.mrf.mxu0
        %v7399 = vpop.f32.mrf.mxu0
        %v7400 = vadd.f32 0.0, %v7399
        %v7401 = vpop.f32.mrf.mxu0
        %7402 = vmatprep.mubr.bf16.mxu0 %v7263
        %7403 = vmatmul.mubr.bf16.gmra.mxu0 %v7146
        %v7404 = vpop.f32.mrf.mxu0
        %v7405 = vadd.f32 0.0, %v7404
        %v7406 = vpop.f32.mrf.mxu0
        %v7407 = vpop.f32.mrf.mxu0
        %v7408 = vadd.f32 0.0, %v7407
        %v7409 = vpop.f32.mrf.mxu0
        %7410 = vmatprep.mubr.bf16.mxu0 %v7266
        %7411 = vmatmul.mubr.bf16.gmra.mxu0 %v7148
        %v7412 = vpop.f32.mrf.mxu0
        %v7413 = vadd.f32 0.0, %v7412
        %v7414 = vpop.f32.mrf.mxu0
        %v7415 = vpop.f32.mrf.mxu0
        %v7416 = vadd.f32 0.0, %v7415
        %v7417 = vpop.f32.mrf.mxu0
        %7418 = vmatprep.mubr.bf16.mxu0 %v7269
        %7419 = vmatmul.mubr.bf16.gmra.mxu0 %v7150
        %v7420 = vpop.f32.mrf.mxu0
        %v7421 = vadd.f32 0.0, %v7420
        %v7422 = vpop.f32.mrf.mxu0
        %v7423 = vpop.f32.mrf.mxu0
        %v7424 = vadd.f32 0.0, %v7423
        %v7425 = vpop.f32.mrf.mxu0
        %7426 = vmatprep.mubr.bf16.mxu0 %v7272
        %7427 = vmatmul.mubr.bf16.gmra.mxu0 %v7152
        %v7428 = vpop.f32.mrf.mxu0
        %v7429 = vadd.f32 0.0, %v7428
        %v7430 = vpop.f32.mrf.mxu0
        %v7431 = vpop.f32.mrf.mxu0
        %v7432 = vadd.f32 0.0, %v7431
        %v7433 = vpop.f32.mrf.mxu0
        %7434 = vdwg.mxu0
        %v7435 = vld [vmem:[%s11] sm:$0x1]
        %v7437 = vlaneseq
        %v7438 = vshrl.u32 %v7437, 7
        %v7439 = vsub.s32 0, %v7438
        %v7440 = vrot.slane %v7435, %v7439
        %v7442 = vmul.f32 %v7309, %v7440
        %v7443 = vmul.f32 %v7312, %v7440
        %v7444 = vmul.f32 %v7317, %v7440
        %v7445 = vmul.f32 %v7320, %v7440
        %v7446 = vmul.f32 %v7325, %v7440
        %v7447 = vmul.f32 %v7328, %v7440
        %v7448 = vmul.f32 %v7333, %v7440
        %v7449 = vmul.f32 %v7336, %v7440
        %v7450 = vmul.f32 %v7341, %v7440
        %v7451 = vmul.f32 %v7344, %v7440
        %v7452 = vmul.f32 %v7349, %v7440
        %v7453 = vmul.f32 %v7352, %v7440
        %v7454 = vmul.f32 %v7357, %v7440
        %v7455 = vmul.f32 %v7360, %v7440
        %v7456 = vmul.f32 %v7365, %v7440
        %v7457 = vmul.f32 %v7368, %v7440
        %v7458 = vmul.f32 %v7373, %v7440
        %v7459 = vmul.f32 %v7376, %v7440
        %v7460 = vmul.f32 %v7381, %v7440
        %v7461 = vmul.f32 %v7384, %v7440
        %v7462 = vmul.f32 %v7389, %v7440
        %v7463 = vmul.f32 %v7392, %v7440
        %v7464 = vmul.f32 %v7397, %v7440
        %v7465 = vmul.f32 %v7400, %v7440
        %v7466 = vmul.f32 %v7405, %v7440
        %v7467 = vmul.f32 %v7408, %v7440
        %v7468 = vmul.f32 %v7413, %v7440
        %v7469 = vmul.f32 %v7416, %v7440
        %v7470 = vmul.f32 %v7421, %v7440
        %v7471 = vmul.f32 %v7424, %v7440
        %v7472 = vmul.f32 %v7429, %v7440
        %v7473 = vmul.f32 %v7432, %v7440
        %v7474 = vld [vmem:[%s12] sm:$0x1]
        %v7476 = vlaneseq
        %v7477 = vshrl.u32 %v7476, 7
        %v7478 = vsub.s32 0, %v7477
        %v7479 = vrot.slane %v7474, %v7478
        %v7481 = vadd.f32 %v7442, %v7479
        %v7482 = vadd.f32 %v7443, %v7479
        %v7483 = vadd.f32 %v7444, %v7479
        %v7484 = vadd.f32 %v7445, %v7479
        %v7485 = vadd.f32 %v7446, %v7479
        %v7486 = vadd.f32 %v7447, %v7479
        %v7487 = vadd.f32 %v7448, %v7479
        %v7488 = vadd.f32 %v7449, %v7479
        %v7489 = vadd.f32 %v7450, %v7479
        %v7490 = vadd.f32 %v7451, %v7479
        %v7491 = vadd.f32 %v7452, %v7479
        %v7492 = vadd.f32 %v7453, %v7479
        %v7493 = vadd.f32 %v7454, %v7479
        %v7494 = vadd.f32 %v7455, %v7479
        %v7495 = vadd.f32 %v7456, %v7479
        %v7496 = vadd.f32 %v7457, %v7479
        %v7497 = vadd.f32 %v7458, %v7479
        %v7498 = vadd.f32 %v7459, %v7479
        %v7499 = vadd.f32 %v7460, %v7479
        %v7500 = vadd.f32 %v7461, %v7479
        %v7501 = vadd.f32 %v7462, %v7479
        %v7502 = vadd.f32 %v7463, %v7479
        %v7503 = vadd.f32 %v7464, %v7479
        %v7504 = vadd.f32 %v7465, %v7479
        %v7505 = vadd.f32 %v7466, %v7479
        %v7506 = vadd.f32 %v7467, %v7479
        %v7507 = vadd.f32 %v7468, %v7479
        %v7508 = vadd.f32 %v7469, %v7479
        %v7509 = vadd.f32 %v7470, %v7479
        %v7510 = vadd.f32 %v7471, %v7479
        %v7511 = vadd.f32 %v7472, %v7479
        %v7512 = vadd.f32 %v7473, %v7479
        %v7513 = vmax.f32 %v7481, 0.0
        %v7514 = vmax.f32 %v7482, 0.0
        %v7515 = vmax.f32 %v7483, 0.0
        %v7516 = vmax.f32 %v7484, 0.0
        %v7517 = vmax.f32 %v7485, 0.0
        %v7518 = vmax.f32 %v7486, 0.0
        %v7519 = vmax.f32 %v7487, 0.0
        %v7520 = vmax.f32 %v7488, 0.0
        %v7521 = vmax.f32 %v7489, 0.0
        %v7522 = vmax.f32 %v7490, 0.0
        %v7523 = vmax.f32 %v7491, 0.0
        %v7524 = vmax.f32 %v7492, 0.0
        %v7525 = vmax.f32 %v7493, 0.0
        %v7526 = vmax.f32 %v7494, 0.0
        %v7527 = vmax.f32 %v7495, 0.0
        %v7528 = vmax.f32 %v7496, 0.0
        %v7529 = vmax.f32 %v7497, 0.0
        %v7530 = vmax.f32 %v7498, 0.0
        %v7531 = vmax.f32 %v7499, 0.0
        %v7532 = vmax.f32 %v7500, 0.0
        %v7533 = vmax.f32 %v7501, 0.0
        %v7534 = vmax.f32 %v7502, 0.0
        %v7535 = vmax.f32 %v7503, 0.0
        %v7536 = vmax.f32 %v7504, 0.0
        %v7537 = vmax.f32 %v7505, 0.0
        %v7538 = vmax.f32 %v7506, 0.0
        %v7539 = vmax.f32 %v7507, 0.0
        %v7540 = vmax.f32 %v7508, 0.0
        %v7541 = vmax.f32 %v7509, 0.0
        %v7542 = vmax.f32 %v7510, 0.0
        %v7543 = vmax.f32 %v7511, 0.0
        %v7544 = vmax.f32 %v7512, 0.0
        %7545 = vst.msk [vmem:[#allocation2] sm:$0xff] %vm1058, -inf
        %7546 = vst.msk [vmem:[#allocation2 + $0x8] sm:$0xff] %vm1058, -inf
        %7547 = vst.msk [vmem:[#allocation2 + $0x10] sm:$0xff] %vm1058, -inf
        %7548 = vst.msk [vmem:[#allocation2 + $0x118] sm:$0xff] %vm1058, -inf
        %7549 = vst.msk [vmem:[#allocation2 + $0x120] sm:$0xff] %vm1058, -inf
        %7550 = vst.msk [vmem:[#allocation2 + $0x128] sm:$0xff] %vm1058, -inf
        %7551 = vst.msk [vmem:[#allocation2 + $0x18] sm:$0xff] %vm1058, %v1002
        %7552 = vst.msk [vmem:[#allocation2 + $0x20] sm:$0xff] %vm1058, %v1003
        %7553 = vst.msk [vmem:[#allocation2 + $0x28] sm:$0xff] %vm1058, %v1004
        %7554 = vst.msk [vmem:[#allocation2 + $0x30] sm:$0xff] %vm1058, %v1005
        %7555 = vst.msk [vmem:[#allocation2 + $0x38] sm:$0xff] %vm1058, %v1006
        %7556 = vst.msk [vmem:[#allocation2 + $0x40] sm:$0xff] %vm1058, %v1007
        %7557 = vst.msk [vmem:[#allocation2 + $0x48] sm:$0xff] %vm1058, %v1008
        %7558 = vst.msk [vmem:[#allocation2 + $0x50] sm:$0xff] %vm1058, %v1009
        %7559 = vst.msk [vmem:[#allocation2 + $0x58] sm:$0xff] %vm1058, %v1010
        %7560 = vst.msk [vmem:[#allocation2 + $0x60] sm:$0xff] %vm1058, %v1011
        %7561 = vst.msk [vmem:[#allocation2 + $0x68] sm:$0xff] %vm1058, %v1012
        %7562 = vst.msk [vmem:[#allocation2 + $0x70] sm:$0xff] %vm1058, %v1013
        %7563 = vst.msk [vmem:[#allocation2 + $0x78] sm:$0xff] %vm1058, %v1014
        %7564 = vst.msk [vmem:[#allocation2 + $0x80] sm:$0xff] %vm1058, %v1015
        %7565 = vst.msk [vmem:[#allocation2 + $0x88] sm:$0xff] %vm1058, %v1016
        %7566 = vst.msk [vmem:[#allocation2 + $0x90] sm:$0xff] %vm1058, %v1017
        %7567 = vst.msk [vmem:[#allocation2 + $0x98] sm:$0xff] %vm1058, %v1018
        %7568 = vst.msk [vmem:[#allocation2 + $0xa0] sm:$0xff] %vm1058, %v1019
        %7569 = vst.msk [vmem:[#allocation2 + $0xa8] sm:$0xff] %vm1058, %v1020
        %7570 = vst.msk [vmem:[#allocation2 + $0xb0] sm:$0xff] %vm1058, %v1021
        %7571 = vst.msk [vmem:[#allocation2 + $0xb8] sm:$0xff] %vm1058, %v1022
        %7572 = vst.msk [vmem:[#allocation2 + $0xc0] sm:$0xff] %vm1058, %v1023
        %7573 = vst.msk [vmem:[#allocation2 + $0xc8] sm:$0xff] %vm1058, %v1024
        %7574 = vst.msk [vmem:[#allocation2 + $0xd0] sm:$0xff] %vm1058, %v1025
        %7575 = vst.msk [vmem:[#allocation2 + $0xd8] sm:$0xff] %vm1058, %v1026
        %7576 = vst.msk [vmem:[#allocation2 + $0xe0] sm:$0xff] %vm1058, %v1027
        %7577 = vst.msk [vmem:[#allocation2 + $0xe8] sm:$0xff] %vm1058, %v1028
        %7578 = vst.msk [vmem:[#allocation2 + $0xf0] sm:$0xff] %vm1058, %v1029
        %7579 = vst.msk [vmem:[#allocation2 + $0xf8] sm:$0xff] %vm1058, %v1030
        %7580 = vst.msk [vmem:[#allocation2 + $0x100] sm:$0xff] %vm1058, %v1031
        %7581 = vst.msk [vmem:[#allocation2 + $0x108] sm:$0xff] %vm1058, %v1032
        %7582 = vst.msk [vmem:[#allocation2 + $0x110] sm:$0xff] %vm1058, %v1033
        %v7583 = vld [vmem:[#allocation2 + $0x7] sm:$0xff]
        %v7584 = vld [vmem:[#allocation2 + $0xf] sm:$0xff]
        %v7585 = vld [vmem:[#allocation2 + $0x17] sm:$0xff]
        %v7586 = vld [vmem:[#allocation2 + $0x1f] sm:$0xff]
        %v7587 = vld [vmem:[#allocation2 + $0x27] sm:$0xff]
        %v7588 = vld [vmem:[#allocation2 + $0x2f] sm:$0xff]
        %v7589 = vld [vmem:[#allocation2 + $0x37] sm:$0xff]
        %v7590 = vld [vmem:[#allocation2 + $0x3f] sm:$0xff]
        %v7591 = vld [vmem:[#allocation2 + $0x47] sm:$0xff]
        %v7592 = vld [vmem:[#allocation2 + $0x4f] sm:$0xff]
        %v7593 = vld [vmem:[#allocation2 + $0x57] sm:$0xff]
        %v7594 = vld [vmem:[#allocation2 + $0x5f] sm:$0xff]
        %v7595 = vld [vmem:[#allocation2 + $0x67] sm:$0xff]
        %v7596 = vld [vmem:[#allocation2 + $0x6f] sm:$0xff]
        %v7597 = vld [vmem:[#allocation2 + $0x77] sm:$0xff]
        %v7598 = vld [vmem:[#allocation2 + $0x7f] sm:$0xff]
        %v7599 = vld [vmem:[#allocation2 + $0x87] sm:$0xff]
        %v7600 = vld [vmem:[#allocation2 + $0x8f] sm:$0xff]
        %v7601 = vld [vmem:[#allocation2 + $0x97] sm:$0xff]
        %v7602 = vld [vmem:[#allocation2 + $0x9f] sm:$0xff]
        %v7603 = vld [vmem:[#allocation2 + $0xa7] sm:$0xff]
        %v7604 = vld [vmem:[#allocation2 + $0xaf] sm:$0xff]
        %v7605 = vld [vmem:[#allocation2 + $0xb7] sm:$0xff]
        %v7606 = vld [vmem:[#allocation2 + $0xbf] sm:$0xff]
        %v7607 = vld [vmem:[#allocation2 + $0xc7] sm:$0xff]
        %v7608 = vld [vmem:[#allocation2 + $0xcf] sm:$0xff]
        %v7609 = vld [vmem:[#allocation2 + $0xd7] sm:$0xff]
        %v7610 = vld [vmem:[#allocation2 + $0xdf] sm:$0xff]
        %v7611 = vld [vmem:[#allocation2 + $0xe7] sm:$0xff]
        %v7612 = vld [vmem:[#allocation2 + $0xef] sm:$0xff]
        %v7613 = vld [vmem:[#allocation2 + $0xf7] sm:$0xff]
        %v7614 = vld [vmem:[#allocation2 + $0xff] sm:$0xff]
        %v7615 = vsel %vm1481, %v7583, -inf
        %v7616 = vsel %vm1482, %v7584, -inf
        %v7617 = vsel %vm1483, %v7585, -inf
        %v7618 = vsel %vm1484, %v7586, -inf
        %v7619 = vsel %vm1485, %v7587, -inf
        %v7620 = vsel %vm1486, %v7588, -inf
        %v7621 = vsel %vm1487, %v7589, -inf
        %v7622 = vsel %vm1488, %v7590, -inf
        %v7623 = vsel %vm1489, %v7591, -inf
        %v7624 = vsel %vm1490, %v7592, -inf
        %v7625 = vsel %vm1491, %v7593, -inf
        %v7626 = vsel %vm1492, %v7594, -inf
        %v7627 = vsel %vm1493, %v7595, -inf
        %v7628 = vsel %vm1494, %v7596, -inf
        %v7629 = vsel %vm1495, %v7597, -inf
        %v7630 = vsel %vm1496, %v7598, -inf
        %v7631 = vsel %vm1497, %v7599, -inf
        %v7632 = vsel %vm1498, %v7600, -inf
        %v7633 = vsel %vm1499, %v7601, -inf
        %v7634 = vsel %vm1500, %v7602, -inf
        %v7635 = vsel %vm1501, %v7603, -inf
        %v7636 = vsel %vm1502, %v7604, -inf
        %v7637 = vsel %vm1503, %v7605, -inf
        %v7638 = vsel %vm1504, %v7606, -inf
        %v7639 = vsel %vm1505, %v7607, -inf
        %v7640 = vsel %vm1506, %v7608, -inf
        %v7641 = vsel %vm1507, %v7609, -inf
        %v7642 = vsel %vm1508, %v7610, -inf
        %v7643 = vsel %vm1509, %v7611, -inf
        %v7644 = vsel %vm1510, %v7612, -inf
        %v7645 = vsel %vm1511, %v7613, -inf
        %v7646 = vsel %vm1512, %v7614, -inf
        %v7647 = vld [vmem:[#allocation2 + $0x8] sm:$0xff]
        %v7648 = vld [vmem:[#allocation2 + $0x10] sm:$0xff]
        %v7649 = vld [vmem:[#allocation2 + $0x18] sm:$0xff]
        %v7650 = vld [vmem:[#allocation2 + $0x20] sm:$0xff]
        %v7651 = vld [vmem:[#allocation2 + $0x28] sm:$0xff]
        %v7652 = vld [vmem:[#allocation2 + $0x30] sm:$0xff]
        %v7653 = vld [vmem:[#allocation2 + $0x38] sm:$0xff]
        %v7654 = vld [vmem:[#allocation2 + $0x40] sm:$0xff]
        %v7655 = vld [vmem:[#allocation2 + $0x48] sm:$0xff]
        %v7656 = vld [vmem:[#allocation2 + $0x50] sm:$0xff]
        %v7657 = vld [vmem:[#allocation2 + $0x58] sm:$0xff]
        %v7658 = vld [vmem:[#allocation2 + $0x60] sm:$0xff]
        %v7659 = vld [vmem:[#allocation2 + $0x68] sm:$0xff]
        %v7660 = vld [vmem:[#allocation2 + $0x70] sm:$0xff]
        %v7661 = vld [vmem:[#allocation2 + $0x78] sm:$0xff]
        %v7662 = vld [vmem:[#allocation2 + $0x80] sm:$0xff]
        %v7663 = vld [vmem:[#allocation2 + $0x88] sm:$0xff]
        %v7664 = vld [vmem:[#allocation2 + $0x90] sm:$0xff]
        %v7665 = vld [vmem:[#allocation2 + $0x98] sm:$0xff]
        %v7666 = vld [vmem:[#allocation2 + $0xa0] sm:$0xff]
        %v7667 = vld [vmem:[#allocation2 + $0xa8] sm:$0xff]
        %v7668 = vld [vmem:[#allocation2 + $0xb0] sm:$0xff]
        %v7669 = vld [vmem:[#allocation2 + $0xb8] sm:$0xff]
        %v7670 = vld [vmem:[#allocation2 + $0xc0] sm:$0xff]
        %v7671 = vld [vmem:[#allocation2 + $0xc8] sm:$0xff]
        %v7672 = vld [vmem:[#allocation2 + $0xd0] sm:$0xff]
        %v7673 = vld [vmem:[#allocation2 + $0xd8] sm:$0xff]
        %v7674 = vld [vmem:[#allocation2 + $0xe0] sm:$0xff]
        %v7675 = vld [vmem:[#allocation2 + $0xe8] sm:$0xff]
        %v7676 = vld [vmem:[#allocation2 + $0xf0] sm:$0xff]
        %v7677 = vld [vmem:[#allocation2 + $0xf8] sm:$0xff]
        %v7678 = vld [vmem:[#allocation2 + $0x100] sm:$0xff]
        %v7679 = vld [vmem:[#allocation2 + $0x9] sm:$0xff]
        %v7680 = vld [vmem:[#allocation2 + $0x11] sm:$0xff]
        %v7681 = vld [vmem:[#allocation2 + $0x19] sm:$0xff]
        %v7682 = vld [vmem:[#allocation2 + $0x21] sm:$0xff]
        %v7683 = vld [vmem:[#allocation2 + $0x29] sm:$0xff]
        %v7684 = vld [vmem:[#allocation2 + $0x31] sm:$0xff]
        %v7685 = vld [vmem:[#allocation2 + $0x39] sm:$0xff]
        %v7686 = vld [vmem:[#allocation2 + $0x41] sm:$0xff]
        %v7687 = vld [vmem:[#allocation2 + $0x49] sm:$0xff]
        %v7688 = vld [vmem:[#allocation2 + $0x51] sm:$0xff]
        %v7689 = vld [vmem:[#allocation2 + $0x59] sm:$0xff]
        %v7690 = vld [vmem:[#allocation2 + $0x61] sm:$0xff]
        %v7691 = vld [vmem:[#allocation2 + $0x69] sm:$0xff]
        %v7692 = vld [vmem:[#allocation2 + $0x71] sm:$0xff]
        %v7693 = vld [vmem:[#allocation2 + $0x79] sm:$0xff]
        %v7694 = vld [vmem:[#allocation2 + $0x81] sm:$0xff]
        %v7695 = vld [vmem:[#allocation2 + $0x89] sm:$0xff]
        %v7696 = vld [vmem:[#allocation2 + $0x91] sm:$0xff]
        %v7697 = vld [vmem:[#allocation2 + $0x99] sm:$0xff]
        %v7698 = vld [vmem:[#allocation2 + $0xa1] sm:$0xff]
        %v7699 = vld [vmem:[#allocation2 + $0xa9] sm:$0xff]
        %v7700 = vld [vmem:[#allocation2 + $0xb1] sm:$0xff]
        %v7701 = vld [vmem:[#allocation2 + $0xb9] sm:$0xff]
        %v7702 = vld [vmem:[#allocation2 + $0xc1] sm:$0xff]
        %v7703 = vld [vmem:[#allocation2 + $0xc9] sm:$0xff]
        %v7704 = vld [vmem:[#allocation2 + $0xd1] sm:$0xff]
        %v7705 = vld [vmem:[#allocation2 + $0xd9] sm:$0xff]
        %v7706 = vld [vmem:[#allocation2 + $0xe1] sm:$0xff]
        %v7707 = vld [vmem:[#allocation2 + $0xe9] sm:$0xff]
        %v7708 = vld [vmem:[#allocation2 + $0xf1] sm:$0xff]
        %v7709 = vld [vmem:[#allocation2 + $0xf9] sm:$0xff]
        %v7710 = vld [vmem:[#allocation2 + $0x101] sm:$0xff]
        %v7711 = vsel %vm1641, %v7679, -inf
        %v7712 = vsel %vm1642, %v7680, -inf
        %v7713 = vsel %vm1643, %v7681, -inf
        %v7714 = vsel %vm1644, %v7682, -inf
        %v7715 = vsel %vm1645, %v7683, -inf
        %v7716 = vsel %vm1646, %v7684, -inf
        %v7717 = vsel %vm1647, %v7685, -inf
        %v7718 = vsel %vm1648, %v7686, -inf
        %v7719 = vsel %vm1649, %v7687, -inf
        %v7720 = vsel %vm1650, %v7688, -inf
        %v7721 = vsel %vm1651, %v7689, -inf
        %v7722 = vsel %vm1652, %v7690, -inf
        %v7723 = vsel %vm1653, %v7691, -inf
        %v7724 = vsel %vm1654, %v7692, -inf
        %v7725 = vsel %vm1655, %v7693, -inf
        %v7726 = vsel %vm1656, %v7694, -inf
        %v7727 = vsel %vm1657, %v7695, -inf
        %v7728 = vsel %vm1658, %v7696, -inf
        %v7729 = vsel %vm1659, %v7697, -inf
        %v7730 = vsel %vm1660, %v7698, -inf
        %v7731 = vsel %vm1661, %v7699, -inf
        %v7732 = vsel %vm1662, %v7700, -inf
        %v7733 = vsel %vm1663, %v7701, -inf
        %v7734 = vsel %vm1664, %v7702, -inf
        %v7735 = vsel %vm1665, %v7703, -inf
        %v7736 = vsel %vm1666, %v7704, -inf
        %v7737 = vsel %vm1667, %v7705, -inf
        %v7738 = vsel %vm1668, %v7706, -inf
        %v7739 = vsel %vm1669, %v7707, -inf
        %v7740 = vsel %vm1670, %v7708, -inf
        %v7741 = vsel %vm1671, %v7709, -inf
        %v7742 = vsel %vm1672, %v7710, -inf
        %v7743 = vld [vmem:[#allocation2 + $0x107] sm:$0xff]
        %v7744 = vld [vmem:[#allocation2 + $0x10f] sm:$0xff]
        %v7745 = vsel %vm1481, %v7585, -inf
        %v7746 = vsel %vm1482, %v7586, -inf
        %v7747 = vsel %vm1483, %v7587, -inf
        %v7748 = vsel %vm1484, %v7588, -inf
        %v7749 = vsel %vm1485, %v7589, -inf
        %v7750 = vsel %vm1486, %v7590, -inf
        %v7751 = vsel %vm1487, %v7591, -inf
        %v7752 = vsel %vm1488, %v7592, -inf
        %v7753 = vsel %vm1489, %v7593, -inf
        %v7754 = vsel %vm1490, %v7594, -inf
        %v7755 = vsel %vm1491, %v7595, -inf
        %v7756 = vsel %vm1492, %v7596, -inf
        %v7757 = vsel %vm1493, %v7597, -inf
        %v7758 = vsel %vm1494, %v7598, -inf
        %v7759 = vsel %vm1495, %v7599, -inf
        %v7760 = vsel %vm1496, %v7600, -inf
        %v7761 = vsel %vm1497, %v7601, -inf
        %v7762 = vsel %vm1498, %v7602, -inf
        %v7763 = vsel %vm1499, %v7603, -inf
        %v7764 = vsel %vm1500, %v7604, -inf
        %v7765 = vsel %vm1501, %v7605, -inf
        %v7766 = vsel %vm1502, %v7606, -inf
        %v7767 = vsel %vm1503, %v7607, -inf
        %v7768 = vsel %vm1504, %v7608, -inf
        %v7769 = vsel %vm1505, %v7609, -inf
        %v7770 = vsel %vm1506, %v7610, -inf
        %v7771 = vsel %vm1507, %v7611, -inf
        %v7772 = vsel %vm1508, %v7612, -inf
        %v7773 = vsel %vm1509, %v7613, -inf
        %v7774 = vsel %vm1510, %v7614, -inf
        %v7775 = vsel %vm1511, %v7743, -inf
        %v7776 = vsel %vm1512, %v7744, -inf
        %v7777 = vld [vmem:[#allocation2 + $0x108] sm:$0xff]
        %v7778 = vld [vmem:[#allocation2 + $0x110] sm:$0xff]
        %v7779 = vld [vmem:[#allocation2 + $0x109] sm:$0xff]
        %v7780 = vld [vmem:[#allocation2 + $0x111] sm:$0xff]
        %v7781 = vsel %vm1641, %v7681, -inf
        %v7782 = vsel %vm1642, %v7682, -inf
        %v7783 = vsel %vm1643, %v7683, -inf
        %v7784 = vsel %vm1644, %v7684, -inf
        %v7785 = vsel %vm1645, %v7685, -inf
        %v7786 = vsel %vm1646, %v7686, -inf
        %v7787 = vsel %vm1647, %v7687, -inf
        %v7788 = vsel %vm1648, %v7688, -inf
        %v7789 = vsel %vm1649, %v7689, -inf
        %v7790 = vsel %vm1650, %v7690, -inf
        %v7791 = vsel %vm1651, %v7691, -inf
        %v7792 = vsel %vm1652, %v7692, -inf
        %v7793 = vsel %vm1653, %v7693, -inf
        %v7794 = vsel %vm1654, %v7694, -inf
        %v7795 = vsel %vm1655, %v7695, -inf
        %v7796 = vsel %vm1656, %v7696, -inf
        %v7797 = vsel %vm1657, %v7697, -inf
        %v7798 = vsel %vm1658, %v7698, -inf
        %v7799 = vsel %vm1659, %v7699, -inf
        %v7800 = vsel %vm1660, %v7700, -inf
        %v7801 = vsel %vm1661, %v7701, -inf
        %v7802 = vsel %vm1662, %v7702, -inf
        %v7803 = vsel %vm1663, %v7703, -inf
        %v7804 = vsel %vm1664, %v7704, -inf
        %v7805 = vsel %vm1665, %v7705, -inf
        %v7806 = vsel %vm1666, %v7706, -inf
        %v7807 = vsel %vm1667, %v7707, -inf
        %v7808 = vsel %vm1668, %v7708, -inf
        %v7809 = vsel %vm1669, %v7709, -inf
        %v7810 = vsel %vm1670, %v7710, -inf
        %v7811 = vsel %vm1671, %v7779, -inf
        %v7812 = vsel %vm1672, %v7780, -inf
        %v7813 = vld [vmem:[#allocation2 + $0x117] sm:$0xff]
        %v7814 = vld [vmem:[#allocation2 + $0x11f] sm:$0xff]
        %v7815 = vsel %vm1481, %v7587, -inf
        %v7816 = vsel %vm1482, %v7588, -inf
        %v7817 = vsel %vm1483, %v7589, -inf
        %v7818 = vsel %vm1484, %v7590, -inf
        %v7819 = vsel %vm1485, %v7591, -inf
        %v7820 = vsel %vm1486, %v7592, -inf
        %v7821 = vsel %vm1487, %v7593, -inf
        %v7822 = vsel %vm1488, %v7594, -inf
        %v7823 = vsel %vm1489, %v7595, -inf
        %v7824 = vsel %vm1490, %v7596, -inf
        %v7825 = vsel %vm1491, %v7597, -inf
        %v7826 = vsel %vm1492, %v7598, -inf
        %v7827 = vsel %vm1493, %v7599, -inf
        %v7828 = vsel %vm1494, %v7600, -inf
        %v7829 = vsel %vm1495, %v7601, -inf
        %v7830 = vsel %vm1496, %v7602, -inf
        %v7831 = vsel %vm1497, %v7603, -inf
        %v7832 = vsel %vm1498, %v7604, -inf
        %v7833 = vsel %vm1499, %v7605, -inf
        %v7834 = vsel %vm1500, %v7606, -inf
        %v7835 = vsel %vm1501, %v7607, -inf
        %v7836 = vsel %vm1502, %v7608, -inf
        %v7837 = vsel %vm1503, %v7609, -inf
        %v7838 = vsel %vm1504, %v7610, -inf
        %v7839 = vsel %vm1505, %v7611, -inf
        %v7840 = vsel %vm1506, %v7612, -inf
        %v7841 = vsel %vm1507, %v7613, -inf
        %v7842 = vsel %vm1508, %v7614, -inf
        %v7843 = vsel %vm1509, %v7743, -inf
        %v7844 = vsel %vm1510, %v7744, -inf
        %v7845 = vsel %vm1511, %v7813, -inf
        %v7846 = vsel %vm1512, %v7814, -inf
        %v7847 = vld [vmem:[#allocation2 + $0x118] sm:$0xff]
        %v7848 = vld [vmem:[#allocation2 + $0x120] sm:$0xff]
        %v7849 = vld [vmem:[#allocation2 + $0x119] sm:$0xff]
        %v7850 = vld [vmem:[#allocation2 + $0x121] sm:$0xff]
        %v7851 = vsel %vm1641, %v7683, -inf
        %v7852 = vsel %vm1642, %v7684, -inf
        %v7853 = vsel %vm1643, %v7685, -inf
        %v7854 = vsel %vm1644, %v7686, -inf
        %v7855 = vsel %vm1645, %v7687, -inf
        %v7856 = vsel %vm1646, %v7688, -inf
        %v7857 = vsel %vm1647, %v7689, -inf
        %v7858 = vsel %vm1648, %v7690, -inf
        %v7859 = vsel %vm1649, %v7691, -inf
        %v7860 = vsel %vm1650, %v7692, -inf
        %v7861 = vsel %vm1651, %v7693, -inf
        %v7862 = vsel %vm1652, %v7694, -inf
        %v7863 = vsel %vm1653, %v7695, -inf
        %v7864 = vsel %vm1654, %v7696, -inf
        %v7865 = vsel %vm1655, %v7697, -inf
        %v7866 = vsel %vm1656, %v7698, -inf
        %v7867 = vsel %vm1657, %v7699, -inf
        %v7868 = vsel %vm1658, %v7700, -inf
        %v7869 = vsel %vm1659, %v7701, -inf
        %v7870 = vsel %vm1660, %v7702, -inf
        %v7871 = vsel %vm1661, %v7703, -inf
        %v7872 = vsel %vm1662, %v7704, -inf
        %v7873 = vsel %vm1663, %v7705, -inf
        %v7874 = vsel %vm1664, %v7706, -inf
        %v7875 = vsel %vm1665, %v7707, -inf
        %v7876 = vsel %vm1666, %v7708, -inf
        %v7877 = vsel %vm1667, %v7709, -inf
        %v7878 = vsel %vm1668, %v7710, -inf
        %v7879 = vsel %vm1669, %v7779, -inf
        %v7880 = vsel %vm1670, %v7780, -inf
        %v7881 = vsel %vm1671, %v7849, -inf
        %v7882 = vsel %vm1672, %v7850, -inf
        %v7883 = vmax.f32 %v7615, %v7647
        %v7884 = vmax.f32 %v7616, %v7648
        %v7885 = vmax.f32 %v7617, %v7649
        %v7886 = vmax.f32 %v7618, %v7650
        %v7887 = vmax.f32 %v7619, %v7651
        %v7888 = vmax.f32 %v7620, %v7652
        %v7889 = vmax.f32 %v7621, %v7653
        %v7890 = vmax.f32 %v7622, %v7654
        %v7891 = vmax.f32 %v7623, %v7655
        %v7892 = vmax.f32 %v7624, %v7656
        %v7893 = vmax.f32 %v7625, %v7657
        %v7894 = vmax.f32 %v7626, %v7658
        %v7895 = vmax.f32 %v7627, %v7659
        %v7896 = vmax.f32 %v7628, %v7660
        %v7897 = vmax.f32 %v7629, %v7661
        %v7898 = vmax.f32 %v7630, %v7662
        %v7899 = vmax.f32 %v7631, %v7663
        %v7900 = vmax.f32 %v7632, %v7664
        %v7901 = vmax.f32 %v7633, %v7665
        %v7902 = vmax.f32 %v7634, %v7666
        %v7903 = vmax.f32 %v7635, %v7667
        %v7904 = vmax.f32 %v7636, %v7668
        %v7905 = vmax.f32 %v7637, %v7669
        %v7906 = vmax.f32 %v7638, %v7670
        %v7907 = vmax.f32 %v7639, %v7671
        %v7908 = vmax.f32 %v7640, %v7672
        %v7909 = vmax.f32 %v7641, %v7673
        %v7910 = vmax.f32 %v7642, %v7674
        %v7911 = vmax.f32 %v7643, %v7675
        %v7912 = vmax.f32 %v7644, %v7676
        %v7913 = vmax.f32 %v7645, %v7677
        %v7914 = vmax.f32 %v7646, %v7678
        %v7915 = vmax.f32 %v7883, %v7711
        %v7916 = vmax.f32 %v7884, %v7712
        %v7917 = vmax.f32 %v7885, %v7713
        %v7918 = vmax.f32 %v7886, %v7714
        %v7919 = vmax.f32 %v7887, %v7715
        %v7920 = vmax.f32 %v7888, %v7716
        %v7921 = vmax.f32 %v7889, %v7717
        %v7922 = vmax.f32 %v7890, %v7718
        %v7923 = vmax.f32 %v7891, %v7719
        %v7924 = vmax.f32 %v7892, %v7720
        %v7925 = vmax.f32 %v7893, %v7721
        %v7926 = vmax.f32 %v7894, %v7722
        %v7927 = vmax.f32 %v7895, %v7723
        %v7928 = vmax.f32 %v7896, %v7724
        %v7929 = vmax.f32 %v7897, %v7725
        %v7930 = vmax.f32 %v7898, %v7726
        %v7931 = vmax.f32 %v7899, %v7727
        %v7932 = vmax.f32 %v7900, %v7728
        %v7933 = vmax.f32 %v7901, %v7729
        %v7934 = vmax.f32 %v7902, %v7730
        %v7935 = vmax.f32 %v7903, %v7731
        %v7936 = vmax.f32 %v7904, %v7732
        %v7937 = vmax.f32 %v7905, %v7733
        %v7938 = vmax.f32 %v7906, %v7734
        %v7939 = vmax.f32 %v7907, %v7735
        %v7940 = vmax.f32 %v7908, %v7736
        %v7941 = vmax.f32 %v7909, %v7737
        %v7942 = vmax.f32 %v7910, %v7738
        %v7943 = vmax.f32 %v7911, %v7739
        %v7944 = vmax.f32 %v7912, %v7740
        %v7945 = vmax.f32 %v7913, %v7741
        %v7946 = vmax.f32 %v7914, %v7742
        %v7947 = vmax.f32 %v7915, %v7745
        %v7948 = vmax.f32 %v7916, %v7746
        %v7949 = vmax.f32 %v7917, %v7747
        %v7950 = vmax.f32 %v7918, %v7748
        %v7951 = vmax.f32 %v7919, %v7749
        %v7952 = vmax.f32 %v7920, %v7750
        %v7953 = vmax.f32 %v7921, %v7751
        %v7954 = vmax.f32 %v7922, %v7752
        %v7955 = vmax.f32 %v7923, %v7753
        %v7956 = vmax.f32 %v7924, %v7754
        %v7957 = vmax.f32 %v7925, %v7755
        %v7958 = vmax.f32 %v7926, %v7756
        %v7959 = vmax.f32 %v7927, %v7757
        %v7960 = vmax.f32 %v7928, %v7758
        %v7961 = vmax.f32 %v7929, %v7759
        %v7962 = vmax.f32 %v7930, %v7760
        %v7963 = vmax.f32 %v7931, %v7761
        %v7964 = vmax.f32 %v7932, %v7762
        %v7965 = vmax.f32 %v7933, %v7763
        %v7966 = vmax.f32 %v7934, %v7764
        %v7967 = vmax.f32 %v7935, %v7765
        %v7968 = vmax.f32 %v7936, %v7766
        %v7969 = vmax.f32 %v7937, %v7767
        %v7970 = vmax.f32 %v7938, %v7768
        %v7971 = vmax.f32 %v7939, %v7769
        %v7972 = vmax.f32 %v7940, %v7770
        %v7973 = vmax.f32 %v7941, %v7771
        %v7974 = vmax.f32 %v7942, %v7772
        %v7975 = vmax.f32 %v7943, %v7773
        %v7976 = vmax.f32 %v7944, %v7774
        %v7977 = vmax.f32 %v7945, %v7775
        %v7978 = vmax.f32 %v7946, %v7776
        %v7979 = vmax.f32 %v7947, %v7649
        %v7980 = vmax.f32 %v7948, %v7650
        %v7981 = vmax.f32 %v7949, %v7651
        %v7982 = vmax.f32 %v7950, %v7652
        %v7983 = vmax.f32 %v7951, %v7653
        %v7984 = vmax.f32 %v7952, %v7654
        %v7985 = vmax.f32 %v7953, %v7655
        %v7986 = vmax.f32 %v7954, %v7656
        %v7987 = vmax.f32 %v7955, %v7657
        %v7988 = vmax.f32 %v7956, %v7658
        %v7989 = vmax.f32 %v7957, %v7659
        %v7990 = vmax.f32 %v7958, %v7660
        %v7991 = vmax.f32 %v7959, %v7661
        %v7992 = vmax.f32 %v7960, %v7662
        %v7993 = vmax.f32 %v7961, %v7663
        %v7994 = vmax.f32 %v7962, %v7664
        %v7995 = vmax.f32 %v7963, %v7665
        %v7996 = vmax.f32 %v7964, %v7666
        %v7997 = vmax.f32 %v7965, %v7667
        %v7998 = vmax.f32 %v7966, %v7668
        %v7999 = vmax.f32 %v7967, %v7669
        %v8000 = vmax.f32 %v7968, %v7670
        %v8001 = vmax.f32 %v7969, %v7671
        %v8002 = vmax.f32 %v7970, %v7672
        %v8003 = vmax.f32 %v7971, %v7673
        %v8004 = vmax.f32 %v7972, %v7674
        %v8005 = vmax.f32 %v7973, %v7675
        %v8006 = vmax.f32 %v7974, %v7676
        %v8007 = vmax.f32 %v7975, %v7677
        %v8008 = vmax.f32 %v7976, %v7678
        %v8009 = vmax.f32 %v7977, %v7777
        %v8010 = vmax.f32 %v7978, %v7778
        %v8011 = vmax.f32 %v7979, %v7781
        %v8012 = vmax.f32 %v7980, %v7782
        %v8013 = vmax.f32 %v7981, %v7783
        %v8014 = vmax.f32 %v7982, %v7784
        %v8015 = vmax.f32 %v7983, %v7785
        %v8016 = vmax.f32 %v7984, %v7786
        %v8017 = vmax.f32 %v7985, %v7787
        %v8018 = vmax.f32 %v7986, %v7788
        %v8019 = vmax.f32 %v7987, %v7789
        %v8020 = vmax.f32 %v7988, %v7790
        %v8021 = vmax.f32 %v7989, %v7791
        %v8022 = vmax.f32 %v7990, %v7792
        %v8023 = vmax.f32 %v7991, %v7793
        %v8024 = vmax.f32 %v7992, %v7794
        %v8025 = vmax.f32 %v7993, %v7795
        %v8026 = vmax.f32 %v7994, %v7796
        %v8027 = vmax.f32 %v7995, %v7797
        %v8028 = vmax.f32 %v7996, %v7798
        %v8029 = vmax.f32 %v7997, %v7799
        %v8030 = vmax.f32 %v7998, %v7800
        %v8031 = vmax.f32 %v7999, %v7801
        %v8032 = vmax.f32 %v8000, %v7802
        %v8033 = vmax.f32 %v8001, %v7803
        %v8034 = vmax.f32 %v8002, %v7804
        %v8035 = vmax.f32 %v8003, %v7805
        %v8036 = vmax.f32 %v8004, %v7806
        %v8037 = vmax.f32 %v8005, %v7807
        %v8038 = vmax.f32 %v8006, %v7808
        %v8039 = vmax.f32 %v8007, %v7809
        %v8040 = vmax.f32 %v8008, %v7810
        %v8041 = vmax.f32 %v8009, %v7811
        %v8042 = vmax.f32 %v8010, %v7812
        %v8043 = vmax.f32 %v8011, %v7815
        %v8044 = vmax.f32 %v8012, %v7816
        %v8045 = vmax.f32 %v8013, %v7817
        %v8046 = vmax.f32 %v8014, %v7818
        %v8047 = vmax.f32 %v8015, %v7819
        %v8048 = vmax.f32 %v8016, %v7820
        %v8049 = vmax.f32 %v8017, %v7821
        %v8050 = vmax.f32 %v8018, %v7822
        %v8051 = vmax.f32 %v8019, %v7823
        %v8052 = vmax.f32 %v8020, %v7824
        %v8053 = vmax.f32 %v8021, %v7825
        %v8054 = vmax.f32 %v8022, %v7826
        %v8055 = vmax.f32 %v8023, %v7827
        %v8056 = vmax.f32 %v8024, %v7828
        %v8057 = vmax.f32 %v8025, %v7829
        %v8058 = vmax.f32 %v8026, %v7830
        %v8059 = vmax.f32 %v8027, %v7831
        %v8060 = vmax.f32 %v8028, %v7832
        %v8061 = vmax.f32 %v8029, %v7833
        %v8062 = vmax.f32 %v8030, %v7834
        %v8063 = vmax.f32 %v8031, %v7835
        %v8064 = vmax.f32 %v8032, %v7836
        %v8065 = vmax.f32 %v8033, %v7837
        %v8066 = vmax.f32 %v8034, %v7838
        %v8067 = vmax.f32 %v8035, %v7839
        %v8068 = vmax.f32 %v8036, %v7840
        %v8069 = vmax.f32 %v8037, %v7841
        %v8070 = vmax.f32 %v8038, %v7842
        %v8071 = vmax.f32 %v8039, %v7843
        %v8072 = vmax.f32 %v8040, %v7844
        %v8073 = vmax.f32 %v8041, %v7845
        %v8074 = vmax.f32 %v8042, %v7846
        %v8075 = vmax.f32 %v8043, %v7651
        %v8076 = vmax.f32 %v8044, %v7652
        %v8077 = vmax.f32 %v8045, %v7653
        %v8078 = vmax.f32 %v8046, %v7654
        %v8079 = vmax.f32 %v8047, %v7655
        %v8080 = vmax.f32 %v8048, %v7656
        %v8081 = vmax.f32 %v8049, %v7657
        %v8082 = vmax.f32 %v8050, %v7658
        %v8083 = vmax.f32 %v8051, %v7659
        %v8084 = vmax.f32 %v8052, %v7660
        %v8085 = vmax.f32 %v8053, %v7661
        %v8086 = vmax.f32 %v8054, %v7662
        %v8087 = vmax.f32 %v8055, %v7663
        %v8088 = vmax.f32 %v8056, %v7664
        %v8089 = vmax.f32 %v8057, %v7665
        %v8090 = vmax.f32 %v8058, %v7666
        %v8091 = vmax.f32 %v8059, %v7667
        %v8092 = vmax.f32 %v8060, %v7668
        %v8093 = vmax.f32 %v8061, %v7669
        %v8094 = vmax.f32 %v8062, %v7670
        %v8095 = vmax.f32 %v8063, %v7671
        %v8096 = vmax.f32 %v8064, %v7672
        %v8097 = vmax.f32 %v8065, %v7673
        %v8098 = vmax.f32 %v8066, %v7674
        %v8099 = vmax.f32 %v8067, %v7675
        %v8100 = vmax.f32 %v8068, %v7676
        %v8101 = vmax.f32 %v8069, %v7677
        %v8102 = vmax.f32 %v8070, %v7678
        %v8103 = vmax.f32 %v8071, %v7777
        %v8104 = vmax.f32 %v8072, %v7778
        %v8105 = vmax.f32 %v8073, %v7847
        %v8106 = vmax.f32 %v8074, %v7848
        %v8107 = vmax.f32 %v8075, %v7851
        %v8108 = vmax.f32 %v8076, %v7852
        %v8109 = vmax.f32 %v8077, %v7853
        %v8110 = vmax.f32 %v8078, %v7854
        %v8111 = vmax.f32 %v8079, %v7855
        %v8112 = vmax.f32 %v8080, %v7856
        %v8113 = vmax.f32 %v8081, %v7857
        %v8114 = vmax.f32 %v8082, %v7858
        %v8115 = vmax.f32 %v8083, %v7859
        %v8116 = vmax.f32 %v8084, %v7860
        %v8117 = vmax.f32 %v8085, %v7861
        %v8118 = vmax.f32 %v8086, %v7862
        %v8119 = vmax.f32 %v8087, %v7863
        %v8120 = vmax.f32 %v8088, %v7864
        %v8121 = vmax.f32 %v8089, %v7865
        %v8122 = vmax.f32 %v8090, %v7866
        %v8123 = vmax.f32 %v8091, %v7867
        %v8124 = vmax.f32 %v8092, %v7868
        %v8125 = vmax.f32 %v8093, %v7869
        %v8126 = vmax.f32 %v8094, %v7870
        %v8127 = vmax.f32 %v8095, %v7871
        %v8128 = vmax.f32 %v8096, %v7872
        %v8129 = vmax.f32 %v8097, %v7873
        %v8130 = vmax.f32 %v8098, %v7874
        %v8131 = vmax.f32 %v8099, %v7875
        %v8132 = vmax.f32 %v8100, %v7876
        %v8133 = vmax.f32 %v8101, %v7877
        %v8134 = vmax.f32 %v8102, %v7878
        %v8135 = vmax.f32 %v8103, %v7879
        %v8136 = vmax.f32 %v8104, %v7880
        %v8137 = vmax.f32 %v8105, %v7881
        %v8138 = vmax.f32 %v8106, %v7882
        %v8139 = vpack.c.bf16 %v8108, %v8107
        %v8140 = vpack.c.bf16 %v8110, %v8109
        %v8141 = vpack.c.bf16 %v8112, %v8111
        %v8142 = vpack.c.bf16 %v8114, %v8113
        %v8143 = vpack.c.bf16 %v8116, %v8115
        %v8144 = vpack.c.bf16 %v8118, %v8117
        %v8145 = vpack.c.bf16 %v8120, %v8119
        %v8146 = vpack.c.bf16 %v8122, %v8121
        %v8147 = vpack.c.bf16 %v8124, %v8123
        %v8148 = vpack.c.bf16 %v8126, %v8125
        %v8149 = vpack.c.bf16 %v8128, %v8127
        %v8150 = vpack.c.bf16 %v8130, %v8129
        %v8151 = vpack.c.bf16 %v8132, %v8131
        %v8152 = vpack.c.bf16 %v8134, %v8133
        %v8153 = vpack.c.bf16 %v8136, %v8135
        %v8154 = vpack.c.bf16 %v8138, %v8137
        %v8155 = vld [vmem:[%s13] sm:$0xf]
        %v8156 = vld [vmem:[%s13 + $0x4] sm:$0xf]
        %v8159 = vunpack.c.l.b16 %v8155
        %v8160 = vunpack.c.l.b16 %v8156
        %v8161 = vpack.c.b16 %v8160, %v8159
        %v8164 = vsel %vm1058, %v8139, 0
        %v8167 = vsel %vm1058, %v8140, 0
        %v8170 = vsel %vm1058, %v8141, 0
        %v8173 = vsel %vm1058, %v8142, 0
        %v8176 = vsel %vm1058, %v8143, 0
        %v8179 = vsel %vm1058, %v8144, 0
        %v8182 = vsel %vm1058, %v8145, 0
        %v8185 = vsel %vm1058, %v8146, 0
        %v8188 = vsel %vm1058, %v8147, 0
        %v8191 = vsel %vm1058, %v8148, 0
        %v8194 = vsel %vm1058, %v8149, 0
        %v8197 = vsel %vm1058, %v8150, 0
        %v8200 = vsel %vm1058, %v8151, 0
        %v8203 = vsel %vm1058, %v8152, 0
        %v8206 = vsel %vm1058, %v8153, 0
        %v8209 = vsel %vm1058, %v8154, 0
        %8211 = vmatprep.subr.bf16.mxu0 0
        %8212 = vmatpush1.bf16.msra.mxu0 0
        %8213 = vmatprep.subr.bf16.mxu0 0
        %8214 = vmatpush1.bf16.msra.mxu0 0
        %8215 = vmatprep.subr.bf16.mxu0 0
        %8216 = vmatpush1.bf16.msra.mxu0 0
        %8217 = vmatprep.subr.bf16.mxu0 0
        %8218 = vmatpush1.bf16.msra.mxu0 0
        %8219 = vmatprep.subr.bf16.mxu0 0
        %8220 = vmatpush1.bf16.msra.mxu0 0
        %8221 = vmatprep.subr.bf16.mxu0 0
        %8222 = vmatpush1.bf16.msra.mxu0 0
        %8223 = vmatprep.subr.bf16.mxu0 0
        %8224 = vmatpush1.bf16.msra.mxu0 0
        %8225 = vmatprep.subr.bf16.mxu0 0
        %8226 = vmatpush1.bf16.msra.mxu0 %v8161
        %8227 = vmatprep.subr.bf16.mxu0 0
        %8228 = vmatpush2.bf16.msra.mxu0 0
        %8229 = vmatprep.subr.bf16.mxu0 0
        %8230 = vmatpush2.bf16.msra.mxu0 0
        %8231 = vmatprep.subr.bf16.mxu0 0
        %8232 = vmatpush2.bf16.msra.mxu0 0
        %8233 = vmatprep.subr.bf16.mxu0 0
        %8234 = vmatpush2.bf16.msra.mxu0 0
        %8235 = vmatprep.subr.bf16.mxu0 0
        %8236 = vmatpush2.bf16.msra.mxu0 0
        %8237 = vmatprep.subr.bf16.mxu0 0
        %8238 = vmatpush2.bf16.msra.mxu0 0
        %8239 = vmatprep.subr.bf16.mxu0 0
        %8240 = vmatpush2.bf16.msra.mxu0 0
        %8241 = vmatprep.subr.bf16.mxu0 0
        %8242 = vmatpush2.bf16.msra.mxu0 0
        %8243 = vmatprep.mubr.bf16.mxu0 0
        %8244 = vmatmul.mubr.bf16.gmra.mxu0 %v8164
        %v8245 = vpop.f32.mrf.mxu0
        %v8246 = vadd.f32 0.0, %v8245
        %v8247 = vpop.f32.mrf.mxu0
        %v8248 = vpop.f32.mrf.mxu0
        %v8249 = vadd.f32 0.0, %v8248
        %v8250 = vpop.f32.mrf.mxu0
        %8251 = vmatprep.mubr.bf16.mxu0 0
        %8252 = vmatmul.mubr.bf16.gmra.mxu0 %v8167
        %v8253 = vpop.f32.mrf.mxu0
        %v8254 = vadd.f32 0.0, %v8253
        %v8255 = vpop.f32.mrf.mxu0
        %v8256 = vpop.f32.mrf.mxu0
        %v8257 = vadd.f32 0.0, %v8256
        %v8258 = vpop.f32.mrf.mxu0
        %8259 = vmatprep.mubr.bf16.mxu0 0
        %8260 = vmatmul.mubr.bf16.gmra.mxu0 %v8170
        %v8261 = vpop.f32.mrf.mxu0
        %v8262 = vadd.f32 0.0, %v8261
        %v8263 = vpop.f32.mrf.mxu0
        %v8264 = vpop.f32.mrf.mxu0
        %v8265 = vadd.f32 0.0, %v8264
        %v8266 = vpop.f32.mrf.mxu0
        %8267 = vmatprep.mubr.bf16.mxu0 0
        %8268 = vmatmul.mubr.bf16.gmra.mxu0 %v8173
        %v8269 = vpop.f32.mrf.mxu0
        %v8270 = vadd.f32 0.0, %v8269
        %v8271 = vpop.f32.mrf.mxu0
        %v8272 = vpop.f32.mrf.mxu0
        %v8273 = vadd.f32 0.0, %v8272
        %v8274 = vpop.f32.mrf.mxu0
        %8275 = vmatprep.mubr.bf16.mxu0 0
        %8276 = vmatmul.mubr.bf16.gmra.mxu0 %v8176
        %v8277 = vpop.f32.mrf.mxu0
        %v8278 = vadd.f32 0.0, %v8277
        %v8279 = vpop.f32.mrf.mxu0
        %v8280 = vpop.f32.mrf.mxu0
        %v8281 = vadd.f32 0.0, %v8280
        %v8282 = vpop.f32.mrf.mxu0
        %8283 = vmatprep.mubr.bf16.mxu0 0
        %8284 = vmatmul.mubr.bf16.gmra.mxu0 %v8179
        %v8285 = vpop.f32.mrf.mxu0
        %v8286 = vadd.f32 0.0, %v8285
        %v8287 = vpop.f32.mrf.mxu0
        %v8288 = vpop.f32.mrf.mxu0
        %v8289 = vadd.f32 0.0, %v8288
        %v8290 = vpop.f32.mrf.mxu0
        %8291 = vmatprep.mubr.bf16.mxu0 0
        %8292 = vmatmul.mubr.bf16.gmra.mxu0 %v8182
        %v8293 = vpop.f32.mrf.mxu0
        %v8294 = vadd.f32 0.0, %v8293
        %v8295 = vpop.f32.mrf.mxu0
        %v8296 = vpop.f32.mrf.mxu0
        %v8297 = vadd.f32 0.0, %v8296
        %v8298 = vpop.f32.mrf.mxu0
        %8299 = vmatprep.mubr.bf16.mxu0 0
        %8300 = vmatmul.mubr.bf16.gmra.mxu0 %v8185
        %v8301 = vpop.f32.mrf.mxu0
        %v8302 = vadd.f32 0.0, %v8301
        %v8303 = vpop.f32.mrf.mxu0
        %v8304 = vpop.f32.mrf.mxu0
        %v8305 = vadd.f32 0.0, %v8304
        %v8306 = vpop.f32.mrf.mxu0
        %8307 = vmatprep.mubr.bf16.mxu0 0
        %8308 = vmatmul.mubr.bf16.gmra.mxu0 %v8188
        %v8309 = vpop.f32.mrf.mxu0
        %v8310 = vadd.f32 0.0, %v8309
        %v8311 = vpop.f32.mrf.mxu0
        %v8312 = vpop.f32.mrf.mxu0
        %v8313 = vadd.f32 0.0, %v8312
        %v8314 = vpop.f32.mrf.mxu0
        %8315 = vmatprep.mubr.bf16.mxu0 0
        %8316 = vmatmul.mubr.bf16.gmra.mxu0 %v8191
        %v8317 = vpop.f32.mrf.mxu0
        %v8318 = vadd.f32 0.0, %v8317
        %v8319 = vpop.f32.mrf.mxu0
        %v8320 = vpop.f32.mrf.mxu0
        %v8321 = vadd.f32 0.0, %v8320
        %v8322 = vpop.f32.mrf.mxu0
        %8323 = vmatprep.mubr.bf16.mxu0 0
        %8324 = vmatmul.mubr.bf16.gmra.mxu0 %v8194
        %v8325 = vpop.f32.mrf.mxu0
        %v8326 = vadd.f32 0.0, %v8325
        %v8327 = vpop.f32.mrf.mxu0
        %v8328 = vpop.f32.mrf.mxu0
        %v8329 = vadd.f32 0.0, %v8328
        %v8330 = vpop.f32.mrf.mxu0
        %8331 = vmatprep.mubr.bf16.mxu0 0
        %8332 = vmatmul.mubr.bf16.gmra.mxu0 %v8197
        %v8333 = vpop.f32.mrf.mxu0
        %v8334 = vadd.f32 0.0, %v8333
        %v8335 = vpop.f32.mrf.mxu0
        %v8336 = vpop.f32.mrf.mxu0
        %v8337 = vadd.f32 0.0, %v8336
        %v8338 = vpop.f32.mrf.mxu0
        %8339 = vmatprep.mubr.bf16.mxu0 0
        %8340 = vmatmul.mubr.bf16.gmra.mxu0 %v8200
        %v8341 = vpop.f32.mrf.mxu0
        %v8342 = vadd.f32 0.0, %v8341
        %v8343 = vpop.f32.mrf.mxu0
        %v8344 = vpop.f32.mrf.mxu0
        %v8345 = vadd.f32 0.0, %v8344
        %v8346 = vpop.f32.mrf.mxu0
        %8347 = vmatprep.mubr.bf16.mxu0 0
        %8348 = vmatmul.mubr.bf16.gmra.mxu0 %v8203
        %v8349 = vpop.f32.mrf.mxu0
        %v8350 = vadd.f32 0.0, %v8349
        %v8351 = vpop.f32.mrf.mxu0
        %v8352 = vpop.f32.mrf.mxu0
        %v8353 = vadd.f32 0.0, %v8352
        %v8354 = vpop.f32.mrf.mxu0
        %8355 = vmatprep.mubr.bf16.mxu0 0
        %8356 = vmatmul.mubr.bf16.gmra.mxu0 %v8206
        %v8357 = vpop.f32.mrf.mxu0
        %v8358 = vadd.f32 0.0, %v8357
        %v8359 = vpop.f32.mrf.mxu0
        %v8360 = vpop.f32.mrf.mxu0
        %v8361 = vadd.f32 0.0, %v8360
        %v8362 = vpop.f32.mrf.mxu0
        %8363 = vmatprep.mubr.bf16.mxu0 0
        %8364 = vmatmul.mubr.bf16.gmra.mxu0 %v8209
        %v8365 = vpop.f32.mrf.mxu0
        %v8366 = vadd.f32 0.0, %v8365
        %v8367 = vpop.f32.mrf.mxu0
        %v8368 = vpop.f32.mrf.mxu0
        %v8369 = vadd.f32 0.0, %v8368
        %v8370 = vpop.f32.mrf.mxu0
        %8371 = vdwg.mxu0
        %v8372 = vld [vmem:[%s14] sm:$0x1]
        %v8374 = vlaneseq
        %v8375 = vshrl.u32 %v8374, 7
        %v8376 = vsub.s32 0, %v8375
        %v8377 = vrot.slane %v8372, %v8376
        %v8379 = vmul.f32 %v8246, %v8377
        %v8380 = vmul.f32 %v8249, %v8377
        %v8381 = vmul.f32 %v8254, %v8377
        %v8382 = vmul.f32 %v8257, %v8377
        %v8383 = vmul.f32 %v8262, %v8377
        %v8384 = vmul.f32 %v8265, %v8377
        %v8385 = vmul.f32 %v8270, %v8377
        %v8386 = vmul.f32 %v8273, %v8377
        %v8387 = vmul.f32 %v8278, %v8377
        %v8388 = vmul.f32 %v8281, %v8377
        %v8389 = vmul.f32 %v8286, %v8377
        %v8390 = vmul.f32 %v8289, %v8377
        %v8391 = vmul.f32 %v8294, %v8377
        %v8392 = vmul.f32 %v8297, %v8377
        %v8393 = vmul.f32 %v8302, %v8377
        %v8394 = vmul.f32 %v8305, %v8377
        %v8395 = vmul.f32 %v8310, %v8377
        %v8396 = vmul.f32 %v8313, %v8377
        %v8397 = vmul.f32 %v8318, %v8377
        %v8398 = vmul.f32 %v8321, %v8377
        %v8399 = vmul.f32 %v8326, %v8377
        %v8400 = vmul.f32 %v8329, %v8377
        %v8401 = vmul.f32 %v8334, %v8377
        %v8402 = vmul.f32 %v8337, %v8377
        %v8403 = vmul.f32 %v8342, %v8377
        %v8404 = vmul.f32 %v8345, %v8377
        %v8405 = vmul.f32 %v8350, %v8377
        %v8406 = vmul.f32 %v8353, %v8377
        %v8407 = vmul.f32 %v8358, %v8377
        %v8408 = vmul.f32 %v8361, %v8377
        %v8409 = vmul.f32 %v8366, %v8377
        %v8410 = vmul.f32 %v8369, %v8377
        %v8411 = vld [vmem:[%s15] sm:$0x1]
        %v8413 = vlaneseq
        %v8414 = vshrl.u32 %v8413, 7
        %v8415 = vsub.s32 0, %v8414
        %v8416 = vrot.slane %v8411, %v8415
        %v8418 = vadd.f32 %v8379, %v8416
        %v8419 = vadd.f32 %v8380, %v8416
        %v8420 = vadd.f32 %v8381, %v8416
        %v8421 = vadd.f32 %v8382, %v8416
        %v8422 = vadd.f32 %v8383, %v8416
        %v8423 = vadd.f32 %v8384, %v8416
        %v8424 = vadd.f32 %v8385, %v8416
        %v8425 = vadd.f32 %v8386, %v8416
        %v8426 = vadd.f32 %v8387, %v8416
        %v8427 = vadd.f32 %v8388, %v8416
        %v8428 = vadd.f32 %v8389, %v8416
        %v8429 = vadd.f32 %v8390, %v8416
        %v8430 = vadd.f32 %v8391, %v8416
        %v8431 = vadd.f32 %v8392, %v8416
        %v8432 = vadd.f32 %v8393, %v8416
        %v8433 = vadd.f32 %v8394, %v8416
        %v8434 = vadd.f32 %v8395, %v8416
        %v8435 = vadd.f32 %v8396, %v8416
        %v8436 = vadd.f32 %v8397, %v8416
        %v8437 = vadd.f32 %v8398, %v8416
        %v8438 = vadd.f32 %v8399, %v8416
        %v8439 = vadd.f32 %v8400, %v8416
        %v8440 = vadd.f32 %v8401, %v8416
        %v8441 = vadd.f32 %v8402, %v8416
        %v8442 = vadd.f32 %v8403, %v8416
        %v8443 = vadd.f32 %v8404, %v8416
        %v8444 = vadd.f32 %v8405, %v8416
        %v8445 = vadd.f32 %v8406, %v8416
        %v8446 = vadd.f32 %v8407, %v8416
        %v8447 = vadd.f32 %v8408, %v8416
        %v8448 = vadd.f32 %v8409, %v8416
        %v8449 = vadd.f32 %v8410, %v8416
        %v8450 = vmax.f32 %v8418, 0.0
        %v8451 = vmax.f32 %v8419, 0.0
        %v8452 = vmax.f32 %v8420, 0.0
        %v8453 = vmax.f32 %v8421, 0.0
        %v8454 = vmax.f32 %v8422, 0.0
        %v8455 = vmax.f32 %v8423, 0.0
        %v8456 = vmax.f32 %v8424, 0.0
        %v8457 = vmax.f32 %v8425, 0.0
        %v8458 = vmax.f32 %v8426, 0.0
        %v8459 = vmax.f32 %v8427, 0.0
        %v8460 = vmax.f32 %v8428, 0.0
        %v8461 = vmax.f32 %v8429, 0.0
        %v8462 = vmax.f32 %v8430, 0.0
        %v8463 = vmax.f32 %v8431, 0.0
        %v8464 = vmax.f32 %v8432, 0.0
        %v8465 = vmax.f32 %v8433, 0.0
        %v8466 = vmax.f32 %v8434, 0.0
        %v8467 = vmax.f32 %v8435, 0.0
        %v8468 = vmax.f32 %v8436, 0.0
        %v8469 = vmax.f32 %v8437, 0.0
        %v8470 = vmax.f32 %v8438, 0.0
        %v8471 = vmax.f32 %v8439, 0.0
        %v8472 = vmax.f32 %v8440, 0.0
        %v8473 = vmax.f32 %v8441, 0.0
        %v8474 = vmax.f32 %v8442, 0.0
        %v8475 = vmax.f32 %v8443, 0.0
        %v8476 = vmax.f32 %v8444, 0.0
        %v8477 = vmax.f32 %v8445, 0.0
        %v8478 = vmax.f32 %v8446, 0.0
        %v8479 = vmax.f32 %v8447, 0.0
        %v8480 = vmax.f32 %v8448, 0.0
        %v8481 = vmax.f32 %v8449, 0.0
        %8482 = vrot.lane.b32.xlu0 %v1346, 72
        %v8483 = vpop.permute.xlu0 %8482
        %8484 = vrot.lane.b32.xlu0 %v1347, 72
        %v8485 = vpop.permute.xlu0 %8484
        %8486 = vrot.lane.b32.xlu0 %v1348, 72
        %v8487 = vpop.permute.xlu0 %8486
        %8488 = vrot.lane.b32.xlu0 %v1349, 72
        %v8489 = vpop.permute.xlu0 %8488
        %8490 = vrot.lane.b32.xlu0 %v1350, 72
        %v8491 = vpop.permute.xlu0 %8490
        %8492 = vrot.lane.b32.xlu0 %v1351, 72
        %v8493 = vpop.permute.xlu0 %8492
        %8494 = vrot.lane.b32.xlu0 %v1352, 72
        %v8495 = vpop.permute.xlu0 %8494
        %8496 = vrot.lane.b32.xlu0 %v1353, 72
        %v8497 = vpop.permute.xlu0 %8496
        %8498 = vrot.lane.b32.xlu0 %v1354, 72
        %v8499 = vpop.permute.xlu0 %8498
        %8500 = vrot.lane.b32.xlu0 %v1355, 72
        %v8501 = vpop.permute.xlu0 %8500
        %8502 = vrot.lane.b32.xlu0 %v1356, 72
        %v8503 = vpop.permute.xlu0 %8502
        %8504 = vrot.lane.b32.xlu0 %v1357, 72
        %v8505 = vpop.permute.xlu0 %8504
        %8506 = vrot.lane.b32.xlu0 %v1358, 72
        %v8507 = vpop.permute.xlu0 %8506
        %8508 = vrot.lane.b32.xlu0 %v1359, 72
        %v8509 = vpop.permute.xlu0 %8508
        %8510 = vrot.lane.b32.xlu0 %v1360, 72
        %v8511 = vpop.permute.xlu0 %8510
        %8512 = vrot.lane.b32.xlu0 %v1361, 72
        %v8513 = vpop.permute.xlu0 %8512
        %8514 = vrot.lane.b32.xlu0 %v1362, 72
        %v8515 = vpop.permute.xlu0 %8514
        %8516 = vrot.lane.b32.xlu0 %v1363, 72
        %v8517 = vpop.permute.xlu0 %8516
        %8518 = vrot.lane.b32.xlu0 %v1364, 72
        %v8519 = vpop.permute.xlu0 %8518
        %8520 = vrot.lane.b32.xlu0 %v1365, 72
        %v8521 = vpop.permute.xlu0 %8520
        %8522 = vrot.lane.b32.xlu0 %v1366, 72
        %v8523 = vpop.permute.xlu0 %8522
        %8524 = vrot.lane.b32.xlu0 %v1367, 72
        %v8525 = vpop.permute.xlu0 %8524
        %8526 = vrot.lane.b32.xlu0 %v1368, 72
        %v8527 = vpop.permute.xlu0 %8526
        %8528 = vrot.lane.b32.xlu0 %v1369, 72
        %v8529 = vpop.permute.xlu0 %8528
        %8530 = vrot.lane.b32.xlu0 %v1370, 72
        %v8531 = vpop.permute.xlu0 %8530
        %8532 = vrot.lane.b32.xlu0 %v1371, 72
        %v8533 = vpop.permute.xlu0 %8532
        %8534 = vrot.lane.b32.xlu0 %v1372, 72
        %v8535 = vpop.permute.xlu0 %8534
        %8536 = vrot.lane.b32.xlu0 %v1373, 72
        %v8537 = vpop.permute.xlu0 %8536
        %8538 = vrot.lane.b32.xlu0 %v1374, 72
        %v8539 = vpop.permute.xlu0 %8538
        %8540 = vrot.lane.b32.xlu0 %v1375, 72
        %v8541 = vpop.permute.xlu0 %8540
        %8542 = vrot.lane.b32.xlu0 %v1376, 72
        %v8543 = vpop.permute.xlu0 %8542
        %8544 = vrot.lane.b32.xlu0 %v1377, 72
        %v8545 = vpop.permute.xlu0 %8544
        %8610 = vrot.lane.b32.xlu0 %v3638, 32
        %v8611 = vpop.permute.xlu0 %8610
        %8612 = vrot.lane.b32.xlu0 %v3639, 32
        %v8613 = vpop.permute.xlu0 %8612
        %8614 = vrot.lane.b32.xlu0 %v3640, 32
        %v8615 = vpop.permute.xlu0 %8614
        %8616 = vrot.lane.b32.xlu0 %v3641, 32
        %v8617 = vpop.permute.xlu0 %8616
        %8618 = vrot.lane.b32.xlu0 %v3642, 32
        %v8619 = vpop.permute.xlu0 %8618
        %8620 = vrot.lane.b32.xlu0 %v3643, 32
        %v8621 = vpop.permute.xlu0 %8620
        %8622 = vrot.lane.b32.xlu0 %v3644, 32
        %v8623 = vpop.permute.xlu0 %8622
        %8624 = vrot.lane.b32.xlu0 %v3645, 32
        %v8625 = vpop.permute.xlu0 %8624
        %8626 = vrot.lane.b32.xlu0 %v3646, 32
        %v8627 = vpop.permute.xlu0 %8626
        %8628 = vrot.lane.b32.xlu0 %v3647, 32
        %v8629 = vpop.permute.xlu0 %8628
        %8630 = vrot.lane.b32.xlu0 %v3648, 32
        %v8631 = vpop.permute.xlu0 %8630
        %8632 = vrot.lane.b32.xlu0 %v3649, 32
        %v8633 = vpop.permute.xlu0 %8632
        %8634 = vrot.lane.b32.xlu0 %v3650, 32
        %v8635 = vpop.permute.xlu0 %8634
        %8636 = vrot.lane.b32.xlu0 %v3651, 32
        %v8637 = vpop.permute.xlu0 %8636
        %8638 = vrot.lane.b32.xlu0 %v3652, 32
        %v8639 = vpop.permute.xlu0 %8638
        %8640 = vrot.lane.b32.xlu0 %v3653, 32
        %v8641 = vpop.permute.xlu0 %8640
        %8642 = vrot.lane.b32.xlu0 %v3654, 32
        %v8643 = vpop.permute.xlu0 %8642
        %8644 = vrot.lane.b32.xlu0 %v3655, 32
        %v8645 = vpop.permute.xlu0 %8644
        %8646 = vrot.lane.b32.xlu0 %v3656, 32
        %v8647 = vpop.permute.xlu0 %8646
        %8648 = vrot.lane.b32.xlu0 %v3657, 32
        %v8649 = vpop.permute.xlu0 %8648
        %8650 = vrot.lane.b32.xlu0 %v3658, 32
        %v8651 = vpop.permute.xlu0 %8650
        %8652 = vrot.lane.b32.xlu0 %v3659, 32
        %v8653 = vpop.permute.xlu0 %8652
        %8654 = vrot.lane.b32.xlu0 %v3660, 32
        %v8655 = vpop.permute.xlu0 %8654
        %8656 = vrot.lane.b32.xlu0 %v3661, 32
        %v8657 = vpop.permute.xlu0 %8656
        %8658 = vrot.lane.b32.xlu0 %v3662, 32
        %v8659 = vpop.permute.xlu0 %8658
        %8660 = vrot.lane.b32.xlu0 %v3663, 32
        %v8661 = vpop.permute.xlu0 %8660
        %8662 = vrot.lane.b32.xlu0 %v3664, 32
        %v8663 = vpop.permute.xlu0 %8662
        %8664 = vrot.lane.b32.xlu0 %v3665, 32
        %v8665 = vpop.permute.xlu0 %8664
        %8666 = vrot.lane.b32.xlu0 %v3666, 32
        %v8667 = vpop.permute.xlu0 %8666
        %8668 = vrot.lane.b32.xlu0 %v3667, 32
        %v8669 = vpop.permute.xlu0 %8668
        %8670 = vrot.lane.b32.xlu0 %v3668, 32
        %v8671 = vpop.permute.xlu0 %8670
        %8672 = vrot.lane.b32.xlu0 %v3669, 32
        %v8673 = vpop.permute.xlu0 %8672
        %8738 = vrot.lane.b32.xlu0 %v7513, 96
        %v8739 = vpop.permute.xlu0 %8738
        %8740 = vrot.lane.b32.xlu0 %v7514, 96
        %v8741 = vpop.permute.xlu0 %8740
        %8742 = vrot.lane.b32.xlu0 %v7515, 96
        %v8743 = vpop.permute.xlu0 %8742
        %8744 = vrot.lane.b32.xlu0 %v7516, 96
        %v8745 = vpop.permute.xlu0 %8744
        %8746 = vrot.lane.b32.xlu0 %v7517, 96
        %v8747 = vpop.permute.xlu0 %8746
        %8748 = vrot.lane.b32.xlu0 %v7518, 96
        %v8749 = vpop.permute.xlu0 %8748
        %8750 = vrot.lane.b32.xlu0 %v7519, 96
        %v8751 = vpop.permute.xlu0 %8750
        %8752 = vrot.lane.b32.xlu0 %v7520, 96
        %v8753 = vpop.permute.xlu0 %8752
        %8754 = vrot.lane.b32.xlu0 %v7521, 96
        %v8755 = vpop.permute.xlu0 %8754
        %8756 = vrot.lane.b32.xlu0 %v7522, 96
        %v8757 = vpop.permute.xlu0 %8756
        %8758 = vrot.lane.b32.xlu0 %v7523, 96
        %v8759 = vpop.permute.xlu0 %8758
        %8760 = vrot.lane.b32.xlu0 %v7524, 96
        %v8761 = vpop.permute.xlu0 %8760
        %8762 = vrot.lane.b32.xlu0 %v7525, 96
        %v8763 = vpop.permute.xlu0 %8762
        %8764 = vrot.lane.b32.xlu0 %v7526, 96
        %v8765 = vpop.permute.xlu0 %8764
        %8766 = vrot.lane.b32.xlu0 %v7527, 96
        %v8767 = vpop.permute.xlu0 %8766
        %8768 = vrot.lane.b32.xlu0 %v7528, 96
        %v8769 = vpop.permute.xlu0 %8768
        %8770 = vrot.lane.b32.xlu0 %v7529, 96
        %v8771 = vpop.permute.xlu0 %8770
        %8772 = vrot.lane.b32.xlu0 %v7530, 96
        %v8773 = vpop.permute.xlu0 %8772
        %8774 = vrot.lane.b32.xlu0 %v7531, 96
        %v8775 = vpop.permute.xlu0 %8774
        %8776 = vrot.lane.b32.xlu0 %v7532, 96
        %v8777 = vpop.permute.xlu0 %8776
        %8778 = vrot.lane.b32.xlu0 %v7533, 96
        %v8779 = vpop.permute.xlu0 %8778
        %8780 = vrot.lane.b32.xlu0 %v7534, 96
        %v8781 = vpop.permute.xlu0 %8780
        %8782 = vrot.lane.b32.xlu0 %v7535, 96
        %v8783 = vpop.permute.xlu0 %8782
        %8784 = vrot.lane.b32.xlu0 %v7536, 96
        %v8785 = vpop.permute.xlu0 %8784
        %8786 = vrot.lane.b32.xlu0 %v7537, 96
        %v8787 = vpop.permute.xlu0 %8786
        %8788 = vrot.lane.b32.xlu0 %v7538, 96
        %v8789 = vpop.permute.xlu0 %8788
        %8790 = vrot.lane.b32.xlu0 %v7539, 96
        %v8791 = vpop.permute.xlu0 %8790
        %8792 = vrot.lane.b32.xlu0 %v7540, 96
        %v8793 = vpop.permute.xlu0 %8792
        %8794 = vrot.lane.b32.xlu0 %v7541, 96
        %v8795 = vpop.permute.xlu0 %8794
        %8796 = vrot.lane.b32.xlu0 %v7542, 96
        %v8797 = vpop.permute.xlu0 %8796
        %8798 = vrot.lane.b32.xlu0 %v7543, 96
        %v8799 = vpop.permute.xlu0 %8798
        %8800 = vrot.lane.b32.xlu0 %v7544, 96
        %v8801 = vpop.permute.xlu0 %8800
        %8866 = vrot.lane.b32.xlu0 %v8450, 112
        %v8867 = vpop.permute.xlu0 %8866
        %8868 = vrot.lane.b32.xlu0 %v8451, 112
        %v8869 = vpop.permute.xlu0 %8868
        %8870 = vrot.lane.b32.xlu0 %v8452, 112
        %v8871 = vpop.permute.xlu0 %8870
        %8872 = vrot.lane.b32.xlu0 %v8453, 112
        %v8873 = vpop.permute.xlu0 %8872
        %8874 = vrot.lane.b32.xlu0 %v8454, 112
        %v8875 = vpop.permute.xlu0 %8874
        %8876 = vrot.lane.b32.xlu0 %v8455, 112
        %v8877 = vpop.permute.xlu0 %8876
        %8878 = vrot.lane.b32.xlu0 %v8456, 112
        %v8879 = vpop.permute.xlu0 %8878
        %8880 = vrot.lane.b32.xlu0 %v8457, 112
        %v8881 = vpop.permute.xlu0 %8880
        %8882 = vrot.lane.b32.xlu0 %v8458, 112
        %v8883 = vpop.permute.xlu0 %8882
        %8884 = vrot.lane.b32.xlu0 %v8459, 112
        %v8885 = vpop.permute.xlu0 %8884
        %8886 = vrot.lane.b32.xlu0 %v8460, 112
        %v8887 = vpop.permute.xlu0 %8886
        %8888 = vrot.lane.b32.xlu0 %v8461, 112
        %v8889 = vpop.permute.xlu0 %8888
        %8890 = vrot.lane.b32.xlu0 %v8462, 112
        %v8891 = vpop.permute.xlu0 %8890
        %8892 = vrot.lane.b32.xlu0 %v8463, 112
        %v8893 = vpop.permute.xlu0 %8892
        %8894 = vrot.lane.b32.xlu0 %v8464, 112
        %v8895 = vpop.permute.xlu0 %8894
        %8896 = vrot.lane.b32.xlu0 %v8465, 112
        %v8897 = vpop.permute.xlu0 %8896
        %8898 = vrot.lane.b32.xlu0 %v8466, 112
        %v8899 = vpop.permute.xlu0 %8898
        %8900 = vrot.lane.b32.xlu0 %v8467, 112
        %v8901 = vpop.permute.xlu0 %8900
        %8902 = vrot.lane.b32.xlu0 %v8468, 112
        %v8903 = vpop.permute.xlu0 %8902
        %8904 = vrot.lane.b32.xlu0 %v8469, 112
        %v8905 = vpop.permute.xlu0 %8904
        %8906 = vrot.lane.b32.xlu0 %v8470, 112
        %v8907 = vpop.permute.xlu0 %8906
        %8908 = vrot.lane.b32.xlu0 %v8471, 112
        %v8909 = vpop.permute.xlu0 %8908
        %8910 = vrot.lane.b32.xlu0 %v8472, 112
        %v8911 = vpop.permute.xlu0 %8910
        %8912 = vrot.lane.b32.xlu0 %v8473, 112
        %v8913 = vpop.permute.xlu0 %8912
        %8914 = vrot.lane.b32.xlu0 %v8474, 112
        %v8915 = vpop.permute.xlu0 %8914
        %8916 = vrot.lane.b32.xlu0 %v8475, 112
        %v8917 = vpop.permute.xlu0 %8916
        %8918 = vrot.lane.b32.xlu0 %v8476, 112
        %v8919 = vpop.permute.xlu0 %8918
        %8920 = vrot.lane.b32.xlu0 %v8477, 112
        %v8921 = vpop.permute.xlu0 %8920
        %8922 = vrot.lane.b32.xlu0 %v8478, 112
        %v8923 = vpop.permute.xlu0 %8922
        %8924 = vrot.lane.b32.xlu0 %v8479, 112
        %v8925 = vpop.permute.xlu0 %8924
        %8926 = vrot.lane.b32.xlu0 %v8480, 112
        %v8927 = vpop.permute.xlu0 %8926
        %8928 = vrot.lane.b32.xlu0 %v8481, 112
        %v8929 = vpop.permute.xlu0 %8928
        %v8962 = vsel %vm2844, %v8483, %v8611
        %v8963 = vsel %vm2844, %v8485, %v8613
        %v8964 = vsel %vm2844, %v8487, %v8615
        %v8965 = vsel %vm2844, %v8489, %v8617
        %v8966 = vsel %vm2844, %v8491, %v8619
        %v8967 = vsel %vm2844, %v8493, %v8621
        %v8968 = vsel %vm2844, %v8495, %v8623
        %v8969 = vsel %vm2844, %v8497, %v8625
        %v8970 = vsel %vm2844, %v8499, %v8627
        %v8971 = vsel %vm2844, %v8501, %v8629
        %v8972 = vsel %vm2844, %v8503, %v8631
        %v8973 = vsel %vm2844, %v8505, %v8633
        %v8974 = vsel %vm2844, %v8507, %v8635
        %v8975 = vsel %vm2844, %v8509, %v8637
        %v8976 = vsel %vm2844, %v8511, %v8639
        %v8977 = vsel %vm2844, %v8513, %v8641
        %v8978 = vsel %vm2844, %v8515, %v8643
        %v8979 = vsel %vm2844, %v8517, %v8645
        %v8980 = vsel %vm2844, %v8519, %v8647
        %v8981 = vsel %vm2844, %v8521, %v8649
        %v8982 = vsel %vm2844, %v8523, %v8651
        %v8983 = vsel %vm2844, %v8525, %v8653
        %v8984 = vsel %vm2844, %v8527, %v8655
        %v8985 = vsel %vm2844, %v8529, %v8657
        %v8986 = vsel %vm2844, %v8531, %v8659
        %v8987 = vsel %vm2844, %v8533, %v8661
        %v8988 = vsel %vm2844, %v8535, %v8663
        %v8989 = vsel %vm2844, %v8537, %v8665
        %v8990 = vsel %vm2844, %v8539, %v8667
        %v8991 = vsel %vm2844, %v8541, %v8669
        %v8992 = vsel %vm2844, %v8543, %v8671
        %v8993 = vsel %vm2844, %v8545, %v8673
        %v8994 = vsel %vm2713, %v8962, %v8739
        %v8995 = vsel %vm2713, %v8963, %v8741
        %v8996 = vsel %vm2713, %v8964, %v8743
        %v8997 = vsel %vm2713, %v8965, %v8745
        %v8998 = vsel %vm2713, %v8966, %v8747
        %v8999 = vsel %vm2713, %v8967, %v8749
        %v9000 = vsel %vm2713, %v8968, %v8751
        %v9001 = vsel %vm2713, %v8969, %v8753
        %v9002 = vsel %vm2713, %v8970, %v8755
        %v9003 = vsel %vm2713, %v8971, %v8757
        %v9004 = vsel %vm2713, %v8972, %v8759
        %v9005 = vsel %vm2713, %v8973, %v8761
        %v9006 = vsel %vm2713, %v8974, %v8763
        %v9007 = vsel %vm2713, %v8975, %v8765
        %v9008 = vsel %vm2713, %v8976, %v8767
        %v9009 = vsel %vm2713, %v8977, %v8769
        %v9010 = vsel %vm2713, %v8978, %v8771
        %v9011 = vsel %vm2713, %v8979, %v8773
        %v9012 = vsel %vm2713, %v8980, %v8775
        %v9013 = vsel %vm2713, %v8981, %v8777
        %v9014 = vsel %vm2713, %v8982, %v8779
        %v9015 = vsel %vm2713, %v8983, %v8781
        %v9016 = vsel %vm2713, %v8984, %v8783
        %v9017 = vsel %vm2713, %v8985, %v8785
        %v9018 = vsel %vm2713, %v8986, %v8787
        %v9019 = vsel %vm2713, %v8987, %v8789
        %v9020 = vsel %vm2713, %v8988, %v8791
        %v9021 = vsel %vm2713, %v8989, %v8793
        %v9022 = vsel %vm2713, %v8990, %v8795
        %v9023 = vsel %vm2713, %v8991, %v8797
        %v9024 = vsel %vm2713, %v8992, %v8799
        %v9025 = vsel %vm2713, %v8993, %v8801
        %v9026 = vsel %vm2811, %v8994, %v8867
        %v9027 = vsel %vm2811, %v8995, %v8869
        %v9028 = vsel %vm2811, %v8996, %v8871
        %v9029 = vsel %vm2811, %v8997, %v8873
        %v9030 = vsel %vm2811, %v8998, %v8875
        %v9031 = vsel %vm2811, %v8999, %v8877
        %v9032 = vsel %vm2811, %v9000, %v8879
        %v9033 = vsel %vm2811, %v9001, %v8881
        %v9034 = vsel %vm2811, %v9002, %v8883
        %v9035 = vsel %vm2811, %v9003, %v8885
        %v9036 = vsel %vm2811, %v9004, %v8887
        %v9037 = vsel %vm2811, %v9005, %v8889
        %v9038 = vsel %vm2811, %v9006, %v8891
        %v9039 = vsel %vm2811, %v9007, %v8893
        %v9040 = vsel %vm2811, %v9008, %v8895
        %v9041 = vsel %vm2811, %v9009, %v8897
        %v9042 = vsel %vm2811, %v9010, %v8899
        %v9043 = vsel %vm2811, %v9011, %v8901
        %v9044 = vsel %vm2811, %v9012, %v8903
        %v9045 = vsel %vm2811, %v9013, %v8905
        %v9046 = vsel %vm2811, %v9014, %v8907
        %v9047 = vsel %vm2811, %v9015, %v8909
        %v9048 = vsel %vm2811, %v9016, %v8911
        %v9049 = vsel %vm2811, %v9017, %v8913
        %v9050 = vsel %vm2811, %v9018, %v8915
        %v9051 = vsel %vm2811, %v9019, %v8917
        %v9052 = vsel %vm2811, %v9020, %v8919
        %v9053 = vsel %vm2811, %v9021, %v8921
        %v9054 = vsel %vm2811, %v9022, %v8923
        %v9055 = vsel %vm2811, %v9023, %v8925
        %v9056 = vsel %vm2811, %v9024, %v8927
        %v9057 = vsel %vm2811, %v9025, %v8929
        %9058 = vst [vmem:[%s514] sm:$0xff] %v9026
        %9059 = vst [vmem:[%s514 + $0x8] sm:$0xff] %v9027
        %9060 = vst [vmem:[%s514 + $0x10] sm:$0xff] %v9028
        %9061 = vst [vmem:[%s514 + $0x18] sm:$0xff] %v9029
        %9062 = vst [vmem:[%s514 + $0x20] sm:$0xff] %v9030
        %9063 = vst [vmem:[%s514 + $0x28] sm:$0xff] %v9031
        %9064 = vst [vmem:[%s514 + $0x30] sm:$0xff] %v9032
        %9065 = vst [vmem:[%s514 + $0x38] sm:$0xff] %v9033
        %9066 = vst [vmem:[%s514 + $0x40] sm:$0xff] %v9034
        %9067 = vst [vmem:[%s514 + $0x48] sm:$0xff] %v9035
        %9068 = vst [vmem:[%s514 + $0x50] sm:$0xff] %v9036
        %9069 = vst [vmem:[%s514 + $0x58] sm:$0xff] %v9037
        %9070 = vst [vmem:[%s514 + $0x60] sm:$0xff] %v9038
        %9071 = vst [vmem:[%s514 + $0x68] sm:$0xff] %v9039
        %9072 = vst [vmem:[%s514 + $0x70] sm:$0xff] %v9040
        %9073 = vst [vmem:[%s514 + $0x78] sm:$0xff] %v9041
        %9074 = vst [vmem:[%s514 + $0x80] sm:$0xff] %v9042
        %9075 = vst [vmem:[%s514 + $0x88] sm:$0xff] %v9043
        %9076 = vst [vmem:[%s514 + $0x90] sm:$0xff] %v9044
        %9077 = vst [vmem:[%s514 + $0x98] sm:$0xff] %v9045
        %9078 = vst [vmem:[%s514 + $0xa0] sm:$0xff] %v9046
        %9079 = vst [vmem:[%s514 + $0xa8] sm:$0xff] %v9047
        %9080 = vst [vmem:[%s514 + $0xb0] sm:$0xff] %v9048
        %9081 = vst [vmem:[%s514 + $0xb8] sm:$0xff] %v9049
        %9082 = vst [vmem:[%s514 + $0xc0] sm:$0xff] %v9050
        %9083 = vst [vmem:[%s514 + $0xc8] sm:$0xff] %v9051
        %9084 = vst [vmem:[%s514 + $0xd0] sm:$0xff] %v9052
        %9085 = vst [vmem:[%s514 + $0xd8] sm:$0xff] %v9053
        %9086 = vst [vmem:[%s514 + $0xe0] sm:$0xff] %v9054
        %9087 = vst [vmem:[%s514 + $0xe8] sm:$0xff] %v9055
        %9088 = vst [vmem:[%s514 + $0xf0] sm:$0xff] %v9056
        %9089 = vst [vmem:[%s514 + $0xf8] sm:$0xff] %v9057
        %s9090 = sand.u32 %s379, 1
        %s9091 = scalar_lea.sflag [#allocation4], %s9090
        %s9092 = sand.u32 %s379, 1
        %s9093 = smul.addr %s9092, 256
        %s9094 = scalar_lea.vmem [#allocation3], %s9093
        // Predicated region
        $region85: #{_lambda_.1} parent=83 // pred_check
          %p9095 = pneg %p389
        $region86: #{_lambda_.1} parent=83 // pred_check_branch
          %9097 = sbr.rel (%p9095) target = $region88
        $region87: #{_lambda_.1} parent=83 // pred_region
          %s9099 = ssub.s32 4096, 4096
          %9100 = vsyncadd %s9091, %s9099
          %s9101 = smul.addr %s30, 32
          %s9102 = smul.addr %s9101, 128
          %s9103 = scalar_lea.hbm %s16, %s9102
          %s9104 = sshll.u32 %s9094, 4
          %s9105 = int_to_ptr.vmem [resolvable:$true] %s9104
          %9110 = dma.vmem_to_hbm [thread:$0]  %s9105, 4096, %s9103, %s9091, 128, 128, 8
        $region88: #{_lambda_.1} parent=83 // pred_fallthru
          _
      $region84: #{_lambda_.1} parent=5 // pred_fallthru
        _
      %p9111 = scmp.le.s32.totalorder 2, %s25
      // Predicated region
      $region89: #{_lambda_.1} parent=5 // pred_check
        %p9112 = pneg %p9111
      $region90: #{_lambda_.1} parent=5 // pred_check_branch
        %9114 = sbr.rel (%p9112) target = $region92
      $region91: #{_lambda_.1} parent=5 // pred_region
        %s9115 = ssub.s32 %s25, 2
        // Predicated region
        $region93: #{_lambda_.1} parent=91 // pred_check
          %p9116 = pneg %p395
        $region94: #{_lambda_.1} parent=91 // pred_check_branch
          %9118 = sbr.rel (%p9116) target = $region96
        $region95: #{_lambda_.1} parent=91 // pred_region
          %s9119 = sand.u32 %s380, 1
          %s9120 = scalar_lea.sflag [#allocation4], %s9119
          %s9121 = sand.u32 %s380, 1
          %s9122 = smul.addr %s9121, 256
          %s9123 = scalar_lea.vmem [#allocation3], %s9122
          %9124 = dma.done %s9120, 4096
        $region96: #{_lambda_.1} parent=91 // pred_fallthru
          _
      $region92: #{_lambda_.1} parent=5 // pred_fallthru
        _
    $region6: #{_lambda_.1} parent=1 // loop_footer
      %s29 = sadd.s32 1, %s25
    $region7: #{_lambda_.1} parent=1 // loop_footer_branch
      %24 = sbr.rel target = $region3
    $region8: #{_lambda_.1} parent=1 // loop_exit
      _
    %9125 = vsyncpa [#allocation4], 1
    %s9126 = scalar_lea.sflag [#allocation4], 1
    %9127 = vsyncpa %s9126, 1

</llo_original>
